<compile_context>
chip_gen: v6e
topology: v6e:2x2x1
jax: 0.10.0
libtpu: 0.0.40
codegen_flags: <defaults>
</compile_context>

<pallas_src>
import functools

import numpy as np
import jax
import jax.numpy as jnp
from jax.experimental import pallas as pl
from jax.experimental.pallas import tpu as pltpu

EPS = 1e-5


def _round_up(x, m):
    return (x + m - 1) // m * m


def _padded_sizes(N, H, W):
    """Row counts: valid rows R, conv1-output rows L1, padded input rows R_pad."""
    R = N * H * W
    L1 = _round_up(R + W + 1, 16)      # conv2 taps read up to row R-1 + (W+1)
    R_pad = _round_up(L1 + W + 1, 16)  # conv1 taps read up to row L1-1 + (W+1)
    return R, L1, R_pad


# ------------------------------ fused kernel ------------------------------

def _fused_forward_kernel(
    x_ref,        # (R_pad, Cin) bf16  flattened input rows (zero row padding)
    w1_ref,       # (4, Cin, C1) bf16  conv1 weights, one (Cin, C1) matrix per 2x2 tap
    bgb1_ref,     # (3, C1) f32        rows: conv1 bias, bn1 gamma, bn1 beta
    w2_ref,       # (4, C1, C2) bf16
    bgb2_ref,     # (3, C2) f32
    fc1w_ref,     # (32, 32) f32       torch orientation (out_features, in_features)
    fc1b_ref,     # (32, 1) f32
    fc2w_ref,     # (A, 32) f32
    fc2b_ref,     # (A, 1) f32
    m1_ref,       # (L1, 1) f32        1.0 on valid conv1 output rows
    m2_ref,       # (R, 1) f32         1.0 on valid conv2 output rows
    out_ref,      # (A, N*H2*C2) f32   lane-dense Q values
    y1_scr,       # (L1, C1) bf16 VMEM scratch (BN1 output, full padded grid)
    y2_scr,       # (R,  C2) f32  VMEM scratch (BN2 output, full grid)
    *, N, H, W, H2, W2, L1, R, V1, V2):

    shifts = (0, 1, W, W + 1)          # row offsets of the 4 taps of a 2x2 kernel

    def conv2x2(src_ref, n_rows, w_ref):
        # VALID 2x2 conv as 4 accumulating bf16 MXU matmuls over shifted views.
        acc = None
        for k, s in enumerate(shifts):
            part = jnp.dot(src_ref[pl.ds(s, n_rows), :], w_ref[k],
                           preferred_element_type=jnp.float32)
            acc = part if acc is None else acc + part
        return acc

    def relu_bn(y, bgb_ref, mask, count):
        # conv bias + ReLU, then training-mode BN with one-pass masked stats.
        y = jnp.maximum(y + bgb_ref[0:1, :], 0.0)
        ym = y * mask
        inv_n = 1.0 / count
        mean = jnp.sum(ym, axis=0, keepdims=True) * inv_n
        var = jnp.sum(ym * ym, axis=0, keepdims=True) * inv_n - mean * mean
        scale = jax.lax.rsqrt(var + EPS) * bgb_ref[1:2, :]
        return (y - mean) * scale + bgb_ref[2:3, :]

    # conv1 -> ReLU -> BN1 (full padded row grid, stats masked); store bf16 once.
    y1 = relu_bn(conv2x2(x_ref, L1, w1_ref), bgb1_ref, m1_ref[...], V1)
    y1_scr[...] = y1.astype(jnp.bfloat16)

    # conv2 -> ReLU -> BN2 (f32, consumed once by the fc stage)
    y2_scr[...] = relu_bn(conv2x2(y1_scr, R, w2_ref), bgb2_ref, m2_ref[...], V2)

    # fc1 -> ReLU -> fc2, transpose-free and batched over all (n, h) blocks:
    #   blk[w, c] = x2[n, c, h, w];  lane-concat blocks -> big (W2, N*H2*C2)
    #   out[a, (n*H2+h)*C2 + c] = fc2_w @ relu(fc1_w @ big + b1) + b2
    blocks = [y2_scr[pl.ds(n * H * W + h * W, W2), :]
              for n in range(N) for h in range(H2)]
    big = jnp.concatenate(blocks, axis=1)                          # (W2, N*H2*C2)
    hid = jnp.maximum(
        jnp.dot(fc1w_ref[...], big, preferred_element_type=jnp.float32)
        + fc1b_ref[...], 0.0)
    out_ref[...] = (
        jnp.dot(fc2w_ref[...], hid, preferred_element_type=jnp.float32)
        + fc2b_ref[...]).astype(out_ref.dtype)


def _vmem_spec():
    return pl.BlockSpec(memory_space=pltpu.MemorySpace.VMEM)


# ------------------------- one-time parameter prep -------------------------

def prepare_params(params, input_shape):
    """Weight re-layout / packing / bf16 cast + valid-row masks (outside jit)."""
    N, Cin, H, W = input_shape
    C1 = params["conv1_w"].shape[0]
    C2 = params["conv2_w"].shape[0]
    H1, W1, H2, W2 = H - 1, W - 1, H - 2, W - 2
    assert W2 == params["fc1_w"].shape[1], "fc1 acts on the width axis: W must equal fc1_in + 2"
    R, L1, _ = _padded_sizes(N, H, W)

    r = np.arange(L1)
    rem = r % (H * W)
    h, w = rem // W, rem % W
    m1 = ((r < R) & (h < H1) & (w < W1)).astype(np.float32)[:, None]
    m2 = ((h < H2) & (w < W2)).astype(np.float32)[:R, None]

    return dict(
        w1=jnp.transpose(params["conv1_w"], (2, 3, 1, 0)).reshape(4, Cin, C1).astype(jnp.bfloat16),
        w2=jnp.transpose(params["conv2_w"], (2, 3, 1, 0)).reshape(4, C1, C2).astype(jnp.bfloat16),
        bgb1=jnp.stack([params["conv1_b"], params["bn1_g"], params["bn1_b"]]).astype(jnp.float32),
        bgb2=jnp.stack([params["conv2_b"], params["bn2_g"], params["bn2_b"]]).astype(jnp.float32),
        fc1w=params["fc1_w"].astype(jnp.float32),
        fc1b=params["fc1_b"].astype(jnp.float32)[:, None],
        fc2w=params["fc2_w"].astype(jnp.float32),
        fc2b=params["fc2_b"].astype(jnp.float32)[:, None],
        m1=jnp.asarray(m1),
        m2=jnp.asarray(m2),
    )


# --------------------------------- forward ---------------------------------

def pixel_qnetwork_forward(state_nchw, prep):
    N, Cin, H, W = state_nchw.shape
    H2, W2 = H - 2, W - 2
    C1 = prep["w1"].shape[2]
    C2 = prep["w2"].shape[2]
    A = prep["fc2w"].shape[0]
    R, L1, R_pad = _padded_sizes(N, H, W)
    V1 = float(N * (H - 1) * (W - 1))
    V2 = float(N * H2 * W2)

    # NCHW -> (row = (n,h,w), lane = channel) bf16 rows with zero row padding
    # so all shifted in-kernel reads stay in bounds.
    x_rows = jnp.transpose(state_nchw, (0, 2, 3, 1)).reshape(R, Cin).astype(jnp.bfloat16)
    x_rows = jnp.pad(x_rows, ((0, R_pad - R), (0, 0)))

    kernel = functools.partial(
        _fused_forward_kernel,
        N=N, H=H, W=W, H2=H2, W2=W2, L1=L1, R=R, V1=V1, V2=V2)

    out = pl.pallas_call(
        kernel,
        out_shape=jax.ShapeDtypeStruct((A, N * H2 * C2), jnp.float32),
        in_specs=[_vmem_spec()] * 11,
        out_specs=_vmem_spec(),
        scratch_shapes=[pltpu.VMEM((L1, C1), jnp.bfloat16),
                        pltpu.VMEM((R, C2), jnp.float32)],
    )(x_rows, prep["w1"], prep["bgb1"], prep["w2"], prep["bgb2"],
      prep["fc1w"], prep["fc1b"], prep["fc2w"], prep["fc2b"],
      prep["m1"], prep["m2"])

    # (A, N*H2*C2) -> (N, C2, H2, A): the PyTorch module's output layout.
    return jnp.transpose(out.reshape(A, N, H2, C2), (1, 3, 2, 0))


# ------------------------- params & pure-JAX reference -------------------------

def init_params(key, action_size):
    ks = jax.random.split(key, 12)
    u = lambda k, s, sc: jax.random.uniform(k, s, jnp.float32, -sc, sc)
    return dict(
        conv1_w=u(ks[0], (64, 84, 2, 2), 0.05), conv1_b=u(ks[1], (64,), 0.05),
        bn1_g=1.0 + u(ks[2], (64,), 0.1),       bn1_b=u(ks[3], (64,), 0.1),
        conv2_w=u(ks[4], (32, 64, 2, 2), 0.05), conv2_b=u(ks[5], (32,), 0.05),
        bn2_g=1.0 + u(ks[6], (32,), 0.1),       bn2_b=u(ks[7], (32,), 0.1),
        fc1_w=u(ks[8], (32, 32), 0.1),          fc1_b=u(ks[9], (32,), 0.1),
        fc2_w=u(ks[10], (action_size, 32), 0.1), fc2_b=u(ks[11], (action_size,), 0.1),
    )


def reference_forward(state, params):
    hp = jax.lax.Precision.HIGHEST

    def conv_relu_bn_ref(x, w, b, g, beta):
        y = jax.lax.conv_general_dilated(
            x, w, (1, 1), "VALID",
            dimension_numbers=("NCHW", "OIHW", "NCHW"), precision=hp)
        y = jnp.maximum(y + b[None, :, None, None], 0.0)
        mean = jnp.mean(y, axis=(0, 2, 3), keepdims=True)
        var = jnp.mean((y - mean) ** 2, axis=(0, 2, 3), keepdims=True)
        return ((y - mean) / jnp.sqrt(var + EPS) * g[None, :, None, None]
                + beta[None, :, None, None])

    y = conv_relu_bn_ref(state, params["conv1_w"], params["conv1_b"],
                         params["bn1_g"], params["bn1_b"])
    y = conv_relu_bn_ref(y, params["conv2_w"], params["conv2_b"],
                         params["bn2_g"], params["bn2_b"])
    y = jnp.maximum(jnp.einsum("nchw,ow->ncho", y, params["fc1_w"], precision=hp)
                    + params["fc1_b"], 0.0)
    y = jnp.einsum("nchw,ow->ncho", y, params["fc2_w"], precision=hp) + params["fc2_b"]
    return y


if __name__ == "__main__":
    key = jax.random.PRNGKey(0)
    kx, kp = jax.random.split(key)

    # W must be 34 so that after two 2x2 VALID convs the width is 32 (fc1 input).
    N, Cin, H, W = 2, 84, 6, 34
    action_size = 4

    x = jax.random.normal(kx, (N, Cin, H, W), jnp.float32)
    params = init_params(kp, action_size)
    prep = prepare_params(params, (N, Cin, H, W))

    fwd = jax.jit(pixel_qnetwork_forward)
    out = jax.block_until_ready(fwd(x, prep))

    ref = reference_forward(x, params)
    assert out.shape == (N, 32, H - 2, action_size), out.shape
    max_err = float(jnp.max(jnp.abs(out - ref)))
    assert jnp.allclose(out, ref, rtol=3e-2, atol=3e-2), max_err
    print("KERNEL_OK")
</pallas_src>

<mosaic_0001>
module attributes {stable_mosaic.version = 11 : i64} {
  func.func @_fused_forward_kernel(%arg0: memref<496x84xbf16, #tpu.memory_space<vmem>>, %arg1: memref<4x84x64xbf16, #tpu.memory_space<vmem>>, %arg2: memref<3x64xf32, #tpu.memory_space<vmem>>, %arg3: memref<4x64x32xbf16, #tpu.memory_space<vmem>>, %arg4: memref<3x32xf32, #tpu.memory_space<vmem>>, %arg5: memref<32x32xf32, #tpu.memory_space<vmem>>, %arg6: memref<32x1xf32, #tpu.memory_space<vmem>>, %arg7: memref<4x32xf32, #tpu.memory_space<vmem>>, %arg8: memref<4x1xf32, #tpu.memory_space<vmem>>, %arg9: memref<448x1xf32, #tpu.memory_space<vmem>>, %arg10: memref<408x1xf32, #tpu.memory_space<vmem>>, %arg11: memref<4x256xf32, #tpu.memory_space<vmem>>, %arg12: memref<448x64xbf16, #tpu.memory_space<vmem>>, %arg13: memref<408x32xf32, #tpu.memory_space<vmem>>) attributes {dimension_semantics = [], scalar_prefetch = 0 : i64, scratch_operands = 2 : i64, tpu.core_type = #tpu.core_type<tc>} {
    %c0 = arith.constant 0 : index
    %c0_0 = arith.constant 0 : index
    %0 = vector.load %arg0[%c0, %c0_0] : memref<496x84xbf16, #tpu.memory_space<vmem>>, vector<448x84xbf16>
    %c0_1 = arith.constant 0 : index
    %c0_2 = arith.constant 0 : index
    %c0_3 = arith.constant 0 : index
    %1 = vector.load %arg1[%c0_1, %c0_2, %c0_3] : memref<4x84x64xbf16, #tpu.memory_space<vmem>>, vector<1x84x64xbf16>
    %2 = vector.shape_cast %1 : vector<1x84x64xbf16> to vector<84x64xbf16>
    %cst = arith.constant dense<0.000000e+00> : vector<448x64xf32>
    %3 = tpu.matmul %0, %2, %cst {dimension_numbers = #tpu.dot_dimension_numbers<[1], [0], [0], [1], [0, 0, 1, 1], [], []>} : vector<448x84xbf16>, vector<84x64xbf16>, vector<448x64xf32> -> vector<448x64xf32>
    %c1 = arith.constant 1 : index
    %c0_4 = arith.constant 0 : index
    %4 = vector.load %arg0[%c1, %c0_4] : memref<496x84xbf16, #tpu.memory_space<vmem>>, vector<448x84xbf16>
    %c1_5 = arith.constant 1 : index
    %c0_6 = arith.constant 0 : index
    %c0_7 = arith.constant 0 : index
    %5 = vector.load %arg1[%c1_5, %c0_6, %c0_7] : memref<4x84x64xbf16, #tpu.memory_space<vmem>>, vector<1x84x64xbf16>
    %6 = vector.shape_cast %5 : vector<1x84x64xbf16> to vector<84x64xbf16>
    %cst_8 = arith.constant dense<0.000000e+00> : vector<448x64xf32>
    %7 = tpu.matmul %4, %6, %cst_8 {dimension_numbers = #tpu.dot_dimension_numbers<[1], [0], [0], [1], [0, 0, 1, 1], [], []>} : vector<448x84xbf16>, vector<84x64xbf16>, vector<448x64xf32> -> vector<448x64xf32>
    %8 = arith.addf %3, %7 : vector<448x64xf32>
    %c34 = arith.constant 34 : index
    %c0_9 = arith.constant 0 : index
    %9 = vector.load %arg0[%c34, %c0_9] : memref<496x84xbf16, #tpu.memory_space<vmem>>, vector<448x84xbf16>
    %c2 = arith.constant 2 : index
    %c0_10 = arith.constant 0 : index
    %c0_11 = arith.constant 0 : index
    %10 = vector.load %arg1[%c2, %c0_10, %c0_11] : memref<4x84x64xbf16, #tpu.memory_space<vmem>>, vector<1x84x64xbf16>
    %11 = vector.shape_cast %10 : vector<1x84x64xbf16> to vector<84x64xbf16>
    %cst_12 = arith.constant dense<0.000000e+00> : vector<448x64xf32>
    %12 = tpu.matmul %9, %11, %cst_12 {dimension_numbers = #tpu.dot_dimension_numbers<[1], [0], [0], [1], [0, 0, 1, 1], [], []>} : vector<448x84xbf16>, vector<84x64xbf16>, vector<448x64xf32> -> vector<448x64xf32>
    %13 = arith.addf %8, %12 : vector<448x64xf32>
    %c35 = arith.constant 35 : index
    %c0_13 = arith.constant 0 : index
    %14 = vector.load %arg0[%c35, %c0_13] : memref<496x84xbf16, #tpu.memory_space<vmem>>, vector<448x84xbf16>
    %c3 = arith.constant 3 : index
    %c0_14 = arith.constant 0 : index
    %c0_15 = arith.constant 0 : index
    %15 = vector.load %arg1[%c3, %c0_14, %c0_15] : memref<4x84x64xbf16, #tpu.memory_space<vmem>>, vector<1x84x64xbf16>
    %16 = vector.shape_cast %15 : vector<1x84x64xbf16> to vector<84x64xbf16>
    %cst_16 = arith.constant dense<0.000000e+00> : vector<448x64xf32>
    %17 = tpu.matmul %14, %16, %cst_16 {dimension_numbers = #tpu.dot_dimension_numbers<[1], [0], [0], [1], [0, 0, 1, 1], [], []>} : vector<448x84xbf16>, vector<84x64xbf16>, vector<448x64xf32> -> vector<448x64xf32>
    %18 = arith.addf %13, %17 : vector<448x64xf32>
    %c0_17 = arith.constant 0 : index
    %c0_18 = arith.constant 0 : index
    %19 = vector.load %arg9[%c0_17, %c0_18] : memref<448x1xf32, #tpu.memory_space<vmem>>, vector<448x1xf32>
    %c0_19 = arith.constant 0 : index
    %c0_20 = arith.constant 0 : index
    %20 = vector.load %arg2[%c0_19, %c0_20] : memref<3x64xf32, #tpu.memory_space<vmem>>, vector<1x64xf32>
    %21 = vector.broadcast %20 : vector<1x64xf32> to vector<448x64xf32>
    %22 = arith.addf %18, %21 : vector<448x64xf32>
    %cst_21 = arith.constant 0.000000e+00 : f32
    %23 = vector.broadcast %cst_21 : f32 to vector<448x64xf32>
    %24 = arith.maximumf %22, %23 : vector<448x64xf32>
    %25 = vector.broadcast %19 : vector<448x1xf32> to vector<448x64xf32>
    %26 = arith.mulf %24, %25 : vector<448x64xf32>
    %cst_22 = arith.constant dense<0.000000e+00> : vector<64xf32>
    %27 = vector.multi_reduction <add>, %26, %cst_22 [0] : vector<448x64xf32> to vector<64xf32>
    %28 = vector.shape_cast %27 : vector<64xf32> to vector<1x64xf32>
    %cst_23 = arith.constant 0.00303030293 : f32
    %29 = vector.broadcast %cst_23 : f32 to vector<1x64xf32>
    %30 = arith.mulf %28, %29 : vector<1x64xf32>
    %31 = arith.mulf %26, %26 : vector<448x64xf32>
    %cst_24 = arith.constant dense<0.000000e+00> : vector<64xf32>
    %32 = vector.multi_reduction <add>, %31, %cst_24 [0] : vector<448x64xf32> to vector<64xf32>
    %33 = vector.shape_cast %32 : vector<64xf32> to vector<1x64xf32>
    %cst_25 = arith.constant 0.00303030293 : f32
    %34 = vector.broadcast %cst_25 : f32 to vector<1x64xf32>
    %35 = arith.mulf %33, %34 : vector<1x64xf32>
    %36 = arith.mulf %30, %30 : vector<1x64xf32>
    %37 = arith.subf %35, %36 : vector<1x64xf32>
    %cst_26 = arith.constant 9.99999974E-6 : f32
    %38 = vector.broadcast %cst_26 : f32 to vector<1x64xf32>
    %39 = arith.addf %37, %38 : vector<1x64xf32>
    %40 = math.rsqrt %39 : vector<1x64xf32>
    %c1_27 = arith.constant 1 : index
    %c0_28 = arith.constant 0 : index
    %41 = vector.load %arg2[%c1_27, %c0_28] : memref<3x64xf32, #tpu.memory_space<vmem>>, vector<1x64xf32>
    %42 = arith.mulf %40, %41 : vector<1x64xf32>
    %43 = vector.broadcast %30 : vector<1x64xf32> to vector<448x64xf32>
    %44 = arith.subf %24, %43 : vector<448x64xf32>
    %45 = vector.broadcast %42 : vector<1x64xf32> to vector<448x64xf32>
    %46 = arith.mulf %44, %45 : vector<448x64xf32>
    %c2_29 = arith.constant 2 : index
    %c0_30 = arith.constant 0 : index
    %47 = vector.load %arg2[%c2_29, %c0_30] : memref<3x64xf32, #tpu.memory_space<vmem>>, vector<1x64xf32>
    %48 = vector.broadcast %47 : vector<1x64xf32> to vector<448x64xf32>
    %49 = arith.addf %46, %48 : vector<448x64xf32>
    %50 = arith.truncf %49 : vector<448x64xf32> to vector<448x64xbf16>
    %c0_31 = arith.constant 0 : index
    %c0_32 = arith.constant 0 : index
    %51 = vector.load %arg12[%c0_31, %c0_32] : memref<448x64xbf16, #tpu.memory_space<vmem>>, vector<448x64xbf16>
    tpu.vector_store %arg12[%c0_31, %c0_32], %50 {strides = array<i32>} : memref<448x64xbf16, #tpu.memory_space<vmem>>, vector<448x64xbf16>,
    %c0_33 = arith.constant 0 : index
    %c0_34 = arith.constant 0 : index
    %52 = vector.load %arg12[%c0_33, %c0_34] : memref<448x64xbf16, #tpu.memory_space<vmem>>, vector<408x64xbf16>
    %c0_35 = arith.constant 0 : index
    %c0_36 = arith.constant 0 : index
    %c0_37 = arith.constant 0 : index
    %53 = vector.load %arg3[%c0_35, %c0_36, %c0_37] : memref<4x64x32xbf16, #tpu.memory_space<vmem>>, vector<1x64x32xbf16>
    %54 = vector.shape_cast %53 : vector<1x64x32xbf16> to vector<64x32xbf16>
    %cst_38 = arith.constant dense<0.000000e+00> : vector<408x32xf32>
    %55 = tpu.matmul %52, %54, %cst_38 {dimension_numbers = #tpu.dot_dimension_numbers<[1], [0], [0], [1], [0, 0, 1, 1], [], []>} : vector<408x64xbf16>, vector<64x32xbf16>, vector<408x32xf32> -> vector<408x32xf32>
    %c1_39 = arith.constant 1 : index
    %c0_40 = arith.constant 0 : index
    %56 = vector.load %arg12[%c1_39, %c0_40] : memref<448x64xbf16, #tpu.memory_space<vmem>>, vector<408x64xbf16>
    %c1_41 = arith.constant 1 : index
    %c0_42 = arith.constant 0 : index
    %c0_43 = arith.constant 0 : index
    %57 = vector.load %arg3[%c1_41, %c0_42, %c0_43] : memref<4x64x32xbf16, #tpu.memory_space<vmem>>, vector<1x64x32xbf16>
    %58 = vector.shape_cast %57 : vector<1x64x32xbf16> to vector<64x32xbf16>
    %cst_44 = arith.constant dense<0.000000e+00> : vector<408x32xf32>
    %59 = tpu.matmul %56, %58, %cst_44 {dimension_numbers = #tpu.dot_dimension_numbers<[1], [0], [0], [1], [0, 0, 1, 1], [], []>} : vector<408x64xbf16>, vector<64x32xbf16>, vector<408x32xf32> -> vector<408x32xf32>
    %60 = arith.addf %55, %59 : vector<408x32xf32>
    %c34_45 = arith.constant 34 : index
    %c0_46 = arith.constant 0 : index
    %61 = vector.load %arg12[%c34_45, %c0_46] : memref<448x64xbf16, #tpu.memory_space<vmem>>, vector<408x64xbf16>
    %c2_47 = arith.constant 2 : index
    %c0_48 = arith.constant 0 : index
    %c0_49 = arith.constant 0 : index
    %62 = vector.load %arg3[%c2_47, %c0_48, %c0_49] : memref<4x64x32xbf16, #tpu.memory_space<vmem>>, vector<1x64x32xbf16>
    %63 = vector.shape_cast %62 : vector<1x64x32xbf16> to vector<64x32xbf16>
    %cst_50 = arith.constant dense<0.000000e+00> : vector<408x32xf32>
    %64 = tpu.matmul %61, %63, %cst_50 {dimension_numbers = #tpu.dot_dimension_numbers<[1], [0], [0], [1], [0, 0, 1, 1], [], []>} : vector<408x64xbf16>, vector<64x32xbf16>, vector<408x32xf32> -> vector<408x32xf32>
    %65 = arith.addf %60, %64 : vector<408x32xf32>
    %c35_51 = arith.constant 35 : index
    %c0_52 = arith.constant 0 : index
    %66 = vector.load %arg12[%c35_51, %c0_52] : memref<448x64xbf16, #tpu.memory_space<vmem>>, vector<408x64xbf16>
    %c3_53 = arith.constant 3 : index
    %c0_54 = arith.constant 0 : index
    %c0_55 = arith.constant 0 : index
    %67 = vector.load %arg3[%c3_53, %c0_54, %c0_55] : memref<4x64x32xbf16, #tpu.memory_space<vmem>>, vector<1x64x32xbf16>
    %68 = vector.shape_cast %67 : vector<1x64x32xbf16> to vector<64x32xbf16>
    %cst_56 = arith.constant dense<0.000000e+00> : vector<408x32xf32>
    %69 = tpu.matmul %66, %68, %cst_56 {dimension_numbers = #tpu.dot_dimension_numbers<[1], [0], [0], [1], [0, 0, 1, 1], [], []>} : vector<408x64xbf16>, vector<64x32xbf16>, vector<408x32xf32> -> vector<408x32xf32>
    %70 = arith.addf %65, %69 : vector<408x32xf32>
    %c0_57 = arith.constant 0 : index
    %c0_58 = arith.constant 0 : index
    %71 = vector.load %arg10[%c0_57, %c0_58] : memref<408x1xf32, #tpu.memory_space<vmem>>, vector<408x1xf32>
    %c0_59 = arith.constant 0 : index
    %c0_60 = arith.constant 0 : index
    %72 = vector.load %arg4[%c0_59, %c0_60] : memref<3x32xf32, #tpu.memory_space<vmem>>, vector<1x32xf32>
    %73 = vector.broadcast %72 : vector<1x32xf32> to vector<408x32xf32>
    %74 = arith.addf %70, %73 : vector<408x32xf32>
    %cst_61 = arith.constant 0.000000e+00 : f32
    %75 = vector.broadcast %cst_61 : f32 to vector<408x32xf32>
    %76 = arith.maximumf %74, %75 : vector<408x32xf32>
    %77 = vector.broadcast %71 : vector<408x1xf32> to vector<408x32xf32>
    %78 = arith.mulf %76, %77 : vector<408x32xf32>
    %cst_62 = arith.constant dense<0.000000e+00> : vector<32xf32>
    %79 = vector.multi_reduction <add>, %78, %cst_62 [0] : vector<408x32xf32> to vector<32xf32>
    %80 = vector.shape_cast %79 : vector<32xf32> to vector<1x32xf32>
    %cst_63 = arith.constant 3.906250e-03 : f32
    %81 = vector.broadcast %cst_63 : f32 to vector<1x32xf32>
    %82 = arith.mulf %80, %81 : vector<1x32xf32>
    %83 = arith.mulf %78, %78 : vector<408x32xf32>
    %cst_64 = arith.constant dense<0.000000e+00> : vector<32xf32>
    %84 = vector.multi_reduction <add>, %83, %cst_64 [0] : vector<408x32xf32> to vector<32xf32>
    %85 = vector.shape_cast %84 : vector<32xf32> to vector<1x32xf32>
    %cst_65 = arith.constant 3.906250e-03 : f32
    %86 = vector.broadcast %cst_65 : f32 to vector<1x32xf32>
    %87 = arith.mulf %85, %86 : vector<1x32xf32>
    %88 = arith.mulf %82, %82 : vector<1x32xf32>
    %89 = arith.subf %87, %88 : vector<1x32xf32>
    %cst_66 = arith.constant 9.99999974E-6 : f32
    %90 = vector.broadcast %cst_66 : f32 to vector<1x32xf32>
    %91 = arith.addf %89, %90 : vector<1x32xf32>
    %92 = math.rsqrt %91 : vector<1x32xf32>
    %c1_67 = arith.constant 1 : index
    %c0_68 = arith.constant 0 : index
    %93 = vector.load %arg4[%c1_67, %c0_68] : memref<3x32xf32, #tpu.memory_space<vmem>>, vector<1x32xf32>
    %94 = arith.mulf %92, %93 : vector<1x32xf32>
    %95 = vector.broadcast %82 : vector<1x32xf32> to vector<408x32xf32>
    %96 = arith.subf %76, %95 : vector<408x32xf32>
    %97 = vector.broadcast %94 : vector<1x32xf32> to vector<408x32xf32>
    %98 = arith.mulf %96, %97 : vector<408x32xf32>
    %c2_69 = arith.constant 2 : index
    %c0_70 = arith.constant 0 : index
    %99 = vector.load %arg4[%c2_69, %c0_70] : memref<3x32xf32, #tpu.memory_space<vmem>>, vector<1x32xf32>
    %100 = vector.broadcast %99 : vector<1x32xf32> to vector<408x32xf32>
    %101 = arith.addf %98, %100 : vector<408x32xf32>
    %c0_71 = arith.constant 0 : index
    %c0_72 = arith.constant 0 : index
    %102 = vector.load %arg13[%c0_71, %c0_72] : memref<408x32xf32, #tpu.memory_space<vmem>>, vector<408x32xf32>
    tpu.vector_store %arg13[%c0_71, %c0_72], %101 {strides = array<i32>} : memref<408x32xf32, #tpu.memory_space<vmem>>, vector<408x32xf32>,
    %c0_73 = arith.constant 0 : index
    %c0_74 = arith.constant 0 : index
    %103 = vector.load %arg13[%c0_73, %c0_74] : memref<408x32xf32, #tpu.memory_space<vmem>>, vector<32x32xf32>
    %c34_75 = arith.constant 34 : index
    %c0_76 = arith.constant 0 : index
    %104 = vector.load %arg13[%c34_75, %c0_76] : memref<408x32xf32, #tpu.memory_space<vmem>>, vector<32x32xf32>
    %c68 = arith.constant 68 : index
    %c0_77 = arith.constant 0 : index
    %105 = vector.load %arg13[%c68, %c0_77] : memref<408x32xf32, #tpu.memory_space<vmem>>, vector<32x32xf32>
    %c102 = arith.constant 102 : index
    %c0_78 = arith.constant 0 : index
    %106 = vector.load %arg13[%c102, %c0_78] : memref<408x32xf32, #tpu.memory_space<vmem>>, vector<32x32xf32>
    %c204 = arith.constant 204 : index
    %c0_79 = arith.constant 0 : index
    %107 = vector.load %arg13[%c204, %c0_79] : memref<408x32xf32, #tpu.memory_space<vmem>>, vector<32x32xf32>
    %c238 = arith.constant 238 : index
    %c0_80 = arith.constant 0 : index
    %108 = vector.load %arg13[%c238, %c0_80] : memref<408x32xf32, #tpu.memory_space<vmem>>, vector<32x32xf32>
    %c272 = arith.constant 272 : index
    %c0_81 = arith.constant 0 : index
    %109 = vector.load %arg13[%c272, %c0_81] : memref<408x32xf32, #tpu.memory_space<vmem>>, vector<32x32xf32>
    %c306 = arith.constant 306 : index
    %c0_82 = arith.constant 0 : index
    %110 = vector.load %arg13[%c306, %c0_82] : memref<408x32xf32, #tpu.memory_space<vmem>>, vector<32x32xf32>
    %111 = tpu.concatenate %103, %104, %105, %106, %107, %108, %109, %110 in 1 : vector<32x32xf32>, vector<32x32xf32>, vector<32x32xf32>, vector<32x32xf32>, vector<32x32xf32>, vector<32x32xf32>, vector<32x32xf32>, vector<32x32xf32> -> vector<32x256xf32>
    %c0_83 = arith.constant 0 : index
    %c0_84 = arith.constant 0 : index
    %112 = vector.load %arg5[%c0_83, %c0_84] : memref<32x32xf32, #tpu.memory_space<vmem>>, vector<32x32xf32>
    %cst_85 = arith.constant dense<0.000000e+00> : vector<32x256xf32>
    %113 = tpu.matmul %112, %111, %cst_85 {dimension_numbers = #tpu.dot_dimension_numbers<[1], [0], [0], [1], [0, 0, 1, 1], [], []>} : vector<32x32xf32>, vector<32x256xf32>, vector<32x256xf32> -> vector<32x256xf32>
    %c0_86 = arith.constant 0 : index
    %c0_87 = arith.constant 0 : index
    %114 = vector.load %arg6[%c0_86, %c0_87] : memref<32x1xf32, #tpu.memory_space<vmem>>, vector<32x1xf32>
    %115 = vector.broadcast %114 : vector<32x1xf32> to vector<32x256xf32>
    %116 = arith.addf %113, %115 : vector<32x256xf32>
    %cst_88 = arith.constant 0.000000e+00 : f32
    %117 = vector.broadcast %cst_88 : f32 to vector<32x256xf32>
    %118 = arith.maximumf %116, %117 : vector<32x256xf32>
    %c0_89 = arith.constant 0 : index
    %c0_90 = arith.constant 0 : index
    %119 = vector.load %arg7[%c0_89, %c0_90] : memref<4x32xf32, #tpu.memory_space<vmem>>, vector<4x32xf32>
    %cst_91 = arith.constant dense<0.000000e+00> : vector<4x256xf32>
    %120 = tpu.matmul %119, %118, %cst_91 {dimension_numbers = #tpu.dot_dimension_numbers<[1], [0], [0], [1], [0, 0, 1, 1], [], []>} : vector<4x32xf32>, vector<32x256xf32>, vector<4x256xf32> -> vector<4x256xf32>
    %c0_92 = arith.constant 0 : index
    %c0_93 = arith.constant 0 : index
    %121 = vector.load %arg8[%c0_92, %c0_93] : memref<4x1xf32, #tpu.memory_space<vmem>>, vector<4x1xf32>
    %122 = vector.broadcast %121 : vector<4x1xf32> to vector<4x256xf32>
    %123 = arith.addf %120, %122 : vector<4x256xf32>
    %c0_94 = arith.constant 0 : index
    %c0_95 = arith.constant 0 : index
    %124 = vector.load %arg11[%c0_94, %c0_95] : memref<4x256xf32, #tpu.memory_space<vmem>>, vector<4x256xf32>
    tpu.vector_store %arg11[%c0_94, %c0_95], %123 {strides = array<i32>} : memref<4x256xf32, #tpu.memory_space<vmem>>, vector<4x256xf32>,
    return
  }
}

</mosaic_0001>

<llo_original>
// kernel: pixel_qnetwork_forward.1
$region0: #{pixel_qnetwork_forward.1}
  #allocation0 [shape = 'u32[]', space=smem, size = 0x4, offset = 0x4, fixed_abs, tag = 'smem constant byte address 0x4 - core index']
  #allocation1 [shape = 'u32[144,128]{1,0:T(1,128)}', space=vmem, size = 0x12000, scoped, tag = 'internal scratch']
  #allocation2 [shape = 'bf16[448,64]{1,0:T(8,128)(2,1)}', space=vmem, size = 0x1c000, scoped, tag = 'scratch operand']
  #allocation3 [shape = 'f32[408,32]{1,0:T(8,128)}', space=vmem, size = 0x33000, scoped, tag = 'scratch operand']
  %s0 = inlined_call_operand.vmem [shape: bf16[496,84], index: 0, kind: input, shape index: {}]
  %s1 = inlined_call_operand.vmem [shape: bf16[4,84,64], index: 1, kind: input, shape index: {}]
  %s2 = inlined_call_operand.vmem [shape: f32[3,64], index: 2, kind: input, shape index: {}]
  %s3 = inlined_call_operand.vmem [shape: bf16[4,64,32], index: 3, kind: input, shape index: {}]
  %s4 = inlined_call_operand.vmem [shape: f32[3,32], index: 4, kind: input, shape index: {}]
  %s5 = inlined_call_operand.vmem [shape: f32[32,32], index: 5, kind: input, shape index: {}]
  %s6 = inlined_call_operand.vmem [shape: f32[32,1], index: 6, kind: input, shape index: {}]
  %s7 = inlined_call_operand.vmem [shape: f32[4,32], index: 7, kind: input, shape index: {}]
  %s8 = inlined_call_operand.vmem [shape: f32[4,1], index: 8, kind: input, shape index: {}]
  %s9 = inlined_call_operand.vmem [shape: f32[448,1], index: 9, kind: input, shape index: {}]
  %s10 = inlined_call_operand.vmem [shape: f32[408,1], index: 10, kind: input, shape index: {}]
  %s11 = inlined_call_operand.vmem [shape: f32[4,256], index: 11, kind: output, shape index: {}]
  %s12 = sld [smem:[#allocation0]]
  $region54: #{pixel_qnetwork_forward.1} parent=0
    _
  %s14 = ssub.s32 1, %s12
  %s15 = scalar_select 0, %s14, %s12
  // Predicated region
  $region2: #{pixel_qnetwork_forward.1} parent=0 // pred_check
    _
  $region3: #{pixel_qnetwork_forward.1} parent=0 // pred_check_branch
    %17 = sbr.rel (0) target = $region5
  $region4: #{pixel_qnetwork_forward.1} parent=0 // pred_region
    _
  $region5: #{pixel_qnetwork_forward.1} parent=0 // pred_fallthru
    _
  // Predicated region
  $region6: #{pixel_qnetwork_forward.1} parent=0 // pred_check
    _
  $region7: #{pixel_qnetwork_forward.1} parent=0 // pred_check_branch
    %19 = sbr.rel (0) target = $region9
  $region8: #{pixel_qnetwork_forward.1} parent=0 // pred_region
    _
  $region9: #{pixel_qnetwork_forward.1} parent=0 // pred_fallthru
    _
  // Predicated region
  $region10: #{pixel_qnetwork_forward.1} parent=0 // pred_check
    _
  $region11: #{pixel_qnetwork_forward.1} parent=0 // pred_check_branch
    %21 = sbr.rel (0) target = $region13
  $region12: #{pixel_qnetwork_forward.1} parent=0 // pred_region
    _
  $region13: #{pixel_qnetwork_forward.1} parent=0 // pred_fallthru
    _
  // Predicated region
  $region14: #{pixel_qnetwork_forward.1} parent=0 // pred_check
    _
  $region15: #{pixel_qnetwork_forward.1} parent=0 // pred_check_branch
    %23 = sbr.rel (0) target = $region17
  $region16: #{pixel_qnetwork_forward.1} parent=0 // pred_region
    _
  $region17: #{pixel_qnetwork_forward.1} parent=0 // pred_fallthru
    _
  // Predicated region
  $region18: #{pixel_qnetwork_forward.1} parent=0 // pred_check
    _
  $region19: #{pixel_qnetwork_forward.1} parent=0 // pred_check_branch
    %25 = sbr.rel (0) target = $region21
  $region20: #{pixel_qnetwork_forward.1} parent=0 // pred_region
    _
  $region21: #{pixel_qnetwork_forward.1} parent=0 // pred_fallthru
    _
  // Predicated region
  $region22: #{pixel_qnetwork_forward.1} parent=0 // pred_check
    _
  $region23: #{pixel_qnetwork_forward.1} parent=0 // pred_check_branch
    %27 = sbr.rel (0) target = $region25
  $region24: #{pixel_qnetwork_forward.1} parent=0 // pred_region
    _
  $region25: #{pixel_qnetwork_forward.1} parent=0 // pred_fallthru
    _
  // Predicated region
  $region26: #{pixel_qnetwork_forward.1} parent=0 // pred_check
    _
  $region27: #{pixel_qnetwork_forward.1} parent=0 // pred_check_branch
    %29 = sbr.rel (0) target = $region29
  $region28: #{pixel_qnetwork_forward.1} parent=0 // pred_region
    _
  $region29: #{pixel_qnetwork_forward.1} parent=0 // pred_fallthru
    _
  // Predicated region
  $region30: #{pixel_qnetwork_forward.1} parent=0 // pred_check
    _
  $region31: #{pixel_qnetwork_forward.1} parent=0 // pred_check_branch
    %31 = sbr.rel (0) target = $region33
  $region32: #{pixel_qnetwork_forward.1} parent=0 // pred_region
    _
  $region33: #{pixel_qnetwork_forward.1} parent=0 // pred_fallthru
    _
  // Predicated region
  $region34: #{pixel_qnetwork_forward.1} parent=0 // pred_check
    _
  $region35: #{pixel_qnetwork_forward.1} parent=0 // pred_check_branch
    %33 = sbr.rel (0) target = $region37
  $region36: #{pixel_qnetwork_forward.1} parent=0 // pred_region
    _
  $region37: #{pixel_qnetwork_forward.1} parent=0 // pred_fallthru
    _
  // Predicated region
  $region38: #{pixel_qnetwork_forward.1} parent=0 // pred_check
    _
  $region39: #{pixel_qnetwork_forward.1} parent=0 // pred_check_branch
    %35 = sbr.rel (0) target = $region41
  $region40: #{pixel_qnetwork_forward.1} parent=0 // pred_region
    _
  $region41: #{pixel_qnetwork_forward.1} parent=0 // pred_fallthru
    _
  // Predicated region
  $region42: #{pixel_qnetwork_forward.1} parent=0 // pred_check
    _
  $region43: #{pixel_qnetwork_forward.1} parent=0 // pred_check_branch
    %37 = sbr.rel (0) target = $region45
  $region44: #{pixel_qnetwork_forward.1} parent=0 // pred_region
    _
  $region45: #{pixel_qnetwork_forward.1} parent=0 // pred_fallthru
    _
  %v39 = vld [vmem:[%s0] sm:$0xf]
  %v40 = vld [vmem:[%s0 + $0x4] sm:$0xf]
  %v41 = vld [vmem:[%s0 + $0x8] sm:$0xf]
  %v42 = vld [vmem:[%s0 + $0xc] sm:$0xf]
  %v43 = vld [vmem:[%s0 + $0x10] sm:$0xf]
  %v44 = vld [vmem:[%s0 + $0x14] sm:$0xf]
  %v45 = vld [vmem:[%s0 + $0x18] sm:$0xf]
  %v46 = vld [vmem:[%s0 + $0x1c] sm:$0xf]
  %v47 = vld [vmem:[%s0 + $0x20] sm:$0xf]
  %v48 = vld [vmem:[%s0 + $0x24] sm:$0xf]
  %v49 = vld [vmem:[%s0 + $0x28] sm:$0xf]
  %v50 = vld [vmem:[%s0 + $0x2c] sm:$0xf]
  %v51 = vld [vmem:[%s0 + $0x30] sm:$0xf]
  %v52 = vld [vmem:[%s0 + $0x34] sm:$0xf]
  %v53 = vld [vmem:[%s0 + $0x38] sm:$0xf]
  %v54 = vld [vmem:[%s0 + $0x3c] sm:$0xf]
  %v55 = vld [vmem:[%s0 + $0x40] sm:$0xf]
  %v56 = vld [vmem:[%s0 + $0x44] sm:$0xf]
  %v57 = vld [vmem:[%s0 + $0x48] sm:$0xf]
  %v58 = vld [vmem:[%s0 + $0x4c] sm:$0xf]
  %v59 = vld [vmem:[%s0 + $0x50] sm:$0xf]
  %v60 = vld [vmem:[%s0 + $0x54] sm:$0xf]
  %v61 = vld [vmem:[%s0 + $0x58] sm:$0xf]
  %v62 = vld [vmem:[%s0 + $0x5c] sm:$0xf]
  %v63 = vld [vmem:[%s0 + $0x60] sm:$0xf]
  %v64 = vld [vmem:[%s0 + $0x64] sm:$0xf]
  %v65 = vld [vmem:[%s0 + $0x68] sm:$0xf]
  %v66 = vld [vmem:[%s0 + $0x6c] sm:$0xf]
  %v67 = vld [vmem:[%s0 + $0x70] sm:$0xf]
  %v68 = vld [vmem:[%s0 + $0x74] sm:$0xf]
  %v69 = vld [vmem:[%s0 + $0x78] sm:$0xf]
  %v70 = vld [vmem:[%s0 + $0x7c] sm:$0xf]
  %v71 = vld [vmem:[%s0 + $0x80] sm:$0xf]
  %v72 = vld [vmem:[%s0 + $0x84] sm:$0xf]
  %v73 = vld [vmem:[%s0 + $0x88] sm:$0xf]
  %v74 = vld [vmem:[%s0 + $0x8c] sm:$0xf]
  %v75 = vld [vmem:[%s0 + $0x90] sm:$0xf]
  %v76 = vld [vmem:[%s0 + $0x94] sm:$0xf]
  %v77 = vld [vmem:[%s0 + $0x98] sm:$0xf]
  %v78 = vld [vmem:[%s0 + $0x9c] sm:$0xf]
  %v79 = vld [vmem:[%s0 + $0xa0] sm:$0xf]
  %v80 = vld [vmem:[%s0 + $0xa4] sm:$0xf]
  %v81 = vld [vmem:[%s0 + $0xa8] sm:$0xf]
  %v82 = vld [vmem:[%s0 + $0xac] sm:$0xf]
  %v83 = vld [vmem:[%s0 + $0xb0] sm:$0xf]
  %v84 = vld [vmem:[%s0 + $0xb4] sm:$0xf]
  %v85 = vld [vmem:[%s0 + $0xb8] sm:$0xf]
  %v86 = vld [vmem:[%s0 + $0xbc] sm:$0xf]
  %v87 = vld [vmem:[%s0 + $0xc0] sm:$0xf]
  %v88 = vld [vmem:[%s0 + $0xc4] sm:$0xf]
  %v89 = vld [vmem:[%s0 + $0xc8] sm:$0xf]
  %v90 = vld [vmem:[%s0 + $0xcc] sm:$0xf]
  %v91 = vld [vmem:[%s0 + $0xd0] sm:$0xf]
  %v92 = vld [vmem:[%s0 + $0xd4] sm:$0xf]
  %v93 = vld [vmem:[%s0 + $0xd8] sm:$0xf]
  %v94 = vld [vmem:[%s0 + $0xdc] sm:$0xf]
  %v95 = vld [vmem:[%s1] sm:$0xf]
  %v96 = vld [vmem:[%s1 + $0x4] sm:$0xf]
  %v97 = vld [vmem:[%s1 + $0x8] sm:$0xf]
  %v98 = vld [vmem:[%s1 + $0xc] sm:$0xf]
  %v99 = vld [vmem:[%s1 + $0x10] sm:$0xf]
  %v100 = vld [vmem:[%s1 + $0x14] sm:$0xf]
  %v101 = vld [vmem:[%s1 + $0x18] sm:$0xf]
  %v102 = vld [vmem:[%s1 + $0x1c] sm:$0xf]
  %v103 = vld [vmem:[%s1 + $0x20] sm:$0xf]
  %v104 = vld [vmem:[%s1 + $0x24] sm:$0xf]
  %v105 = vld [vmem:[%s1 + $0x28] sm:$0x3]
  %v106 = vld [vmem:[%s0 + $0xe0] sm:$0x1]
  %s107 = scalar_lea.vmem %s1, 44
  %v108 = vld [vmem:[%s107] sm:$0xf]
  %v109 = vld [vmem:[%s107 + $0x4] sm:$0xf]
  %v110 = vld [vmem:[%s107 + $0x8] sm:$0xf]
  %v111 = vld [vmem:[%s107 + $0xc] sm:$0xf]
  %v112 = vld [vmem:[%s107 + $0x10] sm:$0xf]
  %v113 = vld [vmem:[%s107 + $0x14] sm:$0xf]
  %v114 = vld [vmem:[%s107 + $0x18] sm:$0xf]
  %v115 = vld [vmem:[%s107 + $0x1c] sm:$0xf]
  %v116 = vld [vmem:[%s107 + $0x20] sm:$0xf]
  %v117 = vld [vmem:[%s107 + $0x24] sm:$0xf]
  %v118 = vld [vmem:[%s107 + $0x28] sm:$0x3]
  %v176 = vunpack.c.l.b16 %v39
  %v177 = vunpack.c.l.b16 %v40
  %v178 = vunpack.c.l.b16 %v41
  %v179 = vunpack.c.l.b16 %v42
  %v180 = vunpack.c.l.b16 %v43
  %v181 = vunpack.c.l.b16 %v44
  %v182 = vunpack.c.l.b16 %v45
  %v183 = vunpack.c.l.b16 %v46
  %v184 = vunpack.c.l.b16 %v47
  %v185 = vunpack.c.l.b16 %v48
  %v186 = vunpack.c.l.b16 %v49
  %v187 = vunpack.c.l.b16 %v50
  %v188 = vunpack.c.l.b16 %v51
  %v189 = vunpack.c.l.b16 %v52
  %v190 = vunpack.c.l.b16 %v53
  %v191 = vunpack.c.l.b16 %v54
  %v192 = vunpack.c.l.b16 %v55
  %v193 = vunpack.c.l.b16 %v56
  %v194 = vunpack.c.l.b16 %v57
  %v195 = vunpack.c.l.b16 %v58
  %v196 = vunpack.c.l.b16 %v59
  %v197 = vunpack.c.l.b16 %v60
  %v198 = vunpack.c.l.b16 %v61
  %v199 = vunpack.c.l.b16 %v62
  %v200 = vunpack.c.l.b16 %v63
  %v201 = vunpack.c.l.b16 %v64
  %v202 = vunpack.c.l.b16 %v65
  %v203 = vunpack.c.l.b16 %v66
  %v204 = vunpack.c.l.b16 %v67
  %v205 = vunpack.c.l.b16 %v68
  %v206 = vunpack.c.l.b16 %v69
  %v207 = vunpack.c.l.b16 %v70
  %v208 = vunpack.c.l.b16 %v71
  %v209 = vunpack.c.l.b16 %v72
  %v210 = vunpack.c.l.b16 %v73
  %v211 = vunpack.c.l.b16 %v74
  %v212 = vunpack.c.l.b16 %v75
  %v213 = vunpack.c.l.b16 %v76
  %v214 = vunpack.c.l.b16 %v77
  %v215 = vunpack.c.l.b16 %v78
  %v216 = vunpack.c.l.b16 %v79
  %v217 = vunpack.c.l.b16 %v80
  %v218 = vunpack.c.l.b16 %v81
  %v219 = vunpack.c.l.b16 %v82
  %v220 = vunpack.c.l.b16 %v83
  %v221 = vunpack.c.l.b16 %v84
  %v222 = vunpack.c.l.b16 %v85
  %v223 = vunpack.c.l.b16 %v86
  %v224 = vunpack.c.l.b16 %v87
  %v225 = vunpack.c.l.b16 %v88
  %v226 = vunpack.c.l.b16 %v89
  %v227 = vunpack.c.l.b16 %v90
  %v228 = vunpack.c.l.b16 %v91
  %v229 = vunpack.c.l.b16 %v92
  %v230 = vunpack.c.l.b16 %v93
  %v231 = vunpack.c.l.b16 %v94
  %v232 = vunpack.c.l.b16 %v106
  %v233 = vpack.c.b16 %v177, %v176
  %v234 = vpack.c.b16 %v179, %v178
  %v235 = vpack.c.b16 %v181, %v180
  %v236 = vpack.c.b16 %v183, %v182
  %v237 = vpack.c.b16 %v185, %v184
  %v238 = vpack.c.b16 %v187, %v186
  %v239 = vpack.c.b16 %v189, %v188
  %v240 = vpack.c.b16 %v191, %v190
  %v241 = vpack.c.b16 %v193, %v192
  %v242 = vpack.c.b16 %v195, %v194
  %v243 = vpack.c.b16 %v197, %v196
  %v244 = vpack.c.b16 %v199, %v198
  %v245 = vpack.c.b16 %v201, %v200
  %v246 = vpack.c.b16 %v203, %v202
  %v247 = vpack.c.b16 %v205, %v204
  %v248 = vpack.c.b16 %v207, %v206
  %v249 = vpack.c.b16 %v209, %v208
  %v250 = vpack.c.b16 %v211, %v210
  %v251 = vpack.c.b16 %v213, %v212
  %v252 = vpack.c.b16 %v215, %v214
  %v253 = vpack.c.b16 %v217, %v216
  %v254 = vpack.c.b16 %v219, %v218
  %v255 = vpack.c.b16 %v221, %v220
  %v256 = vpack.c.b16 %v223, %v222
  %v257 = vpack.c.b16 %v225, %v224
  %v258 = vpack.c.b16 %v227, %v226
  %v259 = vpack.c.b16 %v229, %v228
  %v260 = vpack.c.b16 %v231, %v230
  %v261 = vpack.c.b16 %v232, %v232
  %vm262 = vsmask.f32 7424
  %v264 = vshrl.u32 %v233, 16
  %v266 = vshll.u32 %v233, 16
  %v268 = vrot.slane %v266, 1
  %v269 = vor.u32 %v264, %v268
  %v271 = vshll.u32 %v234, 16
  %v273 = vrot.slane %v271, 1
  %v274 = vsel %vm262, %v269, %v273
  %v275 = vshrl.u32 %v234, 16
  %v277 = vor.u32 %v275, %v273
  %v279 = vshll.u32 %v235, 16
  %v281 = vrot.slane %v279, 1
  %v282 = vsel %vm262, %v277, %v281
  %v283 = vshrl.u32 %v235, 16
  %v285 = vor.u32 %v283, %v281
  %v287 = vshll.u32 %v236, 16
  %v289 = vrot.slane %v287, 1
  %v290 = vsel %vm262, %v285, %v289
  %v291 = vshrl.u32 %v236, 16
  %v293 = vor.u32 %v291, %v289
  %v295 = vshll.u32 %v237, 16
  %v297 = vrot.slane %v295, 1
  %v298 = vsel %vm262, %v293, %v297
  %v299 = vshrl.u32 %v237, 16
  %v301 = vor.u32 %v299, %v297
  %v303 = vshll.u32 %v238, 16
  %v305 = vrot.slane %v303, 1
  %v306 = vsel %vm262, %v301, %v305
  %v307 = vshrl.u32 %v238, 16
  %v309 = vor.u32 %v307, %v305
  %v311 = vshll.u32 %v239, 16
  %v313 = vrot.slane %v311, 1
  %v314 = vsel %vm262, %v309, %v313
  %v315 = vshrl.u32 %v239, 16
  %v317 = vor.u32 %v315, %v313
  %v319 = vshll.u32 %v240, 16
  %v321 = vrot.slane %v319, 1
  %v322 = vsel %vm262, %v317, %v321
  %v323 = vshrl.u32 %v240, 16
  %v325 = vor.u32 %v323, %v321
  %v327 = vshll.u32 %v241, 16
  %v329 = vrot.slane %v327, 1
  %v330 = vsel %vm262, %v325, %v329
  %v331 = vshrl.u32 %v241, 16
  %v333 = vor.u32 %v331, %v329
  %v335 = vshll.u32 %v242, 16
  %v337 = vrot.slane %v335, 1
  %v338 = vsel %vm262, %v333, %v337
  %v339 = vshrl.u32 %v242, 16
  %v341 = vor.u32 %v339, %v337
  %v343 = vshll.u32 %v243, 16
  %v345 = vrot.slane %v343, 1
  %v346 = vsel %vm262, %v341, %v345
  %v347 = vshrl.u32 %v243, 16
  %v349 = vor.u32 %v347, %v345
  %v351 = vshll.u32 %v244, 16
  %v353 = vrot.slane %v351, 1
  %v354 = vsel %vm262, %v349, %v353
  %v355 = vshrl.u32 %v244, 16
  %v357 = vor.u32 %v355, %v353
  %v359 = vshll.u32 %v245, 16
  %v361 = vrot.slane %v359, 1
  %v362 = vsel %vm262, %v357, %v361
  %v363 = vshrl.u32 %v245, 16
  %v365 = vor.u32 %v363, %v361
  %v367 = vshll.u32 %v246, 16
  %v369 = vrot.slane %v367, 1
  %v370 = vsel %vm262, %v365, %v369
  %v371 = vshrl.u32 %v246, 16
  %v373 = vor.u32 %v371, %v369
  %v375 = vshll.u32 %v247, 16
  %v377 = vrot.slane %v375, 1
  %v378 = vsel %vm262, %v373, %v377
  %v379 = vshrl.u32 %v247, 16
  %v381 = vor.u32 %v379, %v377
  %v383 = vshll.u32 %v248, 16
  %v385 = vrot.slane %v383, 1
  %v386 = vsel %vm262, %v381, %v385
  %v387 = vshrl.u32 %v248, 16
  %v389 = vor.u32 %v387, %v385
  %v391 = vshll.u32 %v249, 16
  %v393 = vrot.slane %v391, 1
  %v394 = vsel %vm262, %v389, %v393
  %v395 = vshrl.u32 %v249, 16
  %v397 = vor.u32 %v395, %v393
  %v399 = vshll.u32 %v250, 16
  %v401 = vrot.slane %v399, 1
  %v402 = vsel %vm262, %v397, %v401
  %v403 = vshrl.u32 %v250, 16
  %v405 = vor.u32 %v403, %v401
  %v407 = vshll.u32 %v251, 16
  %v409 = vrot.slane %v407, 1
  %v410 = vsel %vm262, %v405, %v409
  %v411 = vshrl.u32 %v251, 16
  %v413 = vor.u32 %v411, %v409
  %v415 = vshll.u32 %v252, 16
  %v417 = vrot.slane %v415, 1
  %v418 = vsel %vm262, %v413, %v417
  %v419 = vshrl.u32 %v252, 16
  %v421 = vor.u32 %v419, %v417
  %v423 = vshll.u32 %v253, 16
  %v425 = vrot.slane %v423, 1
  %v426 = vsel %vm262, %v421, %v425
  %v427 = vshrl.u32 %v253, 16
  %v429 = vor.u32 %v427, %v425
  %v431 = vshll.u32 %v254, 16
  %v433 = vrot.slane %v431, 1
  %v434 = vsel %vm262, %v429, %v433
  %v435 = vshrl.u32 %v254, 16
  %v437 = vor.u32 %v435, %v433
  %v439 = vshll.u32 %v255, 16
  %v441 = vrot.slane %v439, 1
  %v442 = vsel %vm262, %v437, %v441
  %v443 = vshrl.u32 %v255, 16
  %v445 = vor.u32 %v443, %v441
  %v447 = vshll.u32 %v256, 16
  %v449 = vrot.slane %v447, 1
  %v450 = vsel %vm262, %v445, %v449
  %v451 = vshrl.u32 %v256, 16
  %v453 = vor.u32 %v451, %v449
  %v455 = vshll.u32 %v257, 16
  %v457 = vrot.slane %v455, 1
  %v458 = vsel %vm262, %v453, %v457
  %v459 = vshrl.u32 %v257, 16
  %v461 = vor.u32 %v459, %v457
  %v463 = vshll.u32 %v258, 16
  %v465 = vrot.slane %v463, 1
  %v466 = vsel %vm262, %v461, %v465
  %v467 = vshrl.u32 %v258, 16
  %v469 = vor.u32 %v467, %v465
  %v471 = vshll.u32 %v259, 16
  %v473 = vrot.slane %v471, 1
  %v474 = vsel %vm262, %v469, %v473
  %v475 = vshrl.u32 %v259, 16
  %v477 = vor.u32 %v475, %v473
  %v479 = vshll.u32 %v260, 16
  %v481 = vrot.slane %v479, 1
  %v482 = vsel %vm262, %v477, %v481
  %v483 = vshrl.u32 %v260, 16
  %v485 = vor.u32 %v483, %v481
  %v487 = vshll.u32 %v261, 16
  %v489 = vrot.slane %v487, 1
  %v490 = vsel %vm262, %v485, %v489
  %v502 = vunpack.c.l.b16 %v108
  %v503 = vunpack.c.l.b16 %v109
  %v504 = vunpack.c.l.b16 %v110
  %v505 = vunpack.c.l.b16 %v111
  %v506 = vunpack.c.l.b16 %v112
  %v507 = vunpack.c.l.b16 %v113
  %v508 = vunpack.c.l.b16 %v114
  %v509 = vunpack.c.l.b16 %v115
  %v510 = vunpack.c.l.b16 %v116
  %v511 = vunpack.c.l.b16 %v117
  %v512 = vunpack.c.l.b16 %v118
  %v513 = vpack.c.b16 %v503, %v502
  %v514 = vpack.c.b16 %v505, %v504
  %v515 = vpack.c.b16 %v507, %v506
  %v516 = vpack.c.b16 %v509, %v508
  %v517 = vpack.c.b16 %v511, %v510
  %v518 = vpack.c.b16 %v512, %v512
  %vm524 = vcmask 687104
  %v526 = vsel %vm524, %v274, 0
  %v529 = vsel %vm524, %v282, 0
  %v532 = vsel %vm524, %v290, 0
  %v535 = vsel %vm524, %v298, 0
  %v538 = vsel %vm524, %v306, 0
  %v541 = vsel %vm524, %v314, 0
  %v544 = vsel %vm524, %v322, 0
  %v547 = vsel %vm524, %v330, 0
  %v550 = vsel %vm524, %v338, 0
  %v553 = vsel %vm524, %v346, 0
  %v556 = vsel %vm524, %v354, 0
  %v559 = vsel %vm524, %v362, 0
  %v562 = vsel %vm524, %v370, 0
  %v565 = vsel %vm524, %v378, 0
  %v568 = vsel %vm524, %v386, 0
  %v571 = vsel %vm524, %v394, 0
  %v574 = vsel %vm524, %v402, 0
  %v577 = vsel %vm524, %v410, 0
  %v580 = vsel %vm524, %v418, 0
  %v583 = vsel %vm524, %v426, 0
  %v586 = vsel %vm524, %v434, 0
  %v589 = vsel %vm524, %v442, 0
  %v592 = vsel %vm524, %v450, 0
  %v595 = vsel %vm524, %v458, 0
  %v598 = vsel %vm524, %v466, 0
  %v601 = vsel %vm524, %v474, 0
  %v604 = vsel %vm524, %v482, 0
  %v607 = vsel %vm524, %v490, 0
  %vm609 = vcmask 1041408
  %v611 = vsel %vm609, %v518, 0
  %613 = vmatprep.subr.bf16.mxu0 0
  %614 = vmatpush1.bf16.msra.mxu0 0
  %615 = vmatprep.subr.bf16.mxu0 0
  %616 = vmatpush1.bf16.msra.mxu0 0
  %617 = vmatprep.subr.bf16.mxu0 0
  %618 = vmatpush1.bf16.msra.mxu0 %v611
  %619 = vmatprep.subr.bf16.mxu0 0
  %620 = vmatpush1.bf16.msra.mxu0 %v517
  %621 = vmatprep.subr.bf16.mxu0 0
  %622 = vmatpush1.bf16.msra.mxu0 %v516
  %623 = vmatprep.subr.bf16.mxu0 0
  %624 = vmatpush1.bf16.msra.mxu0 %v515
  %625 = vmatprep.subr.bf16.mxu0 0
  %626 = vmatpush1.bf16.msra.mxu0 %v514
  %627 = vmatprep.subr.bf16.mxu0 0
  %628 = vmatpush1.bf16.msra.mxu0 %v513
  %629 = vmatprep.subr.bf16.mxu0 0
  %630 = vmatpush2.bf16.msra.mxu0 0
  %631 = vmatprep.subr.bf16.mxu0 0
  %632 = vmatpush2.bf16.msra.mxu0 0
  %633 = vmatprep.subr.bf16.mxu0 0
  %634 = vmatpush2.bf16.msra.mxu0 0
  %635 = vmatprep.subr.bf16.mxu0 0
  %636 = vmatpush2.bf16.msra.mxu0 0
  %637 = vmatprep.subr.bf16.mxu0 0
  %638 = vmatpush2.bf16.msra.mxu0 0
  %639 = vmatprep.subr.bf16.mxu0 0
  %640 = vmatpush2.bf16.msra.mxu0 0
  %641 = vmatprep.subr.bf16.mxu0 0
  %642 = vmatpush2.bf16.msra.mxu0 0
  %643 = vmatprep.subr.bf16.mxu0 0
  %644 = vmatpush2.bf16.msra.mxu0 0
  %645 = vmatprep.mubr.bf16.mxu0 0
  %646 = vmatmul.mubr.bf16.gmra.mxu0 %v526
  %v647 = vpop.f32.mrf.mxu0
  %v648 = vadd.f32 0.0, %v647
  %v649 = vpop.f32.mrf.mxu0
  %v650 = vpop.f32.mrf.mxu0
  %v651 = vadd.f32 0.0, %v650
  %v652 = vpop.f32.mrf.mxu0
  %653 = vmatprep.mubr.bf16.mxu0 0
  %654 = vmatmul.mubr.bf16.gmra.mxu0 %v529
  %v655 = vpop.f32.mrf.mxu0
  %v656 = vadd.f32 0.0, %v655
  %v657 = vpop.f32.mrf.mxu0
  %v658 = vpop.f32.mrf.mxu0
  %v659 = vadd.f32 0.0, %v658
  %v660 = vpop.f32.mrf.mxu0
  %661 = vmatprep.mubr.bf16.mxu0 0
  %662 = vmatmul.mubr.bf16.gmra.mxu0 %v532
  %v663 = vpop.f32.mrf.mxu0
  %v664 = vadd.f32 0.0, %v663
  %v665 = vpop.f32.mrf.mxu0
  %v666 = vpop.f32.mrf.mxu0
  %v667 = vadd.f32 0.0, %v666
  %v668 = vpop.f32.mrf.mxu0
  %669 = vmatprep.mubr.bf16.mxu0 0
  %670 = vmatmul.mubr.bf16.gmra.mxu0 %v535
  %v671 = vpop.f32.mrf.mxu0
  %v672 = vadd.f32 0.0, %v671
  %v673 = vpop.f32.mrf.mxu0
  %v674 = vpop.f32.mrf.mxu0
  %v675 = vadd.f32 0.0, %v674
  %v676 = vpop.f32.mrf.mxu0
  %677 = vmatprep.mubr.bf16.mxu0 0
  %678 = vmatmul.mubr.bf16.gmra.mxu0 %v538
  %v679 = vpop.f32.mrf.mxu0
  %v680 = vadd.f32 0.0, %v679
  %v681 = vpop.f32.mrf.mxu0
  %v682 = vpop.f32.mrf.mxu0
  %v683 = vadd.f32 0.0, %v682
  %v684 = vpop.f32.mrf.mxu0
  %685 = vmatprep.mubr.bf16.mxu0 0
  %686 = vmatmul.mubr.bf16.gmra.mxu0 %v541
  %v687 = vpop.f32.mrf.mxu0
  %v688 = vadd.f32 0.0, %v687
  %v689 = vpop.f32.mrf.mxu0
  %v690 = vpop.f32.mrf.mxu0
  %v691 = vadd.f32 0.0, %v690
  %v692 = vpop.f32.mrf.mxu0
  %693 = vmatprep.mubr.bf16.mxu0 0
  %694 = vmatmul.mubr.bf16.gmra.mxu0 %v544
  %v695 = vpop.f32.mrf.mxu0
  %v696 = vadd.f32 0.0, %v695
  %v697 = vpop.f32.mrf.mxu0
  %v698 = vpop.f32.mrf.mxu0
  %v699 = vadd.f32 0.0, %v698
  %v700 = vpop.f32.mrf.mxu0
  %701 = vmatprep.mubr.bf16.mxu0 0
  %702 = vmatmul.mubr.bf16.gmra.mxu0 %v547
  %v703 = vpop.f32.mrf.mxu0
  %v704 = vadd.f32 0.0, %v703
  %v705 = vpop.f32.mrf.mxu0
  %v706 = vpop.f32.mrf.mxu0
  %v707 = vadd.f32 0.0, %v706
  %v708 = vpop.f32.mrf.mxu0
  %709 = vmatprep.mubr.bf16.mxu0 0
  %710 = vmatmul.mubr.bf16.gmra.mxu0 %v550
  %v711 = vpop.f32.mrf.mxu0
  %v712 = vadd.f32 0.0, %v711
  %v713 = vpop.f32.mrf.mxu0
  %v714 = vpop.f32.mrf.mxu0
  %v715 = vadd.f32 0.0, %v714
  %v716 = vpop.f32.mrf.mxu0
  %717 = vmatprep.mubr.bf16.mxu0 0
  %718 = vmatmul.mubr.bf16.gmra.mxu0 %v553
  %v719 = vpop.f32.mrf.mxu0
  %v720 = vadd.f32 0.0, %v719
  %v721 = vpop.f32.mrf.mxu0
  %v722 = vpop.f32.mrf.mxu0
  %v723 = vadd.f32 0.0, %v722
  %v724 = vpop.f32.mrf.mxu0
  %725 = vmatprep.mubr.bf16.mxu0 0
  %726 = vmatmul.mubr.bf16.gmra.mxu0 %v556
  %v727 = vpop.f32.mrf.mxu0
  %v728 = vadd.f32 0.0, %v727
  %v729 = vpop.f32.mrf.mxu0
  %v730 = vpop.f32.mrf.mxu0
  %v731 = vadd.f32 0.0, %v730
  %v732 = vpop.f32.mrf.mxu0
  %733 = vmatprep.mubr.bf16.mxu0 0
  %734 = vmatmul.mubr.bf16.gmra.mxu0 %v559
  %v735 = vpop.f32.mrf.mxu0
  %v736 = vadd.f32 0.0, %v735
  %v737 = vpop.f32.mrf.mxu0
  %v738 = vpop.f32.mrf.mxu0
  %v739 = vadd.f32 0.0, %v738
  %v740 = vpop.f32.mrf.mxu0
  %741 = vmatprep.mubr.bf16.mxu0 0
  %742 = vmatmul.mubr.bf16.gmra.mxu0 %v562
  %v743 = vpop.f32.mrf.mxu0
  %v744 = vadd.f32 0.0, %v743
  %v745 = vpop.f32.mrf.mxu0
  %v746 = vpop.f32.mrf.mxu0
  %v747 = vadd.f32 0.0, %v746
  %v748 = vpop.f32.mrf.mxu0
  %749 = vmatprep.mubr.bf16.mxu0 0
  %750 = vmatmul.mubr.bf16.gmra.mxu0 %v565
  %v751 = vpop.f32.mrf.mxu0
  %v752 = vadd.f32 0.0, %v751
  %v753 = vpop.f32.mrf.mxu0
  %v754 = vpop.f32.mrf.mxu0
  %v755 = vadd.f32 0.0, %v754
  %v756 = vpop.f32.mrf.mxu0
  %757 = vmatprep.mubr.bf16.mxu0 0
  %758 = vmatmul.mubr.bf16.gmra.mxu0 %v568
  %v759 = vpop.f32.mrf.mxu0
  %v760 = vadd.f32 0.0, %v759
  %v761 = vpop.f32.mrf.mxu0
  %v762 = vpop.f32.mrf.mxu0
  %v763 = vadd.f32 0.0, %v762
  %v764 = vpop.f32.mrf.mxu0
  %765 = vmatprep.mubr.bf16.mxu0 0
  %766 = vmatmul.mubr.bf16.gmra.mxu0 %v571
  %v767 = vpop.f32.mrf.mxu0
  %v768 = vadd.f32 0.0, %v767
  %v769 = vpop.f32.mrf.mxu0
  %v770 = vpop.f32.mrf.mxu0
  %v771 = vadd.f32 0.0, %v770
  %v772 = vpop.f32.mrf.mxu0
  %773 = vmatprep.mubr.bf16.mxu0 0
  %774 = vmatmul.mubr.bf16.gmra.mxu0 %v574
  %v775 = vpop.f32.mrf.mxu0
  %v776 = vadd.f32 0.0, %v775
  %v777 = vpop.f32.mrf.mxu0
  %v778 = vpop.f32.mrf.mxu0
  %v779 = vadd.f32 0.0, %v778
  %v780 = vpop.f32.mrf.mxu0
  %781 = vmatprep.mubr.bf16.mxu0 0
  %782 = vmatmul.mubr.bf16.gmra.mxu0 %v577
  %v783 = vpop.f32.mrf.mxu0
  %v784 = vadd.f32 0.0, %v783
  %v785 = vpop.f32.mrf.mxu0
  %v786 = vpop.f32.mrf.mxu0
  %v787 = vadd.f32 0.0, %v786
  %v788 = vpop.f32.mrf.mxu0
  %789 = vmatprep.mubr.bf16.mxu0 0
  %790 = vmatmul.mubr.bf16.gmra.mxu0 %v580
  %v791 = vpop.f32.mrf.mxu0
  %v792 = vadd.f32 0.0, %v791
  %v793 = vpop.f32.mrf.mxu0
  %v794 = vpop.f32.mrf.mxu0
  %v795 = vadd.f32 0.0, %v794
  %v796 = vpop.f32.mrf.mxu0
  %797 = vmatprep.mubr.bf16.mxu0 0
  %798 = vmatmul.mubr.bf16.gmra.mxu0 %v583
  %v799 = vpop.f32.mrf.mxu0
  %v800 = vadd.f32 0.0, %v799
  %v801 = vpop.f32.mrf.mxu0
  %v802 = vpop.f32.mrf.mxu0
  %v803 = vadd.f32 0.0, %v802
  %v804 = vpop.f32.mrf.mxu0
  %805 = vmatprep.mubr.bf16.mxu0 0
  %806 = vmatmul.mubr.bf16.gmra.mxu0 %v586
  %v807 = vpop.f32.mrf.mxu0
  %v808 = vadd.f32 0.0, %v807
  %v809 = vpop.f32.mrf.mxu0
  %v810 = vpop.f32.mrf.mxu0
  %v811 = vadd.f32 0.0, %v810
  %v812 = vpop.f32.mrf.mxu0
  %813 = vmatprep.mubr.bf16.mxu0 0
  %814 = vmatmul.mubr.bf16.gmra.mxu0 %v589
  %v815 = vpop.f32.mrf.mxu0
  %v816 = vadd.f32 0.0, %v815
  %v817 = vpop.f32.mrf.mxu0
  %v818 = vpop.f32.mrf.mxu0
  %v819 = vadd.f32 0.0, %v818
  %v820 = vpop.f32.mrf.mxu0
  %821 = vmatprep.mubr.bf16.mxu0 0
  %822 = vmatmul.mubr.bf16.gmra.mxu0 %v592
  %v823 = vpop.f32.mrf.mxu0
  %v824 = vadd.f32 0.0, %v823
  %v825 = vpop.f32.mrf.mxu0
  %v826 = vpop.f32.mrf.mxu0
  %v827 = vadd.f32 0.0, %v826
  %v828 = vpop.f32.mrf.mxu0
  %829 = vmatprep.mubr.bf16.mxu0 0
  %830 = vmatmul.mubr.bf16.gmra.mxu0 %v595
  %v831 = vpop.f32.mrf.mxu0
  %v832 = vadd.f32 0.0, %v831
  %v833 = vpop.f32.mrf.mxu0
  %v834 = vpop.f32.mrf.mxu0
  %v835 = vadd.f32 0.0, %v834
  %v836 = vpop.f32.mrf.mxu0
  %837 = vmatprep.mubr.bf16.mxu0 0
  %838 = vmatmul.mubr.bf16.gmra.mxu0 %v598
  %v839 = vpop.f32.mrf.mxu0
  %v840 = vadd.f32 0.0, %v839
  %v841 = vpop.f32.mrf.mxu0
  %v842 = vpop.f32.mrf.mxu0
  %v843 = vadd.f32 0.0, %v842
  %v844 = vpop.f32.mrf.mxu0
  %845 = vmatprep.mubr.bf16.mxu0 0
  %846 = vmatmul.mubr.bf16.gmra.mxu0 %v601
  %v847 = vpop.f32.mrf.mxu0
  %v848 = vadd.f32 0.0, %v847
  %v849 = vpop.f32.mrf.mxu0
  %v850 = vpop.f32.mrf.mxu0
  %v851 = vadd.f32 0.0, %v850
  %v852 = vpop.f32.mrf.mxu0
  %853 = vmatprep.mubr.bf16.mxu0 0
  %854 = vmatmul.mubr.bf16.gmra.mxu0 %v604
  %v855 = vpop.f32.mrf.mxu0
  %v856 = vadd.f32 0.0, %v855
  %v857 = vpop.f32.mrf.mxu0
  %v858 = vpop.f32.mrf.mxu0
  %v859 = vadd.f32 0.0, %v858
  %v860 = vpop.f32.mrf.mxu0
  %861 = vmatprep.mubr.bf16.mxu0 0
  %862 = vmatmul.mubr.bf16.gmra.mxu0 %v607
  %v863 = vpop.f32.mrf.mxu0
  %v864 = vadd.f32 0.0, %v863
  %v865 = vpop.f32.mrf.mxu0
  %v866 = vpop.f32.mrf.mxu0
  %v867 = vadd.f32 0.0, %v866
  %v868 = vpop.f32.mrf.mxu0
  %869 = vdwg.mxu0
  %v881 = vunpack.c.l.b16 %v95
  %v882 = vunpack.c.l.b16 %v96
  %v883 = vunpack.c.l.b16 %v97
  %v884 = vunpack.c.l.b16 %v98
  %v885 = vunpack.c.l.b16 %v99
  %v886 = vunpack.c.l.b16 %v100
  %v887 = vunpack.c.l.b16 %v101
  %v888 = vunpack.c.l.b16 %v102
  %v889 = vunpack.c.l.b16 %v103
  %v890 = vunpack.c.l.b16 %v104
  %v891 = vunpack.c.l.b16 %v105
  %v892 = vpack.c.b16 %v882, %v881
  %v893 = vpack.c.b16 %v884, %v883
  %v894 = vpack.c.b16 %v886, %v885
  %v895 = vpack.c.b16 %v888, %v887
  %v896 = vpack.c.b16 %v890, %v889
  %v897 = vpack.c.b16 %v891, %v891
  %v903 = vsel %vm524, %v233, 0
  %v905 = vsel %vm524, %v234, 0
  %v907 = vsel %vm524, %v235, 0
  %v909 = vsel %vm524, %v236, 0
  %v911 = vsel %vm524, %v237, 0
  %v913 = vsel %vm524, %v238, 0
  %v915 = vsel %vm524, %v239, 0
  %v917 = vsel %vm524, %v240, 0
  %v919 = vsel %vm524, %v241, 0
  %v921 = vsel %vm524, %v242, 0
  %v923 = vsel %vm524, %v243, 0
  %v925 = vsel %vm524, %v244, 0
  %v927 = vsel %vm524, %v245, 0
  %v929 = vsel %vm524, %v246, 0
  %v931 = vsel %vm524, %v247, 0
  %v933 = vsel %vm524, %v248, 0
  %v935 = vsel %vm524, %v249, 0
  %v937 = vsel %vm524, %v250, 0
  %v939 = vsel %vm524, %v251, 0
  %v941 = vsel %vm524, %v252, 0
  %v943 = vsel %vm524, %v253, 0
  %v945 = vsel %vm524, %v254, 0
  %v947 = vsel %vm524, %v255, 0
  %v949 = vsel %vm524, %v256, 0
  %v951 = vsel %vm524, %v257, 0
  %v953 = vsel %vm524, %v258, 0
  %v955 = vsel %vm524, %v259, 0
  %v957 = vsel %vm524, %v260, 0
  %v960 = vsel %vm609, %v897, 0
  %962 = vmatprep.subr.bf16.mxu0 0
  %963 = vmatpush1.bf16.msra.mxu0 0
  %964 = vmatprep.subr.bf16.mxu0 0
  %965 = vmatpush1.bf16.msra.mxu0 0
  %966 = vmatprep.subr.bf16.mxu0 0
  %967 = vmatpush1.bf16.msra.mxu0 %v960
  %968 = vmatprep.subr.bf16.mxu0 0
  %969 = vmatpush1.bf16.msra.mxu0 %v896
  %970 = vmatprep.subr.bf16.mxu0 0
  %971 = vmatpush1.bf16.msra.mxu0 %v895
  %972 = vmatprep.subr.bf16.mxu0 0
  %973 = vmatpush1.bf16.msra.mxu0 %v894
  %974 = vmatprep.subr.bf16.mxu0 0
  %975 = vmatpush1.bf16.msra.mxu0 %v893
  %976 = vmatprep.subr.bf16.mxu0 0
  %977 = vmatpush1.bf16.msra.mxu0 %v892
  %978 = vmatprep.subr.bf16.mxu0 0
  %979 = vmatpush2.bf16.msra.mxu0 0
  %980 = vmatprep.subr.bf16.mxu0 0
  %981 = vmatpush2.bf16.msra.mxu0 0
  %982 = vmatprep.subr.bf16.mxu0 0
  %983 = vmatpush2.bf16.msra.mxu0 0
  %984 = vmatprep.subr.bf16.mxu0 0
  %985 = vmatpush2.bf16.msra.mxu0 0
  %986 = vmatprep.subr.bf16.mxu0 0
  %987 = vmatpush2.bf16.msra.mxu0 0
  %988 = vmatprep.subr.bf16.mxu0 0
  %989 = vmatpush2.bf16.msra.mxu0 0
  %990 = vmatprep.subr.bf16.mxu0 0
  %991 = vmatpush2.bf16.msra.mxu0 0
  %992 = vmatprep.subr.bf16.mxu0 0
  %993 = vmatpush2.bf16.msra.mxu0 0
  %994 = vmatprep.mubr.bf16.mxu0 0
  %995 = vmatmul.mubr.bf16.gmra.mxu0 %v903
  %v996 = vpop.f32.mrf.mxu0
  %v997 = vadd.f32 %v648, %v996
  %v998 = vpop.f32.mrf.mxu0
  %v999 = vpop.f32.mrf.mxu0
  %v1000 = vadd.f32 %v651, %v999
  %v1001 = vpop.f32.mrf.mxu0
  %1002 = vmatprep.mubr.bf16.mxu0 0
  %1003 = vmatmul.mubr.bf16.gmra.mxu0 %v905
  %v1004 = vpop.f32.mrf.mxu0
  %v1005 = vadd.f32 %v656, %v1004
  %v1006 = vpop.f32.mrf.mxu0
  %v1007 = vpop.f32.mrf.mxu0
  %v1008 = vadd.f32 %v659, %v1007
  %v1009 = vpop.f32.mrf.mxu0
  %1010 = vmatprep.mubr.bf16.mxu0 0
  %1011 = vmatmul.mubr.bf16.gmra.mxu0 %v907
  %v1012 = vpop.f32.mrf.mxu0
  %v1013 = vadd.f32 %v664, %v1012
  %v1014 = vpop.f32.mrf.mxu0
  %v1015 = vpop.f32.mrf.mxu0
  %v1016 = vadd.f32 %v667, %v1015
  %v1017 = vpop.f32.mrf.mxu0
  %1018 = vmatprep.mubr.bf16.mxu0 0
  %1019 = vmatmul.mubr.bf16.gmra.mxu0 %v909
  %v1020 = vpop.f32.mrf.mxu0
  %v1021 = vadd.f32 %v672, %v1020
  %v1022 = vpop.f32.mrf.mxu0
  %v1023 = vpop.f32.mrf.mxu0
  %v1024 = vadd.f32 %v675, %v1023
  %v1025 = vpop.f32.mrf.mxu0
  %1026 = vmatprep.mubr.bf16.mxu0 0
  %1027 = vmatmul.mubr.bf16.gmra.mxu0 %v911
  %v1028 = vpop.f32.mrf.mxu0
  %v1029 = vadd.f32 %v680, %v1028
  %v1030 = vpop.f32.mrf.mxu0
  %v1031 = vpop.f32.mrf.mxu0
  %v1032 = vadd.f32 %v683, %v1031
  %v1033 = vpop.f32.mrf.mxu0
  %1034 = vmatprep.mubr.bf16.mxu0 0
  %1035 = vmatmul.mubr.bf16.gmra.mxu0 %v913
  %v1036 = vpop.f32.mrf.mxu0
  %v1037 = vadd.f32 %v688, %v1036
  %v1038 = vpop.f32.mrf.mxu0
  %v1039 = vpop.f32.mrf.mxu0
  %v1040 = vadd.f32 %v691, %v1039
  %v1041 = vpop.f32.mrf.mxu0
  %1042 = vmatprep.mubr.bf16.mxu0 0
  %1043 = vmatmul.mubr.bf16.gmra.mxu0 %v915
  %v1044 = vpop.f32.mrf.mxu0
  %v1045 = vadd.f32 %v696, %v1044
  %v1046 = vpop.f32.mrf.mxu0
  %v1047 = vpop.f32.mrf.mxu0
  %v1048 = vadd.f32 %v699, %v1047
  %v1049 = vpop.f32.mrf.mxu0
  %1050 = vmatprep.mubr.bf16.mxu0 0
  %1051 = vmatmul.mubr.bf16.gmra.mxu0 %v917
  %v1052 = vpop.f32.mrf.mxu0
  %v1053 = vadd.f32 %v704, %v1052
  %v1054 = vpop.f32.mrf.mxu0
  %v1055 = vpop.f32.mrf.mxu0
  %v1056 = vadd.f32 %v707, %v1055
  %v1057 = vpop.f32.mrf.mxu0
  %1058 = vmatprep.mubr.bf16.mxu0 0
  %1059 = vmatmul.mubr.bf16.gmra.mxu0 %v919
  %v1060 = vpop.f32.mrf.mxu0
  %v1061 = vadd.f32 %v712, %v1060
  %v1062 = vpop.f32.mrf.mxu0
  %v1063 = vpop.f32.mrf.mxu0
  %v1064 = vadd.f32 %v715, %v1063
  %v1065 = vpop.f32.mrf.mxu0
  %1066 = vmatprep.mubr.bf16.mxu0 0
  %1067 = vmatmul.mubr.bf16.gmra.mxu0 %v921
  %v1068 = vpop.f32.mrf.mxu0
  %v1069 = vadd.f32 %v720, %v1068
  %v1070 = vpop.f32.mrf.mxu0
  %v1071 = vpop.f32.mrf.mxu0
  %v1072 = vadd.f32 %v723, %v1071
  %v1073 = vpop.f32.mrf.mxu0
  %1074 = vmatprep.mubr.bf16.mxu0 0
  %1075 = vmatmul.mubr.bf16.gmra.mxu0 %v923
  %v1076 = vpop.f32.mrf.mxu0
  %v1077 = vadd.f32 %v728, %v1076
  %v1078 = vpop.f32.mrf.mxu0
  %v1079 = vpop.f32.mrf.mxu0
  %v1080 = vadd.f32 %v731, %v1079
  %v1081 = vpop.f32.mrf.mxu0
  %1082 = vmatprep.mubr.bf16.mxu0 0
  %1083 = vmatmul.mubr.bf16.gmra.mxu0 %v925
  %v1084 = vpop.f32.mrf.mxu0
  %v1085 = vadd.f32 %v736, %v1084
  %v1086 = vpop.f32.mrf.mxu0
  %v1087 = vpop.f32.mrf.mxu0
  %v1088 = vadd.f32 %v739, %v1087
  %v1089 = vpop.f32.mrf.mxu0
  %1090 = vmatprep.mubr.bf16.mxu0 0
  %1091 = vmatmul.mubr.bf16.gmra.mxu0 %v927
  %v1092 = vpop.f32.mrf.mxu0
  %v1093 = vadd.f32 %v744, %v1092
  %v1094 = vpop.f32.mrf.mxu0
  %v1095 = vpop.f32.mrf.mxu0
  %v1096 = vadd.f32 %v747, %v1095
  %v1097 = vpop.f32.mrf.mxu0
  %1098 = vmatprep.mubr.bf16.mxu0 0
  %1099 = vmatmul.mubr.bf16.gmra.mxu0 %v929
  %v1100 = vpop.f32.mrf.mxu0
  %v1101 = vadd.f32 %v752, %v1100
  %v1102 = vpop.f32.mrf.mxu0
  %v1103 = vpop.f32.mrf.mxu0
  %v1104 = vadd.f32 %v755, %v1103
  %v1105 = vpop.f32.mrf.mxu0
  %1106 = vmatprep.mubr.bf16.mxu0 0
  %1107 = vmatmul.mubr.bf16.gmra.mxu0 %v931
  %v1108 = vpop.f32.mrf.mxu0
  %v1109 = vadd.f32 %v760, %v1108
  %v1110 = vpop.f32.mrf.mxu0
  %v1111 = vpop.f32.mrf.mxu0
  %v1112 = vadd.f32 %v763, %v1111
  %v1113 = vpop.f32.mrf.mxu0
  %1114 = vmatprep.mubr.bf16.mxu0 0
  %1115 = vmatmul.mubr.bf16.gmra.mxu0 %v933
  %v1116 = vpop.f32.mrf.mxu0
  %v1117 = vadd.f32 %v768, %v1116
  %v1118 = vpop.f32.mrf.mxu0
  %v1119 = vpop.f32.mrf.mxu0
  %v1120 = vadd.f32 %v771, %v1119
  %v1121 = vpop.f32.mrf.mxu0
  %1122 = vmatprep.mubr.bf16.mxu0 0
  %1123 = vmatmul.mubr.bf16.gmra.mxu0 %v935
  %v1124 = vpop.f32.mrf.mxu0
  %v1125 = vadd.f32 %v776, %v1124
  %v1126 = vpop.f32.mrf.mxu0
  %v1127 = vpop.f32.mrf.mxu0
  %v1128 = vadd.f32 %v779, %v1127
  %v1129 = vpop.f32.mrf.mxu0
  %1130 = vmatprep.mubr.bf16.mxu0 0
  %1131 = vmatmul.mubr.bf16.gmra.mxu0 %v937
  %v1132 = vpop.f32.mrf.mxu0
  %v1133 = vadd.f32 %v784, %v1132
  %v1134 = vpop.f32.mrf.mxu0
  %v1135 = vpop.f32.mrf.mxu0
  %v1136 = vadd.f32 %v787, %v1135
  %v1137 = vpop.f32.mrf.mxu0
  %1138 = vmatprep.mubr.bf16.mxu0 0
  %1139 = vmatmul.mubr.bf16.gmra.mxu0 %v939
  %v1140 = vpop.f32.mrf.mxu0
  %v1141 = vadd.f32 %v792, %v1140
  %v1142 = vpop.f32.mrf.mxu0
  %v1143 = vpop.f32.mrf.mxu0
  %v1144 = vadd.f32 %v795, %v1143
  %v1145 = vpop.f32.mrf.mxu0
  %1146 = vmatprep.mubr.bf16.mxu0 0
  %1147 = vmatmul.mubr.bf16.gmra.mxu0 %v941
  %v1148 = vpop.f32.mrf.mxu0
  %v1149 = vadd.f32 %v800, %v1148
  %v1150 = vpop.f32.mrf.mxu0
  %v1151 = vpop.f32.mrf.mxu0
  %v1152 = vadd.f32 %v803, %v1151
  %v1153 = vpop.f32.mrf.mxu0
  %1154 = vmatprep.mubr.bf16.mxu0 0
  %1155 = vmatmul.mubr.bf16.gmra.mxu0 %v943
  %v1156 = vpop.f32.mrf.mxu0
  %v1157 = vadd.f32 %v808, %v1156
  %v1158 = vpop.f32.mrf.mxu0
  %v1159 = vpop.f32.mrf.mxu0
  %v1160 = vadd.f32 %v811, %v1159
  %v1161 = vpop.f32.mrf.mxu0
  %1162 = vmatprep.mubr.bf16.mxu0 0
  %1163 = vmatmul.mubr.bf16.gmra.mxu0 %v945
  %v1164 = vpop.f32.mrf.mxu0
  %v1165 = vadd.f32 %v816, %v1164
  %v1166 = vpop.f32.mrf.mxu0
  %v1167 = vpop.f32.mrf.mxu0
  %v1168 = vadd.f32 %v819, %v1167
  %v1169 = vpop.f32.mrf.mxu0
  %1170 = vmatprep.mubr.bf16.mxu0 0
  %1171 = vmatmul.mubr.bf16.gmra.mxu0 %v947
  %v1172 = vpop.f32.mrf.mxu0
  %v1173 = vadd.f32 %v824, %v1172
  %v1174 = vpop.f32.mrf.mxu0
  %v1175 = vpop.f32.mrf.mxu0
  %v1176 = vadd.f32 %v827, %v1175
  %v1177 = vpop.f32.mrf.mxu0
  %1178 = vmatprep.mubr.bf16.mxu0 0
  %1179 = vmatmul.mubr.bf16.gmra.mxu0 %v949
  %v1180 = vpop.f32.mrf.mxu0
  %v1181 = vadd.f32 %v832, %v1180
  %v1182 = vpop.f32.mrf.mxu0
  %v1183 = vpop.f32.mrf.mxu0
  %v1184 = vadd.f32 %v835, %v1183
  %v1185 = vpop.f32.mrf.mxu0
  %1186 = vmatprep.mubr.bf16.mxu0 0
  %1187 = vmatmul.mubr.bf16.gmra.mxu0 %v951
  %v1188 = vpop.f32.mrf.mxu0
  %v1189 = vadd.f32 %v840, %v1188
  %v1190 = vpop.f32.mrf.mxu0
  %v1191 = vpop.f32.mrf.mxu0
  %v1192 = vadd.f32 %v843, %v1191
  %v1193 = vpop.f32.mrf.mxu0
  %1194 = vmatprep.mubr.bf16.mxu0 0
  %1195 = vmatmul.mubr.bf16.gmra.mxu0 %v953
  %v1196 = vpop.f32.mrf.mxu0
  %v1197 = vadd.f32 %v848, %v1196
  %v1198 = vpop.f32.mrf.mxu0
  %v1199 = vpop.f32.mrf.mxu0
  %v1200 = vadd.f32 %v851, %v1199
  %v1201 = vpop.f32.mrf.mxu0
  %1202 = vmatprep.mubr.bf16.mxu0 0
  %1203 = vmatmul.mubr.bf16.gmra.mxu0 %v955
  %v1204 = vpop.f32.mrf.mxu0
  %v1205 = vadd.f32 %v856, %v1204
  %v1206 = vpop.f32.mrf.mxu0
  %v1207 = vpop.f32.mrf.mxu0
  %v1208 = vadd.f32 %v859, %v1207
  %v1209 = vpop.f32.mrf.mxu0
  %1210 = vmatprep.mubr.bf16.mxu0 0
  %1211 = vmatmul.mubr.bf16.gmra.mxu0 %v957
  %v1212 = vpop.f32.mrf.mxu0
  %v1213 = vadd.f32 %v864, %v1212
  %v1214 = vpop.f32.mrf.mxu0
  %v1215 = vpop.f32.mrf.mxu0
  %v1216 = vadd.f32 %v867, %v1215
  %v1217 = vpop.f32.mrf.mxu0
  %1218 = vdwg.mxu0
  %v1219 = vld [vmem:[%s0 + $0x10] sm:$0xe]
  %v1220 = vld [vmem:[%s0 + $0x14] sm:$0xf]
  %v1221 = vld [vmem:[%s0 + $0x18] sm:$0xf]
  %v1222 = vld [vmem:[%s0 + $0x1c] sm:$0xf]
  %v1223 = vld [vmem:[%s0 + $0x20] sm:$0xf]
  %v1224 = vld [vmem:[%s0 + $0x24] sm:$0xf]
  %v1225 = vld [vmem:[%s0 + $0x28] sm:$0xf]
  %v1226 = vld [vmem:[%s0 + $0x2c] sm:$0xf]
  %v1227 = vld [vmem:[%s0 + $0x30] sm:$0xf]
  %v1228 = vld [vmem:[%s0 + $0x34] sm:$0xf]
  %v1229 = vld [vmem:[%s0 + $0x38] sm:$0xf]
  %v1230 = vld [vmem:[%s0 + $0x3c] sm:$0xf]
  %v1231 = vld [vmem:[%s0 + $0x40] sm:$0xf]
  %v1232 = vld [vmem:[%s0 + $0x44] sm:$0xf]
  %v1233 = vld [vmem:[%s0 + $0x48] sm:$0xf]
  %v1234 = vld [vmem:[%s0 + $0x4c] sm:$0xf]
  %v1235 = vld [vmem:[%s0 + $0x50] sm:$0xf]
  %v1236 = vld [vmem:[%s0 + $0x54] sm:$0xf]
  %v1237 = vld [vmem:[%s0 + $0x58] sm:$0xf]
  %v1238 = vld [vmem:[%s0 + $0x5c] sm:$0xf]
  %v1239 = vld [vmem:[%s0 + $0x60] sm:$0xf]
  %v1240 = vld [vmem:[%s0 + $0x64] sm:$0xf]
  %v1241 = vld [vmem:[%s0 + $0x68] sm:$0xf]
  %v1242 = vld [vmem:[%s0 + $0x6c] sm:$0xf]
  %v1243 = vld [vmem:[%s0 + $0x70] sm:$0xf]
  %v1244 = vld [vmem:[%s0 + $0x74] sm:$0xf]
  %v1245 = vld [vmem:[%s0 + $0x78] sm:$0xf]
  %v1246 = vld [vmem:[%s0 + $0x7c] sm:$0xf]
  %v1247 = vld [vmem:[%s0 + $0x80] sm:$0xf]
  %v1248 = vld [vmem:[%s0 + $0x84] sm:$0xf]
  %v1249 = vld [vmem:[%s0 + $0x88] sm:$0xf]
  %v1250 = vld [vmem:[%s0 + $0x8c] sm:$0xf]
  %v1251 = vld [vmem:[%s0 + $0x90] sm:$0xf]
  %v1252 = vld [vmem:[%s0 + $0x94] sm:$0xf]
  %v1253 = vld [vmem:[%s0 + $0x98] sm:$0xf]
  %v1254 = vld [vmem:[%s0 + $0x9c] sm:$0xf]
  %v1255 = vld [vmem:[%s0 + $0xa0] sm:$0xf]
  %v1256 = vld [vmem:[%s0 + $0xa4] sm:$0xf]
  %v1257 = vld [vmem:[%s0 + $0xa8] sm:$0xf]
  %v1258 = vld [vmem:[%s0 + $0xac] sm:$0xf]
  %v1259 = vld [vmem:[%s0 + $0xb0] sm:$0xf]
  %v1260 = vld [vmem:[%s0 + $0xb4] sm:$0xf]
  %v1261 = vld [vmem:[%s0 + $0xb8] sm:$0xf]
  %v1262 = vld [vmem:[%s0 + $0xbc] sm:$0xf]
  %v1263 = vld [vmem:[%s0 + $0xc0] sm:$0xf]
  %v1264 = vld [vmem:[%s0 + $0xc4] sm:$0xf]
  %v1265 = vld [vmem:[%s0 + $0xc8] sm:$0xf]
  %v1266 = vld [vmem:[%s0 + $0xcc] sm:$0xf]
  %v1267 = vld [vmem:[%s0 + $0xd0] sm:$0xf]
  %v1268 = vld [vmem:[%s0 + $0xd4] sm:$0xf]
  %v1269 = vld [vmem:[%s0 + $0xd8] sm:$0xf]
  %v1270 = vld [vmem:[%s0 + $0xdc] sm:$0xf]
  %v1271 = vld [vmem:[%s0 + $0xe0] sm:$0xf]
  %v1272 = vld [vmem:[%s0 + $0xe4] sm:$0xf]
  %v1273 = vld [vmem:[%s0 + $0xe8] sm:$0xf]
  %v1274 = vld [vmem:[%s0 + $0xec] sm:$0xf]
  %v1275 = vld [vmem:[%s0 + $0xf0] sm:$0x1]
  %s1276 = scalar_lea.vmem %s1, 88
  %v1277 = vld [vmem:[%s1276] sm:$0xf]
  %v1278 = vld [vmem:[%s1276 + $0x4] sm:$0xf]
  %v1279 = vld [vmem:[%s1276 + $0x8] sm:$0xf]
  %v1280 = vld [vmem:[%s1276 + $0xc] sm:$0xf]
  %v1281 = vld [vmem:[%s1276 + $0x10] sm:$0xf]
  %v1282 = vld [vmem:[%s1276 + $0x14] sm:$0xf]
  %v1283 = vld [vmem:[%s1276 + $0x18] sm:$0xf]
  %v1284 = vld [vmem:[%s1276 + $0x1c] sm:$0xf]
  %v1285 = vld [vmem:[%s1276 + $0x20] sm:$0xf]
  %v1286 = vld [vmem:[%s1276 + $0x24] sm:$0xf]
  %v1287 = vld [vmem:[%s1276 + $0x28] sm:$0x3]
  %v1345 = vunpack.c.l.b16 %v1219
  %v1346 = vunpack.c.l.b16 %v1220
  %v1347 = vunpack.c.l.b16 %v1221
  %v1348 = vunpack.c.l.b16 %v1222
  %v1349 = vunpack.c.l.b16 %v1223
  %v1350 = vunpack.c.l.b16 %v1224
  %v1351 = vunpack.c.l.b16 %v1225
  %v1352 = vunpack.c.l.b16 %v1226
  %v1353 = vunpack.c.l.b16 %v1227
  %v1354 = vunpack.c.l.b16 %v1228
  %v1355 = vunpack.c.l.b16 %v1229
  %v1356 = vunpack.c.l.b16 %v1230
  %v1357 = vunpack.c.l.b16 %v1231
  %v1358 = vunpack.c.l.b16 %v1232
  %v1359 = vunpack.c.l.b16 %v1233
  %v1360 = vunpack.c.l.b16 %v1234
  %v1361 = vunpack.c.l.b16 %v1235
  %v1362 = vunpack.c.l.b16 %v1236
  %v1363 = vunpack.c.l.b16 %v1237
  %v1364 = vunpack.c.l.b16 %v1238
  %v1365 = vunpack.c.l.b16 %v1239
  %v1366 = vunpack.c.l.b16 %v1240
  %v1367 = vunpack.c.l.b16 %v1241
  %v1368 = vunpack.c.l.b16 %v1242
  %v1369 = vunpack.c.l.b16 %v1243
  %v1370 = vunpack.c.l.b16 %v1244
  %v1371 = vunpack.c.l.b16 %v1245
  %v1372 = vunpack.c.l.b16 %v1246
  %v1373 = vunpack.c.l.b16 %v1247
  %v1374 = vunpack.c.l.b16 %v1248
  %v1375 = vunpack.c.l.b16 %v1249
  %v1376 = vunpack.c.l.b16 %v1250
  %v1377 = vunpack.c.l.b16 %v1251
  %v1378 = vunpack.c.l.b16 %v1252
  %v1379 = vunpack.c.l.b16 %v1253
  %v1380 = vunpack.c.l.b16 %v1254
  %v1381 = vunpack.c.l.b16 %v1255
  %v1382 = vunpack.c.l.b16 %v1256
  %v1383 = vunpack.c.l.b16 %v1257
  %v1384 = vunpack.c.l.b16 %v1258
  %v1385 = vunpack.c.l.b16 %v1259
  %v1386 = vunpack.c.l.b16 %v1260
  %v1387 = vunpack.c.l.b16 %v1261
  %v1388 = vunpack.c.l.b16 %v1262
  %v1389 = vunpack.c.l.b16 %v1263
  %v1390 = vunpack.c.l.b16 %v1264
  %v1391 = vunpack.c.l.b16 %v1265
  %v1392 = vunpack.c.l.b16 %v1266
  %v1393 = vunpack.c.l.b16 %v1267
  %v1394 = vunpack.c.l.b16 %v1268
  %v1395 = vunpack.c.l.b16 %v1269
  %v1396 = vunpack.c.l.b16 %v1270
  %v1397 = vunpack.c.l.b16 %v1271
  %v1398 = vunpack.c.l.b16 %v1272
  %v1399 = vunpack.c.l.b16 %v1273
  %v1400 = vunpack.c.l.b16 %v1274
  %v1401 = vunpack.c.l.b16 %v1275
  %v1402 = vpack.c.b16 %v1346, %v1345
  %v1403 = vpack.c.b16 %v1348, %v1347
  %v1404 = vpack.c.b16 %v1350, %v1349
  %v1405 = vpack.c.b16 %v1352, %v1351
  %v1406 = vpack.c.b16 %v1354, %v1353
  %v1407 = vpack.c.b16 %v1356, %v1355
  %v1408 = vpack.c.b16 %v1358, %v1357
  %v1409 = vpack.c.b16 %v1360, %v1359
  %v1410 = vpack.c.b16 %v1362, %v1361
  %v1411 = vpack.c.b16 %v1364, %v1363
  %v1412 = vpack.c.b16 %v1366, %v1365
  %v1413 = vpack.c.b16 %v1368, %v1367
  %v1414 = vpack.c.b16 %v1370, %v1369
  %v1415 = vpack.c.b16 %v1372, %v1371
  %v1416 = vpack.c.b16 %v1374, %v1373
  %v1417 = vpack.c.b16 %v1376, %v1375
  %v1418 = vpack.c.b16 %v1378, %v1377
  %v1419 = vpack.c.b16 %v1380, %v1379
  %v1420 = vpack.c.b16 %v1382, %v1381
  %v1421 = vpack.c.b16 %v1384, %v1383
  %v1422 = vpack.c.b16 %v1386, %v1385
  %v1423 = vpack.c.b16 %v1388, %v1387
  %v1424 = vpack.c.b16 %v1390, %v1389
  %v1425 = vpack.c.b16 %v1392, %v1391
  %v1426 = vpack.c.b16 %v1394, %v1393
  %v1427 = vpack.c.b16 %v1396, %v1395
  %v1428 = vpack.c.b16 %v1398, %v1397
  %v1429 = vpack.c.b16 %v1400, %v1399
  %v1430 = vpack.c.b16 %v1401, %v1401
  %vm1431 = vcmask 1046528
  %v1432 = vrot.slane %v1402, 1
  %v1433 = vrot.slane %v1403, 1
  %v1434 = vsel %vm1431, %v1432, %v1433
  %v1435 = vrot.slane %v1404, 1
  %v1436 = vsel %vm1431, %v1433, %v1435
  %v1437 = vrot.slane %v1405, 1
  %v1438 = vsel %vm1431, %v1435, %v1437
  %v1439 = vrot.slane %v1406, 1
  %v1440 = vsel %vm1431, %v1437, %v1439
  %v1441 = vrot.slane %v1407, 1
  %v1442 = vsel %vm1431, %v1439, %v1441
  %v1443 = vrot.slane %v1408, 1
  %v1444 = vsel %vm1431, %v1441, %v1443
  %v1445 = vrot.slane %v1409, 1
  %v1446 = vsel %vm1431, %v1443, %v1445
  %v1447 = vrot.slane %v1410, 1
  %v1448 = vsel %vm1431, %v1445, %v1447
  %v1449 = vrot.slane %v1411, 1
  %v1450 = vsel %vm1431, %v1447, %v1449
  %v1451 = vrot.slane %v1412, 1
  %v1452 = vsel %vm1431, %v1449, %v1451
  %v1453 = vrot.slane %v1413, 1
  %v1454 = vsel %vm1431, %v1451, %v1453
  %v1455 = vrot.slane %v1414, 1
  %v1456 = vsel %vm1431, %v1453, %v1455
  %v1457 = vrot.slane %v1415, 1
  %v1458 = vsel %vm1431, %v1455, %v1457
  %v1459 = vrot.slane %v1416, 1
  %v1460 = vsel %vm1431, %v1457, %v1459
  %v1461 = vrot.slane %v1417, 1
  %v1462 = vsel %vm1431, %v1459, %v1461
  %v1463 = vrot.slane %v1418, 1
  %v1464 = vsel %vm1431, %v1461, %v1463
  %v1465 = vrot.slane %v1419, 1
  %v1466 = vsel %vm1431, %v1463, %v1465
  %v1467 = vrot.slane %v1420, 1
  %v1468 = vsel %vm1431, %v1465, %v1467
  %v1469 = vrot.slane %v1421, 1
  %v1470 = vsel %vm1431, %v1467, %v1469
  %v1471 = vrot.slane %v1422, 1
  %v1472 = vsel %vm1431, %v1469, %v1471
  %v1473 = vrot.slane %v1423, 1
  %v1474 = vsel %vm1431, %v1471, %v1473
  %v1475 = vrot.slane %v1424, 1
  %v1476 = vsel %vm1431, %v1473, %v1475
  %v1477 = vrot.slane %v1425, 1
  %v1478 = vsel %vm1431, %v1475, %v1477
  %v1479 = vrot.slane %v1426, 1
  %v1480 = vsel %vm1431, %v1477, %v1479
  %v1481 = vrot.slane %v1427, 1
  %v1482 = vsel %vm1431, %v1479, %v1481
  %v1483 = vrot.slane %v1428, 1
  %v1484 = vsel %vm1431, %v1481, %v1483
  %v1485 = vrot.slane %v1429, 1
  %v1486 = vsel %vm1431, %v1483, %v1485
  %v1487 = vrot.slane %v1430, 1
  %v1488 = vsel %vm1431, %v1485, %v1487
  %v1500 = vunpack.c.l.b16 %v1277
  %v1501 = vunpack.c.l.b16 %v1278
  %v1502 = vunpack.c.l.b16 %v1279
  %v1503 = vunpack.c.l.b16 %v1280
  %v1504 = vunpack.c.l.b16 %v1281
  %v1505 = vunpack.c.l.b16 %v1282
  %v1506 = vunpack.c.l.b16 %v1283
  %v1507 = vunpack.c.l.b16 %v1284
  %v1508 = vunpack.c.l.b16 %v1285
  %v1509 = vunpack.c.l.b16 %v1286
  %v1510 = vunpack.c.l.b16 %v1287
  %v1511 = vpack.c.b16 %v1501, %v1500
  %v1512 = vpack.c.b16 %v1503, %v1502
  %v1513 = vpack.c.b16 %v1505, %v1504
  %v1514 = vpack.c.b16 %v1507, %v1506
  %v1515 = vpack.c.b16 %v1509, %v1508
  %v1516 = vpack.c.b16 %v1510, %v1510
  %v1523 = vsel %vm524, %v1434, 0
  %v1526 = vsel %vm524, %v1436, 0
  %v1529 = vsel %vm524, %v1438, 0
  %v1532 = vsel %vm524, %v1440, 0
  %v1535 = vsel %vm524, %v1442, 0
  %v1538 = vsel %vm524, %v1444, 0
  %v1541 = vsel %vm524, %v1446, 0
  %v1544 = vsel %vm524, %v1448, 0
  %v1547 = vsel %vm524, %v1450, 0
  %v1550 = vsel %vm524, %v1452, 0
  %v1553 = vsel %vm524, %v1454, 0
  %v1556 = vsel %vm524, %v1456, 0
  %v1559 = vsel %vm524, %v1458, 0
  %v1562 = vsel %vm524, %v1460, 0
  %v1565 = vsel %vm524, %v1462, 0
  %v1568 = vsel %vm524, %v1464, 0
  %v1571 = vsel %vm524, %v1466, 0
  %v1574 = vsel %vm524, %v1468, 0
  %v1577 = vsel %vm524, %v1470, 0
  %v1580 = vsel %vm524, %v1472, 0
  %v1583 = vsel %vm524, %v1474, 0
  %v1586 = vsel %vm524, %v1476, 0
  %v1589 = vsel %vm524, %v1478, 0
  %v1592 = vsel %vm524, %v1480, 0
  %v1595 = vsel %vm524, %v1482, 0
  %v1598 = vsel %vm524, %v1484, 0
  %v1601 = vsel %vm524, %v1486, 0
  %v1604 = vsel %vm524, %v1488, 0
  %v1607 = vsel %vm609, %v1516, 0
  %1609 = vmatprep.subr.bf16.mxu0 0
  %1610 = vmatpush1.bf16.msra.mxu0 0
  %1611 = vmatprep.subr.bf16.mxu0 0
  %1612 = vmatpush1.bf16.msra.mxu0 0
  %1613 = vmatprep.subr.bf16.mxu0 0
  %1614 = vmatpush1.bf16.msra.mxu0 %v1607
  %1615 = vmatprep.subr.bf16.mxu0 0
  %1616 = vmatpush1.bf16.msra.mxu0 %v1515
  %1617 = vmatprep.subr.bf16.mxu0 0
  %1618 = vmatpush1.bf16.msra.mxu0 %v1514
  %1619 = vmatprep.subr.bf16.mxu0 0
  %1620 = vmatpush1.bf16.msra.mxu0 %v1513
  %1621 = vmatprep.subr.bf16.mxu0 0
  %1622 = vmatpush1.bf16.msra.mxu0 %v1512
  %1623 = vmatprep.subr.bf16.mxu0 0
  %1624 = vmatpush1.bf16.msra.mxu0 %v1511
  %1625 = vmatprep.subr.bf16.mxu0 0
  %1626 = vmatpush2.bf16.msra.mxu0 0
  %1627 = vmatprep.subr.bf16.mxu0 0
  %1628 = vmatpush2.bf16.msra.mxu0 0
  %1629 = vmatprep.subr.bf16.mxu0 0
  %1630 = vmatpush2.bf16.msra.mxu0 0
  %1631 = vmatprep.subr.bf16.mxu0 0
  %1632 = vmatpush2.bf16.msra.mxu0 0
  %1633 = vmatprep.subr.bf16.mxu0 0
  %1634 = vmatpush2.bf16.msra.mxu0 0
  %1635 = vmatprep.subr.bf16.mxu0 0
  %1636 = vmatpush2.bf16.msra.mxu0 0
  %1637 = vmatprep.subr.bf16.mxu0 0
  %1638 = vmatpush2.bf16.msra.mxu0 0
  %1639 = vmatprep.subr.bf16.mxu0 0
  %1640 = vmatpush2.bf16.msra.mxu0 0
  %1641 = vmatprep.mubr.bf16.mxu0 0
  %1642 = vmatmul.mubr.bf16.gmra.mxu0 %v1523
  %v1643 = vpop.f32.mrf.mxu0
  %v1644 = vadd.f32 0.0, %v1643
  %v1645 = vpop.f32.mrf.mxu0
  %v1646 = vpop.f32.mrf.mxu0
  %v1647 = vadd.f32 0.0, %v1646
  %v1648 = vpop.f32.mrf.mxu0
  %1649 = vmatprep.mubr.bf16.mxu0 0
  %1650 = vmatmul.mubr.bf16.gmra.mxu0 %v1526
  %v1651 = vpop.f32.mrf.mxu0
  %v1652 = vadd.f32 0.0, %v1651
  %v1653 = vpop.f32.mrf.mxu0
  %v1654 = vpop.f32.mrf.mxu0
  %v1655 = vadd.f32 0.0, %v1654
  %v1656 = vpop.f32.mrf.mxu0
  %1657 = vmatprep.mubr.bf16.mxu0 0
  %1658 = vmatmul.mubr.bf16.gmra.mxu0 %v1529
  %v1659 = vpop.f32.mrf.mxu0
  %v1660 = vadd.f32 0.0, %v1659
  %v1661 = vpop.f32.mrf.mxu0
  %v1662 = vpop.f32.mrf.mxu0
  %v1663 = vadd.f32 0.0, %v1662
  %v1664 = vpop.f32.mrf.mxu0
  %1665 = vmatprep.mubr.bf16.mxu0 0
  %1666 = vmatmul.mubr.bf16.gmra.mxu0 %v1532
  %v1667 = vpop.f32.mrf.mxu0
  %v1668 = vadd.f32 0.0, %v1667
  %v1669 = vpop.f32.mrf.mxu0
  %v1670 = vpop.f32.mrf.mxu0
  %v1671 = vadd.f32 0.0, %v1670
  %v1672 = vpop.f32.mrf.mxu0
  %1673 = vmatprep.mubr.bf16.mxu0 0
  %1674 = vmatmul.mubr.bf16.gmra.mxu0 %v1535
  %v1675 = vpop.f32.mrf.mxu0
  %v1676 = vadd.f32 0.0, %v1675
  %v1677 = vpop.f32.mrf.mxu0
  %v1678 = vpop.f32.mrf.mxu0
  %v1679 = vadd.f32 0.0, %v1678
  %v1680 = vpop.f32.mrf.mxu0
  %1681 = vmatprep.mubr.bf16.mxu0 0
  %1682 = vmatmul.mubr.bf16.gmra.mxu0 %v1538
  %v1683 = vpop.f32.mrf.mxu0
  %v1684 = vadd.f32 0.0, %v1683
  %v1685 = vpop.f32.mrf.mxu0
  %v1686 = vpop.f32.mrf.mxu0
  %v1687 = vadd.f32 0.0, %v1686
  %v1688 = vpop.f32.mrf.mxu0
  %1689 = vmatprep.mubr.bf16.mxu0 0
  %1690 = vmatmul.mubr.bf16.gmra.mxu0 %v1541
  %v1691 = vpop.f32.mrf.mxu0
  %v1692 = vadd.f32 0.0, %v1691
  %v1693 = vpop.f32.mrf.mxu0
  %v1694 = vpop.f32.mrf.mxu0
  %v1695 = vadd.f32 0.0, %v1694
  %v1696 = vpop.f32.mrf.mxu0
  %1697 = vmatprep.mubr.bf16.mxu0 0
  %1698 = vmatmul.mubr.bf16.gmra.mxu0 %v1544
  %v1699 = vpop.f32.mrf.mxu0
  %v1700 = vadd.f32 0.0, %v1699
  %v1701 = vpop.f32.mrf.mxu0
  %v1702 = vpop.f32.mrf.mxu0
  %v1703 = vadd.f32 0.0, %v1702
  %v1704 = vpop.f32.mrf.mxu0
  %1705 = vmatprep.mubr.bf16.mxu0 0
  %1706 = vmatmul.mubr.bf16.gmra.mxu0 %v1547
  %v1707 = vpop.f32.mrf.mxu0
  %v1708 = vadd.f32 0.0, %v1707
  %v1709 = vpop.f32.mrf.mxu0
  %v1710 = vpop.f32.mrf.mxu0
  %v1711 = vadd.f32 0.0, %v1710
  %v1712 = vpop.f32.mrf.mxu0
  %1713 = vmatprep.mubr.bf16.mxu0 0
  %1714 = vmatmul.mubr.bf16.gmra.mxu0 %v1550
  %v1715 = vpop.f32.mrf.mxu0
  %v1716 = vadd.f32 0.0, %v1715
  %v1717 = vpop.f32.mrf.mxu0
  %v1718 = vpop.f32.mrf.mxu0
  %v1719 = vadd.f32 0.0, %v1718
  %v1720 = vpop.f32.mrf.mxu0
  %1721 = vmatprep.mubr.bf16.mxu0 0
  %1722 = vmatmul.mubr.bf16.gmra.mxu0 %v1553
  %v1723 = vpop.f32.mrf.mxu0
  %v1724 = vadd.f32 0.0, %v1723
  %v1725 = vpop.f32.mrf.mxu0
  %v1726 = vpop.f32.mrf.mxu0
  %v1727 = vadd.f32 0.0, %v1726
  %v1728 = vpop.f32.mrf.mxu0
  %1729 = vmatprep.mubr.bf16.mxu0 0
  %1730 = vmatmul.mubr.bf16.gmra.mxu0 %v1556
  %v1731 = vpop.f32.mrf.mxu0
  %v1732 = vadd.f32 0.0, %v1731
  %v1733 = vpop.f32.mrf.mxu0
  %v1734 = vpop.f32.mrf.mxu0
  %v1735 = vadd.f32 0.0, %v1734
  %v1736 = vpop.f32.mrf.mxu0
  %1737 = vmatprep.mubr.bf16.mxu0 0
  %1738 = vmatmul.mubr.bf16.gmra.mxu0 %v1559
  %v1739 = vpop.f32.mrf.mxu0
  %v1740 = vadd.f32 0.0, %v1739
  %v1741 = vpop.f32.mrf.mxu0
  %v1742 = vpop.f32.mrf.mxu0
  %v1743 = vadd.f32 0.0, %v1742
  %v1744 = vpop.f32.mrf.mxu0
  %1745 = vmatprep.mubr.bf16.mxu0 0
  %1746 = vmatmul.mubr.bf16.gmra.mxu0 %v1562
  %v1747 = vpop.f32.mrf.mxu0
  %v1748 = vadd.f32 0.0, %v1747
  %v1749 = vpop.f32.mrf.mxu0
  %v1750 = vpop.f32.mrf.mxu0
  %v1751 = vadd.f32 0.0, %v1750
  %v1752 = vpop.f32.mrf.mxu0
  %1753 = vmatprep.mubr.bf16.mxu0 0
  %1754 = vmatmul.mubr.bf16.gmra.mxu0 %v1565
  %v1755 = vpop.f32.mrf.mxu0
  %v1756 = vadd.f32 0.0, %v1755
  %v1757 = vpop.f32.mrf.mxu0
  %v1758 = vpop.f32.mrf.mxu0
  %v1759 = vadd.f32 0.0, %v1758
  %v1760 = vpop.f32.mrf.mxu0
  %1761 = vmatprep.mubr.bf16.mxu0 0
  %1762 = vmatmul.mubr.bf16.gmra.mxu0 %v1568
  %v1763 = vpop.f32.mrf.mxu0
  %v1764 = vadd.f32 0.0, %v1763
  %v1765 = vpop.f32.mrf.mxu0
  %v1766 = vpop.f32.mrf.mxu0
  %v1767 = vadd.f32 0.0, %v1766
  %v1768 = vpop.f32.mrf.mxu0
  %1769 = vmatprep.mubr.bf16.mxu0 0
  %1770 = vmatmul.mubr.bf16.gmra.mxu0 %v1571
  %v1771 = vpop.f32.mrf.mxu0
  %v1772 = vadd.f32 0.0, %v1771
  %v1773 = vpop.f32.mrf.mxu0
  %v1774 = vpop.f32.mrf.mxu0
  %v1775 = vadd.f32 0.0, %v1774
  %v1776 = vpop.f32.mrf.mxu0
  %1777 = vmatprep.mubr.bf16.mxu0 0
  %1778 = vmatmul.mubr.bf16.gmra.mxu0 %v1574
  %v1779 = vpop.f32.mrf.mxu0
  %v1780 = vadd.f32 0.0, %v1779
  %v1781 = vpop.f32.mrf.mxu0
  %v1782 = vpop.f32.mrf.mxu0
  %v1783 = vadd.f32 0.0, %v1782
  %v1784 = vpop.f32.mrf.mxu0
  %1785 = vmatprep.mubr.bf16.mxu0 0
  %1786 = vmatmul.mubr.bf16.gmra.mxu0 %v1577
  %v1787 = vpop.f32.mrf.mxu0
  %v1788 = vadd.f32 0.0, %v1787
  %v1789 = vpop.f32.mrf.mxu0
  %v1790 = vpop.f32.mrf.mxu0
  %v1791 = vadd.f32 0.0, %v1790
  %v1792 = vpop.f32.mrf.mxu0
  %1793 = vmatprep.mubr.bf16.mxu0 0
  %1794 = vmatmul.mubr.bf16.gmra.mxu0 %v1580
  %v1795 = vpop.f32.mrf.mxu0
  %v1796 = vadd.f32 0.0, %v1795
  %v1797 = vpop.f32.mrf.mxu0
  %v1798 = vpop.f32.mrf.mxu0
  %v1799 = vadd.f32 0.0, %v1798
  %v1800 = vpop.f32.mrf.mxu0
  %1801 = vmatprep.mubr.bf16.mxu0 0
  %1802 = vmatmul.mubr.bf16.gmra.mxu0 %v1583
  %v1803 = vpop.f32.mrf.mxu0
  %v1804 = vadd.f32 0.0, %v1803
  %v1805 = vpop.f32.mrf.mxu0
  %v1806 = vpop.f32.mrf.mxu0
  %v1807 = vadd.f32 0.0, %v1806
  %v1808 = vpop.f32.mrf.mxu0
  %1809 = vmatprep.mubr.bf16.mxu0 0
  %1810 = vmatmul.mubr.bf16.gmra.mxu0 %v1586
  %v1811 = vpop.f32.mrf.mxu0
  %v1812 = vadd.f32 0.0, %v1811
  %v1813 = vpop.f32.mrf.mxu0
  %v1814 = vpop.f32.mrf.mxu0
  %v1815 = vadd.f32 0.0, %v1814
  %v1816 = vpop.f32.mrf.mxu0
  %1817 = vmatprep.mubr.bf16.mxu0 0
  %1818 = vmatmul.mubr.bf16.gmra.mxu0 %v1589
  %v1819 = vpop.f32.mrf.mxu0
  %v1820 = vadd.f32 0.0, %v1819
  %v1821 = vpop.f32.mrf.mxu0
  %v1822 = vpop.f32.mrf.mxu0
  %v1823 = vadd.f32 0.0, %v1822
  %v1824 = vpop.f32.mrf.mxu0
  %1825 = vmatprep.mubr.bf16.mxu0 0
  %1826 = vmatmul.mubr.bf16.gmra.mxu0 %v1592
  %v1827 = vpop.f32.mrf.mxu0
  %v1828 = vadd.f32 0.0, %v1827
  %v1829 = vpop.f32.mrf.mxu0
  %v1830 = vpop.f32.mrf.mxu0
  %v1831 = vadd.f32 0.0, %v1830
  %v1832 = vpop.f32.mrf.mxu0
  %1833 = vmatprep.mubr.bf16.mxu0 0
  %1834 = vmatmul.mubr.bf16.gmra.mxu0 %v1595
  %v1835 = vpop.f32.mrf.mxu0
  %v1836 = vadd.f32 0.0, %v1835
  %v1837 = vpop.f32.mrf.mxu0
  %v1838 = vpop.f32.mrf.mxu0
  %v1839 = vadd.f32 0.0, %v1838
  %v1840 = vpop.f32.mrf.mxu0
  %1841 = vmatprep.mubr.bf16.mxu0 0
  %1842 = vmatmul.mubr.bf16.gmra.mxu0 %v1598
  %v1843 = vpop.f32.mrf.mxu0
  %v1844 = vadd.f32 0.0, %v1843
  %v1845 = vpop.f32.mrf.mxu0
  %v1846 = vpop.f32.mrf.mxu0
  %v1847 = vadd.f32 0.0, %v1846
  %v1848 = vpop.f32.mrf.mxu0
  %1849 = vmatprep.mubr.bf16.mxu0 0
  %1850 = vmatmul.mubr.bf16.gmra.mxu0 %v1601
  %v1851 = vpop.f32.mrf.mxu0
  %v1852 = vadd.f32 0.0, %v1851
  %v1853 = vpop.f32.mrf.mxu0
  %v1854 = vpop.f32.mrf.mxu0
  %v1855 = vadd.f32 0.0, %v1854
  %v1856 = vpop.f32.mrf.mxu0
  %1857 = vmatprep.mubr.bf16.mxu0 0
  %1858 = vmatmul.mubr.bf16.gmra.mxu0 %v1604
  %v1859 = vpop.f32.mrf.mxu0
  %v1860 = vadd.f32 0.0, %v1859
  %v1861 = vpop.f32.mrf.mxu0
  %v1862 = vpop.f32.mrf.mxu0
  %v1863 = vadd.f32 0.0, %v1862
  %v1864 = vpop.f32.mrf.mxu0
  %1865 = vdwg.mxu0
  %v1866 = vadd.f32 %v997, %v1644
  %v1867 = vadd.f32 %v1000, %v1647
  %v1868 = vadd.f32 %v1005, %v1652
  %v1869 = vadd.f32 %v1008, %v1655
  %v1870 = vadd.f32 %v1013, %v1660
  %v1871 = vadd.f32 %v1016, %v1663
  %v1872 = vadd.f32 %v1021, %v1668
  %v1873 = vadd.f32 %v1024, %v1671
  %v1874 = vadd.f32 %v1029, %v1676
  %v1875 = vadd.f32 %v1032, %v1679
  %v1876 = vadd.f32 %v1037, %v1684
  %v1877 = vadd.f32 %v1040, %v1687
  %v1878 = vadd.f32 %v1045, %v1692
  %v1879 = vadd.f32 %v1048, %v1695
  %v1880 = vadd.f32 %v1053, %v1700
  %v1881 = vadd.f32 %v1056, %v1703
  %v1882 = vadd.f32 %v1061, %v1708
  %v1883 = vadd.f32 %v1064, %v1711
  %v1884 = vadd.f32 %v1069, %v1716
  %v1885 = vadd.f32 %v1072, %v1719
  %v1886 = vadd.f32 %v1077, %v1724
  %v1887 = vadd.f32 %v1080, %v1727
  %v1888 = vadd.f32 %v1085, %v1732
  %v1889 = vadd.f32 %v1088, %v1735
  %v1890 = vadd.f32 %v1093, %v1740
  %v1891 = vadd.f32 %v1096, %v1743
  %v1892 = vadd.f32 %v1101, %v1748
  %v1893 = vadd.f32 %v1104, %v1751
  %v1894 = vadd.f32 %v1109, %v1756
  %v1895 = vadd.f32 %v1112, %v1759
  %v1896 = vadd.f32 %v1117, %v1764
  %v1897 = vadd.f32 %v1120, %v1767
  %v1898 = vadd.f32 %v1125, %v1772
  %v1899 = vadd.f32 %v1128, %v1775
  %v1900 = vadd.f32 %v1133, %v1780
  %v1901 = vadd.f32 %v1136, %v1783
  %v1902 = vadd.f32 %v1141, %v1788
  %v1903 = vadd.f32 %v1144, %v1791
  %v1904 = vadd.f32 %v1149, %v1796
  %v1905 = vadd.f32 %v1152, %v1799
  %v1906 = vadd.f32 %v1157, %v1804
  %v1907 = vadd.f32 %v1160, %v1807
  %v1908 = vadd.f32 %v1165, %v1812
  %v1909 = vadd.f32 %v1168, %v1815
  %v1910 = vadd.f32 %v1173, %v1820
  %v1911 = vadd.f32 %v1176, %v1823
  %v1912 = vadd.f32 %v1181, %v1828
  %v1913 = vadd.f32 %v1184, %v1831
  %v1914 = vadd.f32 %v1189, %v1836
  %v1915 = vadd.f32 %v1192, %v1839
  %v1916 = vadd.f32 %v1197, %v1844
  %v1917 = vadd.f32 %v1200, %v1847
  %v1918 = vadd.f32 %v1205, %v1852
  %v1919 = vadd.f32 %v1208, %v1855
  %v1920 = vadd.f32 %v1213, %v1860
  %v1921 = vadd.f32 %v1216, %v1863
  %v1922 = vld [vmem:[%s0 + $0xf0] sm:$0x3]
  %s1923 = scalar_lea.vmem %s1, 132
  %v1924 = vld [vmem:[%s1923] sm:$0xf]
  %v1925 = vld [vmem:[%s1923 + $0x4] sm:$0xf]
  %v1926 = vld [vmem:[%s1923 + $0x8] sm:$0xf]
  %v1927 = vld [vmem:[%s1923 + $0xc] sm:$0xf]
  %v1928 = vld [vmem:[%s1923 + $0x10] sm:$0xf]
  %v1929 = vld [vmem:[%s1923 + $0x14] sm:$0xf]
  %v1930 = vld [vmem:[%s1923 + $0x18] sm:$0xf]
  %v1931 = vld [vmem:[%s1923 + $0x1c] sm:$0xf]
  %v1932 = vld [vmem:[%s1923 + $0x20] sm:$0xf]
  %v1933 = vld [vmem:[%s1923 + $0x24] sm:$0xf]
  %v1934 = vld [vmem:[%s1923 + $0x28] sm:$0x3]
  %v1936 = vunpack.c.l.b16 %v1922
  %v1937 = vpack.c.b16 %v1936, %v1936
  %vm1938 = vsmask.f32 6400
  %v1940 = vshrl.u32 %v1402, 16
  %v1942 = vrot.slane %v1940, 1
  %v1943 = vshll.u32 %v1402, 16
  %v1945 = vrot.slane %v1943, 2
  %v1946 = vor.u32 %v1942, %v1945
  %v1948 = vshrl.u32 %v1403, 16
  %v1950 = vrot.slane %v1948, 1
  %v1951 = vshll.u32 %v1403, 16
  %v1953 = vrot.slane %v1951, 2
  %v1954 = vor.u32 %v1950, %v1953
  %v1955 = vsel %vm1938, %v1946, %v1954
  %v1957 = vshrl.u32 %v1404, 16
  %v1959 = vrot.slane %v1957, 1
  %v1960 = vshll.u32 %v1404, 16
  %v1962 = vrot.slane %v1960, 2
  %v1963 = vor.u32 %v1959, %v1962
  %v1964 = vsel %vm1938, %v1954, %v1963
  %v1966 = vshrl.u32 %v1405, 16
  %v1968 = vrot.slane %v1966, 1
  %v1969 = vshll.u32 %v1405, 16
  %v1971 = vrot.slane %v1969, 2
  %v1972 = vor.u32 %v1968, %v1971
  %v1973 = vsel %vm1938, %v1963, %v1972
  %v1975 = vshrl.u32 %v1406, 16
  %v1977 = vrot.slane %v1975, 1
  %v1978 = vshll.u32 %v1406, 16
  %v1980 = vrot.slane %v1978, 2
  %v1981 = vor.u32 %v1977, %v1980
  %v1982 = vsel %vm1938, %v1972, %v1981
  %v1984 = vshrl.u32 %v1407, 16
  %v1986 = vrot.slane %v1984, 1
  %v1987 = vshll.u32 %v1407, 16
  %v1989 = vrot.slane %v1987, 2
  %v1990 = vor.u32 %v1986, %v1989
  %v1991 = vsel %vm1938, %v1981, %v1990
  %v1993 = vshrl.u32 %v1408, 16
  %v1995 = vrot.slane %v1993, 1
  %v1996 = vshll.u32 %v1408, 16
  %v1998 = vrot.slane %v1996, 2
  %v1999 = vor.u32 %v1995, %v1998
  %v2000 = vsel %vm1938, %v1990, %v1999
  %v2002 = vshrl.u32 %v1409, 16
  %v2004 = vrot.slane %v2002, 1
  %v2005 = vshll.u32 %v1409, 16
  %v2007 = vrot.slane %v2005, 2
  %v2008 = vor.u32 %v2004, %v2007
  %v2009 = vsel %vm1938, %v1999, %v2008
  %v2011 = vshrl.u32 %v1410, 16
  %v2013 = vrot.slane %v2011, 1
  %v2014 = vshll.u32 %v1410, 16
  %v2016 = vrot.slane %v2014, 2
  %v2017 = vor.u32 %v2013, %v2016
  %v2018 = vsel %vm1938, %v2008, %v2017
  %v2020 = vshrl.u32 %v1411, 16
  %v2022 = vrot.slane %v2020, 1
  %v2023 = vshll.u32 %v1411, 16
  %v2025 = vrot.slane %v2023, 2
  %v2026 = vor.u32 %v2022, %v2025
  %v2027 = vsel %vm1938, %v2017, %v2026
  %v2029 = vshrl.u32 %v1412, 16
  %v2031 = vrot.slane %v2029, 1
  %v2032 = vshll.u32 %v1412, 16
  %v2034 = vrot.slane %v2032, 2
  %v2035 = vor.u32 %v2031, %v2034
  %v2036 = vsel %vm1938, %v2026, %v2035
  %v2038 = vshrl.u32 %v1413, 16
  %v2040 = vrot.slane %v2038, 1
  %v2041 = vshll.u32 %v1413, 16
  %v2043 = vrot.slane %v2041, 2
  %v2044 = vor.u32 %v2040, %v2043
  %v2045 = vsel %vm1938, %v2035, %v2044
  %v2047 = vshrl.u32 %v1414, 16
  %v2049 = vrot.slane %v2047, 1
  %v2050 = vshll.u32 %v1414, 16
  %v2052 = vrot.slane %v2050, 2
  %v2053 = vor.u32 %v2049, %v2052
  %v2054 = vsel %vm1938, %v2044, %v2053
  %v2056 = vshrl.u32 %v1415, 16
  %v2058 = vrot.slane %v2056, 1
  %v2059 = vshll.u32 %v1415, 16
  %v2061 = vrot.slane %v2059, 2
  %v2062 = vor.u32 %v2058, %v2061
  %v2063 = vsel %vm1938, %v2053, %v2062
  %v2065 = vshrl.u32 %v1416, 16
  %v2067 = vrot.slane %v2065, 1
  %v2068 = vshll.u32 %v1416, 16
  %v2070 = vrot.slane %v2068, 2
  %v2071 = vor.u32 %v2067, %v2070
  %v2072 = vsel %vm1938, %v2062, %v2071
  %v2074 = vshrl.u32 %v1417, 16
  %v2076 = vrot.slane %v2074, 1
  %v2077 = vshll.u32 %v1417, 16
  %v2079 = vrot.slane %v2077, 2
  %v2080 = vor.u32 %v2076, %v2079
  %v2081 = vsel %vm1938, %v2071, %v2080
  %v2083 = vshrl.u32 %v1418, 16
  %v2085 = vrot.slane %v2083, 1
  %v2086 = vshll.u32 %v1418, 16
  %v2088 = vrot.slane %v2086, 2
  %v2089 = vor.u32 %v2085, %v2088
  %v2090 = vsel %vm1938, %v2080, %v2089
  %v2092 = vshrl.u32 %v1419, 16
  %v2094 = vrot.slane %v2092, 1
  %v2095 = vshll.u32 %v1419, 16
  %v2097 = vrot.slane %v2095, 2
  %v2098 = vor.u32 %v2094, %v2097
  %v2099 = vsel %vm1938, %v2089, %v2098
  %v2101 = vshrl.u32 %v1420, 16
  %v2103 = vrot.slane %v2101, 1
  %v2104 = vshll.u32 %v1420, 16
  %v2106 = vrot.slane %v2104, 2
  %v2107 = vor.u32 %v2103, %v2106
  %v2108 = vsel %vm1938, %v2098, %v2107
  %v2110 = vshrl.u32 %v1421, 16
  %v2112 = vrot.slane %v2110, 1
  %v2113 = vshll.u32 %v1421, 16
  %v2115 = vrot.slane %v2113, 2
  %v2116 = vor.u32 %v2112, %v2115
  %v2117 = vsel %vm1938, %v2107, %v2116
  %v2119 = vshrl.u32 %v1422, 16
  %v2121 = vrot.slane %v2119, 1
  %v2122 = vshll.u32 %v1422, 16
  %v2124 = vrot.slane %v2122, 2
  %v2125 = vor.u32 %v2121, %v2124
  %v2126 = vsel %vm1938, %v2116, %v2125
  %v2128 = vshrl.u32 %v1423, 16
  %v2130 = vrot.slane %v2128, 1
  %v2131 = vshll.u32 %v1423, 16
  %v2133 = vrot.slane %v2131, 2
  %v2134 = vor.u32 %v2130, %v2133
  %v2135 = vsel %vm1938, %v2125, %v2134
  %v2137 = vshrl.u32 %v1424, 16
  %v2139 = vrot.slane %v2137, 1
  %v2140 = vshll.u32 %v1424, 16
  %v2142 = vrot.slane %v2140, 2
  %v2143 = vor.u32 %v2139, %v2142
  %v2144 = vsel %vm1938, %v2134, %v2143
  %v2146 = vshrl.u32 %v1425, 16
  %v2148 = vrot.slane %v2146, 1
  %v2149 = vshll.u32 %v1425, 16
  %v2151 = vrot.slane %v2149, 2
  %v2152 = vor.u32 %v2148, %v2151
  %v2153 = vsel %vm1938, %v2143, %v2152
  %v2155 = vshrl.u32 %v1426, 16
  %v2157 = vrot.slane %v2155, 1
  %v2158 = vshll.u32 %v1426, 16
  %v2160 = vrot.slane %v2158, 2
  %v2161 = vor.u32 %v2157, %v2160
  %v2162 = vsel %vm1938, %v2152, %v2161
  %v2164 = vshrl.u32 %v1427, 16
  %v2166 = vrot.slane %v2164, 1
  %v2167 = vshll.u32 %v1427, 16
  %v2169 = vrot.slane %v2167, 2
  %v2170 = vor.u32 %v2166, %v2169
  %v2171 = vsel %vm1938, %v2161, %v2170
  %v2173 = vshrl.u32 %v1428, 16
  %v2175 = vrot.slane %v2173, 1
  %v2176 = vshll.u32 %v1428, 16
  %v2178 = vrot.slane %v2176, 2
  %v2179 = vor.u32 %v2175, %v2178
  %v2180 = vsel %vm1938, %v2170, %v2179
  %v2182 = vshrl.u32 %v1429, 16
  %v2184 = vrot.slane %v2182, 1
  %v2185 = vshll.u32 %v1429, 16
  %v2187 = vrot.slane %v2185, 2
  %v2188 = vor.u32 %v2184, %v2187
  %v2189 = vsel %vm1938, %v2179, %v2188
  %v2191 = vshrl.u32 %v1937, 16
  %v2193 = vrot.slane %v2191, 1
  %v2194 = vshll.u32 %v1937, 16
  %v2196 = vrot.slane %v2194, 2
  %v2197 = vor.u32 %v2193, %v2196
  %v2198 = vsel %vm1938, %v2188, %v2197
  %v2210 = vunpack.c.l.b16 %v1924
  %v2211 = vunpack.c.l.b16 %v1925
  %v2212 = vunpack.c.l.b16 %v1926
  %v2213 = vunpack.c.l.b16 %v1927
  %v2214 = vunpack.c.l.b16 %v1928
  %v2215 = vunpack.c.l.b16 %v1929
  %v2216 = vunpack.c.l.b16 %v1930
  %v2217 = vunpack.c.l.b16 %v1931
  %v2218 = vunpack.c.l.b16 %v1932
  %v2219 = vunpack.c.l.b16 %v1933
  %v2220 = vunpack.c.l.b16 %v1934
  %v2221 = vpack.c.b16 %v2211, %v2210
  %v2222 = vpack.c.b16 %v2213, %v2212
  %v2223 = vpack.c.b16 %v2215, %v2214
  %v2224 = vpack.c.b16 %v2217, %v2216
  %v2225 = vpack.c.b16 %v2219, %v2218
  %v2226 = vpack.c.b16 %v2220, %v2220
  %v2233 = vsel %vm524, %v1955, 0
  %v2236 = vsel %vm524, %v1964, 0
  %v2239 = vsel %vm524, %v1973, 0
  %v2242 = vsel %vm524, %v1982, 0
  %v2245 = vsel %vm524, %v1991, 0
  %v2248 = vsel %vm524, %v2000, 0
  %v2251 = vsel %vm524, %v2009, 0
  %v2254 = vsel %vm524, %v2018, 0
  %v2257 = vsel %vm524, %v2027, 0
  %v2260 = vsel %vm524, %v2036, 0
  %v2263 = vsel %vm524, %v2045, 0
  %v2266 = vsel %vm524, %v2054, 0
  %v2269 = vsel %vm524, %v2063, 0
  %v2272 = vsel %vm524, %v2072, 0
  %v2275 = vsel %vm524, %v2081, 0
  %v2278 = vsel %vm524, %v2090, 0
  %v2281 = vsel %vm524, %v2099, 0
  %v2284 = vsel %vm524, %v2108, 0
  %v2287 = vsel %vm524, %v2117, 0
  %v2290 = vsel %vm524, %v2126, 0
  %v2293 = vsel %vm524, %v2135, 0
  %v2296 = vsel %vm524, %v2144, 0
  %v2299 = vsel %vm524, %v2153, 0
  %v2302 = vsel %vm524, %v2162, 0
  %v2305 = vsel %vm524, %v2171, 0
  %v2308 = vsel %vm524, %v2180, 0
  %v2311 = vsel %vm524, %v2189, 0
  %v2314 = vsel %vm524, %v2198, 0
  %v2317 = vsel %vm609, %v2226, 0
  %2319 = vmatprep.subr.bf16.mxu0 0
  %2320 = vmatpush1.bf16.msra.mxu0 0
  %2321 = vmatprep.subr.bf16.mxu0 0
  %2322 = vmatpush1.bf16.msra.mxu0 0
  %2323 = vmatprep.subr.bf16.mxu0 0
  %2324 = vmatpush1.bf16.msra.mxu0 %v2317
  %2325 = vmatprep.subr.bf16.mxu0 0
  %2326 = vmatpush1.bf16.msra.mxu0 %v2225
  %2327 = vmatprep.subr.bf16.mxu0 0
  %2328 = vmatpush1.bf16.msra.mxu0 %v2224
  %2329 = vmatprep.subr.bf16.mxu0 0
  %2330 = vmatpush1.bf16.msra.mxu0 %v2223
  %2331 = vmatprep.subr.bf16.mxu0 0
  %2332 = vmatpush1.bf16.msra.mxu0 %v2222
  %2333 = vmatprep.subr.bf16.mxu0 0
  %2334 = vmatpush1.bf16.msra.mxu0 %v2221
  %2335 = vmatprep.subr.bf16.mxu0 0
  %2336 = vmatpush2.bf16.msra.mxu0 0
  %2337 = vmatprep.subr.bf16.mxu0 0
  %2338 = vmatpush2.bf16.msra.mxu0 0
  %2339 = vmatprep.subr.bf16.mxu0 0
  %2340 = vmatpush2.bf16.msra.mxu0 0
  %2341 = vmatprep.subr.bf16.mxu0 0
  %2342 = vmatpush2.bf16.msra.mxu0 0
  %2343 = vmatprep.subr.bf16.mxu0 0
  %2344 = vmatpush2.bf16.msra.mxu0 0
  %2345 = vmatprep.subr.bf16.mxu0 0
  %2346 = vmatpush2.bf16.msra.mxu0 0
  %2347 = vmatprep.subr.bf16.mxu0 0
  %2348 = vmatpush2.bf16.msra.mxu0 0
  %2349 = vmatprep.subr.bf16.mxu0 0
  %2350 = vmatpush2.bf16.msra.mxu0 0
  %2351 = vmatprep.mubr.bf16.mxu0 0
  %2352 = vmatmul.mubr.bf16.gmra.mxu0 %v2233
  %v2353 = vpop.f32.mrf.mxu0
  %v2354 = vadd.f32 0.0, %v2353
  %v2355 = vpop.f32.mrf.mxu0
  %v2356 = vpop.f32.mrf.mxu0
  %v2357 = vadd.f32 0.0, %v2356
  %v2358 = vpop.f32.mrf.mxu0
  %2359 = vmatprep.mubr.bf16.mxu0 0
  %2360 = vmatmul.mubr.bf16.gmra.mxu0 %v2236
  %v2361 = vpop.f32.mrf.mxu0
  %v2362 = vadd.f32 0.0, %v2361
  %v2363 = vpop.f32.mrf.mxu0
  %v2364 = vpop.f32.mrf.mxu0
  %v2365 = vadd.f32 0.0, %v2364
  %v2366 = vpop.f32.mrf.mxu0
  %2367 = vmatprep.mubr.bf16.mxu0 0
  %2368 = vmatmul.mubr.bf16.gmra.mxu0 %v2239
  %v2369 = vpop.f32.mrf.mxu0
  %v2370 = vadd.f32 0.0, %v2369
  %v2371 = vpop.f32.mrf.mxu0
  %v2372 = vpop.f32.mrf.mxu0
  %v2373 = vadd.f32 0.0, %v2372
  %v2374 = vpop.f32.mrf.mxu0
  %2375 = vmatprep.mubr.bf16.mxu0 0
  %2376 = vmatmul.mubr.bf16.gmra.mxu0 %v2242
  %v2377 = vpop.f32.mrf.mxu0
  %v2378 = vadd.f32 0.0, %v2377
  %v2379 = vpop.f32.mrf.mxu0
  %v2380 = vpop.f32.mrf.mxu0
  %v2381 = vadd.f32 0.0, %v2380
  %v2382 = vpop.f32.mrf.mxu0
  %2383 = vmatprep.mubr.bf16.mxu0 0
  %2384 = vmatmul.mubr.bf16.gmra.mxu0 %v2245
  %v2385 = vpop.f32.mrf.mxu0
  %v2386 = vadd.f32 0.0, %v2385
  %v2387 = vpop.f32.mrf.mxu0
  %v2388 = vpop.f32.mrf.mxu0
  %v2389 = vadd.f32 0.0, %v2388
  %v2390 = vpop.f32.mrf.mxu0
  %2391 = vmatprep.mubr.bf16.mxu0 0
  %2392 = vmatmul.mubr.bf16.gmra.mxu0 %v2248
  %v2393 = vpop.f32.mrf.mxu0
  %v2394 = vadd.f32 0.0, %v2393
  %v2395 = vpop.f32.mrf.mxu0
  %v2396 = vpop.f32.mrf.mxu0
  %v2397 = vadd.f32 0.0, %v2396
  %v2398 = vpop.f32.mrf.mxu0
  %2399 = vmatprep.mubr.bf16.mxu0 0
  %2400 = vmatmul.mubr.bf16.gmra.mxu0 %v2251
  %v2401 = vpop.f32.mrf.mxu0
  %v2402 = vadd.f32 0.0, %v2401
  %v2403 = vpop.f32.mrf.mxu0
  %v2404 = vpop.f32.mrf.mxu0
  %v2405 = vadd.f32 0.0, %v2404
  %v2406 = vpop.f32.mrf.mxu0
  %2407 = vmatprep.mubr.bf16.mxu0 0
  %2408 = vmatmul.mubr.bf16.gmra.mxu0 %v2254
  %v2409 = vpop.f32.mrf.mxu0
  %v2410 = vadd.f32 0.0, %v2409
  %v2411 = vpop.f32.mrf.mxu0
  %v2412 = vpop.f32.mrf.mxu0
  %v2413 = vadd.f32 0.0, %v2412
  %v2414 = vpop.f32.mrf.mxu0
  %2415 = vmatprep.mubr.bf16.mxu0 0
  %2416 = vmatmul.mubr.bf16.gmra.mxu0 %v2257
  %v2417 = vpop.f32.mrf.mxu0
  %v2418 = vadd.f32 0.0, %v2417
  %v2419 = vpop.f32.mrf.mxu0
  %v2420 = vpop.f32.mrf.mxu0
  %v2421 = vadd.f32 0.0, %v2420
  %v2422 = vpop.f32.mrf.mxu0
  %2423 = vmatprep.mubr.bf16.mxu0 0
  %2424 = vmatmul.mubr.bf16.gmra.mxu0 %v2260
  %v2425 = vpop.f32.mrf.mxu0
  %v2426 = vadd.f32 0.0, %v2425
  %v2427 = vpop.f32.mrf.mxu0
  %v2428 = vpop.f32.mrf.mxu0
  %v2429 = vadd.f32 0.0, %v2428
  %v2430 = vpop.f32.mrf.mxu0
  %2431 = vmatprep.mubr.bf16.mxu0 0
  %2432 = vmatmul.mubr.bf16.gmra.mxu0 %v2263
  %v2433 = vpop.f32.mrf.mxu0
  %v2434 = vadd.f32 0.0, %v2433
  %v2435 = vpop.f32.mrf.mxu0
  %v2436 = vpop.f32.mrf.mxu0
  %v2437 = vadd.f32 0.0, %v2436
  %v2438 = vpop.f32.mrf.mxu0
  %2439 = vmatprep.mubr.bf16.mxu0 0
  %2440 = vmatmul.mubr.bf16.gmra.mxu0 %v2266
  %v2441 = vpop.f32.mrf.mxu0
  %v2442 = vadd.f32 0.0, %v2441
  %v2443 = vpop.f32.mrf.mxu0
  %v2444 = vpop.f32.mrf.mxu0
  %v2445 = vadd.f32 0.0, %v2444
  %v2446 = vpop.f32.mrf.mxu0
  %2447 = vmatprep.mubr.bf16.mxu0 0
  %2448 = vmatmul.mubr.bf16.gmra.mxu0 %v2269
  %v2449 = vpop.f32.mrf.mxu0
  %v2450 = vadd.f32 0.0, %v2449
  %v2451 = vpop.f32.mrf.mxu0
  %v2452 = vpop.f32.mrf.mxu0
  %v2453 = vadd.f32 0.0, %v2452
  %v2454 = vpop.f32.mrf.mxu0
  %2455 = vmatprep.mubr.bf16.mxu0 0
  %2456 = vmatmul.mubr.bf16.gmra.mxu0 %v2272
  %v2457 = vpop.f32.mrf.mxu0
  %v2458 = vadd.f32 0.0, %v2457
  %v2459 = vpop.f32.mrf.mxu0
  %v2460 = vpop.f32.mrf.mxu0
  %v2461 = vadd.f32 0.0, %v2460
  %v2462 = vpop.f32.mrf.mxu0
  %2463 = vmatprep.mubr.bf16.mxu0 0
  %2464 = vmatmul.mubr.bf16.gmra.mxu0 %v2275
  %v2465 = vpop.f32.mrf.mxu0
  %v2466 = vadd.f32 0.0, %v2465
  %v2467 = vpop.f32.mrf.mxu0
  %v2468 = vpop.f32.mrf.mxu0
  %v2469 = vadd.f32 0.0, %v2468
  %v2470 = vpop.f32.mrf.mxu0
  %2471 = vmatprep.mubr.bf16.mxu0 0
  %2472 = vmatmul.mubr.bf16.gmra.mxu0 %v2278
  %v2473 = vpop.f32.mrf.mxu0
  %v2474 = vadd.f32 0.0, %v2473
  %v2475 = vpop.f32.mrf.mxu0
  %v2476 = vpop.f32.mrf.mxu0
  %v2477 = vadd.f32 0.0, %v2476
  %v2478 = vpop.f32.mrf.mxu0
  %2479 = vmatprep.mubr.bf16.mxu0 0
  %2480 = vmatmul.mubr.bf16.gmra.mxu0 %v2281
  %v2481 = vpop.f32.mrf.mxu0
  %v2482 = vadd.f32 0.0, %v2481
  %v2483 = vpop.f32.mrf.mxu0
  %v2484 = vpop.f32.mrf.mxu0
  %v2485 = vadd.f32 0.0, %v2484
  %v2486 = vpop.f32.mrf.mxu0
  %2487 = vmatprep.mubr.bf16.mxu0 0
  %2488 = vmatmul.mubr.bf16.gmra.mxu0 %v2284
  %v2489 = vpop.f32.mrf.mxu0
  %v2490 = vadd.f32 0.0, %v2489
  %v2491 = vpop.f32.mrf.mxu0
  %v2492 = vpop.f32.mrf.mxu0
  %v2493 = vadd.f32 0.0, %v2492
  %v2494 = vpop.f32.mrf.mxu0
  %2495 = vmatprep.mubr.bf16.mxu0 0
  %2496 = vmatmul.mubr.bf16.gmra.mxu0 %v2287
  %v2497 = vpop.f32.mrf.mxu0
  %v2498 = vadd.f32 0.0, %v2497
  %v2499 = vpop.f32.mrf.mxu0
  %v2500 = vpop.f32.mrf.mxu0
  %v2501 = vadd.f32 0.0, %v2500
  %v2502 = vpop.f32.mrf.mxu0
  %2503 = vmatprep.mubr.bf16.mxu0 0
  %2504 = vmatmul.mubr.bf16.gmra.mxu0 %v2290
  %v2505 = vpop.f32.mrf.mxu0
  %v2506 = vadd.f32 0.0, %v2505
  %v2507 = vpop.f32.mrf.mxu0
  %v2508 = vpop.f32.mrf.mxu0
  %v2509 = vadd.f32 0.0, %v2508
  %v2510 = vpop.f32.mrf.mxu0
  %2511 = vmatprep.mubr.bf16.mxu0 0
  %2512 = vmatmul.mubr.bf16.gmra.mxu0 %v2293
  %v2513 = vpop.f32.mrf.mxu0
  %v2514 = vadd.f32 0.0, %v2513
  %v2515 = vpop.f32.mrf.mxu0
  %v2516 = vpop.f32.mrf.mxu0
  %v2517 = vadd.f32 0.0, %v2516
  %v2518 = vpop.f32.mrf.mxu0
  %2519 = vmatprep.mubr.bf16.mxu0 0
  %2520 = vmatmul.mubr.bf16.gmra.mxu0 %v2296
  %v2521 = vpop.f32.mrf.mxu0
  %v2522 = vadd.f32 0.0, %v2521
  %v2523 = vpop.f32.mrf.mxu0
  %v2524 = vpop.f32.mrf.mxu0
  %v2525 = vadd.f32 0.0, %v2524
  %v2526 = vpop.f32.mrf.mxu0
  %2527 = vmatprep.mubr.bf16.mxu0 0
  %2528 = vmatmul.mubr.bf16.gmra.mxu0 %v2299
  %v2529 = vpop.f32.mrf.mxu0
  %v2530 = vadd.f32 0.0, %v2529
  %v2531 = vpop.f32.mrf.mxu0
  %v2532 = vpop.f32.mrf.mxu0
  %v2533 = vadd.f32 0.0, %v2532
  %v2534 = vpop.f32.mrf.mxu0
  %2535 = vmatprep.mubr.bf16.mxu0 0
  %2536 = vmatmul.mubr.bf16.gmra.mxu0 %v2302
  %v2537 = vpop.f32.mrf.mxu0
  %v2538 = vadd.f32 0.0, %v2537
  %v2539 = vpop.f32.mrf.mxu0
  %v2540 = vpop.f32.mrf.mxu0
  %v2541 = vadd.f32 0.0, %v2540
  %v2542 = vpop.f32.mrf.mxu0
  %2543 = vmatprep.mubr.bf16.mxu0 0
  %2544 = vmatmul.mubr.bf16.gmra.mxu0 %v2305
  %v2545 = vpop.f32.mrf.mxu0
  %v2546 = vadd.f32 0.0, %v2545
  %v2547 = vpop.f32.mrf.mxu0
  %v2548 = vpop.f32.mrf.mxu0
  %v2549 = vadd.f32 0.0, %v2548
  %v2550 = vpop.f32.mrf.mxu0
  %2551 = vmatprep.mubr.bf16.mxu0 0
  %2552 = vmatmul.mubr.bf16.gmra.mxu0 %v2308
  %v2553 = vpop.f32.mrf.mxu0
  %v2554 = vadd.f32 0.0, %v2553
  %v2555 = vpop.f32.mrf.mxu0
  %v2556 = vpop.f32.mrf.mxu0
  %v2557 = vadd.f32 0.0, %v2556
  %v2558 = vpop.f32.mrf.mxu0
  %2559 = vmatprep.mubr.bf16.mxu0 0
  %2560 = vmatmul.mubr.bf16.gmra.mxu0 %v2311
  %v2561 = vpop.f32.mrf.mxu0
  %v2562 = vadd.f32 0.0, %v2561
  %v2563 = vpop.f32.mrf.mxu0
  %v2564 = vpop.f32.mrf.mxu0
  %v2565 = vadd.f32 0.0, %v2564
  %v2566 = vpop.f32.mrf.mxu0
  %2567 = vmatprep.mubr.bf16.mxu0 0
  %2568 = vmatmul.mubr.bf16.gmra.mxu0 %v2314
  %v2569 = vpop.f32.mrf.mxu0
  %v2570 = vadd.f32 0.0, %v2569
  %v2571 = vpop.f32.mrf.mxu0
  %v2572 = vpop.f32.mrf.mxu0
  %v2573 = vadd.f32 0.0, %v2572
  %v2574 = vpop.f32.mrf.mxu0
  %2575 = vdwg.mxu0
  %v2576 = vadd.f32 %v1866, %v2354
  %v2577 = vadd.f32 %v1867, %v2357
  %v2578 = vadd.f32 %v1868, %v2362
  %v2579 = vadd.f32 %v1869, %v2365
  %v2580 = vadd.f32 %v1870, %v2370
  %v2581 = vadd.f32 %v1871, %v2373
  %v2582 = vadd.f32 %v1872, %v2378
  %v2583 = vadd.f32 %v1873, %v2381
  %v2584 = vadd.f32 %v1874, %v2386
  %v2585 = vadd.f32 %v1875, %v2389
  %v2586 = vadd.f32 %v1876, %v2394
  %v2587 = vadd.f32 %v1877, %v2397
  %v2588 = vadd.f32 %v1878, %v2402
  %v2589 = vadd.f32 %v1879, %v2405
  %v2590 = vadd.f32 %v1880, %v2410
  %v2591 = vadd.f32 %v1881, %v2413
  %v2592 = vadd.f32 %v1882, %v2418
  %v2593 = vadd.f32 %v1883, %v2421
  %v2594 = vadd.f32 %v1884, %v2426
  %v2595 = vadd.f32 %v1885, %v2429
  %v2596 = vadd.f32 %v1886, %v2434
  %v2597 = vadd.f32 %v1887, %v2437
  %v2598 = vadd.f32 %v1888, %v2442
  %v2599 = vadd.f32 %v1889, %v2445
  %v2600 = vadd.f32 %v1890, %v2450
  %v2601 = vadd.f32 %v1891, %v2453
  %v2602 = vadd.f32 %v1892, %v2458
  %v2603 = vadd.f32 %v1893, %v2461
  %v2604 = vadd.f32 %v1894, %v2466
  %v2605 = vadd.f32 %v1895, %v2469
  %v2606 = vadd.f32 %v1896, %v2474
  %v2607 = vadd.f32 %v1897, %v2477
  %v2608 = vadd.f32 %v1898, %v2482
  %v2609 = vadd.f32 %v1899, %v2485
  %v2610 = vadd.f32 %v1900, %v2490
  %v2611 = vadd.f32 %v1901, %v2493
  %v2612 = vadd.f32 %v1902, %v2498
  %v2613 = vadd.f32 %v1903, %v2501
  %v2614 = vadd.f32 %v1904, %v2506
  %v2615 = vadd.f32 %v1905, %v2509
  %v2616 = vadd.f32 %v1906, %v2514
  %v2617 = vadd.f32 %v1907, %v2517
  %v2618 = vadd.f32 %v1908, %v2522
  %v2619 = vadd.f32 %v1909, %v2525
  %v2620 = vadd.f32 %v1910, %v2530
  %v2621 = vadd.f32 %v1911, %v2533
  %v2622 = vadd.f32 %v1912, %v2538
  %v2623 = vadd.f32 %v1913, %v2541
  %v2624 = vadd.f32 %v1914, %v2546
  %v2625 = vadd.f32 %v1915, %v2549
  %v2626 = vadd.f32 %v1916, %v2554
  %v2627 = vadd.f32 %v1917, %v2557
  %v2628 = vadd.f32 %v1918, %v2562
  %v2629 = vadd.f32 %v1919, %v2565
  %v2630 = vadd.f32 %v1920, %v2570
  %v2631 = vadd.f32 %v1921, %v2573
  %v2632 = vld [vmem:[%s9] sm:$0xff]
  %v2633 = vld [vmem:[%s9 + $0x8] sm:$0xff]
  %v2634 = vld [vmem:[%s9 + $0x10] sm:$0xff]
  %v2635 = vld [vmem:[%s9 + $0x18] sm:$0xff]
  %v2636 = vld [vmem:[%s9 + $0x20] sm:$0xff]
  %v2637 = vld [vmem:[%s9 + $0x28] sm:$0xff]
  %v2638 = vld [vmem:[%s9 + $0x30] sm:$0xff]
  %v2639 = vld [vmem:[%s9 + $0x38] sm:$0xff]
  %v2640 = vld [vmem:[%s9 + $0x40] sm:$0xff]
  %v2641 = vld [vmem:[%s9 + $0x48] sm:$0xff]
  %v2642 = vld [vmem:[%s9 + $0x50] sm:$0xff]
  %v2643 = vld [vmem:[%s9 + $0x58] sm:$0xff]
  %v2644 = vld [vmem:[%s9 + $0x60] sm:$0xff]
  %v2645 = vld [vmem:[%s9 + $0x68] sm:$0xff]
  %v2646 = vld [vmem:[%s9 + $0x70] sm:$0xff]
  %v2647 = vld [vmem:[%s9 + $0x78] sm:$0xff]
  %v2648 = vld [vmem:[%s9 + $0x80] sm:$0xff]
  %v2649 = vld [vmem:[%s9 + $0x88] sm:$0xff]
  %v2650 = vld [vmem:[%s9 + $0x90] sm:$0xff]
  %v2651 = vld [vmem:[%s9 + $0x98] sm:$0xff]
  %v2652 = vld [vmem:[%s9 + $0xa0] sm:$0xff]
  %v2653 = vld [vmem:[%s9 + $0xa8] sm:$0xff]
  %v2654 = vld [vmem:[%s9 + $0xb0] sm:$0xff]
  %v2655 = vld [vmem:[%s9 + $0xb8] sm:$0xff]
  %v2656 = vld [vmem:[%s9 + $0xc0] sm:$0xff]
  %v2657 = vld [vmem:[%s9 + $0xc8] sm:$0xff]
  %v2658 = vld [vmem:[%s9 + $0xd0] sm:$0xff]
  %v2659 = vld [vmem:[%s9 + $0xd8] sm:$0xff]
  %v2660 = vld [vmem:[%s9 + $0xe0] sm:$0xff]
  %v2661 = vld [vmem:[%s9 + $0xe8] sm:$0xff]
  %v2662 = vld [vmem:[%s9 + $0xf0] sm:$0xff]
  %v2663 = vld [vmem:[%s9 + $0xf8] sm:$0xff]
  %v2664 = vld [vmem:[%s9 + $0x100] sm:$0xff]
  %v2665 = vld [vmem:[%s9 + $0x108] sm:$0xff]
  %v2666 = vld [vmem:[%s9 + $0x110] sm:$0xff]
  %v2667 = vld [vmem:[%s9 + $0x118] sm:$0xff]
  %v2668 = vld [vmem:[%s9 + $0x120] sm:$0xff]
  %v2669 = vld [vmem:[%s9 + $0x128] sm:$0xff]
  %v2670 = vld [vmem:[%s9 + $0x130] sm:$0xff]
  %v2671 = vld [vmem:[%s9 + $0x138] sm:$0xff]
  %v2672 = vld [vmem:[%s9 + $0x140] sm:$0xff]
  %v2673 = vld [vmem:[%s9 + $0x148] sm:$0xff]
  %v2674 = vld [vmem:[%s9 + $0x150] sm:$0xff]
  %v2675 = vld [vmem:[%s9 + $0x158] sm:$0xff]
  %v2676 = vld [vmem:[%s9 + $0x160] sm:$0xff]
  %v2677 = vld [vmem:[%s9 + $0x168] sm:$0xff]
  %v2678 = vld [vmem:[%s9 + $0x170] sm:$0xff]
  %v2679 = vld [vmem:[%s9 + $0x178] sm:$0xff]
  %v2680 = vld [vmem:[%s9 + $0x180] sm:$0xff]
  %v2681 = vld [vmem:[%s9 + $0x188] sm:$0xff]
  %v2682 = vld [vmem:[%s9 + $0x190] sm:$0xff]
  %v2683 = vld [vmem:[%s9 + $0x198] sm:$0xff]
  %v2684 = vld [vmem:[%s9 + $0x1a0] sm:$0xff]
  %v2685 = vld [vmem:[%s9 + $0x1a8] sm:$0xff]
  %v2686 = vld [vmem:[%s9 + $0x1b0] sm:$0xff]
  %v2687 = vld [vmem:[%s9 + $0x1b8] sm:$0xff]
  %v2688 = vld [vmem:[%s2] sm:$0x1]
  %v2689 = vlaneseq
  %v2690 = vshrl.u32 %v2689, 7
  %v2691 = vsub.s32 0, %v2690
  %v2692 = vrot.slane %v2688, %v2691
  %v2693 = vadd.f32 %v2576, %v2692
  %v2694 = vadd.f32 %v2577, %v2692
  %v2695 = vadd.f32 %v2578, %v2692
  %v2696 = vadd.f32 %v2579, %v2692
  %v2697 = vadd.f32 %v2580, %v2692
  %v2698 = vadd.f32 %v2581, %v2692
  %v2699 = vadd.f32 %v2582, %v2692
  %v2700 = vadd.f32 %v2583, %v2692
  %v2701 = vadd.f32 %v2584, %v2692
  %v2702 = vadd.f32 %v2585, %v2692
  %v2703 = vadd.f32 %v2586, %v2692
  %v2704 = vadd.f32 %v2587, %v2692
  %v2705 = vadd.f32 %v2588, %v2692
  %v2706 = vadd.f32 %v2589, %v2692
  %v2707 = vadd.f32 %v2590, %v2692
  %v2708 = vadd.f32 %v2591, %v2692
  %v2709 = vadd.f32 %v2592, %v2692
  %v2710 = vadd.f32 %v2593, %v2692
  %v2711 = vadd.f32 %v2594, %v2692
  %v2712 = vadd.f32 %v2595, %v2692
  %v2713 = vadd.f32 %v2596, %v2692
  %v2714 = vadd.f32 %v2597, %v2692
  %v2715 = vadd.f32 %v2598, %v2692
  %v2716 = vadd.f32 %v2599, %v2692
  %v2717 = vadd.f32 %v2600, %v2692
  %v2718 = vadd.f32 %v2601, %v2692
  %v2719 = vadd.f32 %v2602, %v2692
  %v2720 = vadd.f32 %v2603, %v2692
  %v2721 = vadd.f32 %v2604, %v2692
  %v2722 = vadd.f32 %v2605, %v2692
  %v2723 = vadd.f32 %v2606, %v2692
  %v2724 = vadd.f32 %v2607, %v2692
  %v2725 = vadd.f32 %v2608, %v2692
  %v2726 = vadd.f32 %v2609, %v2692
  %v2727 = vadd.f32 %v2610, %v2692
  %v2728 = vadd.f32 %v2611, %v2692
  %v2729 = vadd.f32 %v2612, %v2692
  %v2730 = vadd.f32 %v2613, %v2692
  %v2731 = vadd.f32 %v2614, %v2692
  %v2732 = vadd.f32 %v2615, %v2692
  %v2733 = vadd.f32 %v2616, %v2692
  %v2734 = vadd.f32 %v2617, %v2692
  %v2735 = vadd.f32 %v2618, %v2692
  %v2736 = vadd.f32 %v2619, %v2692
  %v2737 = vadd.f32 %v2620, %v2692
  %v2738 = vadd.f32 %v2621, %v2692
  %v2739 = vadd.f32 %v2622, %v2692
  %v2740 = vadd.f32 %v2623, %v2692
  %v2741 = vadd.f32 %v2624, %v2692
  %v2742 = vadd.f32 %v2625, %v2692
  %v2743 = vadd.f32 %v2626, %v2692
  %v2744 = vadd.f32 %v2627, %v2692
  %v2745 = vadd.f32 %v2628, %v2692
  %v2746 = vadd.f32 %v2629, %v2692
  %v2747 = vadd.f32 %v2630, %v2692
  %v2748 = vadd.f32 %v2631, %v2692
  %v2749 = vmax.f32 %v2693, 0.0
  %v2750 = vmax.f32 %v2694, 0.0
  %v2751 = vmax.f32 %v2695, 0.0
  %v2752 = vmax.f32 %v2696, 0.0
  %v2753 = vmax.f32 %v2697, 0.0
  %v2754 = vmax.f32 %v2698, 0.0
  %v2755 = vmax.f32 %v2699, 0.0
  %v2756 = vmax.f32 %v2700, 0.0
  %v2757 = vmax.f32 %v2701, 0.0
  %v2758 = vmax.f32 %v2702, 0.0
  %v2759 = vmax.f32 %v2703, 0.0
  %v2760 = vmax.f32 %v2704, 0.0
  %v2761 = vmax.f32 %v2705, 0.0
  %v2762 = vmax.f32 %v2706, 0.0
  %v2763 = vmax.f32 %v2707, 0.0
  %v2764 = vmax.f32 %v2708, 0.0
  %v2765 = vmax.f32 %v2709, 0.0
  %v2766 = vmax.f32 %v2710, 0.0
  %v2767 = vmax.f32 %v2711, 0.0
  %v2768 = vmax.f32 %v2712, 0.0
  %v2769 = vmax.f32 %v2713, 0.0
  %v2770 = vmax.f32 %v2714, 0.0
  %v2771 = vmax.f32 %v2715, 0.0
  %v2772 = vmax.f32 %v2716, 0.0
  %v2773 = vmax.f32 %v2717, 0.0
  %v2774 = vmax.f32 %v2718, 0.0
  %v2775 = vmax.f32 %v2719, 0.0
  %v2776 = vmax.f32 %v2720, 0.0
  %v2777 = vmax.f32 %v2721, 0.0
  %v2778 = vmax.f32 %v2722, 0.0
  %v2779 = vmax.f32 %v2723, 0.0
  %v2780 = vmax.f32 %v2724, 0.0
  %v2781 = vmax.f32 %v2725, 0.0
  %v2782 = vmax.f32 %v2726, 0.0
  %v2783 = vmax.f32 %v2727, 0.0
  %v2784 = vmax.f32 %v2728, 0.0
  %v2785 = vmax.f32 %v2729, 0.0
  %v2786 = vmax.f32 %v2730, 0.0
  %v2787 = vmax.f32 %v2731, 0.0
  %v2788 = vmax.f32 %v2732, 0.0
  %v2789 = vmax.f32 %v2733, 0.0
  %v2790 = vmax.f32 %v2734, 0.0
  %v2791 = vmax.f32 %v2735, 0.0
  %v2792 = vmax.f32 %v2736, 0.0
  %v2793 = vmax.f32 %v2737, 0.0
  %v2794 = vmax.f32 %v2738, 0.0
  %v2795 = vmax.f32 %v2739, 0.0
  %v2796 = vmax.f32 %v2740, 0.0
  %v2797 = vmax.f32 %v2741, 0.0
  %v2798 = vmax.f32 %v2742, 0.0
  %v2799 = vmax.f32 %v2743, 0.0
  %v2800 = vmax.f32 %v2744, 0.0
  %v2801 = vmax.f32 %v2745, 0.0
  %v2802 = vmax.f32 %v2746, 0.0
  %v2803 = vmax.f32 %v2747, 0.0
  %v2804 = vmax.f32 %v2748, 0.0
  %2806 = vset.pattern.permute.xlu0 0
  %2807 = vperm.xlu0 %2806, %v2632
  %v2808 = vpop.permute.xlu0 %2807
  %2811 = vset.pattern.permute.xlu0 0
  %2812 = vperm.xlu0 %2811, %v2633
  %v2813 = vpop.permute.xlu0 %2812
  %2816 = vset.pattern.permute.xlu0 0
  %2817 = vperm.xlu0 %2816, %v2634
  %v2818 = vpop.permute.xlu0 %2817
  %2821 = vset.pattern.permute.xlu0 0
  %2822 = vperm.xlu0 %2821, %v2635
  %v2823 = vpop.permute.xlu0 %2822
  %2826 = vset.pattern.permute.xlu0 0
  %2827 = vperm.xlu0 %2826, %v2636
  %v2828 = vpop.permute.xlu0 %2827
  %2831 = vset.pattern.permute.xlu0 0
  %2832 = vperm.xlu0 %2831, %v2637
  %v2833 = vpop.permute.xlu0 %2832
  %2836 = vset.pattern.permute.xlu0 0
  %2837 = vperm.xlu0 %2836, %v2638
  %v2838 = vpop.permute.xlu0 %2837
  %2841 = vset.pattern.permute.xlu0 0
  %2842 = vperm.xlu0 %2841, %v2639
  %v2843 = vpop.permute.xlu0 %2842
  %2846 = vset.pattern.permute.xlu0 0
  %2847 = vperm.xlu0 %2846, %v2640
  %v2848 = vpop.permute.xlu0 %2847
  %2851 = vset.pattern.permute.xlu0 0
  %2852 = vperm.xlu0 %2851, %v2641
  %v2853 = vpop.permute.xlu0 %2852
  %2856 = vset.pattern.permute.xlu0 0
  %2857 = vperm.xlu0 %2856, %v2642
  %v2858 = vpop.permute.xlu0 %2857
  %2861 = vset.pattern.permute.xlu0 0
  %2862 = vperm.xlu0 %2861, %v2643
  %v2863 = vpop.permute.xlu0 %2862
  %2866 = vset.pattern.permute.xlu0 0
  %2867 = vperm.xlu0 %2866, %v2644
  %v2868 = vpop.permute.xlu0 %2867
  %2871 = vset.pattern.permute.xlu0 0
  %2872 = vperm.xlu0 %2871, %v2645
  %v2873 = vpop.permute.xlu0 %2872
  %2876 = vset.pattern.permute.xlu0 0
  %2877 = vperm.xlu0 %2876, %v2646
  %v2878 = vpop.permute.xlu0 %2877
  %2881 = vset.pattern.permute.xlu0 0
  %2882 = vperm.xlu0 %2881, %v2647
  %v2883 = vpop.permute.xlu0 %2882
  %2886 = vset.pattern.permute.xlu0 0
  %2887 = vperm.xlu0 %2886, %v2648
  %v2888 = vpop.permute.xlu0 %2887
  %2891 = vset.pattern.permute.xlu0 0
  %2892 = vperm.xlu0 %2891, %v2649
  %v2893 = vpop.permute.xlu0 %2892
  %2896 = vset.pattern.permute.xlu0 0
  %2897 = vperm.xlu0 %2896, %v2650
  %v2898 = vpop.permute.xlu0 %2897
  %2901 = vset.pattern.permute.xlu0 0
  %2902 = vperm.xlu0 %2901, %v2651
  %v2903 = vpop.permute.xlu0 %2902
  %2906 = vset.pattern.permute.xlu0 0
  %2907 = vperm.xlu0 %2906, %v2652
  %v2908 = vpop.permute.xlu0 %2907
  %2911 = vset.pattern.permute.xlu0 0
  %2912 = vperm.xlu0 %2911, %v2653
  %v2913 = vpop.permute.xlu0 %2912
  %2916 = vset.pattern.permute.xlu0 0
  %2917 = vperm.xlu0 %2916, %v2654
  %v2918 = vpop.permute.xlu0 %2917
  %2921 = vset.pattern.permute.xlu0 0
  %2922 = vperm.xlu0 %2921, %v2655
  %v2923 = vpop.permute.xlu0 %2922
  %2926 = vset.pattern.permute.xlu0 0
  %2927 = vperm.xlu0 %2926, %v2656
  %v2928 = vpop.permute.xlu0 %2927
  %2931 = vset.pattern.permute.xlu0 0
  %2932 = vperm.xlu0 %2931, %v2657
  %v2933 = vpop.permute.xlu0 %2932
  %2936 = vset.pattern.permute.xlu0 0
  %2937 = vperm.xlu0 %2936, %v2658
  %v2938 = vpop.permute.xlu0 %2937
  %2941 = vset.pattern.permute.xlu0 0
  %2942 = vperm.xlu0 %2941, %v2659
  %v2943 = vpop.permute.xlu0 %2942
  %2946 = vset.pattern.permute.xlu0 0
  %2947 = vperm.xlu0 %2946, %v2660
  %v2948 = vpop.permute.xlu0 %2947
  %2951 = vset.pattern.permute.xlu0 0
  %2952 = vperm.xlu0 %2951, %v2661
  %v2953 = vpop.permute.xlu0 %2952
  %2956 = vset.pattern.permute.xlu0 0
  %2957 = vperm.xlu0 %2956, %v2662
  %v2958 = vpop.permute.xlu0 %2957
  %2961 = vset.pattern.permute.xlu0 0
  %2962 = vperm.xlu0 %2961, %v2663
  %v2963 = vpop.permute.xlu0 %2962
  %2966 = vset.pattern.permute.xlu0 0
  %2967 = vperm.xlu0 %2966, %v2664
  %v2968 = vpop.permute.xlu0 %2967
  %2971 = vset.pattern.permute.xlu0 0
  %2972 = vperm.xlu0 %2971, %v2665
  %v2973 = vpop.permute.xlu0 %2972
  %2976 = vset.pattern.permute.xlu0 0
  %2977 = vperm.xlu0 %2976, %v2666
  %v2978 = vpop.permute.xlu0 %2977
  %2981 = vset.pattern.permute.xlu0 0
  %2982 = vperm.xlu0 %2981, %v2667
  %v2983 = vpop.permute.xlu0 %2982
  %2986 = vset.pattern.permute.xlu0 0
  %2987 = vperm.xlu0 %2986, %v2668
  %v2988 = vpop.permute.xlu0 %2987
  %2991 = vset.pattern.permute.xlu0 0
  %2992 = vperm.xlu0 %2991, %v2669
  %v2993 = vpop.permute.xlu0 %2992
  %2996 = vset.pattern.permute.xlu0 0
  %2997 = vperm.xlu0 %2996, %v2670
  %v2998 = vpop.permute.xlu0 %2997
  %3001 = vset.pattern.permute.xlu0 0
  %3002 = vperm.xlu0 %3001, %v2671
  %v3003 = vpop.permute.xlu0 %3002
  %3006 = vset.pattern.permute.xlu0 0
  %3007 = vperm.xlu0 %3006, %v2672
  %v3008 = vpop.permute.xlu0 %3007
  %3011 = vset.pattern.permute.xlu0 0
  %3012 = vperm.xlu0 %3011, %v2673
  %v3013 = vpop.permute.xlu0 %3012
  %3016 = vset.pattern.permute.xlu0 0
  %3017 = vperm.xlu0 %3016, %v2674
  %v3018 = vpop.permute.xlu0 %3017
  %3021 = vset.pattern.permute.xlu0 0
  %3022 = vperm.xlu0 %3021, %v2675
  %v3023 = vpop.permute.xlu0 %3022
  %3026 = vset.pattern.permute.xlu0 0
  %3027 = vperm.xlu0 %3026, %v2676
  %v3028 = vpop.permute.xlu0 %3027
  %3031 = vset.pattern.permute.xlu0 0
  %3032 = vperm.xlu0 %3031, %v2677
  %v3033 = vpop.permute.xlu0 %3032
  %3036 = vset.pattern.permute.xlu0 0
  %3037 = vperm.xlu0 %3036, %v2678
  %v3038 = vpop.permute.xlu0 %3037
  %3041 = vset.pattern.permute.xlu0 0
  %3042 = vperm.xlu0 %3041, %v2679
  %v3043 = vpop.permute.xlu0 %3042
  %3046 = vset.pattern.permute.xlu0 0
  %3047 = vperm.xlu0 %3046, %v2680
  %v3048 = vpop.permute.xlu0 %3047
  %3051 = vset.pattern.permute.xlu0 0
  %3052 = vperm.xlu0 %3051, %v2681
  %v3053 = vpop.permute.xlu0 %3052
  %3056 = vset.pattern.permute.xlu0 0
  %3057 = vperm.xlu0 %3056, %v2682
  %v3058 = vpop.permute.xlu0 %3057
  %3061 = vset.pattern.permute.xlu0 0
  %3062 = vperm.xlu0 %3061, %v2683
  %v3063 = vpop.permute.xlu0 %3062
  %3066 = vset.pattern.permute.xlu0 0
  %3067 = vperm.xlu0 %3066, %v2684
  %v3068 = vpop.permute.xlu0 %3067
  %3071 = vset.pattern.permute.xlu0 0
  %3072 = vperm.xlu0 %3071, %v2685
  %v3073 = vpop.permute.xlu0 %3072
  %3076 = vset.pattern.permute.xlu0 0
  %3077 = vperm.xlu0 %3076, %v2686
  %v3078 = vpop.permute.xlu0 %3077
  %3081 = vset.pattern.permute.xlu0 0
  %3082 = vperm.xlu0 %3081, %v2687
  %v3083 = vpop.permute.xlu0 %3082
  %v3085 = vmul.f32 %v2749, %v2808
  %v3086 = vmul.f32 %v2750, %v2813
  %v3087 = vmul.f32 %v2751, %v2818
  %v3088 = vmul.f32 %v2752, %v2823
  %v3089 = vmul.f32 %v2753, %v2828
  %v3090 = vmul.f32 %v2754, %v2833
  %v3091 = vmul.f32 %v2755, %v2838
  %v3092 = vmul.f32 %v2756, %v2843
  %v3093 = vmul.f32 %v2757, %v2848
  %v3094 = vmul.f32 %v2758, %v2853
  %v3095 = vmul.f32 %v2759, %v2858
  %v3096 = vmul.f32 %v2760, %v2863
  %v3097 = vmul.f32 %v2761, %v2868
  %v3098 = vmul.f32 %v2762, %v2873
  %v3099 = vmul.f32 %v2763, %v2878
  %v3100 = vmul.f32 %v2764, %v2883
  %v3101 = vmul.f32 %v2765, %v2888
  %v3102 = vmul.f32 %v2766, %v2893
  %v3103 = vmul.f32 %v2767, %v2898
  %v3104 = vmul.f32 %v2768, %v2903
  %v3105 = vmul.f32 %v2769, %v2908
  %v3106 = vmul.f32 %v2770, %v2913
  %v3107 = vmul.f32 %v2771, %v2918
  %v3108 = vmul.f32 %v2772, %v2923
  %v3109 = vmul.f32 %v2773, %v2928
  %v3110 = vmul.f32 %v2774, %v2933
  %v3111 = vmul.f32 %v2775, %v2938
  %v3112 = vmul.f32 %v2776, %v2943
  %v3113 = vmul.f32 %v2777, %v2948
  %v3114 = vmul.f32 %v2778, %v2953
  %v3115 = vmul.f32 %v2779, %v2958
  %v3116 = vmul.f32 %v2780, %v2963
  %v3117 = vmul.f32 %v2781, %v2968
  %v3118 = vmul.f32 %v2782, %v2973
  %v3119 = vmul.f32 %v2783, %v2978
  %v3120 = vmul.f32 %v2784, %v2983
  %v3121 = vmul.f32 %v2785, %v2988
  %v3122 = vmul.f32 %v2786, %v2993
  %v3123 = vmul.f32 %v2787, %v2998
  %v3124 = vmul.f32 %v2788, %v3003
  %v3125 = vmul.f32 %v2789, %v3008
  %v3126 = vmul.f32 %v2790, %v3013
  %v3127 = vmul.f32 %v2791, %v3018
  %v3128 = vmul.f32 %v2792, %v3023
  %v3129 = vmul.f32 %v2793, %v3028
  %v3130 = vmul.f32 %v2794, %v3033
  %v3131 = vmul.f32 %v2795, %v3038
  %v3132 = vmul.f32 %v2796, %v3043
  %v3133 = vmul.f32 %v2797, %v3048
  %v3134 = vmul.f32 %v2798, %v3053
  %v3135 = vmul.f32 %v2799, %v3058
  %v3136 = vmul.f32 %v2800, %v3063
  %v3137 = vmul.f32 %v2801, %v3068
  %v3138 = vmul.f32 %v2802, %v3073
  %v3139 = vmul.f32 %v2803, %v3078
  %v3140 = vmul.f32 %v2804, %v3083
  %vm3141 = vcmask 523264
  %v3142 = vsel %vm3141, %v3085, 0.0
  %v3143 = vsel %vm3141, %v3086, 0.0
  %v3144 = vadd.f32 %v3142, %v3143
  %v3145 = vsel %vm3141, %v3087, 0.0
  %v3146 = vadd.f32 %v3144, %v3145
  %v3147 = vsel %vm3141, %v3088, 0.0
  %v3148 = vadd.f32 %v3146, %v3147
  %v3149 = vsel %vm3141, %v3089, 0.0
  %v3150 = vadd.f32 %v3148, %v3149
  %v3151 = vsel %vm3141, %v3090, 0.0
  %v3152 = vadd.f32 %v3150, %v3151
  %v3153 = vsel %vm3141, %v3091, 0.0
  %v3154 = vadd.f32 %v3152, %v3153
  %v3155 = vsel %vm3141, %v3092, 0.0
  %v3156 = vadd.f32 %v3154, %v3155
  %v3157 = vsel %vm3141, %v3093, 0.0
  %v3158 = vadd.f32 %v3156, %v3157
  %v3159 = vsel %vm3141, %v3094, 0.0
  %v3160 = vadd.f32 %v3158, %v3159
  %v3161 = vsel %vm3141, %v3095, 0.0
  %v3162 = vadd.f32 %v3160, %v3161
  %v3163 = vsel %vm3141, %v3096, 0.0
  %v3164 = vadd.f32 %v3162, %v3163
  %v3165 = vsel %vm3141, %v3097, 0.0
  %v3166 = vadd.f32 %v3164, %v3165
  %v3167 = vsel %vm3141, %v3098, 0.0
  %v3168 = vadd.f32 %v3166, %v3167
  %v3169 = vsel %vm3141, %v3099, 0.0
  %v3170 = vadd.f32 %v3168, %v3169
  %v3171 = vsel %vm3141, %v3100, 0.0
  %v3172 = vadd.f32 %v3170, %v3171
  %v3173 = vsel %vm3141, %v3101, 0.0
  %v3174 = vadd.f32 %v3172, %v3173
  %v3175 = vsel %vm3141, %v3102, 0.0
  %v3176 = vadd.f32 %v3174, %v3175
  %v3177 = vsel %vm3141, %v3103, 0.0
  %v3178 = vadd.f32 %v3176, %v3177
  %v3179 = vsel %vm3141, %v3104, 0.0
  %v3180 = vadd.f32 %v3178, %v3179
  %v3181 = vsel %vm3141, %v3105, 0.0
  %v3182 = vadd.f32 %v3180, %v3181
  %v3183 = vsel %vm3141, %v3106, 0.0
  %v3184 = vadd.f32 %v3182, %v3183
  %v3185 = vsel %vm3141, %v3107, 0.0
  %v3186 = vadd.f32 %v3184, %v3185
  %v3187 = vsel %vm3141, %v3108, 0.0
  %v3188 = vadd.f32 %v3186, %v3187
  %v3189 = vsel %vm3141, %v3109, 0.0
  %v3190 = vadd.f32 %v3188, %v3189
  %v3191 = vsel %vm3141, %v3110, 0.0
  %v3192 = vadd.f32 %v3190, %v3191
  %v3193 = vsel %vm3141, %v3111, 0.0
  %v3194 = vadd.f32 %v3192, %v3193
  %v3195 = vsel %vm3141, %v3112, 0.0
  %v3196 = vadd.f32 %v3194, %v3195
  %v3197 = vsel %vm3141, %v3113, 0.0
  %v3198 = vadd.f32 %v3196, %v3197
  %v3199 = vsel %vm3141, %v3114, 0.0
  %v3200 = vadd.f32 %v3198, %v3199
  %v3201 = vsel %vm3141, %v3115, 0.0
  %v3202 = vadd.f32 %v3200, %v3201
  %v3203 = vsel %vm3141, %v3116, 0.0
  %v3204 = vadd.f32 %v3202, %v3203
  %v3205 = vsel %vm3141, %v3117, 0.0
  %v3206 = vadd.f32 %v3204, %v3205
  %v3207 = vsel %vm3141, %v3118, 0.0
  %v3208 = vadd.f32 %v3206, %v3207
  %v3209 = vsel %vm3141, %v3119, 0.0
  %v3210 = vadd.f32 %v3208, %v3209
  %v3211 = vsel %vm3141, %v3120, 0.0
  %v3212 = vadd.f32 %v3210, %v3211
  %v3213 = vsel %vm3141, %v3121, 0.0
  %v3214 = vadd.f32 %v3212, %v3213
  %v3215 = vsel %vm3141, %v3122, 0.0
  %v3216 = vadd.f32 %v3214, %v3215
  %v3217 = vsel %vm3141, %v3123, 0.0
  %v3218 = vadd.f32 %v3216, %v3217
  %v3219 = vsel %vm3141, %v3124, 0.0
  %v3220 = vadd.f32 %v3218, %v3219
  %v3221 = vsel %vm3141, %v3125, 0.0
  %v3222 = vadd.f32 %v3220, %v3221
  %v3223 = vsel %vm3141, %v3126, 0.0
  %v3224 = vadd.f32 %v3222, %v3223
  %v3225 = vsel %vm3141, %v3127, 0.0
  %v3226 = vadd.f32 %v3224, %v3225
  %v3227 = vsel %vm3141, %v3128, 0.0
  %v3228 = vadd.f32 %v3226, %v3227
  %v3229 = vsel %vm3141, %v3129, 0.0
  %v3230 = vadd.f32 %v3228, %v3229
  %v3231 = vsel %vm3141, %v3130, 0.0
  %v3232 = vadd.f32 %v3230, %v3231
  %v3233 = vsel %vm3141, %v3131, 0.0
  %v3234 = vadd.f32 %v3232, %v3233
  %v3235 = vsel %vm3141, %v3132, 0.0
  %v3236 = vadd.f32 %v3234, %v3235
  %v3237 = vsel %vm3141, %v3133, 0.0
  %v3238 = vadd.f32 %v3236, %v3237
  %v3239 = vsel %vm3141, %v3134, 0.0
  %v3240 = vadd.f32 %v3238, %v3239
  %v3241 = vsel %vm3141, %v3135, 0.0
  %v3242 = vadd.f32 %v3240, %v3241
  %v3243 = vsel %vm3141, %v3136, 0.0
  %v3244 = vadd.f32 %v3242, %v3243
  %v3245 = vsel %vm3141, %v3137, 0.0
  %v3246 = vadd.f32 %v3244, %v3245
  %v3247 = vsel %vm3141, %v3138, 0.0
  %v3248 = vadd.f32 %v3246, %v3247
  %v3249 = vsel %vm3141, %v3139, 0.0
  %v3250 = vadd.f32 %v3248, %v3249
  %v3251 = vsel %vm3141, %v3140, 0.0
  %v3252 = vadd.f32 %v3250, %v3251
  %v3253 = vrot.slane %v3252, 4
  %v3254 = vadd.f32 %v3252, %v3253
  %v3255 = vrot.slane %v3254, 2
  %v3256 = vadd.f32 %v3254, %v3255
  %v3257 = vrot.slane %v3256, 1
  %v3258 = vadd.f32 %v3256, %v3257
  %v3259 = vmul.f32 %v3258, 0.003030303
  %v3260 = vmul.f32 %v3085, %v3085
  %v3261 = vmul.f32 %v3086, %v3086
  %v3262 = vmul.f32 %v3087, %v3087
  %v3263 = vmul.f32 %v3088, %v3088
  %v3264 = vmul.f32 %v3089, %v3089
  %v3265 = vmul.f32 %v3090, %v3090
  %v3266 = vmul.f32 %v3091, %v3091
  %v3267 = vmul.f32 %v3092, %v3092
  %v3268 = vmul.f32 %v3093, %v3093
  %v3269 = vmul.f32 %v3094, %v3094
  %v3270 = vmul.f32 %v3095, %v3095
  %v3271 = vmul.f32 %v3096, %v3096
  %v3272 = vmul.f32 %v3097, %v3097
  %v3273 = vmul.f32 %v3098, %v3098
  %v3274 = vmul.f32 %v3099, %v3099
  %v3275 = vmul.f32 %v3100, %v3100
  %v3276 = vmul.f32 %v3101, %v3101
  %v3277 = vmul.f32 %v3102, %v3102
  %v3278 = vmul.f32 %v3103, %v3103
  %v3279 = vmul.f32 %v3104, %v3104
  %v3280 = vmul.f32 %v3105, %v3105
  %v3281 = vmul.f32 %v3106, %v3106
  %v3282 = vmul.f32 %v3107, %v3107
  %v3283 = vmul.f32 %v3108, %v3108
  %v3284 = vmul.f32 %v3109, %v3109
  %v3285 = vmul.f32 %v3110, %v3110
  %v3286 = vmul.f32 %v3111, %v3111
  %v3287 = vmul.f32 %v3112, %v3112
  %v3288 = vmul.f32 %v3113, %v3113
  %v3289 = vmul.f32 %v3114, %v3114
  %v3290 = vmul.f32 %v3115, %v3115
  %v3291 = vmul.f32 %v3116, %v3116
  %v3292 = vmul.f32 %v3117, %v3117
  %v3293 = vmul.f32 %v3118, %v3118
  %v3294 = vmul.f32 %v3119, %v3119
  %v3295 = vmul.f32 %v3120, %v3120
  %v3296 = vmul.f32 %v3121, %v3121
  %v3297 = vmul.f32 %v3122, %v3122
  %v3298 = vmul.f32 %v3123, %v3123
  %v3299 = vmul.f32 %v3124, %v3124
  %v3300 = vmul.f32 %v3125, %v3125
  %v3301 = vmul.f32 %v3126, %v3126
  %v3302 = vmul.f32 %v3127, %v3127
  %v3303 = vmul.f32 %v3128, %v3128
  %v3304 = vmul.f32 %v3129, %v3129
  %v3305 = vmul.f32 %v3130, %v3130
  %v3306 = vmul.f32 %v3131, %v3131
  %v3307 = vmul.f32 %v3132, %v3132
  %v3308 = vmul.f32 %v3133, %v3133
  %v3309 = vmul.f32 %v3134, %v3134
  %v3310 = vmul.f32 %v3135, %v3135
  %v3311 = vmul.f32 %v3136, %v3136
  %v3312 = vmul.f32 %v3137, %v3137
  %v3313 = vmul.f32 %v3138, %v3138
  %v3314 = vmul.f32 %v3139, %v3139
  %v3315 = vmul.f32 %v3140, %v3140
  %v3316 = vsel %vm3141, %v3260, 0.0
  %v3317 = vsel %vm3141, %v3261, 0.0
  %v3318 = vadd.f32 %v3316, %v3317
  %v3319 = vsel %vm3141, %v3262, 0.0
  %v3320 = vadd.f32 %v3318, %v3319
  %v3321 = vsel %vm3141, %v3263, 0.0
  %v3322 = vadd.f32 %v3320, %v3321
  %v3323 = vsel %vm3141, %v3264, 0.0
  %v3324 = vadd.f32 %v3322, %v3323
  %v3325 = vsel %vm3141, %v3265, 0.0
  %v3326 = vadd.f32 %v3324, %v3325
  %v3327 = vsel %vm3141, %v3266, 0.0
  %v3328 = vadd.f32 %v3326, %v3327
  %v3329 = vsel %vm3141, %v3267, 0.0
  %v3330 = vadd.f32 %v3328, %v3329
  %v3331 = vsel %vm3141, %v3268, 0.0
  %v3332 = vadd.f32 %v3330, %v3331
  %v3333 = vsel %vm3141, %v3269, 0.0
  %v3334 = vadd.f32 %v3332, %v3333
  %v3335 = vsel %vm3141, %v3270, 0.0
  %v3336 = vadd.f32 %v3334, %v3335
  %v3337 = vsel %vm3141, %v3271, 0.0
  %v3338 = vadd.f32 %v3336, %v3337
  %v3339 = vsel %vm3141, %v3272, 0.0
  %v3340 = vadd.f32 %v3338, %v3339
  %v3341 = vsel %vm3141, %v3273, 0.0
  %v3342 = vadd.f32 %v3340, %v3341
  %v3343 = vsel %vm3141, %v3274, 0.0
  %v3344 = vadd.f32 %v3342, %v3343
  %v3345 = vsel %vm3141, %v3275, 0.0
  %v3346 = vadd.f32 %v3344, %v3345
  %v3347 = vsel %vm3141, %v3276, 0.0
  %v3348 = vadd.f32 %v3346, %v3347
  %v3349 = vsel %vm3141, %v3277, 0.0
  %v3350 = vadd.f32 %v3348, %v3349
  %v3351 = vsel %vm3141, %v3278, 0.0
  %v3352 = vadd.f32 %v3350, %v3351
  %v3353 = vsel %vm3141, %v3279, 0.0
  %v3354 = vadd.f32 %v3352, %v3353
  %v3355 = vsel %vm3141, %v3280, 0.0
  %v3356 = vadd.f32 %v3354, %v3355
  %v3357 = vsel %vm3141, %v3281, 0.0
  %v3358 = vadd.f32 %v3356, %v3357
  %v3359 = vsel %vm3141, %v3282, 0.0
  %v3360 = vadd.f32 %v3358, %v3359
  %v3361 = vsel %vm3141, %v3283, 0.0
  %v3362 = vadd.f32 %v3360, %v3361
  %v3363 = vsel %vm3141, %v3284, 0.0
  %v3364 = vadd.f32 %v3362, %v3363
  %v3365 = vsel %vm3141, %v3285, 0.0
  %v3366 = vadd.f32 %v3364, %v3365
  %v3367 = vsel %vm3141, %v3286, 0.0
  %v3368 = vadd.f32 %v3366, %v3367
  %v3369 = vsel %vm3141, %v3287, 0.0
  %v3370 = vadd.f32 %v3368, %v3369
  %v3371 = vsel %vm3141, %v3288, 0.0
  %v3372 = vadd.f32 %v3370, %v3371
  %v3373 = vsel %vm3141, %v3289, 0.0
  %v3374 = vadd.f32 %v3372, %v3373
  %v3375 = vsel %vm3141, %v3290, 0.0
  %v3376 = vadd.f32 %v3374, %v3375
  %v3377 = vsel %vm3141, %v3291, 0.0
  %v3378 = vadd.f32 %v3376, %v3377
  %v3379 = vsel %vm3141, %v3292, 0.0
  %v3380 = vadd.f32 %v3378, %v3379
  %v3381 = vsel %vm3141, %v3293, 0.0
  %v3382 = vadd.f32 %v3380, %v3381
  %v3383 = vsel %vm3141, %v3294, 0.0
  %v3384 = vadd.f32 %v3382, %v3383
  %v3385 = vsel %vm3141, %v3295, 0.0
  %v3386 = vadd.f32 %v3384, %v3385
  %v3387 = vsel %vm3141, %v3296, 0.0
  %v3388 = vadd.f32 %v3386, %v3387
  %v3389 = vsel %vm3141, %v3297, 0.0
  %v3390 = vadd.f32 %v3388, %v3389
  %v3391 = vsel %vm3141, %v3298, 0.0
  %v3392 = vadd.f32 %v3390, %v3391
  %v3393 = vsel %vm3141, %v3299, 0.0
  %v3394 = vadd.f32 %v3392, %v3393
  %v3395 = vsel %vm3141, %v3300, 0.0
  %v3396 = vadd.f32 %v3394, %v3395
  %v3397 = vsel %vm3141, %v3301, 0.0
  %v3398 = vadd.f32 %v3396, %v3397
  %v3399 = vsel %vm3141, %v3302, 0.0
  %v3400 = vadd.f32 %v3398, %v3399
  %v3401 = vsel %vm3141, %v3303, 0.0
  %v3402 = vadd.f32 %v3400, %v3401
  %v3403 = vsel %vm3141, %v3304, 0.0
  %v3404 = vadd.f32 %v3402, %v3403
  %v3405 = vsel %vm3141, %v3305, 0.0
  %v3406 = vadd.f32 %v3404, %v3405
  %v3407 = vsel %vm3141, %v3306, 0.0
  %v3408 = vadd.f32 %v3406, %v3407
  %v3409 = vsel %vm3141, %v3307, 0.0
  %v3410 = vadd.f32 %v3408, %v3409
  %v3411 = vsel %vm3141, %v3308, 0.0
  %v3412 = vadd.f32 %v3410, %v3411
  %v3413 = vsel %vm3141, %v3309, 0.0
  %v3414 = vadd.f32 %v3412, %v3413
  %v3415 = vsel %vm3141, %v3310, 0.0
  %v3416 = vadd.f32 %v3414, %v3415
  %v3417 = vsel %vm3141, %v3311, 0.0
  %v3418 = vadd.f32 %v3416, %v3417
  %v3419 = vsel %vm3141, %v3312, 0.0
  %v3420 = vadd.f32 %v3418, %v3419
  %v3421 = vsel %vm3141, %v3313, 0.0
  %v3422 = vadd.f32 %v3420, %v3421
  %v3423 = vsel %vm3141, %v3314, 0.0
  %v3424 = vadd.f32 %v3422, %v3423
  %v3425 = vsel %vm3141, %v3315, 0.0
  %v3426 = vadd.f32 %v3424, %v3425
  %v3427 = vrot.slane %v3426, 4
  %v3428 = vadd.f32 %v3426, %v3427
  %v3429 = vrot.slane %v3428, 2
  %v3430 = vadd.f32 %v3428, %v3429
  %v3431 = vrot.slane %v3430, 1
  %v3432 = vadd.f32 %v3430, %v3431
  %v3433 = vmul.f32 %v3432, 0.003030303
  %v3434 = vmul.f32 %v3259, %v3259
  %v3435 = vsub.f32 %v3433, %v3434
  %v3436 = vadd.f32 %v3435, 1e-05
  %v3437 = vrsqrt.pop %v3436
  %v3438 = vld [vmem:[%s2 + $0x1] sm:$0x1]
  %v3439 = vmul.f32 %v3437, %v3438
  %v3440 = vsub.f32 %v2749, %v3259
  %v3441 = vsub.f32 %v2750, %v3259
  %v3442 = vsub.f32 %v2751, %v3259
  %v3443 = vsub.f32 %v2752, %v3259
  %v3444 = vsub.f32 %v2753, %v3259
  %v3445 = vsub.f32 %v2754, %v3259
  %v3446 = vsub.f32 %v2755, %v3259
  %v3447 = vsub.f32 %v2756, %v3259
  %v3448 = vsub.f32 %v2757, %v3259
  %v3449 = vsub.f32 %v2758, %v3259
  %v3450 = vsub.f32 %v2759, %v3259
  %v3451 = vsub.f32 %v2760, %v3259
  %v3452 = vsub.f32 %v2761, %v3259
  %v3453 = vsub.f32 %v2762, %v3259
  %v3454 = vsub.f32 %v2763, %v3259
  %v3455 = vsub.f32 %v2764, %v3259
  %v3456 = vsub.f32 %v2765, %v3259
  %v3457 = vsub.f32 %v2766, %v3259
  %v3458 = vsub.f32 %v2767, %v3259
  %v3459 = vsub.f32 %v2768, %v3259
  %v3460 = vsub.f32 %v2769, %v3259
  %v3461 = vsub.f32 %v2770, %v3259
  %v3462 = vsub.f32 %v2771, %v3259
  %v3463 = vsub.f32 %v2772, %v3259
  %v3464 = vsub.f32 %v2773, %v3259
  %v3465 = vsub.f32 %v2774, %v3259
  %v3466 = vsub.f32 %v2775, %v3259
  %v3467 = vsub.f32 %v2776, %v3259
  %v3468 = vsub.f32 %v2777, %v3259
  %v3469 = vsub.f32 %v2778, %v3259
  %v3470 = vsub.f32 %v2779, %v3259
  %v3471 = vsub.f32 %v2780, %v3259
  %v3472 = vsub.f32 %v2781, %v3259
  %v3473 = vsub.f32 %v2782, %v3259
  %v3474 = vsub.f32 %v2783, %v3259
  %v3475 = vsub.f32 %v2784, %v3259
  %v3476 = vsub.f32 %v2785, %v3259
  %v3477 = vsub.f32 %v2786, %v3259
  %v3478 = vsub.f32 %v2787, %v3259
  %v3479 = vsub.f32 %v2788, %v3259
  %v3480 = vsub.f32 %v2789, %v3259
  %v3481 = vsub.f32 %v2790, %v3259
  %v3482 = vsub.f32 %v2791, %v3259
  %v3483 = vsub.f32 %v2792, %v3259
  %v3484 = vsub.f32 %v2793, %v3259
  %v3485 = vsub.f32 %v2794, %v3259
  %v3486 = vsub.f32 %v2795, %v3259
  %v3487 = vsub.f32 %v2796, %v3259
  %v3488 = vsub.f32 %v2797, %v3259
  %v3489 = vsub.f32 %v2798, %v3259
  %v3490 = vsub.f32 %v2799, %v3259
  %v3491 = vsub.f32 %v2800, %v3259
  %v3492 = vsub.f32 %v2801, %v3259
  %v3493 = vsub.f32 %v2802, %v3259
  %v3494 = vsub.f32 %v2803, %v3259
  %v3495 = vsub.f32 %v2804, %v3259
  %v3496 = vlaneseq
  %v3497 = vshrl.u32 %v3496, 7
  %v3498 = vsub.s32 0, %v3497
  %v3499 = vrot.slane %v3439, %v3498
  %v3500 = vmul.f32 %v3440, %v3499
  %v3501 = vmul.f32 %v3441, %v3499
  %v3502 = vmul.f32 %v3442, %v3499
  %v3503 = vmul.f32 %v3443, %v3499
  %v3504 = vmul.f32 %v3444, %v3499
  %v3505 = vmul.f32 %v3445, %v3499
  %v3506 = vmul.f32 %v3446, %v3499
  %v3507 = vmul.f32 %v3447, %v3499
  %v3508 = vmul.f32 %v3448, %v3499
  %v3509 = vmul.f32 %v3449, %v3499
  %v3510 = vmul.f32 %v3450, %v3499
  %v3511 = vmul.f32 %v3451, %v3499
  %v3512 = vmul.f32 %v3452, %v3499
  %v3513 = vmul.f32 %v3453, %v3499
  %v3514 = vmul.f32 %v3454, %v3499
  %v3515 = vmul.f32 %v3455, %v3499
  %v3516 = vmul.f32 %v3456, %v3499
  %v3517 = vmul.f32 %v3457, %v3499
  %v3518 = vmul.f32 %v3458, %v3499
  %v3519 = vmul.f32 %v3459, %v3499
  %v3520 = vmul.f32 %v3460, %v3499
  %v3521 = vmul.f32 %v3461, %v3499
  %v3522 = vmul.f32 %v3462, %v3499
  %v3523 = vmul.f32 %v3463, %v3499
  %v3524 = vmul.f32 %v3464, %v3499
  %v3525 = vmul.f32 %v3465, %v3499
  %v3526 = vmul.f32 %v3466, %v3499
  %v3527 = vmul.f32 %v3467, %v3499
  %v3528 = vmul.f32 %v3468, %v3499
  %v3529 = vmul.f32 %v3469, %v3499
  %v3530 = vmul.f32 %v3470, %v3499
  %v3531 = vmul.f32 %v3471, %v3499
  %v3532 = vmul.f32 %v3472, %v3499
  %v3533 = vmul.f32 %v3473, %v3499
  %v3534 = vmul.f32 %v3474, %v3499
  %v3535 = vmul.f32 %v3475, %v3499
  %v3536 = vmul.f32 %v3476, %v3499
  %v3537 = vmul.f32 %v3477, %v3499
  %v3538 = vmul.f32 %v3478, %v3499
  %v3539 = vmul.f32 %v3479, %v3499
  %v3540 = vmul.f32 %v3480, %v3499
  %v3541 = vmul.f32 %v3481, %v3499
  %v3542 = vmul.f32 %v3482, %v3499
  %v3543 = vmul.f32 %v3483, %v3499
  %v3544 = vmul.f32 %v3484, %v3499
  %v3545 = vmul.f32 %v3485, %v3499
  %v3546 = vmul.f32 %v3486, %v3499
  %v3547 = vmul.f32 %v3487, %v3499
  %v3548 = vmul.f32 %v3488, %v3499
  %v3549 = vmul.f32 %v3489, %v3499
  %v3550 = vmul.f32 %v3490, %v3499
  %v3551 = vmul.f32 %v3491, %v3499
  %v3552 = vmul.f32 %v3492, %v3499
  %v3553 = vmul.f32 %v3493, %v3499
  %v3554 = vmul.f32 %v3494, %v3499
  %v3555 = vmul.f32 %v3495, %v3499
  %v3556 = vld [vmem:[%s2 + $0x2] sm:$0x1]
  %v3557 = vlaneseq
  %v3558 = vshrl.u32 %v3557, 7
  %v3559 = vsub.s32 0, %v3558
  %v3560 = vrot.slane %v3556, %v3559
  %v3561 = vadd.f32 %v3500, %v3560
  %v3562 = vadd.f32 %v3501, %v3560
  %v3563 = vadd.f32 %v3502, %v3560
  %v3564 = vadd.f32 %v3503, %v3560
  %v3565 = vadd.f32 %v3504, %v3560
  %v3566 = vadd.f32 %v3505, %v3560
  %v3567 = vadd.f32 %v3506, %v3560
  %v3568 = vadd.f32 %v3507, %v3560
  %v3569 = vadd.f32 %v3508, %v3560
  %v3570 = vadd.f32 %v3509, %v3560
  %v3571 = vadd.f32 %v3510, %v3560
  %v3572 = vadd.f32 %v3511, %v3560
  %v3573 = vadd.f32 %v3512, %v3560
  %v3574 = vadd.f32 %v3513, %v3560
  %v3575 = vadd.f32 %v3514, %v3560
  %v3576 = vadd.f32 %v3515, %v3560
  %v3577 = vadd.f32 %v3516, %v3560
  %v3578 = vadd.f32 %v3517, %v3560
  %v3579 = vadd.f32 %v3518, %v3560
  %v3580 = vadd.f32 %v3519, %v3560
  %v3581 = vadd.f32 %v3520, %v3560
  %v3582 = vadd.f32 %v3521, %v3560
  %v3583 = vadd.f32 %v3522, %v3560
  %v3584 = vadd.f32 %v3523, %v3560
  %v3585 = vadd.f32 %v3524, %v3560
  %v3586 = vadd.f32 %v3525, %v3560
  %v3587 = vadd.f32 %v3526, %v3560
  %v3588 = vadd.f32 %v3527, %v3560
  %v3589 = vadd.f32 %v3528, %v3560
  %v3590 = vadd.f32 %v3529, %v3560
  %v3591 = vadd.f32 %v3530, %v3560
  %v3592 = vadd.f32 %v3531, %v3560
  %v3593 = vadd.f32 %v3532, %v3560
  %v3594 = vadd.f32 %v3533, %v3560
  %v3595 = vadd.f32 %v3534, %v3560
  %v3596 = vadd.f32 %v3535, %v3560
  %v3597 = vadd.f32 %v3536, %v3560
  %v3598 = vadd.f32 %v3537, %v3560
  %v3599 = vadd.f32 %v3538, %v3560
  %v3600 = vadd.f32 %v3539, %v3560
  %v3601 = vadd.f32 %v3540, %v3560
  %v3602 = vadd.f32 %v3541, %v3560
  %v3603 = vadd.f32 %v3542, %v3560
  %v3604 = vadd.f32 %v3543, %v3560
  %v3605 = vadd.f32 %v3544, %v3560
  %v3606 = vadd.f32 %v3545, %v3560
  %v3607 = vadd.f32 %v3546, %v3560
  %v3608 = vadd.f32 %v3547, %v3560
  %v3609 = vadd.f32 %v3548, %v3560
  %v3610 = vadd.f32 %v3549, %v3560
  %v3611 = vadd.f32 %v3550, %v3560
  %v3612 = vadd.f32 %v3551, %v3560
  %v3613 = vadd.f32 %v3552, %v3560
  %v3614 = vadd.f32 %v3553, %v3560
  %v3615 = vadd.f32 %v3554, %v3560
  %v3616 = vadd.f32 %v3555, %v3560
  %v3617 = vpack.c.bf16 %v3562, %v3561
  %v3618 = vpack.c.bf16 %v3564, %v3563
  %v3619 = vpack.c.bf16 %v3566, %v3565
  %v3620 = vpack.c.bf16 %v3568, %v3567
  %v3621 = vpack.c.bf16 %v3570, %v3569
  %v3622 = vpack.c.bf16 %v3572, %v3571
  %v3623 = vpack.c.bf16 %v3574, %v3573
  %v3624 = vpack.c.bf16 %v3576, %v3575
  %v3625 = vpack.c.bf16 %v3578, %v3577
  %v3626 = vpack.c.bf16 %v3580, %v3579
  %v3627 = vpack.c.bf16 %v3582, %v3581
  %v3628 = vpack.c.bf16 %v3584, %v3583
  %v3629 = vpack.c.bf16 %v3586, %v3585
  %v3630 = vpack.c.bf16 %v3588, %v3587
  %v3631 = vpack.c.bf16 %v3590, %v3589
  %v3632 = vpack.c.bf16 %v3592, %v3591
  %v3633 = vpack.c.bf16 %v3594, %v3593
  %v3634 = vpack.c.bf16 %v3596, %v3595
  %v3635 = vpack.c.bf16 %v3598, %v3597
  %v3636 = vpack.c.bf16 %v3600, %v3599
  %v3637 = vpack.c.bf16 %v3602, %v3601
  %v3638 = vpack.c.bf16 %v3604, %v3603
  %v3639 = vpack.c.bf16 %v3606, %v3605
  %v3640 = vpack.c.bf16 %v3608, %v3607
  %v3641 = vpack.c.bf16 %v3610, %v3609
  %v3642 = vpack.c.bf16 %v3612, %v3611
  %v3643 = vpack.c.bf16 %v3614, %v3613
  %v3644 = vpack.c.bf16 %v3616, %v3615
  %v3673 = vunpack.c.l.b16 %v3617
  %v3674 = vunpack.c.h.b16 %v3617
  %v3675 = vunpack.c.l.b16 %v3618
  %v3676 = vunpack.c.h.b16 %v3618
  %v3677 = vunpack.c.l.b16 %v3619
  %v3678 = vunpack.c.h.b16 %v3619
  %v3679 = vunpack.c.l.b16 %v3620
  %v3680 = vunpack.c.h.b16 %v3620
  %v3681 = vunpack.c.l.b16 %v3621
  %v3682 = vunpack.c.h.b16 %v3621
  %v3683 = vunpack.c.l.b16 %v3622
  %v3684 = vunpack.c.h.b16 %v3622
  %v3685 = vunpack.c.l.b16 %v3623
  %v3686 = vunpack.c.h.b16 %v3623
  %v3687 = vunpack.c.l.b16 %v3624
  %v3688 = vunpack.c.h.b16 %v3624
  %v3689 = vunpack.c.l.b16 %v3625
  %v3690 = vunpack.c.h.b16 %v3625
  %v3691 = vunpack.c.l.b16 %v3626
  %v3692 = vunpack.c.h.b16 %v3626
  %v3693 = vunpack.c.l.b16 %v3627
  %v3694 = vunpack.c.h.b16 %v3627
  %v3695 = vunpack.c.l.b16 %v3628
  %v3696 = vunpack.c.h.b16 %v3628
  %v3697 = vunpack.c.l.b16 %v3629
  %v3698 = vunpack.c.h.b16 %v3629
  %v3699 = vunpack.c.l.b16 %v3630
  %v3700 = vunpack.c.h.b16 %v3630
  %v3701 = vunpack.c.l.b16 %v3631
  %v3702 = vunpack.c.h.b16 %v3631
  %v3703 = vunpack.c.l.b16 %v3632
  %v3704 = vunpack.c.h.b16 %v3632
  %v3705 = vunpack.c.l.b16 %v3633
  %v3706 = vunpack.c.h.b16 %v3633
  %v3707 = vunpack.c.l.b16 %v3634
  %v3708 = vunpack.c.h.b16 %v3634
  %v3709 = vunpack.c.l.b16 %v3635
  %v3710 = vunpack.c.h.b16 %v3635
  %v3711 = vunpack.c.l.b16 %v3636
  %v3712 = vunpack.c.h.b16 %v3636
  %v3713 = vunpack.c.l.b16 %v3637
  %v3714 = vunpack.c.h.b16 %v3637
  %v3715 = vunpack.c.l.b16 %v3638
  %v3716 = vunpack.c.h.b16 %v3638
  %v3717 = vunpack.c.l.b16 %v3639
  %v3718 = vunpack.c.h.b16 %v3639
  %v3719 = vunpack.c.l.b16 %v3640
  %v3720 = vunpack.c.h.b16 %v3640
  %v3721 = vunpack.c.l.b16 %v3641
  %v3722 = vunpack.c.h.b16 %v3641
  %v3723 = vunpack.c.l.b16 %v3642
  %v3724 = vunpack.c.h.b16 %v3642
  %v3725 = vunpack.c.l.b16 %v3643
  %v3726 = vunpack.c.h.b16 %v3643
  %v3727 = vunpack.c.l.b16 %v3644
  %v3728 = vunpack.c.h.b16 %v3644
  %v3729 = vpack.c.b16 %v3673, %v3673
  %v3730 = vpack.c.b16 %v3674, %v3674
  %v3731 = vpack.c.b16 %v3675, %v3675
  %v3732 = vpack.c.b16 %v3676, %v3676
  %v3733 = vpack.c.b16 %v3677, %v3677
  %v3734 = vpack.c.b16 %v3678, %v3678
  %v3735 = vpack.c.b16 %v3679, %v3679
  %v3736 = vpack.c.b16 %v3680, %v3680
  %v3737 = vpack.c.b16 %v3681, %v3681
  %v3738 = vpack.c.b16 %v3682, %v3682
  %v3739 = vpack.c.b16 %v3683, %v3683
  %v3740 = vpack.c.b16 %v3684, %v3684
  %v3741 = vpack.c.b16 %v3685, %v3685
  %v3742 = vpack.c.b16 %v3686, %v3686
  %v3743 = vpack.c.b16 %v3687, %v3687
  %v3744 = vpack.c.b16 %v3688, %v3688
  %v3745 = vpack.c.b16 %v3689, %v3689
  %v3746 = vpack.c.b16 %v3690, %v3690
  %v3747 = vpack.c.b16 %v3691, %v3691
  %v3748 = vpack.c.b16 %v3692, %v3692
  %v3749 = vpack.c.b16 %v3693, %v3693
  %v3750 = vpack.c.b16 %v3694, %v3694
  %v3751 = vpack.c.b16 %v3695, %v3695
  %v3752 = vpack.c.b16 %v3696, %v3696
  %v3753 = vpack.c.b16 %v3697, %v3697
  %v3754 = vpack.c.b16 %v3698, %v3698
  %v3755 = vpack.c.b16 %v3699, %v3699
  %v3756 = vpack.c.b16 %v3700, %v3700
  %v3757 = vpack.c.b16 %v3701, %v3701
  %v3758 = vpack.c.b16 %v3702, %v3702
  %v3759 = vpack.c.b16 %v3703, %v3703
  %v3760 = vpack.c.b16 %v3704, %v3704
  %v3761 = vpack.c.b16 %v3705, %v3705
  %v3762 = vpack.c.b16 %v3706, %v3706
  %v3763 = vpack.c.b16 %v3707, %v3707
  %v3764 = vpack.c.b16 %v3708, %v3708
  %v3765 = vpack.c.b16 %v3709, %v3709
  %v3766 = vpack.c.b16 %v3710, %v3710
  %v3767 = vpack.c.b16 %v3711, %v3711
  %v3768 = vpack.c.b16 %v3712, %v3712
  %v3769 = vpack.c.b16 %v3713, %v3713
  %v3770 = vpack.c.b16 %v3714, %v3714
  %v3771 = vpack.c.b16 %v3715, %v3715
  %v3772 = vpack.c.b16 %v3716, %v3716
  %v3773 = vpack.c.b16 %v3717, %v3717
  %v3774 = vpack.c.b16 %v3718, %v3718
  %v3775 = vpack.c.b16 %v3719, %v3719
  %v3776 = vpack.c.b16 %v3720, %v3720
  %v3777 = vpack.c.b16 %v3721, %v3721
  %v3778 = vpack.c.b16 %v3722, %v3722
  %v3779 = vpack.c.b16 %v3723, %v3723
  %v3780 = vpack.c.b16 %v3724, %v3724
  %v3781 = vpack.c.b16 %v3725, %v3725
  %v3782 = vpack.c.b16 %v3726, %v3726
  %v3783 = vpack.c.b16 %v3727, %v3727
  %v3784 = vpack.c.b16 %v3728, %v3728
  %vm3841 = vcmask 519168
  %3842 = vst.msk [vmem:[#allocation2] sm:$0xf] %vm3841, %v3729
  %3843 = vst.msk [vmem:[#allocation2 + $0x4] sm:$0xf] %vm3841, %v3730
  %3844 = vst.msk [vmem:[#allocation2 + $0x8] sm:$0xf] %vm3841, %v3731
  %3845 = vst.msk [vmem:[#allocation2 + $0xc] sm:$0xf] %vm3841, %v3732
  %3846 = vst.msk [vmem:[#allocation2 + $0x10] sm:$0xf] %vm3841, %v3733
  %3847 = vst.msk [vmem:[#allocation2 + $0x14] sm:$0xf] %vm3841, %v3734
  %3848 = vst.msk [vmem:[#allocation2 + $0x18] sm:$0xf] %vm3841, %v3735
  %3849 = vst.msk [vmem:[#allocation2 + $0x1c] sm:$0xf] %vm3841, %v3736
  %3850 = vst.msk [vmem:[#allocation2 + $0x20] sm:$0xf] %vm3841, %v3737
  %3851 = vst.msk [vmem:[#allocation2 + $0x24] sm:$0xf] %vm3841, %v3738
  %3852 = vst.msk [vmem:[#allocation2 + $0x28] sm:$0xf] %vm3841, %v3739
  %3853 = vst.msk [vmem:[#allocation2 + $0x2c] sm:$0xf] %vm3841, %v3740
  %3854 = vst.msk [vmem:[#allocation2 + $0x30] sm:$0xf] %vm3841, %v3741
  %3855 = vst.msk [vmem:[#allocation2 + $0x34] sm:$0xf] %vm3841, %v3742
  %3856 = vst.msk [vmem:[#allocation2 + $0x38] sm:$0xf] %vm3841, %v3743
  %3857 = vst.msk [vmem:[#allocation2 + $0x3c] sm:$0xf] %vm3841, %v3744
  %3858 = vst.msk [vmem:[#allocation2 + $0x40] sm:$0xf] %vm3841, %v3745
  %3859 = vst.msk [vmem:[#allocation2 + $0x44] sm:$0xf] %vm3841, %v3746
  %3860 = vst.msk [vmem:[#allocation2 + $0x48] sm:$0xf] %vm3841, %v3747
  %3861 = vst.msk [vmem:[#allocation2 + $0x4c] sm:$0xf] %vm3841, %v3748
  %3862 = vst.msk [vmem:[#allocation2 + $0x50] sm:$0xf] %vm3841, %v3749
  %3863 = vst.msk [vmem:[#allocation2 + $0x54] sm:$0xf] %vm3841, %v3750
  %3864 = vst.msk [vmem:[#allocation2 + $0x58] sm:$0xf] %vm3841, %v3751
  %3865 = vst.msk [vmem:[#allocation2 + $0x5c] sm:$0xf] %vm3841, %v3752
  %3866 = vst.msk [vmem:[#allocation2 + $0x60] sm:$0xf] %vm3841, %v3753
  %3867 = vst.msk [vmem:[#allocation2 + $0x64] sm:$0xf] %vm3841, %v3754
  %3868 = vst.msk [vmem:[#allocation2 + $0x68] sm:$0xf] %vm3841, %v3755
  %3869 = vst.msk [vmem:[#allocation2 + $0x6c] sm:$0xf] %vm3841, %v3756
  %3870 = vst.msk [vmem:[#allocation2 + $0x70] sm:$0xf] %vm3841, %v3757
  %3871 = vst.msk [vmem:[#allocation2 + $0x74] sm:$0xf] %vm3841, %v3758
  %3872 = vst.msk [vmem:[#allocation2 + $0x78] sm:$0xf] %vm3841, %v3759
  %3873 = vst.msk [vmem:[#allocation2 + $0x7c] sm:$0xf] %vm3841, %v3760
  %3874 = vst.msk [vmem:[#allocation2 + $0x80] sm:$0xf] %vm3841, %v3761
  %3875 = vst.msk [vmem:[#allocation2 + $0x84] sm:$0xf] %vm3841, %v3762
  %3876 = vst.msk [vmem:[#allocation2 + $0x88] sm:$0xf] %vm3841, %v3763
  %3877 = vst.msk [vmem:[#allocation2 + $0x8c] sm:$0xf] %vm3841, %v3764
  %3878 = vst.msk [vmem:[#allocation2 + $0x90] sm:$0xf] %vm3841, %v3765
  %3879 = vst.msk [vmem:[#allocation2 + $0x94] sm:$0xf] %vm3841, %v3766
  %3880 = vst.msk [vmem:[#allocation2 + $0x98] sm:$0xf] %vm3841, %v3767
  %3881 = vst.msk [vmem:[#allocation2 + $0x9c] sm:$0xf] %vm3841, %v3768
  %3882 = vst.msk [vmem:[#allocation2 + $0xa0] sm:$0xf] %vm3841, %v3769
  %3883 = vst.msk [vmem:[#allocation2 + $0xa4] sm:$0xf] %vm3841, %v3770
  %3884 = vst.msk [vmem:[#allocation2 + $0xa8] sm:$0xf] %vm3841, %v3771
  %3885 = vst.msk [vmem:[#allocation2 + $0xac] sm:$0xf] %vm3841, %v3772
  %3886 = vst.msk [vmem:[#allocation2 + $0xb0] sm:$0xf] %vm3841, %v3773
  %3887 = vst.msk [vmem:[#allocation2 + $0xb4] sm:$0xf] %vm3841, %v3774
  %3888 = vst.msk [vmem:[#allocation2 + $0xb8] sm:$0xf] %vm3841, %v3775
  %3889 = vst.msk [vmem:[#allocation2 + $0xbc] sm:$0xf] %vm3841, %v3776
  %3890 = vst.msk [vmem:[#allocation2 + $0xc0] sm:$0xf] %vm3841, %v3777
  %3891 = vst.msk [vmem:[#allocation2 + $0xc4] sm:$0xf] %vm3841, %v3778
  %3892 = vst.msk [vmem:[#allocation2 + $0xc8] sm:$0xf] %vm3841, %v3779
  %3893 = vst.msk [vmem:[#allocation2 + $0xcc] sm:$0xf] %vm3841, %v3780
  %3894 = vst.msk [vmem:[#allocation2 + $0xd0] sm:$0xf] %vm3841, %v3781
  %3895 = vst.msk [vmem:[#allocation2 + $0xd4] sm:$0xf] %vm3841, %v3782
  %3896 = vst.msk [vmem:[#allocation2 + $0xd8] sm:$0xf] %vm3841, %v3783
  %3897 = vst.msk [vmem:[#allocation2 + $0xdc] sm:$0xf] %vm3841, %v3784
  %v3898 = vld [vmem:[#allocation2] sm:$0xf]
  %v3899 = vld [vmem:[#allocation2 + $0x4] sm:$0xf]
  %v3900 = vld [vmem:[#allocation2 + $0x8] sm:$0xf]
  %v3901 = vld [vmem:[#allocation2 + $0xc] sm:$0xf]
  %v3902 = vld [vmem:[#allocation2 + $0x10] sm:$0xf]
  %v3903 = vld [vmem:[#allocation2 + $0x14] sm:$0xf]
  %v3904 = vld [vmem:[#allocation2 + $0x18] sm:$0xf]
  %v3905 = vld [vmem:[#allocation2 + $0x1c] sm:$0xf]
  %v3906 = vld [vmem:[#allocation2 + $0x20] sm:$0xf]
  %v3907 = vld [vmem:[#allocation2 + $0x24] sm:$0xf]
  %v3908 = vld [vmem:[#allocation2 + $0x28] sm:$0xf]
  %v3909 = vld [vmem:[#allocation2 + $0x2c] sm:$0xf]
  %v3910 = vld [vmem:[#allocation2 + $0x30] sm:$0xf]
  %v3911 = vld [vmem:[#allocation2 + $0x34] sm:$0xf]
  %v3912 = vld [vmem:[#allocation2 + $0x38] sm:$0xf]
  %v3913 = vld [vmem:[#allocation2 + $0x3c] sm:$0xf]
  %v3914 = vld [vmem:[#allocation2 + $0x40] sm:$0xf]
  %v3915 = vld [vmem:[#allocation2 + $0x44] sm:$0xf]
  %v3916 = vld [vmem:[#allocation2 + $0x48] sm:$0xf]
  %v3917 = vld [vmem:[#allocation2 + $0x4c] sm:$0xf]
  %v3918 = vld [vmem:[#allocation2 + $0x50] sm:$0xf]
  %v3919 = vld [vmem:[#allocation2 + $0x54] sm:$0xf]
  %v3920 = vld [vmem:[#allocation2 + $0x58] sm:$0xf]
  %v3921 = vld [vmem:[#allocation2 + $0x5c] sm:$0xf]
  %v3922 = vld [vmem:[#allocation2 + $0x60] sm:$0xf]
  %v3923 = vld [vmem:[#allocation2 + $0x64] sm:$0xf]
  %v3924 = vld [vmem:[#allocation2 + $0x68] sm:$0xf]
  %v3925 = vld [vmem:[#allocation2 + $0x6c] sm:$0xf]
  %v3926 = vld [vmem:[#allocation2 + $0x70] sm:$0xf]
  %v3927 = vld [vmem:[#allocation2 + $0x74] sm:$0xf]
  %v3928 = vld [vmem:[#allocation2 + $0x78] sm:$0xf]
  %v3929 = vld [vmem:[#allocation2 + $0x7c] sm:$0xf]
  %v3930 = vld [vmem:[#allocation2 + $0x80] sm:$0xf]
  %v3931 = vld [vmem:[#allocation2 + $0x84] sm:$0xf]
  %v3932 = vld [vmem:[#allocation2 + $0x88] sm:$0xf]
  %v3933 = vld [vmem:[#allocation2 + $0x8c] sm:$0xf]
  %v3934 = vld [vmem:[#allocation2 + $0x90] sm:$0xf]
  %v3935 = vld [vmem:[#allocation2 + $0x94] sm:$0xf]
  %v3936 = vld [vmem:[#allocation2 + $0x98] sm:$0xf]
  %v3937 = vld [vmem:[#allocation2 + $0x9c] sm:$0xf]
  %v3938 = vld [vmem:[#allocation2 + $0xa0] sm:$0xf]
  %v3939 = vld [vmem:[#allocation2 + $0xa4] sm:$0xf]
  %v3940 = vld [vmem:[#allocation2 + $0xa8] sm:$0xf]
  %v3941 = vld [vmem:[#allocation2 + $0xac] sm:$0xf]
  %v3942 = vld [vmem:[#allocation2 + $0xb0] sm:$0xf]
  %v3943 = vld [vmem:[#allocation2 + $0xb4] sm:$0xf]
  %v3944 = vld [vmem:[#allocation2 + $0xb8] sm:$0xf]
  %v3945 = vld [vmem:[#allocation2 + $0xbc] sm:$0xf]
  %v3946 = vld [vmem:[#allocation2 + $0xc0] sm:$0xf]
  %v3947 = vld [vmem:[#allocation2 + $0xc4] sm:$0xf]
  %v3948 = vld [vmem:[#allocation2 + $0xc8] sm:$0xf]
  %v3949 = vld [vmem:[%s3] sm:$0xf]
  %v3950 = vld [vmem:[%s3 + $0x4] sm:$0xf]
  %v3951 = vld [vmem:[%s3 + $0x8] sm:$0xf]
  %v3952 = vld [vmem:[%s3 + $0xc] sm:$0xf]
  %v3953 = vld [vmem:[%s3 + $0x10] sm:$0xf]
  %v3954 = vld [vmem:[%s3 + $0x14] sm:$0xf]
  %v3955 = vld [vmem:[%s3 + $0x18] sm:$0xf]
  %v3956 = vld [vmem:[%s3 + $0x1c] sm:$0xf]
  %v3957 = vld [vmem:[#allocation2 + $0xcc] sm:$0x1]
  %s3958 = scalar_lea.vmem %s3, 32
  %v3959 = vld [vmem:[%s3958] sm:$0xf]
  %v3960 = vld [vmem:[%s3958 + $0x4] sm:$0xf]
  %v3961 = vld [vmem:[%s3958 + $0x8] sm:$0xf]
  %v3962 = vld [vmem:[%s3958 + $0xc] sm:$0xf]
  %v3963 = vld [vmem:[%s3958 + $0x10] sm:$0xf]
  %v3964 = vld [vmem:[%s3958 + $0x14] sm:$0xf]
  %v3965 = vld [vmem:[%s3958 + $0x18] sm:$0xf]
  %v3966 = vld [vmem:[%s3958 + $0x1c] sm:$0xf]
  %v4019 = vunpack.c.l.b16 %v3898
  %v4020 = vunpack.c.l.b16 %v3899
  %v4021 = vunpack.c.l.b16 %v3900
  %v4022 = vunpack.c.l.b16 %v3901
  %v4023 = vunpack.c.l.b16 %v3902
  %v4024 = vunpack.c.l.b16 %v3903
  %v4025 = vunpack.c.l.b16 %v3904
  %v4026 = vunpack.c.l.b16 %v3905
  %v4027 = vunpack.c.l.b16 %v3906
  %v4028 = vunpack.c.l.b16 %v3907
  %v4029 = vunpack.c.l.b16 %v3908
  %v4030 = vunpack.c.l.b16 %v3909
  %v4031 = vunpack.c.l.b16 %v3910
  %v4032 = vunpack.c.l.b16 %v3911
  %v4033 = vunpack.c.l.b16 %v3912
  %v4034 = vunpack.c.l.b16 %v3913
  %v4035 = vunpack.c.l.b16 %v3914
  %v4036 = vunpack.c.l.b16 %v3915
  %v4037 = vunpack.c.l.b16 %v3916
  %v4038 = vunpack.c.l.b16 %v3917
  %v4039 = vunpack.c.l.b16 %v3918
  %v4040 = vunpack.c.l.b16 %v3919
  %v4041 = vunpack.c.l.b16 %v3920
  %v4042 = vunpack.c.l.b16 %v3921
  %v4043 = vunpack.c.l.b16 %v3922
  %v4044 = vunpack.c.l.b16 %v3923
  %v4045 = vunpack.c.l.b16 %v3924
  %v4046 = vunpack.c.l.b16 %v3925
  %v4047 = vunpack.c.l.b16 %v3926
  %v4048 = vunpack.c.l.b16 %v3927
  %v4049 = vunpack.c.l.b16 %v3928
  %v4050 = vunpack.c.l.b16 %v3929
  %v4051 = vunpack.c.l.b16 %v3930
  %v4052 = vunpack.c.l.b16 %v3931
  %v4053 = vunpack.c.l.b16 %v3932
  %v4054 = vunpack.c.l.b16 %v3933
  %v4055 = vunpack.c.l.b16 %v3934
  %v4056 = vunpack.c.l.b16 %v3935
  %v4057 = vunpack.c.l.b16 %v3936
  %v4058 = vunpack.c.l.b16 %v3937
  %v4059 = vunpack.c.l.b16 %v3938
  %v4060 = vunpack.c.l.b16 %v3939
  %v4061 = vunpack.c.l.b16 %v3940
  %v4062 = vunpack.c.l.b16 %v3941
  %v4063 = vunpack.c.l.b16 %v3942
  %v4064 = vunpack.c.l.b16 %v3943
  %v4065 = vunpack.c.l.b16 %v3944
  %v4066 = vunpack.c.l.b16 %v3945
  %v4067 = vunpack.c.l.b16 %v3946
  %v4068 = vunpack.c.l.b16 %v3947
  %v4069 = vunpack.c.l.b16 %v3948
  %v4070 = vunpack.c.l.b16 %v3957
  %v4071 = vpack.c.b16 %v4020, %v4019
  %v4072 = vpack.c.b16 %v4022, %v4021
  %v4073 = vpack.c.b16 %v4024, %v4023
  %v4074 = vpack.c.b16 %v4026, %v4025
  %v4075 = vpack.c.b16 %v4028, %v4027
  %v4076 = vpack.c.b16 %v4030, %v4029
  %v4077 = vpack.c.b16 %v4032, %v4031
  %v4078 = vpack.c.b16 %v4034, %v4033
  %v4079 = vpack.c.b16 %v4036, %v4035
  %v4080 = vpack.c.b16 %v4038, %v4037
  %v4081 = vpack.c.b16 %v4040, %v4039
  %v4082 = vpack.c.b16 %v4042, %v4041
  %v4083 = vpack.c.b16 %v4044, %v4043
  %v4084 = vpack.c.b16 %v4046, %v4045
  %v4085 = vpack.c.b16 %v4048, %v4047
  %v4086 = vpack.c.b16 %v4050, %v4049
  %v4087 = vpack.c.b16 %v4052, %v4051
  %v4088 = vpack.c.b16 %v4054, %v4053
  %v4089 = vpack.c.b16 %v4056, %v4055
  %v4090 = vpack.c.b16 %v4058, %v4057
  %v4091 = vpack.c.b16 %v4060, %v4059
  %v4092 = vpack.c.b16 %v4062, %v4061
  %v4093 = vpack.c.b16 %v4064, %v4063
  %v4094 = vpack.c.b16 %v4066, %v4065
  %v4095 = vpack.c.b16 %v4068, %v4067
  %v4096 = vpack.c.b16 %v4070, %v4069
  %v4098 = vshrl.u32 %v4071, 16
  %v4100 = vshll.u32 %v4071, 16
  %v4102 = vrot.slane %v4100, 1
  %v4103 = vor.u32 %v4098, %v4102
  %v4105 = vshll.u32 %v4072, 16
  %v4107 = vrot.slane %v4105, 1
  %v4108 = vsel %vm262, %v4103, %v4107
  %v4109 = vshrl.u32 %v4072, 16
  %v4111 = vor.u32 %v4109, %v4107
  %v4113 = vshll.u32 %v4073, 16
  %v4115 = vrot.slane %v4113, 1
  %v4116 = vsel %vm262, %v4111, %v4115
  %v4117 = vshrl.u32 %v4073, 16
  %v4119 = vor.u32 %v4117, %v4115
  %v4121 = vshll.u32 %v4074, 16
  %v4123 = vrot.slane %v4121, 1
  %v4124 = vsel %vm262, %v4119, %v4123
  %v4125 = vshrl.u32 %v4074, 16
  %v4127 = vor.u32 %v4125, %v4123
  %v4129 = vshll.u32 %v4075, 16
  %v4131 = vrot.slane %v4129, 1
  %v4132 = vsel %vm262, %v4127, %v4131
  %v4133 = vshrl.u32 %v4075, 16
  %v4135 = vor.u32 %v4133, %v4131
  %v4137 = vshll.u32 %v4076, 16
  %v4139 = vrot.slane %v4137, 1
  %v4140 = vsel %vm262, %v4135, %v4139
  %v4141 = vshrl.u32 %v4076, 16
  %v4143 = vor.u32 %v4141, %v4139
  %v4145 = vshll.u32 %v4077, 16
  %v4147 = vrot.slane %v4145, 1
  %v4148 = vsel %vm262, %v4143, %v4147
  %v4149 = vshrl.u32 %v4077, 16
  %v4151 = vor.u32 %v4149, %v4147
  %v4153 = vshll.u32 %v4078, 16
  %v4155 = vrot.slane %v4153, 1
  %v4156 = vsel %vm262, %v4151, %v4155
  %v4157 = vshrl.u32 %v4078, 16
  %v4159 = vor.u32 %v4157, %v4155
  %v4161 = vshll.u32 %v4079, 16
  %v4163 = vrot.slane %v4161, 1
  %v4164 = vsel %vm262, %v4159, %v4163
  %v4165 = vshrl.u32 %v4079, 16
  %v4167 = vor.u32 %v4165, %v4163
  %v4169 = vshll.u32 %v4080, 16
  %v4171 = vrot.slane %v4169, 1
  %v4172 = vsel %vm262, %v4167, %v4171
  %v4173 = vshrl.u32 %v4080, 16
  %v4175 = vor.u32 %v4173, %v4171
  %v4177 = vshll.u32 %v4081, 16
  %v4179 = vrot.slane %v4177, 1
  %v4180 = vsel %vm262, %v4175, %v4179
  %v4181 = vshrl.u32 %v4081, 16
  %v4183 = vor.u32 %v4181, %v4179
  %v4185 = vshll.u32 %v4082, 16
  %v4187 = vrot.slane %v4185, 1
  %v4188 = vsel %vm262, %v4183, %v4187
  %v4189 = vshrl.u32 %v4082, 16
  %v4191 = vor.u32 %v4189, %v4187
  %v4193 = vshll.u32 %v4083, 16
  %v4195 = vrot.slane %v4193, 1
  %v4196 = vsel %vm262, %v4191, %v4195
  %v4197 = vshrl.u32 %v4083, 16
  %v4199 = vor.u32 %v4197, %v4195
  %v4201 = vshll.u32 %v4084, 16
  %v4203 = vrot.slane %v4201, 1
  %v4204 = vsel %vm262, %v4199, %v4203
  %v4205 = vshrl.u32 %v4084, 16
  %v4207 = vor.u32 %v4205, %v4203
  %v4209 = vshll.u32 %v4085, 16
  %v4211 = vrot.slane %v4209, 1
  %v4212 = vsel %vm262, %v4207, %v4211
  %v4213 = vshrl.u32 %v4085, 16
  %v4215 = vor.u32 %v4213, %v4211
  %v4217 = vshll.u32 %v4086, 16
  %v4219 = vrot.slane %v4217, 1
  %v4220 = vsel %vm262, %v4215, %v4219
  %v4221 = vshrl.u32 %v4086, 16
  %v4223 = vor.u32 %v4221, %v4219
  %v4225 = vshll.u32 %v4087, 16
  %v4227 = vrot.slane %v4225, 1
  %v4228 = vsel %vm262, %v4223, %v4227
  %v4229 = vshrl.u32 %v4087, 16
  %v4231 = vor.u32 %v4229, %v4227
  %v4233 = vshll.u32 %v4088, 16
  %v4235 = vrot.slane %v4233, 1
  %v4236 = vsel %vm262, %v4231, %v4235
  %v4237 = vshrl.u32 %v4088, 16
  %v4239 = vor.u32 %v4237, %v4235
  %v4241 = vshll.u32 %v4089, 16
  %v4243 = vrot.slane %v4241, 1
  %v4244 = vsel %vm262, %v4239, %v4243
  %v4245 = vshrl.u32 %v4089, 16
  %v4247 = vor.u32 %v4245, %v4243
  %v4249 = vshll.u32 %v4090, 16
  %v4251 = vrot.slane %v4249, 1
  %v4252 = vsel %vm262, %v4247, %v4251
  %v4253 = vshrl.u32 %v4090, 16
  %v4255 = vor.u32 %v4253, %v4251
  %v4257 = vshll.u32 %v4091, 16
  %v4259 = vrot.slane %v4257, 1
  %v4260 = vsel %vm262, %v4255, %v4259
  %v4261 = vshrl.u32 %v4091, 16
  %v4263 = vor.u32 %v4261, %v4259
  %v4265 = vshll.u32 %v4092, 16
  %v4267 = vrot.slane %v4265, 1
  %v4268 = vsel %vm262, %v4263, %v4267
  %v4269 = vshrl.u32 %v4092, 16
  %v4271 = vor.u32 %v4269, %v4267
  %v4273 = vshll.u32 %v4093, 16
  %v4275 = vrot.slane %v4273, 1
  %v4276 = vsel %vm262, %v4271, %v4275
  %v4277 = vshrl.u32 %v4093, 16
  %v4279 = vor.u32 %v4277, %v4275
  %v4281 = vshll.u32 %v4094, 16
  %v4283 = vrot.slane %v4281, 1
  %v4284 = vsel %vm262, %v4279, %v4283
  %v4285 = vshrl.u32 %v4094, 16
  %v4287 = vor.u32 %v4285, %v4283
  %v4289 = vshll.u32 %v4095, 16
  %v4291 = vrot.slane %v4289, 1
  %v4292 = vsel %vm262, %v4287, %v4291
  %v4293 = vshrl.u32 %v4095, 16
  %v4295 = vor.u32 %v4293, %v4291
  %v4297 = vshll.u32 %v4096, 16
  %v4299 = vrot.slane %v4297, 1
  %v4300 = vsel %vm262, %v4295, %v4299
  %v4301 = vshrl.u32 %v4096, 16
  %v4303 = vor.u32 %v4301, %v4299
  %v4312 = vunpack.c.l.b16 %v3959
  %v4313 = vunpack.c.l.b16 %v3960
  %v4314 = vunpack.c.l.b16 %v3961
  %v4315 = vunpack.c.l.b16 %v3962
  %v4316 = vunpack.c.l.b16 %v3963
  %v4317 = vunpack.c.l.b16 %v3964
  %v4318 = vunpack.c.l.b16 %v3965
  %v4319 = vunpack.c.l.b16 %v3966
  %v4320 = vpack.c.b16 %v4313, %v4312
  %v4321 = vpack.c.b16 %v4315, %v4314
  %v4322 = vpack.c.b16 %v4317, %v4316
  %v4323 = vpack.c.b16 %v4319, %v4318
  %v4329 = vsel %vm3141, %v4108, 0
  %v4332 = vsel %vm3141, %v4116, 0
  %v4335 = vsel %vm3141, %v4124, 0
  %v4338 = vsel %vm3141, %v4132, 0
  %v4341 = vsel %vm3141, %v4140, 0
  %v4344 = vsel %vm3141, %v4148, 0
  %v4347 = vsel %vm3141, %v4156, 0
  %v4350 = vsel %vm3141, %v4164, 0
  %v4353 = vsel %vm3141, %v4172, 0
  %v4356 = vsel %vm3141, %v4180, 0
  %v4359 = vsel %vm3141, %v4188, 0
  %v4362 = vsel %vm3141, %v4196, 0
  %v4365 = vsel %vm3141, %v4204, 0
  %v4368 = vsel %vm3141, %v4212, 0
  %v4371 = vsel %vm3141, %v4220, 0
  %v4374 = vsel %vm3141, %v4228, 0
  %v4377 = vsel %vm3141, %v4236, 0
  %v4380 = vsel %vm3141, %v4244, 0
  %v4383 = vsel %vm3141, %v4252, 0
  %v4386 = vsel %vm3141, %v4260, 0
  %v4389 = vsel %vm3141, %v4268, 0
  %v4392 = vsel %vm3141, %v4276, 0
  %v4395 = vsel %vm3141, %v4284, 0
  %v4398 = vsel %vm3141, %v4292, 0
  %v4401 = vsel %vm3141, %v4300, 0
  %v4404 = vsel %vm3141, %v4303, 0
  %4406 = vmatprep.subr.bf16.mxu0 0
  %4407 = vmatpush1.bf16.msra.mxu0 0
  %4408 = vmatprep.subr.bf16.mxu0 0
  %4409 = vmatpush1.bf16.msra.mxu0 0
  %4410 = vmatprep.subr.bf16.mxu0 0
  %4411 = vmatpush1.bf16.msra.mxu0 0
  %4412 = vmatprep.subr.bf16.mxu0 0
  %4413 = vmatpush1.bf16.msra.mxu0 0
  %4414 = vmatprep.subr.bf16.mxu0 0
  %4415 = vmatpush1.bf16.msra.mxu0 %v4323
  %4416 = vmatprep.subr.bf16.mxu0 0
  %4417 = vmatpush1.bf16.msra.mxu0 %v4322
  %4418 = vmatprep.subr.bf16.mxu0 0
  %4419 = vmatpush1.bf16.msra.mxu0 %v4321
  %4420 = vmatprep.subr.bf16.mxu0 0
  %4421 = vmatpush1.bf16.msra.mxu0 %v4320
  %4422 = vmatprep.subr.bf16.mxu0 0
  %4423 = vmatpush2.bf16.msra.mxu0 0
  %4424 = vmatprep.subr.bf16.mxu0 0
  %4425 = vmatpush2.bf16.msra.mxu0 0
  %4426 = vmatprep.subr.bf16.mxu0 0
  %4427 = vmatpush2.bf16.msra.mxu0 0
  %4428 = vmatprep.subr.bf16.mxu0 0
  %4429 = vmatpush2.bf16.msra.mxu0 0
  %4430 = vmatprep.subr.bf16.mxu0 0
  %4431 = vmatpush2.bf16.msra.mxu0 0
  %4432 = vmatprep.subr.bf16.mxu0 0
  %4433 = vmatpush2.bf16.msra.mxu0 0
  %4434 = vmatprep.subr.bf16.mxu0 0
  %4435 = vmatpush2.bf16.msra.mxu0 0
  %4436 = vmatprep.subr.bf16.mxu0 0
  %4437 = vmatpush2.bf16.msra.mxu0 0
  %4438 = vmatprep.mubr.bf16.mxu0 0
  %4439 = vmatmul.mubr.bf16.gmra.mxu0 %v4329
  %v4440 = vpop.f32.mrf.mxu0
  %v4441 = vadd.f32 0.0, %v4440
  %v4442 = vpop.f32.mrf.mxu0
  %v4443 = vpop.f32.mrf.mxu0
  %v4444 = vadd.f32 0.0, %v4443
  %v4445 = vpop.f32.mrf.mxu0
  %4446 = vmatprep.mubr.bf16.mxu0 0
  %4447 = vmatmul.mubr.bf16.gmra.mxu0 %v4332
  %v4448 = vpop.f32.mrf.mxu0
  %v4449 = vadd.f32 0.0, %v4448
  %v4450 = vpop.f32.mrf.mxu0
  %v4451 = vpop.f32.mrf.mxu0
  %v4452 = vadd.f32 0.0, %v4451
  %v4453 = vpop.f32.mrf.mxu0
  %4454 = vmatprep.mubr.bf16.mxu0 0
  %4455 = vmatmul.mubr.bf16.gmra.mxu0 %v4335
  %v4456 = vpop.f32.mrf.mxu0
  %v4457 = vadd.f32 0.0, %v4456
  %v4458 = vpop.f32.mrf.mxu0
  %v4459 = vpop.f32.mrf.mxu0
  %v4460 = vadd.f32 0.0, %v4459
  %v4461 = vpop.f32.mrf.mxu0
  %4462 = vmatprep.mubr.bf16.mxu0 0
  %4463 = vmatmul.mubr.bf16.gmra.mxu0 %v4338
  %v4464 = vpop.f32.mrf.mxu0
  %v4465 = vadd.f32 0.0, %v4464
  %v4466 = vpop.f32.mrf.mxu0
  %v4467 = vpop.f32.mrf.mxu0
  %v4468 = vadd.f32 0.0, %v4467
  %v4469 = vpop.f32.mrf.mxu0
  %4470 = vmatprep.mubr.bf16.mxu0 0
  %4471 = vmatmul.mubr.bf16.gmra.mxu0 %v4341
  %v4472 = vpop.f32.mrf.mxu0
  %v4473 = vadd.f32 0.0, %v4472
  %v4474 = vpop.f32.mrf.mxu0
  %v4475 = vpop.f32.mrf.mxu0
  %v4476 = vadd.f32 0.0, %v4475
  %v4477 = vpop.f32.mrf.mxu0
  %4478 = vmatprep.mubr.bf16.mxu0 0
  %4479 = vmatmul.mubr.bf16.gmra.mxu0 %v4344
  %v4480 = vpop.f32.mrf.mxu0
  %v4481 = vadd.f32 0.0, %v4480
  %v4482 = vpop.f32.mrf.mxu0
  %v4483 = vpop.f32.mrf.mxu0
  %v4484 = vadd.f32 0.0, %v4483
  %v4485 = vpop.f32.mrf.mxu0
  %4486 = vmatprep.mubr.bf16.mxu0 0
  %4487 = vmatmul.mubr.bf16.gmra.mxu0 %v4347
  %v4488 = vpop.f32.mrf.mxu0
  %v4489 = vadd.f32 0.0, %v4488
  %v4490 = vpop.f32.mrf.mxu0
  %v4491 = vpop.f32.mrf.mxu0
  %v4492 = vadd.f32 0.0, %v4491
  %v4493 = vpop.f32.mrf.mxu0
  %4494 = vmatprep.mubr.bf16.mxu0 0
  %4495 = vmatmul.mubr.bf16.gmra.mxu0 %v4350
  %v4496 = vpop.f32.mrf.mxu0
  %v4497 = vadd.f32 0.0, %v4496
  %v4498 = vpop.f32.mrf.mxu0
  %v4499 = vpop.f32.mrf.mxu0
  %v4500 = vadd.f32 0.0, %v4499
  %v4501 = vpop.f32.mrf.mxu0
  %4502 = vmatprep.mubr.bf16.mxu0 0
  %4503 = vmatmul.mubr.bf16.gmra.mxu0 %v4353
  %v4504 = vpop.f32.mrf.mxu0
  %v4505 = vadd.f32 0.0, %v4504
  %v4506 = vpop.f32.mrf.mxu0
  %v4507 = vpop.f32.mrf.mxu0
  %v4508 = vadd.f32 0.0, %v4507
  %v4509 = vpop.f32.mrf.mxu0
  %4510 = vmatprep.mubr.bf16.mxu0 0
  %4511 = vmatmul.mubr.bf16.gmra.mxu0 %v4356
  %v4512 = vpop.f32.mrf.mxu0
  %v4513 = vadd.f32 0.0, %v4512
  %v4514 = vpop.f32.mrf.mxu0
  %v4515 = vpop.f32.mrf.mxu0
  %v4516 = vadd.f32 0.0, %v4515
  %v4517 = vpop.f32.mrf.mxu0
  %4518 = vmatprep.mubr.bf16.mxu0 0
  %4519 = vmatmul.mubr.bf16.gmra.mxu0 %v4359
  %v4520 = vpop.f32.mrf.mxu0
  %v4521 = vadd.f32 0.0, %v4520
  %v4522 = vpop.f32.mrf.mxu0
  %v4523 = vpop.f32.mrf.mxu0
  %v4524 = vadd.f32 0.0, %v4523
  %v4525 = vpop.f32.mrf.mxu0
  %4526 = vmatprep.mubr.bf16.mxu0 0
  %4527 = vmatmul.mubr.bf16.gmra.mxu0 %v4362
  %v4528 = vpop.f32.mrf.mxu0
  %v4529 = vadd.f32 0.0, %v4528
  %v4530 = vpop.f32.mrf.mxu0
  %v4531 = vpop.f32.mrf.mxu0
  %v4532 = vadd.f32 0.0, %v4531
  %v4533 = vpop.f32.mrf.mxu0
  %4534 = vmatprep.mubr.bf16.mxu0 0
  %4535 = vmatmul.mubr.bf16.gmra.mxu0 %v4365
  %v4536 = vpop.f32.mrf.mxu0
  %v4537 = vadd.f32 0.0, %v4536
  %v4538 = vpop.f32.mrf.mxu0
  %v4539 = vpop.f32.mrf.mxu0
  %v4540 = vadd.f32 0.0, %v4539
  %v4541 = vpop.f32.mrf.mxu0
  %4542 = vmatprep.mubr.bf16.mxu0 0
  %4543 = vmatmul.mubr.bf16.gmra.mxu0 %v4368
  %v4544 = vpop.f32.mrf.mxu0
  %v4545 = vadd.f32 0.0, %v4544
  %v4546 = vpop.f32.mrf.mxu0
  %v4547 = vpop.f32.mrf.mxu0
  %v4548 = vadd.f32 0.0, %v4547
  %v4549 = vpop.f32.mrf.mxu0
  %4550 = vmatprep.mubr.bf16.mxu0 0
  %4551 = vmatmul.mubr.bf16.gmra.mxu0 %v4371
  %v4552 = vpop.f32.mrf.mxu0
  %v4553 = vadd.f32 0.0, %v4552
  %v4554 = vpop.f32.mrf.mxu0
  %v4555 = vpop.f32.mrf.mxu0
  %v4556 = vadd.f32 0.0, %v4555
  %v4557 = vpop.f32.mrf.mxu0
  %4558 = vmatprep.mubr.bf16.mxu0 0
  %4559 = vmatmul.mubr.bf16.gmra.mxu0 %v4374
  %v4560 = vpop.f32.mrf.mxu0
  %v4561 = vadd.f32 0.0, %v4560
  %v4562 = vpop.f32.mrf.mxu0
  %v4563 = vpop.f32.mrf.mxu0
  %v4564 = vadd.f32 0.0, %v4563
  %v4565 = vpop.f32.mrf.mxu0
  %4566 = vmatprep.mubr.bf16.mxu0 0
  %4567 = vmatmul.mubr.bf16.gmra.mxu0 %v4377
  %v4568 = vpop.f32.mrf.mxu0
  %v4569 = vadd.f32 0.0, %v4568
  %v4570 = vpop.f32.mrf.mxu0
  %v4571 = vpop.f32.mrf.mxu0
  %v4572 = vadd.f32 0.0, %v4571
  %v4573 = vpop.f32.mrf.mxu0
  %4574 = vmatprep.mubr.bf16.mxu0 0
  %4575 = vmatmul.mubr.bf16.gmra.mxu0 %v4380
  %v4576 = vpop.f32.mrf.mxu0
  %v4577 = vadd.f32 0.0, %v4576
  %v4578 = vpop.f32.mrf.mxu0
  %v4579 = vpop.f32.mrf.mxu0
  %v4580 = vadd.f32 0.0, %v4579
  %v4581 = vpop.f32.mrf.mxu0
  %4582 = vmatprep.mubr.bf16.mxu0 0
  %4583 = vmatmul.mubr.bf16.gmra.mxu0 %v4383
  %v4584 = vpop.f32.mrf.mxu0
  %v4585 = vadd.f32 0.0, %v4584
  %v4586 = vpop.f32.mrf.mxu0
  %v4587 = vpop.f32.mrf.mxu0
  %v4588 = vadd.f32 0.0, %v4587
  %v4589 = vpop.f32.mrf.mxu0
  %4590 = vmatprep.mubr.bf16.mxu0 0
  %4591 = vmatmul.mubr.bf16.gmra.mxu0 %v4386
  %v4592 = vpop.f32.mrf.mxu0
  %v4593 = vadd.f32 0.0, %v4592
  %v4594 = vpop.f32.mrf.mxu0
  %v4595 = vpop.f32.mrf.mxu0
  %v4596 = vadd.f32 0.0, %v4595
  %v4597 = vpop.f32.mrf.mxu0
  %4598 = vmatprep.mubr.bf16.mxu0 0
  %4599 = vmatmul.mubr.bf16.gmra.mxu0 %v4389
  %v4600 = vpop.f32.mrf.mxu0
  %v4601 = vadd.f32 0.0, %v4600
  %v4602 = vpop.f32.mrf.mxu0
  %v4603 = vpop.f32.mrf.mxu0
  %v4604 = vadd.f32 0.0, %v4603
  %v4605 = vpop.f32.mrf.mxu0
  %4606 = vmatprep.mubr.bf16.mxu0 0
  %4607 = vmatmul.mubr.bf16.gmra.mxu0 %v4392
  %v4608 = vpop.f32.mrf.mxu0
  %v4609 = vadd.f32 0.0, %v4608
  %v4610 = vpop.f32.mrf.mxu0
  %v4611 = vpop.f32.mrf.mxu0
  %v4612 = vadd.f32 0.0, %v4611
  %v4613 = vpop.f32.mrf.mxu0
  %4614 = vmatprep.mubr.bf16.mxu0 0
  %4615 = vmatmul.mubr.bf16.gmra.mxu0 %v4395
  %v4616 = vpop.f32.mrf.mxu0
  %v4617 = vadd.f32 0.0, %v4616
  %v4618 = vpop.f32.mrf.mxu0
  %v4619 = vpop.f32.mrf.mxu0
  %v4620 = vadd.f32 0.0, %v4619
  %v4621 = vpop.f32.mrf.mxu0
  %4622 = vmatprep.mubr.bf16.mxu0 0
  %4623 = vmatmul.mubr.bf16.gmra.mxu0 %v4398
  %v4624 = vpop.f32.mrf.mxu0
  %v4625 = vadd.f32 0.0, %v4624
  %v4626 = vpop.f32.mrf.mxu0
  %v4627 = vpop.f32.mrf.mxu0
  %v4628 = vadd.f32 0.0, %v4627
  %v4629 = vpop.f32.mrf.mxu0
  %4630 = vmatprep.mubr.bf16.mxu0 0
  %4631 = vmatmul.mubr.bf16.gmra.mxu0 %v4401
  %v4632 = vpop.f32.mrf.mxu0
  %v4633 = vadd.f32 0.0, %v4632
  %v4634 = vpop.f32.mrf.mxu0
  %v4635 = vpop.f32.mrf.mxu0
  %v4636 = vadd.f32 0.0, %v4635
  %v4637 = vpop.f32.mrf.mxu0
  %4638 = vmatprep.mubr.bf16.mxu0 0
  %4639 = vmatmul.mubr.bf16.gmra.mxu0 %v4404
  %v4640 = vpop.f32.mrf.mxu0
  %v4641 = vadd.f32 0.0, %v4640
  %v4642 = vpop.f32.mrf.mxu0
  %v4643 = vpop.f32.mrf.mxu0
  %v4644 = vpop.f32.mrf.mxu0
  %4645 = vdwg.mxu0
  %v4646 = vpack.c.b16 %v4069, %v4069
  %v4655 = vunpack.c.l.b16 %v3949
  %v4656 = vunpack.c.l.b16 %v3950
  %v4657 = vunpack.c.l.b16 %v3951
  %v4658 = vunpack.c.l.b16 %v3952
  %v4659 = vunpack.c.l.b16 %v3953
  %v4660 = vunpack.c.l.b16 %v3954
  %v4661 = vunpack.c.l.b16 %v3955
  %v4662 = vunpack.c.l.b16 %v3956
  %v4663 = vpack.c.b16 %v4656, %v4655
  %v4664 = vpack.c.b16 %v4658, %v4657
  %v4665 = vpack.c.b16 %v4660, %v4659
  %v4666 = vpack.c.b16 %v4662, %v4661
  %v4671 = vsel %vm3141, %v4071, 0
  %v4673 = vsel %vm3141, %v4072, 0
  %v4675 = vsel %vm3141, %v4073, 0
  %v4677 = vsel %vm3141, %v4074, 0
  %v4679 = vsel %vm3141, %v4075, 0
  %v4681 = vsel %vm3141, %v4076, 0
  %v4683 = vsel %vm3141, %v4077, 0
  %v4685 = vsel %vm3141, %v4078, 0
  %v4687 = vsel %vm3141, %v4079, 0
  %v4689 = vsel %vm3141, %v4080, 0
  %v4691 = vsel %vm3141, %v4081, 0
  %v4693 = vsel %vm3141, %v4082, 0
  %v4695 = vsel %vm3141, %v4083, 0
  %v4697 = vsel %vm3141, %v4084, 0
  %v4699 = vsel %vm3141, %v4085, 0
  %v4701 = vsel %vm3141, %v4086, 0
  %v4703 = vsel %vm3141, %v4087, 0
  %v4705 = vsel %vm3141, %v4088, 0
  %v4707 = vsel %vm3141, %v4089, 0
  %v4709 = vsel %vm3141, %v4090, 0
  %v4711 = vsel %vm3141, %v4091, 0
  %v4713 = vsel %vm3141, %v4092, 0
  %v4715 = vsel %vm3141, %v4093, 0
  %v4717 = vsel %vm3141, %v4094, 0
  %v4719 = vsel %vm3141, %v4095, 0
  %v4722 = vsel %vm3141, %v4646, 0
  %4724 = vmatprep.subr.bf16.mxu0 0
  %4725 = vmatpush1.bf16.msra.mxu0 0
  %4726 = vmatprep.subr.bf16.mxu0 0
  %4727 = vmatpush1.bf16.msra.mxu0 0
  %4728 = vmatprep.subr.bf16.mxu0 0
  %4729 = vmatpush1.bf16.msra.mxu0 0
  %4730 = vmatprep.subr.bf16.mxu0 0
  %4731 = vmatpush1.bf16.msra.mxu0 0
  %4732 = vmatprep.subr.bf16.mxu0 0
  %4733 = vmatpush1.bf16.msra.mxu0 %v4666
  %4734 = vmatprep.subr.bf16.mxu0 0
  %4735 = vmatpush1.bf16.msra.mxu0 %v4665
  %4736 = vmatprep.subr.bf16.mxu0 0
  %4737 = vmatpush1.bf16.msra.mxu0 %v4664
  %4738 = vmatprep.subr.bf16.mxu0 0
  %4739 = vmatpush1.bf16.msra.mxu0 %v4663
  %4740 = vmatprep.subr.bf16.mxu0 0
  %4741 = vmatpush2.bf16.msra.mxu0 0
  %4742 = vmatprep.subr.bf16.mxu0 0
  %4743 = vmatpush2.bf16.msra.mxu0 0
  %4744 = vmatprep.subr.bf16.mxu0 0
  %4745 = vmatpush2.bf16.msra.mxu0 0
  %4746 = vmatprep.subr.bf16.mxu0 0
  %4747 = vmatpush2.bf16.msra.mxu0 0
  %4748 = vmatprep.subr.bf16.mxu0 0
  %4749 = vmatpush2.bf16.msra.mxu0 0
  %4750 = vmatprep.subr.bf16.mxu0 0
  %4751 = vmatpush2.bf16.msra.mxu0 0
  %4752 = vmatprep.subr.bf16.mxu0 0
  %4753 = vmatpush2.bf16.msra.mxu0 0
  %4754 = vmatprep.subr.bf16.mxu0 0
  %4755 = vmatpush2.bf16.msra.mxu0 0
  %4756 = vmatprep.mubr.bf16.mxu0 0
  %4757 = vmatmul.mubr.bf16.gmra.mxu0 %v4671
  %v4758 = vpop.f32.mrf.mxu0
  %v4759 = vadd.f32 %v4441, %v4758
  %v4760 = vpop.f32.mrf.mxu0
  %v4761 = vpop.f32.mrf.mxu0
  %v4762 = vadd.f32 %v4444, %v4761
  %v4763 = vpop.f32.mrf.mxu0
  %4764 = vmatprep.mubr.bf16.mxu0 0
  %4765 = vmatmul.mubr.bf16.gmra.mxu0 %v4673
  %v4766 = vpop.f32.mrf.mxu0
  %v4767 = vadd.f32 %v4449, %v4766
  %v4768 = vpop.f32.mrf.mxu0
  %v4769 = vpop.f32.mrf.mxu0
  %v4770 = vadd.f32 %v4452, %v4769
  %v4771 = vpop.f32.mrf.mxu0
  %4772 = vmatprep.mubr.bf16.mxu0 0
  %4773 = vmatmul.mubr.bf16.gmra.mxu0 %v4675
  %v4774 = vpop.f32.mrf.mxu0
  %v4775 = vadd.f32 %v4457, %v4774
  %v4776 = vpop.f32.mrf.mxu0
  %v4777 = vpop.f32.mrf.mxu0
  %v4778 = vadd.f32 %v4460, %v4777
  %v4779 = vpop.f32.mrf.mxu0
  %4780 = vmatprep.mubr.bf16.mxu0 0
  %4781 = vmatmul.mubr.bf16.gmra.mxu0 %v4677
  %v4782 = vpop.f32.mrf.mxu0
  %v4783 = vadd.f32 %v4465, %v4782
  %v4784 = vpop.f32.mrf.mxu0
  %v4785 = vpop.f32.mrf.mxu0
  %v4786 = vadd.f32 %v4468, %v4785
  %v4787 = vpop.f32.mrf.mxu0
  %4788 = vmatprep.mubr.bf16.mxu0 0
  %4789 = vmatmul.mubr.bf16.gmra.mxu0 %v4679
  %v4790 = vpop.f32.mrf.mxu0
  %v4791 = vadd.f32 %v4473, %v4790
  %v4792 = vpop.f32.mrf.mxu0
  %v4793 = vpop.f32.mrf.mxu0
  %v4794 = vadd.f32 %v4476, %v4793
  %v4795 = vpop.f32.mrf.mxu0
  %4796 = vmatprep.mubr.bf16.mxu0 0
  %4797 = vmatmul.mubr.bf16.gmra.mxu0 %v4681
  %v4798 = vpop.f32.mrf.mxu0
  %v4799 = vadd.f32 %v4481, %v4798
  %v4800 = vpop.f32.mrf.mxu0
  %v4801 = vpop.f32.mrf.mxu0
  %v4802 = vadd.f32 %v4484, %v4801
  %v4803 = vpop.f32.mrf.mxu0
  %4804 = vmatprep.mubr.bf16.mxu0 0
  %4805 = vmatmul.mubr.bf16.gmra.mxu0 %v4683
  %v4806 = vpop.f32.mrf.mxu0
  %v4807 = vadd.f32 %v4489, %v4806
  %v4808 = vpop.f32.mrf.mxu0
  %v4809 = vpop.f32.mrf.mxu0
  %v4810 = vadd.f32 %v4492, %v4809
  %v4811 = vpop.f32.mrf.mxu0
  %4812 = vmatprep.mubr.bf16.mxu0 0
  %4813 = vmatmul.mubr.bf16.gmra.mxu0 %v4685
  %v4814 = vpop.f32.mrf.mxu0
  %v4815 = vadd.f32 %v4497, %v4814
  %v4816 = vpop.f32.mrf.mxu0
  %v4817 = vpop.f32.mrf.mxu0
  %v4818 = vadd.f32 %v4500, %v4817
  %v4819 = vpop.f32.mrf.mxu0
  %4820 = vmatprep.mubr.bf16.mxu0 0
  %4821 = vmatmul.mubr.bf16.gmra.mxu0 %v4687
  %v4822 = vpop.f32.mrf.mxu0
  %v4823 = vadd.f32 %v4505, %v4822
  %v4824 = vpop.f32.mrf.mxu0
  %v4825 = vpop.f32.mrf.mxu0
  %v4826 = vadd.f32 %v4508, %v4825
  %v4827 = vpop.f32.mrf.mxu0
  %4828 = vmatprep.mubr.bf16.mxu0 0
  %4829 = vmatmul.mubr.bf16.gmra.mxu0 %v4689
  %v4830 = vpop.f32.mrf.mxu0
  %v4831 = vadd.f32 %v4513, %v4830
  %v4832 = vpop.f32.mrf.mxu0
  %v4833 = vpop.f32.mrf.mxu0
  %v4834 = vadd.f32 %v4516, %v4833
  %v4835 = vpop.f32.mrf.mxu0
  %4836 = vmatprep.mubr.bf16.mxu0 0
  %4837 = vmatmul.mubr.bf16.gmra.mxu0 %v4691
  %v4838 = vpop.f32.mrf.mxu0
  %v4839 = vadd.f32 %v4521, %v4838
  %v4840 = vpop.f32.mrf.mxu0
  %v4841 = vpop.f32.mrf.mxu0
  %v4842 = vadd.f32 %v4524, %v4841
  %v4843 = vpop.f32.mrf.mxu0
  %4844 = vmatprep.mubr.bf16.mxu0 0
  %4845 = vmatmul.mubr.bf16.gmra.mxu0 %v4693
  %v4846 = vpop.f32.mrf.mxu0
  %v4847 = vadd.f32 %v4529, %v4846
  %v4848 = vpop.f32.mrf.mxu0
  %v4849 = vpop.f32.mrf.mxu0
  %v4850 = vadd.f32 %v4532, %v4849
  %v4851 = vpop.f32.mrf.mxu0
  %4852 = vmatprep.mubr.bf16.mxu0 0
  %4853 = vmatmul.mubr.bf16.gmra.mxu0 %v4695
  %v4854 = vpop.f32.mrf.mxu0
  %v4855 = vadd.f32 %v4537, %v4854
  %v4856 = vpop.f32.mrf.mxu0
  %v4857 = vpop.f32.mrf.mxu0
  %v4858 = vadd.f32 %v4540, %v4857
  %v4859 = vpop.f32.mrf.mxu0
  %4860 = vmatprep.mubr.bf16.mxu0 0
  %4861 = vmatmul.mubr.bf16.gmra.mxu0 %v4697
  %v4862 = vpop.f32.mrf.mxu0
  %v4863 = vadd.f32 %v4545, %v4862
  %v4864 = vpop.f32.mrf.mxu0
  %v4865 = vpop.f32.mrf.mxu0
  %v4866 = vadd.f32 %v4548, %v4865
  %v4867 = vpop.f32.mrf.mxu0
  %4868 = vmatprep.mubr.bf16.mxu0 0
  %4869 = vmatmul.mubr.bf16.gmra.mxu0 %v4699
  %v4870 = vpop.f32.mrf.mxu0
  %v4871 = vadd.f32 %v4553, %v4870
  %v4872 = vpop.f32.mrf.mxu0
  %v4873 = vpop.f32.mrf.mxu0
  %v4874 = vadd.f32 %v4556, %v4873
  %v4875 = vpop.f32.mrf.mxu0
  %4876 = vmatprep.mubr.bf16.mxu0 0
  %4877 = vmatmul.mubr.bf16.gmra.mxu0 %v4701
  %v4878 = vpop.f32.mrf.mxu0
  %v4879 = vadd.f32 %v4561, %v4878
  %v4880 = vpop.f32.mrf.mxu0
  %v4881 = vpop.f32.mrf.mxu0
  %v4882 = vadd.f32 %v4564, %v4881
  %v4883 = vpop.f32.mrf.mxu0
  %4884 = vmatprep.mubr.bf16.mxu0 0
  %4885 = vmatmul.mubr.bf16.gmra.mxu0 %v4703
  %v4886 = vpop.f32.mrf.mxu0
  %v4887 = vadd.f32 %v4569, %v4886
  %v4888 = vpop.f32.mrf.mxu0
  %v4889 = vpop.f32.mrf.mxu0
  %v4890 = vadd.f32 %v4572, %v4889
  %v4891 = vpop.f32.mrf.mxu0
  %4892 = vmatprep.mubr.bf16.mxu0 0
  %4893 = vmatmul.mubr.bf16.gmra.mxu0 %v4705
  %v4894 = vpop.f32.mrf.mxu0
  %v4895 = vadd.f32 %v4577, %v4894
  %v4896 = vpop.f32.mrf.mxu0
  %v4897 = vpop.f32.mrf.mxu0
  %v4898 = vadd.f32 %v4580, %v4897
  %v4899 = vpop.f32.mrf.mxu0
  %4900 = vmatprep.mubr.bf16.mxu0 0
  %4901 = vmatmul.mubr.bf16.gmra.mxu0 %v4707
  %v4902 = vpop.f32.mrf.mxu0
  %v4903 = vadd.f32 %v4585, %v4902
  %v4904 = vpop.f32.mrf.mxu0
  %v4905 = vpop.f32.mrf.mxu0
  %v4906 = vadd.f32 %v4588, %v4905
  %v4907 = vpop.f32.mrf.mxu0
  %4908 = vmatprep.mubr.bf16.mxu0 0
  %4909 = vmatmul.mubr.bf16.gmra.mxu0 %v4709
  %v4910 = vpop.f32.mrf.mxu0
  %v4911 = vadd.f32 %v4593, %v4910
  %v4912 = vpop.f32.mrf.mxu0
  %v4913 = vpop.f32.mrf.mxu0
  %v4914 = vadd.f32 %v4596, %v4913
  %v4915 = vpop.f32.mrf.mxu0
  %4916 = vmatprep.mubr.bf16.mxu0 0
  %4917 = vmatmul.mubr.bf16.gmra.mxu0 %v4711
  %v4918 = vpop.f32.mrf.mxu0
  %v4919 = vadd.f32 %v4601, %v4918
  %v4920 = vpop.f32.mrf.mxu0
  %v4921 = vpop.f32.mrf.mxu0
  %v4922 = vadd.f32 %v4604, %v4921
  %v4923 = vpop.f32.mrf.mxu0
  %4924 = vmatprep.mubr.bf16.mxu0 0
  %4925 = vmatmul.mubr.bf16.gmra.mxu0 %v4713
  %v4926 = vpop.f32.mrf.mxu0
  %v4927 = vadd.f32 %v4609, %v4926
  %v4928 = vpop.f32.mrf.mxu0
  %v4929 = vpop.f32.mrf.mxu0
  %v4930 = vadd.f32 %v4612, %v4929
  %v4931 = vpop.f32.mrf.mxu0
  %4932 = vmatprep.mubr.bf16.mxu0 0
  %4933 = vmatmul.mubr.bf16.gmra.mxu0 %v4715
  %v4934 = vpop.f32.mrf.mxu0
  %v4935 = vadd.f32 %v4617, %v4934
  %v4936 = vpop.f32.mrf.mxu0
  %v4937 = vpop.f32.mrf.mxu0
  %v4938 = vadd.f32 %v4620, %v4937
  %v4939 = vpop.f32.mrf.mxu0
  %4940 = vmatprep.mubr.bf16.mxu0 0
  %4941 = vmatmul.mubr.bf16.gmra.mxu0 %v4717
  %v4942 = vpop.f32.mrf.mxu0
  %v4943 = vadd.f32 %v4625, %v4942
  %v4944 = vpop.f32.mrf.mxu0
  %v4945 = vpop.f32.mrf.mxu0
  %v4946 = vadd.f32 %v4628, %v4945
  %v4947 = vpop.f32.mrf.mxu0
  %4948 = vmatprep.mubr.bf16.mxu0 0
  %4949 = vmatmul.mubr.bf16.gmra.mxu0 %v4719
  %v4950 = vpop.f32.mrf.mxu0
  %v4951 = vadd.f32 %v4633, %v4950
  %v4952 = vpop.f32.mrf.mxu0
  %v4953 = vpop.f32.mrf.mxu0
  %v4954 = vadd.f32 %v4636, %v4953
  %v4955 = vpop.f32.mrf.mxu0
  %4956 = vmatprep.mubr.bf16.mxu0 0
  %4957 = vmatmul.mubr.bf16.gmra.mxu0 %v4722
  %v4958 = vpop.f32.mrf.mxu0
  %v4959 = vadd.f32 %v4641, %v4958
  %v4960 = vpop.f32.mrf.mxu0
  %v4961 = vpop.f32.mrf.mxu0
  %v4962 = vpop.f32.mrf.mxu0
  %4963 = vdwg.mxu0
  %v4964 = vld [vmem:[#allocation2 + $0x10] sm:$0xe]
  %v4965 = vld [vmem:[#allocation2 + $0x14] sm:$0xf]
  %v4966 = vld [vmem:[#allocation2 + $0x18] sm:$0xf]
  %v4967 = vld [vmem:[#allocation2 + $0x1c] sm:$0xf]
  %v4968 = vld [vmem:[#allocation2 + $0x20] sm:$0xf]
  %v4969 = vld [vmem:[#allocation2 + $0x24] sm:$0xf]
  %v4970 = vld [vmem:[#allocation2 + $0x28] sm:$0xf]
  %v4971 = vld [vmem:[#allocation2 + $0x2c] sm:$0xf]
  %v4972 = vld [vmem:[#allocation2 + $0x30] sm:$0xf]
  %v4973 = vld [vmem:[#allocation2 + $0x34] sm:$0xf]
  %v4974 = vld [vmem:[#allocation2 + $0x38] sm:$0xf]
  %v4975 = vld [vmem:[#allocation2 + $0x3c] sm:$0xf]
  %v4976 = vld [vmem:[#allocation2 + $0x40] sm:$0xf]
  %v4977 = vld [vmem:[#allocation2 + $0x44] sm:$0xf]
  %v4978 = vld [vmem:[#allocation2 + $0x48] sm:$0xf]
  %v4979 = vld [vmem:[#allocation2 + $0x4c] sm:$0xf]
  %v4980 = vld [vmem:[#allocation2 + $0x50] sm:$0xf]
  %v4981 = vld [vmem:[#allocation2 + $0x54] sm:$0xf]
  %v4982 = vld [vmem:[#allocation2 + $0x58] sm:$0xf]
  %v4983 = vld [vmem:[#allocation2 + $0x5c] sm:$0xf]
  %v4984 = vld [vmem:[#allocation2 + $0x60] sm:$0xf]
  %v4985 = vld [vmem:[#allocation2 + $0x64] sm:$0xf]
  %v4986 = vld [vmem:[#allocation2 + $0x68] sm:$0xf]
  %v4987 = vld [vmem:[#allocation2 + $0x6c] sm:$0xf]
  %v4988 = vld [vmem:[#allocation2 + $0x70] sm:$0xf]
  %v4989 = vld [vmem:[#allocation2 + $0x74] sm:$0xf]
  %v4990 = vld [vmem:[#allocation2 + $0x78] sm:$0xf]
  %v4991 = vld [vmem:[#allocation2 + $0x7c] sm:$0xf]
  %v4992 = vld [vmem:[#allocation2 + $0x80] sm:$0xf]
  %v4993 = vld [vmem:[#allocation2 + $0x84] sm:$0xf]
  %v4994 = vld [vmem:[#allocation2 + $0x88] sm:$0xf]
  %v4995 = vld [vmem:[#allocation2 + $0x8c] sm:$0xf]
  %v4996 = vld [vmem:[#allocation2 + $0x90] sm:$0xf]
  %v4997 = vld [vmem:[#allocation2 + $0x94] sm:$0xf]
  %v4998 = vld [vmem:[#allocation2 + $0x98] sm:$0xf]
  %v4999 = vld [vmem:[#allocation2 + $0x9c] sm:$0xf]
  %v5000 = vld [vmem:[#allocation2 + $0xa0] sm:$0xf]
  %v5001 = vld [vmem:[#allocation2 + $0xa4] sm:$0xf]
  %v5002 = vld [vmem:[#allocation2 + $0xa8] sm:$0xf]
  %v5003 = vld [vmem:[#allocation2 + $0xac] sm:$0xf]
  %v5004 = vld [vmem:[#allocation2 + $0xb0] sm:$0xf]
  %v5005 = vld [vmem:[#allocation2 + $0xb4] sm:$0xf]
  %v5006 = vld [vmem:[#allocation2 + $0xb8] sm:$0xf]
  %v5007 = vld [vmem:[#allocation2 + $0xbc] sm:$0xf]
  %v5008 = vld [vmem:[#allocation2 + $0xc0] sm:$0xf]
  %v5009 = vld [vmem:[#allocation2 + $0xc4] sm:$0xf]
  %v5010 = vld [vmem:[#allocation2 + $0xc8] sm:$0xf]
  %v5011 = vld [vmem:[#allocation2 + $0xcc] sm:$0xf]
  %v5012 = vld [vmem:[#allocation2 + $0xd0] sm:$0xf]
  %v5013 = vld [vmem:[#allocation2 + $0xd4] sm:$0xf]
  %v5014 = vld [vmem:[#allocation2 + $0xd8] sm:$0xf]
  %v5015 = vld [vmem:[#allocation2 + $0xdc] sm:$0x1]
  %s5016 = scalar_lea.vmem %s3, 64
  %v5017 = vld [vmem:[%s5016] sm:$0xf]
  %v5018 = vld [vmem:[%s5016 + $0x4] sm:$0xf]
  %v5019 = vld [vmem:[%s5016 + $0x8] sm:$0xf]
  %v5020 = vld [vmem:[%s5016 + $0xc] sm:$0xf]
  %v5021 = vld [vmem:[%s5016 + $0x10] sm:$0xf]
  %v5022 = vld [vmem:[%s5016 + $0x14] sm:$0xf]
  %v5023 = vld [vmem:[%s5016 + $0x18] sm:$0xf]
  %v5024 = vld [vmem:[%s5016 + $0x1c] sm:$0xf]
  %v5077 = vunpack.c.l.b16 %v4964
  %v5078 = vunpack.c.l.b16 %v4965
  %v5079 = vunpack.c.l.b16 %v4966
  %v5080 = vunpack.c.l.b16 %v4967
  %v5081 = vunpack.c.l.b16 %v4968
  %v5082 = vunpack.c.l.b16 %v4969
  %v5083 = vunpack.c.l.b16 %v4970
  %v5084 = vunpack.c.l.b16 %v4971
  %v5085 = vunpack.c.l.b16 %v4972
  %v5086 = vunpack.c.l.b16 %v4973
  %v5087 = vunpack.c.l.b16 %v4974
  %v5088 = vunpack.c.l.b16 %v4975
  %v5089 = vunpack.c.l.b16 %v4976
  %v5090 = vunpack.c.l.b16 %v4977
  %v5091 = vunpack.c.l.b16 %v4978
  %v5092 = vunpack.c.l.b16 %v4979
  %v5093 = vunpack.c.l.b16 %v4980
  %v5094 = vunpack.c.l.b16 %v4981
  %v5095 = vunpack.c.l.b16 %v4982
  %v5096 = vunpack.c.l.b16 %v4983
  %v5097 = vunpack.c.l.b16 %v4984
  %v5098 = vunpack.c.l.b16 %v4985
  %v5099 = vunpack.c.l.b16 %v4986
  %v5100 = vunpack.c.l.b16 %v4987
  %v5101 = vunpack.c.l.b16 %v4988
  %v5102 = vunpack.c.l.b16 %v4989
  %v5103 = vunpack.c.l.b16 %v4990
  %v5104 = vunpack.c.l.b16 %v4991
  %v5105 = vunpack.c.l.b16 %v4992
  %v5106 = vunpack.c.l.b16 %v4993
  %v5107 = vunpack.c.l.b16 %v4994
  %v5108 = vunpack.c.l.b16 %v4995
  %v5109 = vunpack.c.l.b16 %v4996
  %v5110 = vunpack.c.l.b16 %v4997
  %v5111 = vunpack.c.l.b16 %v4998
  %v5112 = vunpack.c.l.b16 %v4999
  %v5113 = vunpack.c.l.b16 %v5000
  %v5114 = vunpack.c.l.b16 %v5001
  %v5115 = vunpack.c.l.b16 %v5002
  %v5116 = vunpack.c.l.b16 %v5003
  %v5117 = vunpack.c.l.b16 %v5004
  %v5118 = vunpack.c.l.b16 %v5005
  %v5119 = vunpack.c.l.b16 %v5006
  %v5120 = vunpack.c.l.b16 %v5007
  %v5121 = vunpack.c.l.b16 %v5008
  %v5122 = vunpack.c.l.b16 %v5009
  %v5123 = vunpack.c.l.b16 %v5010
  %v5124 = vunpack.c.l.b16 %v5011
  %v5125 = vunpack.c.l.b16 %v5012
  %v5126 = vunpack.c.l.b16 %v5013
  %v5127 = vunpack.c.l.b16 %v5014
  %v5128 = vunpack.c.l.b16 %v5015
  %v5129 = vpack.c.b16 %v5078, %v5077
  %v5130 = vpack.c.b16 %v5080, %v5079
  %v5131 = vpack.c.b16 %v5082, %v5081
  %v5132 = vpack.c.b16 %v5084, %v5083
  %v5133 = vpack.c.b16 %v5086, %v5085
  %v5134 = vpack.c.b16 %v5088, %v5087
  %v5135 = vpack.c.b16 %v5090, %v5089
  %v5136 = vpack.c.b16 %v5092, %v5091
  %v5137 = vpack.c.b16 %v5094, %v5093
  %v5138 = vpack.c.b16 %v5096, %v5095
  %v5139 = vpack.c.b16 %v5098, %v5097
  %v5140 = vpack.c.b16 %v5100, %v5099
  %v5141 = vpack.c.b16 %v5102, %v5101
  %v5142 = vpack.c.b16 %v5104, %v5103
  %v5143 = vpack.c.b16 %v5106, %v5105
  %v5144 = vpack.c.b16 %v5108, %v5107
  %v5145 = vpack.c.b16 %v5110, %v5109
  %v5146 = vpack.c.b16 %v5112, %v5111
  %v5147 = vpack.c.b16 %v5114, %v5113
  %v5148 = vpack.c.b16 %v5116, %v5115
  %v5149 = vpack.c.b16 %v5118, %v5117
  %v5150 = vpack.c.b16 %v5120, %v5119
  %v5151 = vpack.c.b16 %v5122, %v5121
  %v5152 = vpack.c.b16 %v5124, %v5123
  %v5153 = vpack.c.b16 %v5126, %v5125
  %v5154 = vpack.c.b16 %v5128, %v5127
  %v5155 = vrot.slane %v5129, 1
  %v5156 = vrot.slane %v5130, 1
  %v5157 = vsel %vm1431, %v5155, %v5156
  %v5158 = vrot.slane %v5131, 1
  %v5159 = vsel %vm1431, %v5156, %v5158
  %v5160 = vrot.slane %v5132, 1
  %v5161 = vsel %vm1431, %v5158, %v5160
  %v5162 = vrot.slane %v5133, 1
  %v5163 = vsel %vm1431, %v5160, %v5162
  %v5164 = vrot.slane %v5134, 1
  %v5165 = vsel %vm1431, %v5162, %v5164
  %v5166 = vrot.slane %v5135, 1
  %v5167 = vsel %vm1431, %v5164, %v5166
  %v5168 = vrot.slane %v5136, 1
  %v5169 = vsel %vm1431, %v5166, %v5168
  %v5170 = vrot.slane %v5137, 1
  %v5171 = vsel %vm1431, %v5168, %v5170
  %v5172 = vrot.slane %v5138, 1
  %v5173 = vsel %vm1431, %v5170, %v5172
  %v5174 = vrot.slane %v5139, 1
  %v5175 = vsel %vm1431, %v5172, %v5174
  %v5176 = vrot.slane %v5140, 1
  %v5177 = vsel %vm1431, %v5174, %v5176
  %v5178 = vrot.slane %v5141, 1
  %v5179 = vsel %vm1431, %v5176, %v5178
  %v5180 = vrot.slane %v5142, 1
  %v5181 = vsel %vm1431, %v5178, %v5180
  %v5182 = vrot.slane %v5143, 1
  %v5183 = vsel %vm1431, %v5180, %v5182
  %v5184 = vrot.slane %v5144, 1
  %v5185 = vsel %vm1431, %v5182, %v5184
  %v5186 = vrot.slane %v5145, 1
  %v5187 = vsel %vm1431, %v5184, %v5186
  %v5188 = vrot.slane %v5146, 1
  %v5189 = vsel %vm1431, %v5186, %v5188
  %v5190 = vrot.slane %v5147, 1
  %v5191 = vsel %vm1431, %v5188, %v5190
  %v5192 = vrot.slane %v5148, 1
  %v5193 = vsel %vm1431, %v5190, %v5192
  %v5194 = vrot.slane %v5149, 1
  %v5195 = vsel %vm1431, %v5192, %v5194
  %v5196 = vrot.slane %v5150, 1
  %v5197 = vsel %vm1431, %v5194, %v5196
  %v5198 = vrot.slane %v5151, 1
  %v5199 = vsel %vm1431, %v5196, %v5198
  %v5200 = vrot.slane %v5152, 1
  %v5201 = vsel %vm1431, %v5198, %v5200
  %v5202 = vrot.slane %v5153, 1
  %v5203 = vsel %vm1431, %v5200, %v5202
  %v5204 = vrot.slane %v5154, 1
  %v5205 = vsel %vm1431, %v5202, %v5204
  %v5214 = vunpack.c.l.b16 %v5017
  %v5215 = vunpack.c.l.b16 %v5018
  %v5216 = vunpack.c.l.b16 %v5019
  %v5217 = vunpack.c.l.b16 %v5020
  %v5218 = vunpack.c.l.b16 %v5021
  %v5219 = vunpack.c.l.b16 %v5022
  %v5220 = vunpack.c.l.b16 %v5023
  %v5221 = vunpack.c.l.b16 %v5024
  %v5222 = vpack.c.b16 %v5215, %v5214
  %v5223 = vpack.c.b16 %v5217, %v5216
  %v5224 = vpack.c.b16 %v5219, %v5218
  %v5225 = vpack.c.b16 %v5221, %v5220
  %v5231 = vsel %vm3141, %v5157, 0
  %v5234 = vsel %vm3141, %v5159, 0
  %v5237 = vsel %vm3141, %v5161, 0
  %v5240 = vsel %vm3141, %v5163, 0
  %v5243 = vsel %vm3141, %v5165, 0
  %v5246 = vsel %vm3141, %v5167, 0
  %v5249 = vsel %vm3141, %v5169, 0
  %v5252 = vsel %vm3141, %v5171, 0
  %v5255 = vsel %vm3141, %v5173, 0
  %v5258 = vsel %vm3141, %v5175, 0
  %v5261 = vsel %vm3141, %v5177, 0
  %v5264 = vsel %vm3141, %v5179, 0
  %v5267 = vsel %vm3141, %v5181, 0
  %v5270 = vsel %vm3141, %v5183, 0
  %v5273 = vsel %vm3141, %v5185, 0
  %v5276 = vsel %vm3141, %v5187, 0
  %v5279 = vsel %vm3141, %v5189, 0
  %v5282 = vsel %vm3141, %v5191, 0
  %v5285 = vsel %vm3141, %v5193, 0
  %v5288 = vsel %vm3141, %v5195, 0
  %v5291 = vsel %vm3141, %v5197, 0
  %v5294 = vsel %vm3141, %v5199, 0
  %v5297 = vsel %vm3141, %v5201, 0
  %v5300 = vsel %vm3141, %v5203, 0
  %v5303 = vsel %vm3141, %v5205, 0
  %v5306 = vsel %vm3141, %v5204, 0
  %5308 = vmatprep.subr.bf16.mxu0 0
  %5309 = vmatpush1.bf16.msra.mxu0 0
  %5310 = vmatprep.subr.bf16.mxu0 0
  %5311 = vmatpush1.bf16.msra.mxu0 0
  %5312 = vmatprep.subr.bf16.mxu0 0
  %5313 = vmatpush1.bf16.msra.mxu0 0
  %5314 = vmatprep.subr.bf16.mxu0 0
  %5315 = vmatpush1.bf16.msra.mxu0 0
  %5316 = vmatprep.subr.bf16.mxu0 0
  %5317 = vmatpush1.bf16.msra.mxu0 %v5225
  %5318 = vmatprep.subr.bf16.mxu0 0
  %5319 = vmatpush1.bf16.msra.mxu0 %v5224
  %5320 = vmatprep.subr.bf16.mxu0 0
  %5321 = vmatpush1.bf16.msra.mxu0 %v5223
  %5322 = vmatprep.subr.bf16.mxu0 0
  %5323 = vmatpush1.bf16.msra.mxu0 %v5222
  %5324 = vmatprep.subr.bf16.mxu0 0
  %5325 = vmatpush2.bf16.msra.mxu0 0
  %5326 = vmatprep.subr.bf16.mxu0 0
  %5327 = vmatpush2.bf16.msra.mxu0 0
  %5328 = vmatprep.subr.bf16.mxu0 0
  %5329 = vmatpush2.bf16.msra.mxu0 0
  %5330 = vmatprep.subr.bf16.mxu0 0
  %5331 = vmatpush2.bf16.msra.mxu0 0
  %5332 = vmatprep.subr.bf16.mxu0 0
  %5333 = vmatpush2.bf16.msra.mxu0 0
  %5334 = vmatprep.subr.bf16.mxu0 0
  %5335 = vmatpush2.bf16.msra.mxu0 0
  %5336 = vmatprep.subr.bf16.mxu0 0
  %5337 = vmatpush2.bf16.msra.mxu0 0
  %5338 = vmatprep.subr.bf16.mxu0 0
  %5339 = vmatpush2.bf16.msra.mxu0 0
  %5340 = vmatprep.mubr.bf16.mxu0 0
  %5341 = vmatmul.mubr.bf16.gmra.mxu0 %v5231
  %v5342 = vpop.f32.mrf.mxu0
  %v5343 = vadd.f32 0.0, %v5342
  %v5344 = vpop.f32.mrf.mxu0
  %v5345 = vpop.f32.mrf.mxu0
  %v5346 = vadd.f32 0.0, %v5345
  %v5347 = vpop.f32.mrf.mxu0
  %5348 = vmatprep.mubr.bf16.mxu0 0
  %5349 = vmatmul.mubr.bf16.gmra.mxu0 %v5234
  %v5350 = vpop.f32.mrf.mxu0
  %v5351 = vadd.f32 0.0, %v5350
  %v5352 = vpop.f32.mrf.mxu0
  %v5353 = vpop.f32.mrf.mxu0
  %v5354 = vadd.f32 0.0, %v5353
  %v5355 = vpop.f32.mrf.mxu0
  %5356 = vmatprep.mubr.bf16.mxu0 0
  %5357 = vmatmul.mubr.bf16.gmra.mxu0 %v5237
  %v5358 = vpop.f32.mrf.mxu0
  %v5359 = vadd.f32 0.0, %v5358
  %v5360 = vpop.f32.mrf.mxu0
  %v5361 = vpop.f32.mrf.mxu0
  %v5362 = vadd.f32 0.0, %v5361
  %v5363 = vpop.f32.mrf.mxu0
  %5364 = vmatprep.mubr.bf16.mxu0 0
  %5365 = vmatmul.mubr.bf16.gmra.mxu0 %v5240
  %v5366 = vpop.f32.mrf.mxu0
  %v5367 = vadd.f32 0.0, %v5366
  %v5368 = vpop.f32.mrf.mxu0
  %v5369 = vpop.f32.mrf.mxu0
  %v5370 = vadd.f32 0.0, %v5369
  %v5371 = vpop.f32.mrf.mxu0
  %5372 = vmatprep.mubr.bf16.mxu0 0
  %5373 = vmatmul.mubr.bf16.gmra.mxu0 %v5243
  %v5374 = vpop.f32.mrf.mxu0
  %v5375 = vadd.f32 0.0, %v5374
  %v5376 = vpop.f32.mrf.mxu0
  %v5377 = vpop.f32.mrf.mxu0
  %v5378 = vadd.f32 0.0, %v5377
  %v5379 = vpop.f32.mrf.mxu0
  %5380 = vmatprep.mubr.bf16.mxu0 0
  %5381 = vmatmul.mubr.bf16.gmra.mxu0 %v5246
  %v5382 = vpop.f32.mrf.mxu0
  %v5383 = vadd.f32 0.0, %v5382
  %v5384 = vpop.f32.mrf.mxu0
  %v5385 = vpop.f32.mrf.mxu0
  %v5386 = vadd.f32 0.0, %v5385
  %v5387 = vpop.f32.mrf.mxu0
  %5388 = vmatprep.mubr.bf16.mxu0 0
  %5389 = vmatmul.mubr.bf16.gmra.mxu0 %v5249
  %v5390 = vpop.f32.mrf.mxu0
  %v5391 = vadd.f32 0.0, %v5390
  %v5392 = vpop.f32.mrf.mxu0
  %v5393 = vpop.f32.mrf.mxu0
  %v5394 = vadd.f32 0.0, %v5393
  %v5395 = vpop.f32.mrf.mxu0
  %5396 = vmatprep.mubr.bf16.mxu0 0
  %5397 = vmatmul.mubr.bf16.gmra.mxu0 %v5252
  %v5398 = vpop.f32.mrf.mxu0
  %v5399 = vadd.f32 0.0, %v5398
  %v5400 = vpop.f32.mrf.mxu0
  %v5401 = vpop.f32.mrf.mxu0
  %v5402 = vadd.f32 0.0, %v5401
  %v5403 = vpop.f32.mrf.mxu0
  %5404 = vmatprep.mubr.bf16.mxu0 0
  %5405 = vmatmul.mubr.bf16.gmra.mxu0 %v5255
  %v5406 = vpop.f32.mrf.mxu0
  %v5407 = vadd.f32 0.0, %v5406
  %v5408 = vpop.f32.mrf.mxu0
  %v5409 = vpop.f32.mrf.mxu0
  %v5410 = vadd.f32 0.0, %v5409
  %v5411 = vpop.f32.mrf.mxu0
  %5412 = vmatprep.mubr.bf16.mxu0 0
  %5413 = vmatmul.mubr.bf16.gmra.mxu0 %v5258
  %v5414 = vpop.f32.mrf.mxu0
  %v5415 = vadd.f32 0.0, %v5414
  %v5416 = vpop.f32.mrf.mxu0
  %v5417 = vpop.f32.mrf.mxu0
  %v5418 = vadd.f32 0.0, %v5417
  %v5419 = vpop.f32.mrf.mxu0
  %5420 = vmatprep.mubr.bf16.mxu0 0
  %5421 = vmatmul.mubr.bf16.gmra.mxu0 %v5261
  %v5422 = vpop.f32.mrf.mxu0
  %v5423 = vadd.f32 0.0, %v5422
  %v5424 = vpop.f32.mrf.mxu0
  %v5425 = vpop.f32.mrf.mxu0
  %v5426 = vadd.f32 0.0, %v5425
  %v5427 = vpop.f32.mrf.mxu0
  %5428 = vmatprep.mubr.bf16.mxu0 0
  %5429 = vmatmul.mubr.bf16.gmra.mxu0 %v5264
  %v5430 = vpop.f32.mrf.mxu0
  %v5431 = vadd.f32 0.0, %v5430
  %v5432 = vpop.f32.mrf.mxu0
  %v5433 = vpop.f32.mrf.mxu0
  %v5434 = vadd.f32 0.0, %v5433
  %v5435 = vpop.f32.mrf.mxu0
  %5436 = vmatprep.mubr.bf16.mxu0 0
  %5437 = vmatmul.mubr.bf16.gmra.mxu0 %v5267
  %v5438 = vpop.f32.mrf.mxu0
  %v5439 = vadd.f32 0.0, %v5438
  %v5440 = vpop.f32.mrf.mxu0
  %v5441 = vpop.f32.mrf.mxu0
  %v5442 = vadd.f32 0.0, %v5441
  %v5443 = vpop.f32.mrf.mxu0
  %5444 = vmatprep.mubr.bf16.mxu0 0
  %5445 = vmatmul.mubr.bf16.gmra.mxu0 %v5270
  %v5446 = vpop.f32.mrf.mxu0
  %v5447 = vadd.f32 0.0, %v5446
  %v5448 = vpop.f32.mrf.mxu0
  %v5449 = vpop.f32.mrf.mxu0
  %v5450 = vadd.f32 0.0, %v5449
  %v5451 = vpop.f32.mrf.mxu0
  %5452 = vmatprep.mubr.bf16.mxu0 0
  %5453 = vmatmul.mubr.bf16.gmra.mxu0 %v5273
  %v5454 = vpop.f32.mrf.mxu0
  %v5455 = vadd.f32 0.0, %v5454
  %v5456 = vpop.f32.mrf.mxu0
  %v5457 = vpop.f32.mrf.mxu0
  %v5458 = vadd.f32 0.0, %v5457
  %v5459 = vpop.f32.mrf.mxu0
  %5460 = vmatprep.mubr.bf16.mxu0 0
  %5461 = vmatmul.mubr.bf16.gmra.mxu0 %v5276
  %v5462 = vpop.f32.mrf.mxu0
  %v5463 = vadd.f32 0.0, %v5462
  %v5464 = vpop.f32.mrf.mxu0
  %v5465 = vpop.f32.mrf.mxu0
  %v5466 = vadd.f32 0.0, %v5465
  %v5467 = vpop.f32.mrf.mxu0
  %5468 = vmatprep.mubr.bf16.mxu0 0
  %5469 = vmatmul.mubr.bf16.gmra.mxu0 %v5279
  %v5470 = vpop.f32.mrf.mxu0
  %v5471 = vadd.f32 0.0, %v5470
  %v5472 = vpop.f32.mrf.mxu0
  %v5473 = vpop.f32.mrf.mxu0
  %v5474 = vadd.f32 0.0, %v5473
  %v5475 = vpop.f32.mrf.mxu0
  %5476 = vmatprep.mubr.bf16.mxu0 0
  %5477 = vmatmul.mubr.bf16.gmra.mxu0 %v5282
  %v5478 = vpop.f32.mrf.mxu0
  %v5479 = vadd.f32 0.0, %v5478
  %v5480 = vpop.f32.mrf.mxu0
  %v5481 = vpop.f32.mrf.mxu0
  %v5482 = vadd.f32 0.0, %v5481
  %v5483 = vpop.f32.mrf.mxu0
  %5484 = vmatprep.mubr.bf16.mxu0 0
  %5485 = vmatmul.mubr.bf16.gmra.mxu0 %v5285
  %v5486 = vpop.f32.mrf.mxu0
  %v5487 = vadd.f32 0.0, %v5486
  %v5488 = vpop.f32.mrf.mxu0
  %v5489 = vpop.f32.mrf.mxu0
  %v5490 = vadd.f32 0.0, %v5489
  %v5491 = vpop.f32.mrf.mxu0
  %5492 = vmatprep.mubr.bf16.mxu0 0
  %5493 = vmatmul.mubr.bf16.gmra.mxu0 %v5288
  %v5494 = vpop.f32.mrf.mxu0
  %v5495 = vadd.f32 0.0, %v5494
  %v5496 = vpop.f32.mrf.mxu0
  %v5497 = vpop.f32.mrf.mxu0
  %v5498 = vadd.f32 0.0, %v5497
  %v5499 = vpop.f32.mrf.mxu0
  %5500 = vmatprep.mubr.bf16.mxu0 0
  %5501 = vmatmul.mubr.bf16.gmra.mxu0 %v5291
  %v5502 = vpop.f32.mrf.mxu0
  %v5503 = vadd.f32 0.0, %v5502
  %v5504 = vpop.f32.mrf.mxu0
  %v5505 = vpop.f32.mrf.mxu0
  %v5506 = vadd.f32 0.0, %v5505
  %v5507 = vpop.f32.mrf.mxu0
  %5508 = vmatprep.mubr.bf16.mxu0 0
  %5509 = vmatmul.mubr.bf16.gmra.mxu0 %v5294
  %v5510 = vpop.f32.mrf.mxu0
  %v5511 = vadd.f32 0.0, %v5510
  %v5512 = vpop.f32.mrf.mxu0
  %v5513 = vpop.f32.mrf.mxu0
  %v5514 = vadd.f32 0.0, %v5513
  %v5515 = vpop.f32.mrf.mxu0
  %5516 = vmatprep.mubr.bf16.mxu0 0
  %5517 = vmatmul.mubr.bf16.gmra.mxu0 %v5297
  %v5518 = vpop.f32.mrf.mxu0
  %v5519 = vadd.f32 0.0, %v5518
  %v5520 = vpop.f32.mrf.mxu0
  %v5521 = vpop.f32.mrf.mxu0
  %v5522 = vadd.f32 0.0, %v5521
  %v5523 = vpop.f32.mrf.mxu0
  %5524 = vmatprep.mubr.bf16.mxu0 0
  %5525 = vmatmul.mubr.bf16.gmra.mxu0 %v5300
  %v5526 = vpop.f32.mrf.mxu0
  %v5527 = vadd.f32 0.0, %v5526
  %v5528 = vpop.f32.mrf.mxu0
  %v5529 = vpop.f32.mrf.mxu0
  %v5530 = vadd.f32 0.0, %v5529
  %v5531 = vpop.f32.mrf.mxu0
  %5532 = vmatprep.mubr.bf16.mxu0 0
  %5533 = vmatmul.mubr.bf16.gmra.mxu0 %v5303
  %v5534 = vpop.f32.mrf.mxu0
  %v5535 = vadd.f32 0.0, %v5534
  %v5536 = vpop.f32.mrf.mxu0
  %v5537 = vpop.f32.mrf.mxu0
  %v5538 = vadd.f32 0.0, %v5537
  %v5539 = vpop.f32.mrf.mxu0
  %5540 = vmatprep.mubr.bf16.mxu0 0
  %5541 = vmatmul.mubr.bf16.gmra.mxu0 %v5306
  %v5542 = vpop.f32.mrf.mxu0
  %v5543 = vadd.f32 0.0, %v5542
  %v5544 = vpop.f32.mrf.mxu0
  %v5545 = vpop.f32.mrf.mxu0
  %v5546 = vpop.f32.mrf.mxu0
  %5547 = vdwg.mxu0
  %v5548 = vadd.f32 %v4759, %v5343
  %v5549 = vadd.f32 %v4762, %v5346
  %v5550 = vadd.f32 %v4767, %v5351
  %v5551 = vadd.f32 %v4770, %v5354
  %v5552 = vadd.f32 %v4775, %v5359
  %v5553 = vadd.f32 %v4778, %v5362
  %v5554 = vadd.f32 %v4783, %v5367
  %v5555 = vadd.f32 %v4786, %v5370
  %v5556 = vadd.f32 %v4791, %v5375
  %v5557 = vadd.f32 %v4794, %v5378
  %v5558 = vadd.f32 %v4799, %v5383
  %v5559 = vadd.f32 %v4802, %v5386
  %v5560 = vadd.f32 %v4807, %v5391
  %v5561 = vadd.f32 %v4810, %v5394
  %v5562 = vadd.f32 %v4815, %v5399
  %v5563 = vadd.f32 %v4818, %v5402
  %v5564 = vadd.f32 %v4823, %v5407
  %v5565 = vadd.f32 %v4826, %v5410
  %v5566 = vadd.f32 %v4831, %v5415
  %v5567 = vadd.f32 %v4834, %v5418
  %v5568 = vadd.f32 %v4839, %v5423
  %v5569 = vadd.f32 %v4842, %v5426
  %v5570 = vadd.f32 %v4847, %v5431
  %v5571 = vadd.f32 %v4850, %v5434
  %v5572 = vadd.f32 %v4855, %v5439
  %v5573 = vadd.f32 %v4858, %v5442
  %v5574 = vadd.f32 %v4863, %v5447
  %v5575 = vadd.f32 %v4866, %v5450
  %v5576 = vadd.f32 %v4871, %v5455
  %v5577 = vadd.f32 %v4874, %v5458
  %v5578 = vadd.f32 %v4879, %v5463
  %v5579 = vadd.f32 %v4882, %v5466
  %v5580 = vadd.f32 %v4887, %v5471
  %v5581 = vadd.f32 %v4890, %v5474
  %v5582 = vadd.f32 %v4895, %v5479
  %v5583 = vadd.f32 %v4898, %v5482
  %v5584 = vadd.f32 %v4903, %v5487
  %v5585 = vadd.f32 %v4906, %v5490
  %v5586 = vadd.f32 %v4911, %v5495
  %v5587 = vadd.f32 %v4914, %v5498
  %v5588 = vadd.f32 %v4919, %v5503
  %v5589 = vadd.f32 %v4922, %v5506
  %v5590 = vadd.f32 %v4927, %v5511
  %v5591 = vadd.f32 %v4930, %v5514
  %v5592 = vadd.f32 %v4935, %v5519
  %v5593 = vadd.f32 %v4938, %v5522
  %v5594 = vadd.f32 %v4943, %v5527
  %v5595 = vadd.f32 %v4946, %v5530
  %v5596 = vadd.f32 %v4951, %v5535
  %v5597 = vadd.f32 %v4954, %v5538
  %v5598 = vadd.f32 %v4959, %v5543
  %v5599 = vld [vmem:[#allocation2 + $0xdc] sm:$0x3]
  %s5600 = scalar_lea.vmem %s3, 96
  %v5601 = vld [vmem:[%s5600] sm:$0xf]
  %v5602 = vld [vmem:[%s5600 + $0x4] sm:$0xf]
  %v5603 = vld [vmem:[%s5600 + $0x8] sm:$0xf]
  %v5604 = vld [vmem:[%s5600 + $0xc] sm:$0xf]
  %v5605 = vld [vmem:[%s5600 + $0x10] sm:$0xf]
  %v5606 = vld [vmem:[%s5600 + $0x14] sm:$0xf]
  %v5607 = vld [vmem:[%s5600 + $0x18] sm:$0xf]
  %v5608 = vld [vmem:[%s5600 + $0x1c] sm:$0xf]
  %v5610 = vunpack.c.l.b16 %v5599
  %v5611 = vpack.c.b16 %v5610, %v5127
  %v5613 = vshrl.u32 %v5129, 16
  %v5615 = vrot.slane %v5613, 1
  %v5616 = vshll.u32 %v5129, 16
  %v5618 = vrot.slane %v5616, 2
  %v5619 = vor.u32 %v5615, %v5618
  %v5621 = vshrl.u32 %v5130, 16
  %v5623 = vrot.slane %v5621, 1
  %v5624 = vshll.u32 %v5130, 16
  %v5626 = vrot.slane %v5624, 2
  %v5627 = vor.u32 %v5623, %v5626
  %v5628 = vsel %vm1938, %v5619, %v5627
  %v5630 = vshrl.u32 %v5131, 16
  %v5632 = vrot.slane %v5630, 1
  %v5633 = vshll.u32 %v5131, 16
  %v5635 = vrot.slane %v5633, 2
  %v5636 = vor.u32 %v5632, %v5635
  %v5637 = vsel %vm1938, %v5627, %v5636
  %v5639 = vshrl.u32 %v5132, 16
  %v5641 = vrot.slane %v5639, 1
  %v5642 = vshll.u32 %v5132, 16
  %v5644 = vrot.slane %v5642, 2
  %v5645 = vor.u32 %v5641, %v5644
  %v5646 = vsel %vm1938, %v5636, %v5645
  %v5648 = vshrl.u32 %v5133, 16
  %v5650 = vrot.slane %v5648, 1
  %v5651 = vshll.u32 %v5133, 16
  %v5653 = vrot.slane %v5651, 2
  %v5654 = vor.u32 %v5650, %v5653
  %v5655 = vsel %vm1938, %v5645, %v5654
  %v5657 = vshrl.u32 %v5134, 16
  %v5659 = vrot.slane %v5657, 1
  %v5660 = vshll.u32 %v5134, 16
  %v5662 = vrot.slane %v5660, 2
  %v5663 = vor.u32 %v5659, %v5662
  %v5664 = vsel %vm1938, %v5654, %v5663
  %v5666 = vshrl.u32 %v5135, 16
  %v5668 = vrot.slane %v5666, 1
  %v5669 = vshll.u32 %v5135, 16
  %v5671 = vrot.slane %v5669, 2
  %v5672 = vor.u32 %v5668, %v5671
  %v5673 = vsel %vm1938, %v5663, %v5672
  %v5675 = vshrl.u32 %v5136, 16
  %v5677 = vrot.slane %v5675, 1
  %v5678 = vshll.u32 %v5136, 16
  %v5680 = vrot.slane %v5678, 2
  %v5681 = vor.u32 %v5677, %v5680
  %v5682 = vsel %vm1938, %v5672, %v5681
  %v5684 = vshrl.u32 %v5137, 16
  %v5686 = vrot.slane %v5684, 1
  %v5687 = vshll.u32 %v5137, 16
  %v5689 = vrot.slane %v5687, 2
  %v5690 = vor.u32 %v5686, %v5689
  %v5691 = vsel %vm1938, %v5681, %v5690
  %v5693 = vshrl.u32 %v5138, 16
  %v5695 = vrot.slane %v5693, 1
  %v5696 = vshll.u32 %v5138, 16
  %v5698 = vrot.slane %v5696, 2
  %v5699 = vor.u32 %v5695, %v5698
  %v5700 = vsel %vm1938, %v5690, %v5699
  %v5702 = vshrl.u32 %v5139, 16
  %v5704 = vrot.slane %v5702, 1
  %v5705 = vshll.u32 %v5139, 16
  %v5707 = vrot.slane %v5705, 2
  %v5708 = vor.u32 %v5704, %v5707
  %v5709 = vsel %vm1938, %v5699, %v5708
  %v5711 = vshrl.u32 %v5140, 16
  %v5713 = vrot.slane %v5711, 1
  %v5714 = vshll.u32 %v5140, 16
  %v5716 = vrot.slane %v5714, 2
  %v5717 = vor.u32 %v5713, %v5716
  %v5718 = vsel %vm1938, %v5708, %v5717
  %v5720 = vshrl.u32 %v5141, 16
  %v5722 = vrot.slane %v5720, 1
  %v5723 = vshll.u32 %v5141, 16
  %v5725 = vrot.slane %v5723, 2
  %v5726 = vor.u32 %v5722, %v5725
  %v5727 = vsel %vm1938, %v5717, %v5726
  %v5729 = vshrl.u32 %v5142, 16
  %v5731 = vrot.slane %v5729, 1
  %v5732 = vshll.u32 %v5142, 16
  %v5734 = vrot.slane %v5732, 2
  %v5735 = vor.u32 %v5731, %v5734
  %v5736 = vsel %vm1938, %v5726, %v5735
  %v5738 = vshrl.u32 %v5143, 16
  %v5740 = vrot.slane %v5738, 1
  %v5741 = vshll.u32 %v5143, 16
  %v5743 = vrot.slane %v5741, 2
  %v5744 = vor.u32 %v5740, %v5743
  %v5745 = vsel %vm1938, %v5735, %v5744
  %v5747 = vshrl.u32 %v5144, 16
  %v5749 = vrot.slane %v5747, 1
  %v5750 = vshll.u32 %v5144, 16
  %v5752 = vrot.slane %v5750, 2
  %v5753 = vor.u32 %v5749, %v5752
  %v5754 = vsel %vm1938, %v5744, %v5753
  %v5756 = vshrl.u32 %v5145, 16
  %v5758 = vrot.slane %v5756, 1
  %v5759 = vshll.u32 %v5145, 16
  %v5761 = vrot.slane %v5759, 2
  %v5762 = vor.u32 %v5758, %v5761
  %v5763 = vsel %vm1938, %v5753, %v5762
  %v5765 = vshrl.u32 %v5146, 16
  %v5767 = vrot.slane %v5765, 1
  %v5768 = vshll.u32 %v5146, 16
  %v5770 = vrot.slane %v5768, 2
  %v5771 = vor.u32 %v5767, %v5770
  %v5772 = vsel %vm1938, %v5762, %v5771
  %v5774 = vshrl.u32 %v5147, 16
  %v5776 = vrot.slane %v5774, 1
  %v5777 = vshll.u32 %v5147, 16
  %v5779 = vrot.slane %v5777, 2
  %v5780 = vor.u32 %v5776, %v5779
  %v5781 = vsel %vm1938, %v5771, %v5780
  %v5783 = vshrl.u32 %v5148, 16
  %v5785 = vrot.slane %v5783, 1
  %v5786 = vshll.u32 %v5148, 16
  %v5788 = vrot.slane %v5786, 2
  %v5789 = vor.u32 %v5785, %v5788
  %v5790 = vsel %vm1938, %v5780, %v5789
  %v5792 = vshrl.u32 %v5149, 16
  %v5794 = vrot.slane %v5792, 1
  %v5795 = vshll.u32 %v5149, 16
  %v5797 = vrot.slane %v5795, 2
  %v5798 = vor.u32 %v5794, %v5797
  %v5799 = vsel %vm1938, %v5789, %v5798
  %v5801 = vshrl.u32 %v5150, 16
  %v5803 = vrot.slane %v5801, 1
  %v5804 = vshll.u32 %v5150, 16
  %v5806 = vrot.slane %v5804, 2
  %v5807 = vor.u32 %v5803, %v5806
  %v5808 = vsel %vm1938, %v5798, %v5807
  %v5810 = vshrl.u32 %v5151, 16
  %v5812 = vrot.slane %v5810, 1
  %v5813 = vshll.u32 %v5151, 16
  %v5815 = vrot.slane %v5813, 2
  %v5816 = vor.u32 %v5812, %v5815
  %v5817 = vsel %vm1938, %v5807, %v5816
  %v5819 = vshrl.u32 %v5152, 16
  %v5821 = vrot.slane %v5819, 1
  %v5822 = vshll.u32 %v5152, 16
  %v5824 = vrot.slane %v5822, 2
  %v5825 = vor.u32 %v5821, %v5824
  %v5826 = vsel %vm1938, %v5816, %v5825
  %v5828 = vshrl.u32 %v5153, 16
  %v5830 = vrot.slane %v5828, 1
  %v5831 = vshll.u32 %v5153, 16
  %v5833 = vrot.slane %v5831, 2
  %v5834 = vor.u32 %v5830, %v5833
  %v5835 = vsel %vm1938, %v5825, %v5834
  %v5837 = vshrl.u32 %v5611, 16
  %v5839 = vrot.slane %v5837, 1
  %v5840 = vshll.u32 %v5611, 16
  %v5842 = vrot.slane %v5840, 2
  %v5843 = vor.u32 %v5839, %v5842
  %v5844 = vsel %vm1938, %v5834, %v5843
  %v5853 = vunpack.c.l.b16 %v5601
  %v5854 = vunpack.c.l.b16 %v5602
  %v5855 = vunpack.c.l.b16 %v5603
  %v5856 = vunpack.c.l.b16 %v5604
  %v5857 = vunpack.c.l.b16 %v5605
  %v5858 = vunpack.c.l.b16 %v5606
  %v5859 = vunpack.c.l.b16 %v5607
  %v5860 = vunpack.c.l.b16 %v5608
  %v5861 = vpack.c.b16 %v5854, %v5853
  %v5862 = vpack.c.b16 %v5856, %v5855
  %v5863 = vpack.c.b16 %v5858, %v5857
  %v5864 = vpack.c.b16 %v5860, %v5859
  %v5870 = vsel %vm3141, %v5628, 0
  %v5873 = vsel %vm3141, %v5637, 0
  %v5876 = vsel %vm3141, %v5646, 0
  %v5879 = vsel %vm3141, %v5655, 0
  %v5882 = vsel %vm3141, %v5664, 0
  %v5885 = vsel %vm3141, %v5673, 0
  %v5888 = vsel %vm3141, %v5682, 0
  %v5891 = vsel %vm3141, %v5691, 0
  %v5894 = vsel %vm3141, %v5700, 0
  %v5897 = vsel %vm3141, %v5709, 0
  %v5900 = vsel %vm3141, %v5718, 0
  %v5903 = vsel %vm3141, %v5727, 0
  %v5906 = vsel %vm3141, %v5736, 0
  %v5909 = vsel %vm3141, %v5745, 0
  %v5912 = vsel %vm3141, %v5754, 0
  %v5915 = vsel %vm3141, %v5763, 0
  %v5918 = vsel %vm3141, %v5772, 0
  %v5921 = vsel %vm3141, %v5781, 0
  %v5924 = vsel %vm3141, %v5790, 0
  %v5927 = vsel %vm3141, %v5799, 0
  %v5930 = vsel %vm3141, %v5808, 0
  %v5933 = vsel %vm3141, %v5817, 0
  %v5936 = vsel %vm3141, %v5826, 0
  %v5939 = vsel %vm3141, %v5835, 0
  %v5942 = vsel %vm3141, %v5844, 0
  %v5945 = vsel %vm3141, %v5843, 0
  %5947 = vmatprep.subr.bf16.mxu0 0
  %5948 = vmatpush1.bf16.msra.mxu0 0
  %5949 = vmatprep.subr.bf16.mxu0 0
  %5950 = vmatpush1.bf16.msra.mxu0 0
  %5951 = vmatprep.subr.bf16.mxu0 0
  %5952 = vmatpush1.bf16.msra.mxu0 0
  %5953 = vmatprep.subr.bf16.mxu0 0
  %5954 = vmatpush1.bf16.msra.mxu0 0
  %5955 = vmatprep.subr.bf16.mxu0 0
  %5956 = vmatpush1.bf16.msra.mxu0 %v5864
  %5957 = vmatprep.subr.bf16.mxu0 0
  %5958 = vmatpush1.bf16.msra.mxu0 %v5863
  %5959 = vmatprep.subr.bf16.mxu0 0
  %5960 = vmatpush1.bf16.msra.mxu0 %v5862
  %5961 = vmatprep.subr.bf16.mxu0 0
  %5962 = vmatpush1.bf16.msra.mxu0 %v5861
  %5963 = vmatprep.subr.bf16.mxu0 0
  %5964 = vmatpush2.bf16.msra.mxu0 0
  %5965 = vmatprep.subr.bf16.mxu0 0
  %5966 = vmatpush2.bf16.msra.mxu0 0
  %5967 = vmatprep.subr.bf16.mxu0 0
  %5968 = vmatpush2.bf16.msra.mxu0 0
  %5969 = vmatprep.subr.bf16.mxu0 0
  %5970 = vmatpush2.bf16.msra.mxu0 0
  %5971 = vmatprep.subr.bf16.mxu0 0
  %5972 = vmatpush2.bf16.msra.mxu0 0
  %5973 = vmatprep.subr.bf16.mxu0 0
  %5974 = vmatpush2.bf16.msra.mxu0 0
  %5975 = vmatprep.subr.bf16.mxu0 0
  %5976 = vmatpush2.bf16.msra.mxu0 0
  %5977 = vmatprep.subr.bf16.mxu0 0
  %5978 = vmatpush2.bf16.msra.mxu0 0
  %5979 = vmatprep.mubr.bf16.mxu0 0
  %5980 = vmatmul.mubr.bf16.gmra.mxu0 %v5870
  %v5981 = vpop.f32.mrf.mxu0
  %v5982 = vadd.f32 0.0, %v5981
  %v5983 = vpop.f32.mrf.mxu0
  %v5984 = vpop.f32.mrf.mxu0
  %v5985 = vadd.f32 0.0, %v5984
  %v5986 = vpop.f32.mrf.mxu0
  %5987 = vmatprep.mubr.bf16.mxu0 0
  %5988 = vmatmul.mubr.bf16.gmra.mxu0 %v5873
  %v5989 = vpop.f32.mrf.mxu0
  %v5990 = vadd.f32 0.0, %v5989
  %v5991 = vpop.f32.mrf.mxu0
  %v5992 = vpop.f32.mrf.mxu0
  %v5993 = vadd.f32 0.0, %v5992
  %v5994 = vpop.f32.mrf.mxu0
  %5995 = vmatprep.mubr.bf16.mxu0 0
  %5996 = vmatmul.mubr.bf16.gmra.mxu0 %v5876
  %v5997 = vpop.f32.mrf.mxu0
  %v5998 = vadd.f32 0.0, %v5997
  %v5999 = vpop.f32.mrf.mxu0
  %v6000 = vpop.f32.mrf.mxu0
  %v6001 = vadd.f32 0.0, %v6000
  %v6002 = vpop.f32.mrf.mxu0
  %6003 = vmatprep.mubr.bf16.mxu0 0
  %6004 = vmatmul.mubr.bf16.gmra.mxu0 %v5879
  %v6005 = vpop.f32.mrf.mxu0
  %v6006 = vadd.f32 0.0, %v6005
  %v6007 = vpop.f32.mrf.mxu0
  %v6008 = vpop.f32.mrf.mxu0
  %v6009 = vadd.f32 0.0, %v6008
  %v6010 = vpop.f32.mrf.mxu0
  %6011 = vmatprep.mubr.bf16.mxu0 0
  %6012 = vmatmul.mubr.bf16.gmra.mxu0 %v5882
  %v6013 = vpop.f32.mrf.mxu0
  %v6014 = vadd.f32 0.0, %v6013
  %v6015 = vpop.f32.mrf.mxu0
  %v6016 = vpop.f32.mrf.mxu0
  %v6017 = vadd.f32 0.0, %v6016
  %v6018 = vpop.f32.mrf.mxu0
  %6019 = vmatprep.mubr.bf16.mxu0 0
  %6020 = vmatmul.mubr.bf16.gmra.mxu0 %v5885
  %v6021 = vpop.f32.mrf.mxu0
  %v6022 = vadd.f32 0.0, %v6021
  %v6023 = vpop.f32.mrf.mxu0
  %v6024 = vpop.f32.mrf.mxu0
  %v6025 = vadd.f32 0.0, %v6024
  %v6026 = vpop.f32.mrf.mxu0
  %6027 = vmatprep.mubr.bf16.mxu0 0
  %6028 = vmatmul.mubr.bf16.gmra.mxu0 %v5888
  %v6029 = vpop.f32.mrf.mxu0
  %v6030 = vadd.f32 0.0, %v6029
  %v6031 = vpop.f32.mrf.mxu0
  %v6032 = vpop.f32.mrf.mxu0
  %v6033 = vadd.f32 0.0, %v6032
  %v6034 = vpop.f32.mrf.mxu0
  %6035 = vmatprep.mubr.bf16.mxu0 0
  %6036 = vmatmul.mubr.bf16.gmra.mxu0 %v5891
  %v6037 = vpop.f32.mrf.mxu0
  %v6038 = vadd.f32 0.0, %v6037
  %v6039 = vpop.f32.mrf.mxu0
  %v6040 = vpop.f32.mrf.mxu0
  %v6041 = vadd.f32 0.0, %v6040
  %v6042 = vpop.f32.mrf.mxu0
  %6043 = vmatprep.mubr.bf16.mxu0 0
  %6044 = vmatmul.mubr.bf16.gmra.mxu0 %v5894
  %v6045 = vpop.f32.mrf.mxu0
  %v6046 = vadd.f32 0.0, %v6045
  %v6047 = vpop.f32.mrf.mxu0
  %v6048 = vpop.f32.mrf.mxu0
  %v6049 = vadd.f32 0.0, %v6048
  %v6050 = vpop.f32.mrf.mxu0
  %6051 = vmatprep.mubr.bf16.mxu0 0
  %6052 = vmatmul.mubr.bf16.gmra.mxu0 %v5897
  %v6053 = vpop.f32.mrf.mxu0
  %v6054 = vadd.f32 0.0, %v6053
  %v6055 = vpop.f32.mrf.mxu0
  %v6056 = vpop.f32.mrf.mxu0
  %v6057 = vadd.f32 0.0, %v6056
  %v6058 = vpop.f32.mrf.mxu0
  %6059 = vmatprep.mubr.bf16.mxu0 0
  %6060 = vmatmul.mubr.bf16.gmra.mxu0 %v5900
  %v6061 = vpop.f32.mrf.mxu0
  %v6062 = vadd.f32 0.0, %v6061
  %v6063 = vpop.f32.mrf.mxu0
  %v6064 = vpop.f32.mrf.mxu0
  %v6065 = vadd.f32 0.0, %v6064
  %v6066 = vpop.f32.mrf.mxu0
  %6067 = vmatprep.mubr.bf16.mxu0 0
  %6068 = vmatmul.mubr.bf16.gmra.mxu0 %v5903
  %v6069 = vpop.f32.mrf.mxu0
  %v6070 = vadd.f32 0.0, %v6069
  %v6071 = vpop.f32.mrf.mxu0
  %v6072 = vpop.f32.mrf.mxu0
  %v6073 = vadd.f32 0.0, %v6072
  %v6074 = vpop.f32.mrf.mxu0
  %6075 = vmatprep.mubr.bf16.mxu0 0
  %6076 = vmatmul.mubr.bf16.gmra.mxu0 %v5906
  %v6077 = vpop.f32.mrf.mxu0
  %v6078 = vadd.f32 0.0, %v6077
  %v6079 = vpop.f32.mrf.mxu0
  %v6080 = vpop.f32.mrf.mxu0
  %v6081 = vadd.f32 0.0, %v6080
  %v6082 = vpop.f32.mrf.mxu0
  %6083 = vmatprep.mubr.bf16.mxu0 0
  %6084 = vmatmul.mubr.bf16.gmra.mxu0 %v5909
  %v6085 = vpop.f32.mrf.mxu0
  %v6086 = vadd.f32 0.0, %v6085
  %v6087 = vpop.f32.mrf.mxu0
  %v6088 = vpop.f32.mrf.mxu0
  %v6089 = vadd.f32 0.0, %v6088
  %v6090 = vpop.f32.mrf.mxu0
  %6091 = vmatprep.mubr.bf16.mxu0 0
  %6092 = vmatmul.mubr.bf16.gmra.mxu0 %v5912
  %v6093 = vpop.f32.mrf.mxu0
  %v6094 = vadd.f32 0.0, %v6093
  %v6095 = vpop.f32.mrf.mxu0
  %v6096 = vpop.f32.mrf.mxu0
  %v6097 = vadd.f32 0.0, %v6096
  %v6098 = vpop.f32.mrf.mxu0
  %6099 = vmatprep.mubr.bf16.mxu0 0
  %6100 = vmatmul.mubr.bf16.gmra.mxu0 %v5915
  %v6101 = vpop.f32.mrf.mxu0
  %v6102 = vadd.f32 0.0, %v6101
  %v6103 = vpop.f32.mrf.mxu0
  %v6104 = vpop.f32.mrf.mxu0
  %v6105 = vadd.f32 0.0, %v6104
  %v6106 = vpop.f32.mrf.mxu0
  %6107 = vmatprep.mubr.bf16.mxu0 0
  %6108 = vmatmul.mubr.bf16.gmra.mxu0 %v5918
  %v6109 = vpop.f32.mrf.mxu0
  %v6110 = vadd.f32 0.0, %v6109
  %v6111 = vpop.f32.mrf.mxu0
  %v6112 = vpop.f32.mrf.mxu0
  %v6113 = vadd.f32 0.0, %v6112
  %v6114 = vpop.f32.mrf.mxu0
  %6115 = vmatprep.mubr.bf16.mxu0 0
  %6116 = vmatmul.mubr.bf16.gmra.mxu0 %v5921
  %v6117 = vpop.f32.mrf.mxu0
  %v6118 = vadd.f32 0.0, %v6117
  %v6119 = vpop.f32.mrf.mxu0
  %v6120 = vpop.f32.mrf.mxu0
  %v6121 = vadd.f32 0.0, %v6120
  %v6122 = vpop.f32.mrf.mxu0
  %6123 = vmatprep.mubr.bf16.mxu0 0
  %6124 = vmatmul.mubr.bf16.gmra.mxu0 %v5924
  %v6125 = vpop.f32.mrf.mxu0
  %v6126 = vadd.f32 0.0, %v6125
  %v6127 = vpop.f32.mrf.mxu0
  %v6128 = vpop.f32.mrf.mxu0
  %v6129 = vadd.f32 0.0, %v6128
  %v6130 = vpop.f32.mrf.mxu0
  %6131 = vmatprep.mubr.bf16.mxu0 0
  %6132 = vmatmul.mubr.bf16.gmra.mxu0 %v5927
  %v6133 = vpop.f32.mrf.mxu0
  %v6134 = vadd.f32 0.0, %v6133
  %v6135 = vpop.f32.mrf.mxu0
  %v6136 = vpop.f32.mrf.mxu0
  %v6137 = vadd.f32 0.0, %v6136
  %v6138 = vpop.f32.mrf.mxu0
  %6139 = vmatprep.mubr.bf16.mxu0 0
  %6140 = vmatmul.mubr.bf16.gmra.mxu0 %v5930
  %v6141 = vpop.f32.mrf.mxu0
  %v6142 = vadd.f32 0.0, %v6141
  %v6143 = vpop.f32.mrf.mxu0
  %v6144 = vpop.f32.mrf.mxu0
  %v6145 = vadd.f32 0.0, %v6144
  %v6146 = vpop.f32.mrf.mxu0
  %6147 = vmatprep.mubr.bf16.mxu0 0
  %6148 = vmatmul.mubr.bf16.gmra.mxu0 %v5933
  %v6149 = vpop.f32.mrf.mxu0
  %v6150 = vadd.f32 0.0, %v6149
  %v6151 = vpop.f32.mrf.mxu0
  %v6152 = vpop.f32.mrf.mxu0
  %v6153 = vadd.f32 0.0, %v6152
  %v6154 = vpop.f32.mrf.mxu0
  %6155 = vmatprep.mubr.bf16.mxu0 0
  %6156 = vmatmul.mubr.bf16.gmra.mxu0 %v5936
  %v6157 = vpop.f32.mrf.mxu0
  %v6158 = vadd.f32 0.0, %v6157
  %v6159 = vpop.f32.mrf.mxu0
  %v6160 = vpop.f32.mrf.mxu0
  %v6161 = vadd.f32 0.0, %v6160
  %v6162 = vpop.f32.mrf.mxu0
  %6163 = vmatprep.mubr.bf16.mxu0 0
  %6164 = vmatmul.mubr.bf16.gmra.mxu0 %v5939
  %v6165 = vpop.f32.mrf.mxu0
  %v6166 = vadd.f32 0.0, %v6165
  %v6167 = vpop.f32.mrf.mxu0
  %v6168 = vpop.f32.mrf.mxu0
  %v6169 = vadd.f32 0.0, %v6168
  %v6170 = vpop.f32.mrf.mxu0
  %6171 = vmatprep.mubr.bf16.mxu0 0
  %6172 = vmatmul.mubr.bf16.gmra.mxu0 %v5942
  %v6173 = vpop.f32.mrf.mxu0
  %v6174 = vadd.f32 0.0, %v6173
  %v6175 = vpop.f32.mrf.mxu0
  %v6176 = vpop.f32.mrf.mxu0
  %v6177 = vadd.f32 0.0, %v6176
  %v6178 = vpop.f32.mrf.mxu0
  %6179 = vmatprep.mubr.bf16.mxu0 0
  %6180 = vmatmul.mubr.bf16.gmra.mxu0 %v5945
  %v6181 = vpop.f32.mrf.mxu0
  %v6182 = vadd.f32 0.0, %v6181
  %v6183 = vpop.f32.mrf.mxu0
  %v6184 = vpop.f32.mrf.mxu0
  %v6185 = vpop.f32.mrf.mxu0
  %6186 = vdwg.mxu0
  %v6187 = vadd.f32 %v5548, %v5982
  %v6188 = vadd.f32 %v5549, %v5985
  %v6189 = vadd.f32 %v5550, %v5990
  %v6190 = vadd.f32 %v5551, %v5993
  %v6191 = vadd.f32 %v5552, %v5998
  %v6192 = vadd.f32 %v5553, %v6001
  %v6193 = vadd.f32 %v5554, %v6006
  %v6194 = vadd.f32 %v5555, %v6009
  %v6195 = vadd.f32 %v5556, %v6014
  %v6196 = vadd.f32 %v5557, %v6017
  %v6197 = vadd.f32 %v5558, %v6022
  %v6198 = vadd.f32 %v5559, %v6025
  %v6199 = vadd.f32 %v5560, %v6030
  %v6200 = vadd.f32 %v5561, %v6033
  %v6201 = vadd.f32 %v5562, %v6038
  %v6202 = vadd.f32 %v5563, %v6041
  %v6203 = vadd.f32 %v5564, %v6046
  %v6204 = vadd.f32 %v5565, %v6049
  %v6205 = vadd.f32 %v5566, %v6054
  %v6206 = vadd.f32 %v5567, %v6057
  %v6207 = vadd.f32 %v5568, %v6062
  %v6208 = vadd.f32 %v5569, %v6065
  %v6209 = vadd.f32 %v5570, %v6070
  %v6210 = vadd.f32 %v5571, %v6073
  %v6211 = vadd.f32 %v5572, %v6078
  %v6212 = vadd.f32 %v5573, %v6081
  %v6213 = vadd.f32 %v5574, %v6086
  %v6214 = vadd.f32 %v5575, %v6089
  %v6215 = vadd.f32 %v5576, %v6094
  %v6216 = vadd.f32 %v5577, %v6097
  %v6217 = vadd.f32 %v5578, %v6102
  %v6218 = vadd.f32 %v5579, %v6105
  %v6219 = vadd.f32 %v5580, %v6110
  %v6220 = vadd.f32 %v5581, %v6113
  %v6221 = vadd.f32 %v5582, %v6118
  %v6222 = vadd.f32 %v5583, %v6121
  %v6223 = vadd.f32 %v5584, %v6126
  %v6224 = vadd.f32 %v5585, %v6129
  %v6225 = vadd.f32 %v5586, %v6134
  %v6226 = vadd.f32 %v5587, %v6137
  %v6227 = vadd.f32 %v5588, %v6142
  %v6228 = vadd.f32 %v5589, %v6145
  %v6229 = vadd.f32 %v5590, %v6150
  %v6230 = vadd.f32 %v5591, %v6153
  %v6231 = vadd.f32 %v5592, %v6158
  %v6232 = vadd.f32 %v5593, %v6161
  %v6233 = vadd.f32 %v5594, %v6166
  %v6234 = vadd.f32 %v5595, %v6169
  %v6235 = vadd.f32 %v5596, %v6174
  %v6236 = vadd.f32 %v5597, %v6177
  %v6237 = vadd.f32 %v5598, %v6182
  %v6238 = vld [vmem:[%s10] sm:$0xff]
  %v6239 = vld [vmem:[%s10 + $0x8] sm:$0xff]
  %v6240 = vld [vmem:[%s10 + $0x10] sm:$0xff]
  %v6241 = vld [vmem:[%s10 + $0x18] sm:$0xff]
  %v6242 = vld [vmem:[%s10 + $0x20] sm:$0xff]
  %v6243 = vld [vmem:[%s10 + $0x28] sm:$0xff]
  %v6244 = vld [vmem:[%s10 + $0x30] sm:$0xff]
  %v6245 = vld [vmem:[%s10 + $0x38] sm:$0xff]
  %v6246 = vld [vmem:[%s10 + $0x40] sm:$0xff]
  %v6247 = vld [vmem:[%s10 + $0x48] sm:$0xff]
  %v6248 = vld [vmem:[%s10 + $0x50] sm:$0xff]
  %v6249 = vld [vmem:[%s10 + $0x58] sm:$0xff]
  %v6250 = vld [vmem:[%s10 + $0x60] sm:$0xff]
  %v6251 = vld [vmem:[%s10 + $0x68] sm:$0xff]
  %v6252 = vld [vmem:[%s10 + $0x70] sm:$0xff]
  %v6253 = vld [vmem:[%s10 + $0x78] sm:$0xff]
  %v6254 = vld [vmem:[%s10 + $0x80] sm:$0xff]
  %v6255 = vld [vmem:[%s10 + $0x88] sm:$0xff]
  %v6256 = vld [vmem:[%s10 + $0x90] sm:$0xff]
  %v6257 = vld [vmem:[%s10 + $0x98] sm:$0xff]
  %v6258 = vld [vmem:[%s10 + $0xa0] sm:$0xff]
  %v6259 = vld [vmem:[%s10 + $0xa8] sm:$0xff]
  %v6260 = vld [vmem:[%s10 + $0xb0] sm:$0xff]
  %v6261 = vld [vmem:[%s10 + $0xb8] sm:$0xff]
  %v6262 = vld [vmem:[%s10 + $0xc0] sm:$0xff]
  %v6263 = vld [vmem:[%s10 + $0xc8] sm:$0xff]
  %v6264 = vld [vmem:[%s10 + $0xd0] sm:$0xff]
  %v6265 = vld [vmem:[%s10 + $0xd8] sm:$0xff]
  %v6266 = vld [vmem:[%s10 + $0xe0] sm:$0xff]
  %v6267 = vld [vmem:[%s10 + $0xe8] sm:$0xff]
  %v6268 = vld [vmem:[%s10 + $0xf0] sm:$0xff]
  %v6269 = vld [vmem:[%s10 + $0xf8] sm:$0xff]
  %v6270 = vld [vmem:[%s10 + $0x100] sm:$0xff]
  %v6271 = vld [vmem:[%s10 + $0x108] sm:$0xff]
  %v6272 = vld [vmem:[%s10 + $0x110] sm:$0xff]
  %v6273 = vld [vmem:[%s10 + $0x118] sm:$0xff]
  %v6274 = vld [vmem:[%s10 + $0x120] sm:$0xff]
  %v6275 = vld [vmem:[%s10 + $0x128] sm:$0xff]
  %v6276 = vld [vmem:[%s10 + $0x130] sm:$0xff]
  %v6277 = vld [vmem:[%s10 + $0x138] sm:$0xff]
  %v6278 = vld [vmem:[%s10 + $0x140] sm:$0xff]
  %v6279 = vld [vmem:[%s10 + $0x148] sm:$0xff]
  %v6280 = vld [vmem:[%s10 + $0x150] sm:$0xff]
  %v6281 = vld [vmem:[%s10 + $0x158] sm:$0xff]
  %v6282 = vld [vmem:[%s10 + $0x160] sm:$0xff]
  %v6283 = vld [vmem:[%s10 + $0x168] sm:$0xff]
  %v6284 = vld [vmem:[%s10 + $0x170] sm:$0xff]
  %v6285 = vld [vmem:[%s10 + $0x178] sm:$0xff]
  %v6286 = vld [vmem:[%s10 + $0x180] sm:$0xff]
  %v6287 = vld [vmem:[%s10 + $0x188] sm:$0xff]
  %v6288 = vld [vmem:[%s10 + $0x190] sm:$0xff]
  %v6289 = vld [vmem:[%s4] sm:$0x1]
  %v6290 = vlaneseq
  %v6291 = vshrl.u32 %v6290, 7
  %v6292 = vsub.s32 0, %v6291
  %v6293 = vrot.slane %v6289, %v6292
  %v6294 = vadd.f32 %v6187, %v6293
  %v6295 = vadd.f32 %v6188, %v6293
  %v6296 = vadd.f32 %v6189, %v6293
  %v6297 = vadd.f32 %v6190, %v6293
  %v6298 = vadd.f32 %v6191, %v6293
  %v6299 = vadd.f32 %v6192, %v6293
  %v6300 = vadd.f32 %v6193, %v6293
  %v6301 = vadd.f32 %v6194, %v6293
  %v6302 = vadd.f32 %v6195, %v6293
  %v6303 = vadd.f32 %v6196, %v6293
  %v6304 = vadd.f32 %v6197, %v6293
  %v6305 = vadd.f32 %v6198, %v6293
  %v6306 = vadd.f32 %v6199, %v6293
  %v6307 = vadd.f32 %v6200, %v6293
  %v6308 = vadd.f32 %v6201, %v6293
  %v6309 = vadd.f32 %v6202, %v6293
  %v6310 = vadd.f32 %v6203, %v6293
  %v6311 = vadd.f32 %v6204, %v6293
  %v6312 = vadd.f32 %v6205, %v6293
  %v6313 = vadd.f32 %v6206, %v6293
  %v6314 = vadd.f32 %v6207, %v6293
  %v6315 = vadd.f32 %v6208, %v6293
  %v6316 = vadd.f32 %v6209, %v6293
  %v6317 = vadd.f32 %v6210, %v6293
  %v6318 = vadd.f32 %v6211, %v6293
  %v6319 = vadd.f32 %v6212, %v6293
  %v6320 = vadd.f32 %v6213, %v6293
  %v6321 = vadd.f32 %v6214, %v6293
  %v6322 = vadd.f32 %v6215, %v6293
  %v6323 = vadd.f32 %v6216, %v6293
  %v6324 = vadd.f32 %v6217, %v6293
  %v6325 = vadd.f32 %v6218, %v6293
  %v6326 = vadd.f32 %v6219, %v6293
  %v6327 = vadd.f32 %v6220, %v6293
  %v6328 = vadd.f32 %v6221, %v6293
  %v6329 = vadd.f32 %v6222, %v6293
  %v6330 = vadd.f32 %v6223, %v6293
  %v6331 = vadd.f32 %v6224, %v6293
  %v6332 = vadd.f32 %v6225, %v6293
  %v6333 = vadd.f32 %v6226, %v6293
  %v6334 = vadd.f32 %v6227, %v6293
  %v6335 = vadd.f32 %v6228, %v6293
  %v6336 = vadd.f32 %v6229, %v6293
  %v6337 = vadd.f32 %v6230, %v6293
  %v6338 = vadd.f32 %v6231, %v6293
  %v6339 = vadd.f32 %v6232, %v6293
  %v6340 = vadd.f32 %v6233, %v6293
  %v6341 = vadd.f32 %v6234, %v6293
  %v6342 = vadd.f32 %v6235, %v6293
  %v6343 = vadd.f32 %v6236, %v6293
  %v6344 = vadd.f32 %v6237, %v6293
  %v6345 = vmax.f32 %v6294, 0.0
  %v6346 = vmax.f32 %v6295, 0.0
  %v6347 = vmax.f32 %v6296, 0.0
  %v6348 = vmax.f32 %v6297, 0.0
  %v6349 = vmax.f32 %v6298, 0.0
  %v6350 = vmax.f32 %v6299, 0.0
  %v6351 = vmax.f32 %v6300, 0.0
  %v6352 = vmax.f32 %v6301, 0.0
  %v6353 = vmax.f32 %v6302, 0.0
  %v6354 = vmax.f32 %v6303, 0.0
  %v6355 = vmax.f32 %v6304, 0.0
  %v6356 = vmax.f32 %v6305, 0.0
  %v6357 = vmax.f32 %v6306, 0.0
  %v6358 = vmax.f32 %v6307, 0.0
  %v6359 = vmax.f32 %v6308, 0.0
  %v6360 = vmax.f32 %v6309, 0.0
  %v6361 = vmax.f32 %v6310, 0.0
  %v6362 = vmax.f32 %v6311, 0.0
  %v6363 = vmax.f32 %v6312, 0.0
  %v6364 = vmax.f32 %v6313, 0.0
  %v6365 = vmax.f32 %v6314, 0.0
  %v6366 = vmax.f32 %v6315, 0.0
  %v6367 = vmax.f32 %v6316, 0.0
  %v6368 = vmax.f32 %v6317, 0.0
  %v6369 = vmax.f32 %v6318, 0.0
  %v6370 = vmax.f32 %v6319, 0.0
  %v6371 = vmax.f32 %v6320, 0.0
  %v6372 = vmax.f32 %v6321, 0.0
  %v6373 = vmax.f32 %v6322, 0.0
  %v6374 = vmax.f32 %v6323, 0.0
  %v6375 = vmax.f32 %v6324, 0.0
  %v6376 = vmax.f32 %v6325, 0.0
  %v6377 = vmax.f32 %v6326, 0.0
  %v6378 = vmax.f32 %v6327, 0.0
  %v6379 = vmax.f32 %v6328, 0.0
  %v6380 = vmax.f32 %v6329, 0.0
  %v6381 = vmax.f32 %v6330, 0.0
  %v6382 = vmax.f32 %v6331, 0.0
  %v6383 = vmax.f32 %v6332, 0.0
  %v6384 = vmax.f32 %v6333, 0.0
  %v6385 = vmax.f32 %v6334, 0.0
  %v6386 = vmax.f32 %v6335, 0.0
  %v6387 = vmax.f32 %v6336, 0.0
  %v6388 = vmax.f32 %v6337, 0.0
  %v6389 = vmax.f32 %v6338, 0.0
  %v6390 = vmax.f32 %v6339, 0.0
  %v6391 = vmax.f32 %v6340, 0.0
  %v6392 = vmax.f32 %v6341, 0.0
  %v6393 = vmax.f32 %v6342, 0.0
  %v6394 = vmax.f32 %v6343, 0.0
  %v6395 = vmax.f32 %v6344, 0.0
  %6397 = vset.pattern.permute.xlu0 0
  %6398 = vperm.xlu0 %6397, %v6238
  %v6399 = vpop.permute.xlu0 %6398
  %6402 = vset.pattern.permute.xlu0 0
  %6403 = vperm.xlu0 %6402, %v6239
  %v6404 = vpop.permute.xlu0 %6403
  %6407 = vset.pattern.permute.xlu0 0
  %6408 = vperm.xlu0 %6407, %v6240
  %v6409 = vpop.permute.xlu0 %6408
  %6412 = vset.pattern.permute.xlu0 0
  %6413 = vperm.xlu0 %6412, %v6241
  %v6414 = vpop.permute.xlu0 %6413
  %6417 = vset.pattern.permute.xlu0 0
  %6418 = vperm.xlu0 %6417, %v6242
  %v6419 = vpop.permute.xlu0 %6418
  %6422 = vset.pattern.permute.xlu0 0
  %6423 = vperm.xlu0 %6422, %v6243
  %v6424 = vpop.permute.xlu0 %6423
  %6427 = vset.pattern.permute.xlu0 0
  %6428 = vperm.xlu0 %6427, %v6244
  %v6429 = vpop.permute.xlu0 %6428
  %6432 = vset.pattern.permute.xlu0 0
  %6433 = vperm.xlu0 %6432, %v6245
  %v6434 = vpop.permute.xlu0 %6433
  %6437 = vset.pattern.permute.xlu0 0
  %6438 = vperm.xlu0 %6437, %v6246
  %v6439 = vpop.permute.xlu0 %6438
  %6442 = vset.pattern.permute.xlu0 0
  %6443 = vperm.xlu0 %6442, %v6247
  %v6444 = vpop.permute.xlu0 %6443
  %6447 = vset.pattern.permute.xlu0 0
  %6448 = vperm.xlu0 %6447, %v6248
  %v6449 = vpop.permute.xlu0 %6448
  %6452 = vset.pattern.permute.xlu0 0
  %6453 = vperm.xlu0 %6452, %v6249
  %v6454 = vpop.permute.xlu0 %6453
  %6457 = vset.pattern.permute.xlu0 0
  %6458 = vperm.xlu0 %6457, %v6250
  %v6459 = vpop.permute.xlu0 %6458
  %6462 = vset.pattern.permute.xlu0 0
  %6463 = vperm.xlu0 %6462, %v6251
  %v6464 = vpop.permute.xlu0 %6463
  %6467 = vset.pattern.permute.xlu0 0
  %6468 = vperm.xlu0 %6467, %v6252
  %v6469 = vpop.permute.xlu0 %6468
  %6472 = vset.pattern.permute.xlu0 0
  %6473 = vperm.xlu0 %6472, %v6253
  %v6474 = vpop.permute.xlu0 %6473
  %6477 = vset.pattern.permute.xlu0 0
  %6478 = vperm.xlu0 %6477, %v6254
  %v6479 = vpop.permute.xlu0 %6478
  %6482 = vset.pattern.permute.xlu0 0
  %6483 = vperm.xlu0 %6482, %v6255
  %v6484 = vpop.permute.xlu0 %6483
  %6487 = vset.pattern.permute.xlu0 0
  %6488 = vperm.xlu0 %6487, %v6256
  %v6489 = vpop.permute.xlu0 %6488
  %6492 = vset.pattern.permute.xlu0 0
  %6493 = vperm.xlu0 %6492, %v6257
  %v6494 = vpop.permute.xlu0 %6493
  %6497 = vset.pattern.permute.xlu0 0
  %6498 = vperm.xlu0 %6497, %v6258
  %v6499 = vpop.permute.xlu0 %6498
  %6502 = vset.pattern.permute.xlu0 0
  %6503 = vperm.xlu0 %6502, %v6259
  %v6504 = vpop.permute.xlu0 %6503
  %6507 = vset.pattern.permute.xlu0 0
  %6508 = vperm.xlu0 %6507, %v6260
  %v6509 = vpop.permute.xlu0 %6508
  %6512 = vset.pattern.permute.xlu0 0
  %6513 = vperm.xlu0 %6512, %v6261
  %v6514 = vpop.permute.xlu0 %6513
  %6517 = vset.pattern.permute.xlu0 0
  %6518 = vperm.xlu0 %6517, %v6262
  %v6519 = vpop.permute.xlu0 %6518
  %6522 = vset.pattern.permute.xlu0 0
  %6523 = vperm.xlu0 %6522, %v6263
  %v6524 = vpop.permute.xlu0 %6523
  %6527 = vset.pattern.permute.xlu0 0
  %6528 = vperm.xlu0 %6527, %v6264
  %v6529 = vpop.permute.xlu0 %6528
  %6532 = vset.pattern.permute.xlu0 0
  %6533 = vperm.xlu0 %6532, %v6265
  %v6534 = vpop.permute.xlu0 %6533
  %6537 = vset.pattern.permute.xlu0 0
  %6538 = vperm.xlu0 %6537, %v6266
  %v6539 = vpop.permute.xlu0 %6538
  %6542 = vset.pattern.permute.xlu0 0
  %6543 = vperm.xlu0 %6542, %v6267
  %v6544 = vpop.permute.xlu0 %6543
  %6547 = vset.pattern.permute.xlu0 0
  %6548 = vperm.xlu0 %6547, %v6268
  %v6549 = vpop.permute.xlu0 %6548
  %6552 = vset.pattern.permute.xlu0 0
  %6553 = vperm.xlu0 %6552, %v6269
  %v6554 = vpop.permute.xlu0 %6553
  %6557 = vset.pattern.permute.xlu0 0
  %6558 = vperm.xlu0 %6557, %v6270
  %v6559 = vpop.permute.xlu0 %6558
  %6562 = vset.pattern.permute.xlu0 0
  %6563 = vperm.xlu0 %6562, %v6271
  %v6564 = vpop.permute.xlu0 %6563
  %6567 = vset.pattern.permute.xlu0 0
  %6568 = vperm.xlu0 %6567, %v6272
  %v6569 = vpop.permute.xlu0 %6568
  %6572 = vset.pattern.permute.xlu0 0
  %6573 = vperm.xlu0 %6572, %v6273
  %v6574 = vpop.permute.xlu0 %6573
  %6577 = vset.pattern.permute.xlu0 0
  %6578 = vperm.xlu0 %6577, %v6274
  %v6579 = vpop.permute.xlu0 %6578
  %6582 = vset.pattern.permute.xlu0 0
  %6583 = vperm.xlu0 %6582, %v6275
  %v6584 = vpop.permute.xlu0 %6583
  %6587 = vset.pattern.permute.xlu0 0
  %6588 = vperm.xlu0 %6587, %v6276
  %v6589 = vpop.permute.xlu0 %6588
  %6592 = vset.pattern.permute.xlu0 0
  %6593 = vperm.xlu0 %6592, %v6277
  %v6594 = vpop.permute.xlu0 %6593
  %6597 = vset.pattern.permute.xlu0 0
  %6598 = vperm.xlu0 %6597, %v6278
  %v6599 = vpop.permute.xlu0 %6598
  %6602 = vset.pattern.permute.xlu0 0
  %6603 = vperm.xlu0 %6602, %v6279
  %v6604 = vpop.permute.xlu0 %6603
  %6607 = vset.pattern.permute.xlu0 0
  %6608 = vperm.xlu0 %6607, %v6280
  %v6609 = vpop.permute.xlu0 %6608
  %6612 = vset.pattern.permute.xlu0 0
  %6613 = vperm.xlu0 %6612, %v6281
  %v6614 = vpop.permute.xlu0 %6613
  %6617 = vset.pattern.permute.xlu0 0
  %6618 = vperm.xlu0 %6617, %v6282
  %v6619 = vpop.permute.xlu0 %6618
  %6622 = vset.pattern.permute.xlu0 0
  %6623 = vperm.xlu0 %6622, %v6283
  %v6624 = vpop.permute.xlu0 %6623
  %6627 = vset.pattern.permute.xlu0 0
  %6628 = vperm.xlu0 %6627, %v6284
  %v6629 = vpop.permute.xlu0 %6628
  %6632 = vset.pattern.permute.xlu0 0
  %6633 = vperm.xlu0 %6632, %v6285
  %v6634 = vpop.permute.xlu0 %6633
  %6637 = vset.pattern.permute.xlu0 0
  %6638 = vperm.xlu0 %6637, %v6286
  %v6639 = vpop.permute.xlu0 %6638
  %6642 = vset.pattern.permute.xlu0 0
  %6643 = vperm.xlu0 %6642, %v6287
  %v6644 = vpop.permute.xlu0 %6643
  %6647 = vset.pattern.permute.xlu0 0
  %6648 = vperm.xlu0 %6647, %v6288
  %v6649 = vpop.permute.xlu0 %6648
  %v6651 = vmul.f32 %v6345, %v6399
  %v6652 = vmul.f32 %v6346, %v6404
  %v6653 = vmul.f32 %v6347, %v6409
  %v6654 = vmul.f32 %v6348, %v6414
  %v6655 = vmul.f32 %v6349, %v6419
  %v6656 = vmul.f32 %v6350, %v6424
  %v6657 = vmul.f32 %v6351, %v6429
  %v6658 = vmul.f32 %v6352, %v6434
  %v6659 = vmul.f32 %v6353, %v6439
  %v6660 = vmul.f32 %v6354, %v6444
  %v6661 = vmul.f32 %v6355, %v6449
  %v6662 = vmul.f32 %v6356, %v6454
  %v6663 = vmul.f32 %v6357, %v6459
  %v6664 = vmul.f32 %v6358, %v6464
  %v6665 = vmul.f32 %v6359, %v6469
  %v6666 = vmul.f32 %v6360, %v6474
  %v6667 = vmul.f32 %v6361, %v6479
  %v6668 = vmul.f32 %v6362, %v6484
  %v6669 = vmul.f32 %v6363, %v6489
  %v6670 = vmul.f32 %v6364, %v6494
  %v6671 = vmul.f32 %v6365, %v6499
  %v6672 = vmul.f32 %v6366, %v6504
  %v6673 = vmul.f32 %v6367, %v6509
  %v6674 = vmul.f32 %v6368, %v6514
  %v6675 = vmul.f32 %v6369, %v6519
  %v6676 = vmul.f32 %v6370, %v6524
  %v6677 = vmul.f32 %v6371, %v6529
  %v6678 = vmul.f32 %v6372, %v6534
  %v6679 = vmul.f32 %v6373, %v6539
  %v6680 = vmul.f32 %v6374, %v6544
  %v6681 = vmul.f32 %v6375, %v6549
  %v6682 = vmul.f32 %v6376, %v6554
  %v6683 = vmul.f32 %v6377, %v6559
  %v6684 = vmul.f32 %v6378, %v6564
  %v6685 = vmul.f32 %v6379, %v6569
  %v6686 = vmul.f32 %v6380, %v6574
  %v6687 = vmul.f32 %v6381, %v6579
  %v6688 = vmul.f32 %v6382, %v6584
  %v6689 = vmul.f32 %v6383, %v6589
  %v6690 = vmul.f32 %v6384, %v6594
  %v6691 = vmul.f32 %v6385, %v6599
  %v6692 = vmul.f32 %v6386, %v6604
  %v6693 = vmul.f32 %v6387, %v6609
  %v6694 = vmul.f32 %v6388, %v6614
  %v6695 = vmul.f32 %v6389, %v6619
  %v6696 = vmul.f32 %v6390, %v6624
  %v6697 = vmul.f32 %v6391, %v6629
  %v6698 = vmul.f32 %v6392, %v6634
  %v6699 = vmul.f32 %v6393, %v6639
  %v6700 = vmul.f32 %v6394, %v6644
  %v6701 = vmul.f32 %v6395, %v6649
  %vm6702 = vcmask 261120
  %v6703 = vsel %vm6702, %v6651, 0.0
  %v6704 = vsel %vm6702, %v6652, 0.0
  %v6705 = vadd.f32 %v6703, %v6704
  %v6706 = vsel %vm6702, %v6653, 0.0
  %v6707 = vadd.f32 %v6705, %v6706
  %v6708 = vsel %vm6702, %v6654, 0.0
  %v6709 = vadd.f32 %v6707, %v6708
  %v6710 = vsel %vm6702, %v6655, 0.0
  %v6711 = vadd.f32 %v6709, %v6710
  %v6712 = vsel %vm6702, %v6656, 0.0
  %v6713 = vadd.f32 %v6711, %v6712
  %v6714 = vsel %vm6702, %v6657, 0.0
  %v6715 = vadd.f32 %v6713, %v6714
  %v6716 = vsel %vm6702, %v6658, 0.0
  %v6717 = vadd.f32 %v6715, %v6716
  %v6718 = vsel %vm6702, %v6659, 0.0
  %v6719 = vadd.f32 %v6717, %v6718
  %v6720 = vsel %vm6702, %v6660, 0.0
  %v6721 = vadd.f32 %v6719, %v6720
  %v6722 = vsel %vm6702, %v6661, 0.0
  %v6723 = vadd.f32 %v6721, %v6722
  %v6724 = vsel %vm6702, %v6662, 0.0
  %v6725 = vadd.f32 %v6723, %v6724
  %v6726 = vsel %vm6702, %v6663, 0.0
  %v6727 = vadd.f32 %v6725, %v6726
  %v6728 = vsel %vm6702, %v6664, 0.0
  %v6729 = vadd.f32 %v6727, %v6728
  %v6730 = vsel %vm6702, %v6665, 0.0
  %v6731 = vadd.f32 %v6729, %v6730
  %v6732 = vsel %vm6702, %v6666, 0.0
  %v6733 = vadd.f32 %v6731, %v6732
  %v6734 = vsel %vm6702, %v6667, 0.0
  %v6735 = vadd.f32 %v6733, %v6734
  %v6736 = vsel %vm6702, %v6668, 0.0
  %v6737 = vadd.f32 %v6735, %v6736
  %v6738 = vsel %vm6702, %v6669, 0.0
  %v6739 = vadd.f32 %v6737, %v6738
  %v6740 = vsel %vm6702, %v6670, 0.0
  %v6741 = vadd.f32 %v6739, %v6740
  %v6742 = vsel %vm6702, %v6671, 0.0
  %v6743 = vadd.f32 %v6741, %v6742
  %v6744 = vsel %vm6702, %v6672, 0.0
  %v6745 = vadd.f32 %v6743, %v6744
  %v6746 = vsel %vm6702, %v6673, 0.0
  %v6747 = vadd.f32 %v6745, %v6746
  %v6748 = vsel %vm6702, %v6674, 0.0
  %v6749 = vadd.f32 %v6747, %v6748
  %v6750 = vsel %vm6702, %v6675, 0.0
  %v6751 = vadd.f32 %v6749, %v6750
  %v6752 = vsel %vm6702, %v6676, 0.0
  %v6753 = vadd.f32 %v6751, %v6752
  %v6754 = vsel %vm6702, %v6677, 0.0
  %v6755 = vadd.f32 %v6753, %v6754
  %v6756 = vsel %vm6702, %v6678, 0.0
  %v6757 = vadd.f32 %v6755, %v6756
  %v6758 = vsel %vm6702, %v6679, 0.0
  %v6759 = vadd.f32 %v6757, %v6758
  %v6760 = vsel %vm6702, %v6680, 0.0
  %v6761 = vadd.f32 %v6759, %v6760
  %v6762 = vsel %vm6702, %v6681, 0.0
  %v6763 = vadd.f32 %v6761, %v6762
  %v6764 = vsel %vm6702, %v6682, 0.0
  %v6765 = vadd.f32 %v6763, %v6764
  %v6766 = vsel %vm6702, %v6683, 0.0
  %v6767 = vadd.f32 %v6765, %v6766
  %v6768 = vsel %vm6702, %v6684, 0.0
  %v6769 = vadd.f32 %v6767, %v6768
  %v6770 = vsel %vm6702, %v6685, 0.0
  %v6771 = vadd.f32 %v6769, %v6770
  %v6772 = vsel %vm6702, %v6686, 0.0
  %v6773 = vadd.f32 %v6771, %v6772
  %v6774 = vsel %vm6702, %v6687, 0.0
  %v6775 = vadd.f32 %v6773, %v6774
  %v6776 = vsel %vm6702, %v6688, 0.0
  %v6777 = vadd.f32 %v6775, %v6776
  %v6778 = vsel %vm6702, %v6689, 0.0
  %v6779 = vadd.f32 %v6777, %v6778
  %v6780 = vsel %vm6702, %v6690, 0.0
  %v6781 = vadd.f32 %v6779, %v6780
  %v6782 = vsel %vm6702, %v6691, 0.0
  %v6783 = vadd.f32 %v6781, %v6782
  %v6784 = vsel %vm6702, %v6692, 0.0
  %v6785 = vadd.f32 %v6783, %v6784
  %v6786 = vsel %vm6702, %v6693, 0.0
  %v6787 = vadd.f32 %v6785, %v6786
  %v6788 = vsel %vm6702, %v6694, 0.0
  %v6789 = vadd.f32 %v6787, %v6788
  %v6790 = vsel %vm6702, %v6695, 0.0
  %v6791 = vadd.f32 %v6789, %v6790
  %v6792 = vsel %vm6702, %v6696, 0.0
  %v6793 = vadd.f32 %v6791, %v6792
  %v6794 = vsel %vm6702, %v6697, 0.0
  %v6795 = vadd.f32 %v6793, %v6794
  %v6796 = vsel %vm6702, %v6698, 0.0
  %v6797 = vadd.f32 %v6795, %v6796
  %v6798 = vsel %vm6702, %v6699, 0.0
  %v6799 = vadd.f32 %v6797, %v6798
  %v6800 = vsel %vm6702, %v6700, 0.0
  %v6801 = vadd.f32 %v6799, %v6800
  %v6802 = vsel %vm6702, %v6701, 0.0
  %v6803 = vadd.f32 %v6801, %v6802
  %v6804 = vrot.slane %v6803, 4
  %v6805 = vadd.f32 %v6803, %v6804
  %v6806 = vrot.slane %v6805, 2
  %v6807 = vadd.f32 %v6805, %v6806
  %v6808 = vrot.slane %v6807, 1
  %v6809 = vadd.f32 %v6807, %v6808
  %v6810 = vmul.f32 %v6809, 0.00390625
  %v6811 = vmul.f32 %v6651, %v6651
  %v6812 = vmul.f32 %v6652, %v6652
  %v6813 = vmul.f32 %v6653, %v6653
  %v6814 = vmul.f32 %v6654, %v6654
  %v6815 = vmul.f32 %v6655, %v6655
  %v6816 = vmul.f32 %v6656, %v6656
  %v6817 = vmul.f32 %v6657, %v6657
  %v6818 = vmul.f32 %v6658, %v6658
  %v6819 = vmul.f32 %v6659, %v6659
  %v6820 = vmul.f32 %v6660, %v6660
  %v6821 = vmul.f32 %v6661, %v6661
  %v6822 = vmul.f32 %v6662, %v6662
  %v6823 = vmul.f32 %v6663, %v6663
  %v6824 = vmul.f32 %v6664, %v6664
  %v6825 = vmul.f32 %v6665, %v6665
  %v6826 = vmul.f32 %v6666, %v6666
  %v6827 = vmul.f32 %v6667, %v6667
  %v6828 = vmul.f32 %v6668, %v6668
  %v6829 = vmul.f32 %v6669, %v6669
  %v6830 = vmul.f32 %v6670, %v6670
  %v6831 = vmul.f32 %v6671, %v6671
  %v6832 = vmul.f32 %v6672, %v6672
  %v6833 = vmul.f32 %v6673, %v6673
  %v6834 = vmul.f32 %v6674, %v6674
  %v6835 = vmul.f32 %v6675, %v6675
  %v6836 = vmul.f32 %v6676, %v6676
  %v6837 = vmul.f32 %v6677, %v6677
  %v6838 = vmul.f32 %v6678, %v6678
  %v6839 = vmul.f32 %v6679, %v6679
  %v6840 = vmul.f32 %v6680, %v6680
  %v6841 = vmul.f32 %v6681, %v6681
  %v6842 = vmul.f32 %v6682, %v6682
  %v6843 = vmul.f32 %v6683, %v6683
  %v6844 = vmul.f32 %v6684, %v6684
  %v6845 = vmul.f32 %v6685, %v6685
  %v6846 = vmul.f32 %v6686, %v6686
  %v6847 = vmul.f32 %v6687, %v6687
  %v6848 = vmul.f32 %v6688, %v6688
  %v6849 = vmul.f32 %v6689, %v6689
  %v6850 = vmul.f32 %v6690, %v6690
  %v6851 = vmul.f32 %v6691, %v6691
  %v6852 = vmul.f32 %v6692, %v6692
  %v6853 = vmul.f32 %v6693, %v6693
  %v6854 = vmul.f32 %v6694, %v6694
  %v6855 = vmul.f32 %v6695, %v6695
  %v6856 = vmul.f32 %v6696, %v6696
  %v6857 = vmul.f32 %v6697, %v6697
  %v6858 = vmul.f32 %v6698, %v6698
  %v6859 = vmul.f32 %v6699, %v6699
  %v6860 = vmul.f32 %v6700, %v6700
  %v6861 = vmul.f32 %v6701, %v6701
  %v6862 = vsel %vm6702, %v6811, 0.0
  %v6863 = vsel %vm6702, %v6812, 0.0
  %v6864 = vadd.f32 %v6862, %v6863
  %v6865 = vsel %vm6702, %v6813, 0.0
  %v6866 = vadd.f32 %v6864, %v6865
  %v6867 = vsel %vm6702, %v6814, 0.0
  %v6868 = vadd.f32 %v6866, %v6867
  %v6869 = vsel %vm6702, %v6815, 0.0
  %v6870 = vadd.f32 %v6868, %v6869
  %v6871 = vsel %vm6702, %v6816, 0.0
  %v6872 = vadd.f32 %v6870, %v6871
  %v6873 = vsel %vm6702, %v6817, 0.0
  %v6874 = vadd.f32 %v6872, %v6873
  %v6875 = vsel %vm6702, %v6818, 0.0
  %v6876 = vadd.f32 %v6874, %v6875
  %v6877 = vsel %vm6702, %v6819, 0.0
  %v6878 = vadd.f32 %v6876, %v6877
  %v6879 = vsel %vm6702, %v6820, 0.0
  %v6880 = vadd.f32 %v6878, %v6879
  %v6881 = vsel %vm6702, %v6821, 0.0
  %v6882 = vadd.f32 %v6880, %v6881
  %v6883 = vsel %vm6702, %v6822, 0.0
  %v6884 = vadd.f32 %v6882, %v6883
  %v6885 = vsel %vm6702, %v6823, 0.0
  %v6886 = vadd.f32 %v6884, %v6885
  %v6887 = vsel %vm6702, %v6824, 0.0
  %v6888 = vadd.f32 %v6886, %v6887
  %v6889 = vsel %vm6702, %v6825, 0.0
  %v6890 = vadd.f32 %v6888, %v6889
  %v6891 = vsel %vm6702, %v6826, 0.0
  %v6892 = vadd.f32 %v6890, %v6891
  %v6893 = vsel %vm6702, %v6827, 0.0
  %v6894 = vadd.f32 %v6892, %v6893
  %v6895 = vsel %vm6702, %v6828, 0.0
  %v6896 = vadd.f32 %v6894, %v6895
  %v6897 = vsel %vm6702, %v6829, 0.0
  %v6898 = vadd.f32 %v6896, %v6897
  %v6899 = vsel %vm6702, %v6830, 0.0
  %v6900 = vadd.f32 %v6898, %v6899
  %v6901 = vsel %vm6702, %v6831, 0.0
  %v6902 = vadd.f32 %v6900, %v6901
  %v6903 = vsel %vm6702, %v6832, 0.0
  %v6904 = vadd.f32 %v6902, %v6903
  %v6905 = vsel %vm6702, %v6833, 0.0
  %v6906 = vadd.f32 %v6904, %v6905
  %v6907 = vsel %vm6702, %v6834, 0.0
  %v6908 = vadd.f32 %v6906, %v6907
  %v6909 = vsel %vm6702, %v6835, 0.0
  %v6910 = vadd.f32 %v6908, %v6909
  %v6911 = vsel %vm6702, %v6836, 0.0
  %v6912 = vadd.f32 %v6910, %v6911
  %v6913 = vsel %vm6702, %v6837, 0.0
  %v6914 = vadd.f32 %v6912, %v6913
  %v6915 = vsel %vm6702, %v6838, 0.0
  %v6916 = vadd.f32 %v6914, %v6915
  %v6917 = vsel %vm6702, %v6839, 0.0
  %v6918 = vadd.f32 %v6916, %v6917
  %v6919 = vsel %vm6702, %v6840, 0.0
  %v6920 = vadd.f32 %v6918, %v6919
  %v6921 = vsel %vm6702, %v6841, 0.0
  %v6922 = vadd.f32 %v6920, %v6921
  %v6923 = vsel %vm6702, %v6842, 0.0
  %v6924 = vadd.f32 %v6922, %v6923
  %v6925 = vsel %vm6702, %v6843, 0.0
  %v6926 = vadd.f32 %v6924, %v6925
  %v6927 = vsel %vm6702, %v6844, 0.0
  %v6928 = vadd.f32 %v6926, %v6927
  %v6929 = vsel %vm6702, %v6845, 0.0
  %v6930 = vadd.f32 %v6928, %v6929
  %v6931 = vsel %vm6702, %v6846, 0.0
  %v6932 = vadd.f32 %v6930, %v6931
  %v6933 = vsel %vm6702, %v6847, 0.0
  %v6934 = vadd.f32 %v6932, %v6933
  %v6935 = vsel %vm6702, %v6848, 0.0
  %v6936 = vadd.f32 %v6934, %v6935
  %v6937 = vsel %vm6702, %v6849, 0.0
  %v6938 = vadd.f32 %v6936, %v6937
  %v6939 = vsel %vm6702, %v6850, 0.0
  %v6940 = vadd.f32 %v6938, %v6939
  %v6941 = vsel %vm6702, %v6851, 0.0
  %v6942 = vadd.f32 %v6940, %v6941
  %v6943 = vsel %vm6702, %v6852, 0.0
  %v6944 = vadd.f32 %v6942, %v6943
  %v6945 = vsel %vm6702, %v6853, 0.0
  %v6946 = vadd.f32 %v6944, %v6945
  %v6947 = vsel %vm6702, %v6854, 0.0
  %v6948 = vadd.f32 %v6946, %v6947
  %v6949 = vsel %vm6702, %v6855, 0.0
  %v6950 = vadd.f32 %v6948, %v6949
  %v6951 = vsel %vm6702, %v6856, 0.0
  %v6952 = vadd.f32 %v6950, %v6951
  %v6953 = vsel %vm6702, %v6857, 0.0
  %v6954 = vadd.f32 %v6952, %v6953
  %v6955 = vsel %vm6702, %v6858, 0.0
  %v6956 = vadd.f32 %v6954, %v6955
  %v6957 = vsel %vm6702, %v6859, 0.0
  %v6958 = vadd.f32 %v6956, %v6957
  %v6959 = vsel %vm6702, %v6860, 0.0
  %v6960 = vadd.f32 %v6958, %v6959
  %v6961 = vsel %vm6702, %v6861, 0.0
  %v6962 = vadd.f32 %v6960, %v6961
  %v6963 = vrot.slane %v6962, 4
  %v6964 = vadd.f32 %v6962, %v6963
  %v6965 = vrot.slane %v6964, 2
  %v6966 = vadd.f32 %v6964, %v6965
  %v6967 = vrot.slane %v6966, 1
  %v6968 = vadd.f32 %v6966, %v6967
  %v6969 = vmul.f32 %v6968, 0.00390625
  %v6970 = vmul.f32 %v6810, %v6810
  %v6971 = vsub.f32 %v6969, %v6970
  %v6972 = vadd.f32 %v6971, 1e-05
  %v6973 = vrsqrt.pop %v6972
  %v6974 = vld [vmem:[%s4 + $0x1] sm:$0x1]
  %v6975 = vmul.f32 %v6973, %v6974
  %v6976 = vsub.f32 %v6345, %v6810
  %v6977 = vsub.f32 %v6346, %v6810
  %v6978 = vsub.f32 %v6347, %v6810
  %v6979 = vsub.f32 %v6348, %v6810
  %v6980 = vsub.f32 %v6349, %v6810
  %v6981 = vsub.f32 %v6350, %v6810
  %v6982 = vsub.f32 %v6351, %v6810
  %v6983 = vsub.f32 %v6352, %v6810
  %v6984 = vsub.f32 %v6353, %v6810
  %v6985 = vsub.f32 %v6354, %v6810
  %v6986 = vsub.f32 %v6355, %v6810
  %v6987 = vsub.f32 %v6356, %v6810
  %v6988 = vsub.f32 %v6357, %v6810
  %v6989 = vsub.f32 %v6358, %v6810
  %v6990 = vsub.f32 %v6359, %v6810
  %v6991 = vsub.f32 %v6360, %v6810
  %v6992 = vsub.f32 %v6361, %v6810
  %v6993 = vsub.f32 %v6362, %v6810
  %v6994 = vsub.f32 %v6363, %v6810
  %v6995 = vsub.f32 %v6364, %v6810
  %v6996 = vsub.f32 %v6365, %v6810
  %v6997 = vsub.f32 %v6366, %v6810
  %v6998 = vsub.f32 %v6367, %v6810
  %v6999 = vsub.f32 %v6368, %v6810
  %v7000 = vsub.f32 %v6369, %v6810
  %v7001 = vsub.f32 %v6370, %v6810
  %v7002 = vsub.f32 %v6371, %v6810
  %v7003 = vsub.f32 %v6372, %v6810
  %v7004 = vsub.f32 %v6373, %v6810
  %v7005 = vsub.f32 %v6374, %v6810
  %v7006 = vsub.f32 %v6375, %v6810
  %v7007 = vsub.f32 %v6376, %v6810
  %v7008 = vsub.f32 %v6377, %v6810
  %v7009 = vsub.f32 %v6378, %v6810
  %v7010 = vsub.f32 %v6379, %v6810
  %v7011 = vsub.f32 %v6380, %v6810
  %v7012 = vsub.f32 %v6381, %v6810
  %v7013 = vsub.f32 %v6382, %v6810
  %v7014 = vsub.f32 %v6383, %v6810
  %v7015 = vsub.f32 %v6384, %v6810
  %v7016 = vsub.f32 %v6385, %v6810
  %v7017 = vsub.f32 %v6386, %v6810
  %v7018 = vsub.f32 %v6387, %v6810
  %v7019 = vsub.f32 %v6388, %v6810
  %v7020 = vsub.f32 %v6389, %v6810
  %v7021 = vsub.f32 %v6390, %v6810
  %v7022 = vsub.f32 %v6391, %v6810
  %v7023 = vsub.f32 %v6392, %v6810
  %v7024 = vsub.f32 %v6393, %v6810
  %v7025 = vsub.f32 %v6394, %v6810
  %v7026 = vsub.f32 %v6395, %v6810
  %v7027 = vlaneseq
  %v7028 = vshrl.u32 %v7027, 7
  %v7029 = vsub.s32 0, %v7028
  %v7030 = vrot.slane %v6975, %v7029
  %v7031 = vmul.f32 %v6976, %v7030
  %v7032 = vmul.f32 %v6977, %v7030
  %v7033 = vmul.f32 %v6978, %v7030
  %v7034 = vmul.f32 %v6979, %v7030
  %v7035 = vmul.f32 %v6980, %v7030
  %v7036 = vmul.f32 %v6981, %v7030
  %v7037 = vmul.f32 %v6982, %v7030
  %v7038 = vmul.f32 %v6983, %v7030
  %v7039 = vmul.f32 %v6984, %v7030
  %v7040 = vmul.f32 %v6985, %v7030
  %v7041 = vmul.f32 %v6986, %v7030
  %v7042 = vmul.f32 %v6987, %v7030
  %v7043 = vmul.f32 %v6988, %v7030
  %v7044 = vmul.f32 %v6989, %v7030
  %v7045 = vmul.f32 %v6990, %v7030
  %v7046 = vmul.f32 %v6991, %v7030
  %v7047 = vmul.f32 %v6992, %v7030
  %v7048 = vmul.f32 %v6993, %v7030
  %v7049 = vmul.f32 %v6994, %v7030
  %v7050 = vmul.f32 %v6995, %v7030
  %v7051 = vmul.f32 %v6996, %v7030
  %v7052 = vmul.f32 %v6997, %v7030
  %v7053 = vmul.f32 %v6998, %v7030
  %v7054 = vmul.f32 %v6999, %v7030
  %v7055 = vmul.f32 %v7000, %v7030
  %v7056 = vmul.f32 %v7001, %v7030
  %v7057 = vmul.f32 %v7002, %v7030
  %v7058 = vmul.f32 %v7003, %v7030
  %v7059 = vmul.f32 %v7004, %v7030
  %v7060 = vmul.f32 %v7005, %v7030
  %v7061 = vmul.f32 %v7006, %v7030
  %v7062 = vmul.f32 %v7007, %v7030
  %v7063 = vmul.f32 %v7008, %v7030
  %v7064 = vmul.f32 %v7009, %v7030
  %v7065 = vmul.f32 %v7010, %v7030
  %v7066 = vmul.f32 %v7011, %v7030
  %v7067 = vmul.f32 %v7012, %v7030
  %v7068 = vmul.f32 %v7013, %v7030
  %v7069 = vmul.f32 %v7014, %v7030
  %v7070 = vmul.f32 %v7015, %v7030
  %v7071 = vmul.f32 %v7016, %v7030
  %v7072 = vmul.f32 %v7017, %v7030
  %v7073 = vmul.f32 %v7018, %v7030
  %v7074 = vmul.f32 %v7019, %v7030
  %v7075 = vmul.f32 %v7020, %v7030
  %v7076 = vmul.f32 %v7021, %v7030
  %v7077 = vmul.f32 %v7022, %v7030
  %v7078 = vmul.f32 %v7023, %v7030
  %v7079 = vmul.f32 %v7024, %v7030
  %v7080 = vmul.f32 %v7025, %v7030
  %v7081 = vmul.f32 %v7026, %v7030
  %v7082 = vld [vmem:[%s4 + $0x2] sm:$0x1]
  %v7083 = vlaneseq
  %v7084 = vshrl.u32 %v7083, 7
  %v7085 = vsub.s32 0, %v7084
  %v7086 = vrot.slane %v7082, %v7085
  %v7087 = vadd.f32 %v7031, %v7086
  %v7088 = vadd.f32 %v7032, %v7086
  %v7089 = vadd.f32 %v7033, %v7086
  %v7090 = vadd.f32 %v7034, %v7086
  %v7091 = vadd.f32 %v7035, %v7086
  %v7092 = vadd.f32 %v7036, %v7086
  %v7093 = vadd.f32 %v7037, %v7086
  %v7094 = vadd.f32 %v7038, %v7086
  %v7095 = vadd.f32 %v7039, %v7086
  %v7096 = vadd.f32 %v7040, %v7086
  %v7097 = vadd.f32 %v7041, %v7086
  %v7098 = vadd.f32 %v7042, %v7086
  %v7099 = vadd.f32 %v7043, %v7086
  %v7100 = vadd.f32 %v7044, %v7086
  %v7101 = vadd.f32 %v7045, %v7086
  %v7102 = vadd.f32 %v7046, %v7086
  %v7103 = vadd.f32 %v7047, %v7086
  %v7104 = vadd.f32 %v7048, %v7086
  %v7105 = vadd.f32 %v7049, %v7086
  %v7106 = vadd.f32 %v7050, %v7086
  %v7107 = vadd.f32 %v7051, %v7086
  %v7108 = vadd.f32 %v7052, %v7086
  %v7109 = vadd.f32 %v7053, %v7086
  %v7110 = vadd.f32 %v7054, %v7086
  %v7111 = vadd.f32 %v7055, %v7086
  %v7112 = vadd.f32 %v7056, %v7086
  %v7113 = vadd.f32 %v7057, %v7086
  %v7114 = vadd.f32 %v7058, %v7086
  %v7115 = vadd.f32 %v7059, %v7086
  %v7116 = vadd.f32 %v7060, %v7086
  %v7117 = vadd.f32 %v7061, %v7086
  %v7118 = vadd.f32 %v7062, %v7086
  %v7119 = vadd.f32 %v7063, %v7086
  %v7120 = vadd.f32 %v7064, %v7086
  %v7121 = vadd.f32 %v7065, %v7086
  %v7122 = vadd.f32 %v7066, %v7086
  %v7123 = vadd.f32 %v7067, %v7086
  %v7124 = vadd.f32 %v7068, %v7086
  %v7125 = vadd.f32 %v7069, %v7086
  %v7126 = vadd.f32 %v7070, %v7086
  %v7127 = vadd.f32 %v7071, %v7086
  %v7128 = vadd.f32 %v7072, %v7086
  %v7129 = vadd.f32 %v7073, %v7086
  %v7130 = vadd.f32 %v7074, %v7086
  %v7131 = vadd.f32 %v7075, %v7086
  %v7132 = vadd.f32 %v7076, %v7086
  %v7133 = vadd.f32 %v7077, %v7086
  %v7134 = vadd.f32 %v7078, %v7086
  %v7135 = vadd.f32 %v7079, %v7086
  %v7136 = vadd.f32 %v7080, %v7086
  %v7137 = vadd.f32 %v7081, %v7086
  %7138 = vst.msk [vmem:[#allocation3] sm:$0xff] %vm6702, %v7087
  %7139 = vst.msk [vmem:[#allocation3 + $0x8] sm:$0xff] %vm6702, %v7088
  %7140 = vst.msk [vmem:[#allocation3 + $0x10] sm:$0xff] %vm6702, %v7089
  %7141 = vst.msk [vmem:[#allocation3 + $0x18] sm:$0xff] %vm6702, %v7090
  %7142 = vst.msk [vmem:[#allocation3 + $0x20] sm:$0xff] %vm6702, %v7091
  %7143 = vst.msk [vmem:[#allocation3 + $0x28] sm:$0xff] %vm6702, %v7092
  %7144 = vst.msk [vmem:[#allocation3 + $0x30] sm:$0xff] %vm6702, %v7093
  %7145 = vst.msk [vmem:[#allocation3 + $0x38] sm:$0xff] %vm6702, %v7094
  %7146 = vst.msk [vmem:[#allocation3 + $0x40] sm:$0xff] %vm6702, %v7095
  %7147 = vst.msk [vmem:[#allocation3 + $0x48] sm:$0xff] %vm6702, %v7096
  %7148 = vst.msk [vmem:[#allocation3 + $0x50] sm:$0xff] %vm6702, %v7097
  %7149 = vst.msk [vmem:[#allocation3 + $0x58] sm:$0xff] %vm6702, %v7098
  %7150 = vst.msk [vmem:[#allocation3 + $0x60] sm:$0xff] %vm6702, %v7099
  %7151 = vst.msk [vmem:[#allocation3 + $0x68] sm:$0xff] %vm6702, %v7100
  %7152 = vst.msk [vmem:[#allocation3 + $0x70] sm:$0xff] %vm6702, %v7101
  %7153 = vst.msk [vmem:[#allocation3 + $0x78] sm:$0xff] %vm6702, %v7102
  %7154 = vst.msk [vmem:[#allocation3 + $0x80] sm:$0xff] %vm6702, %v7103
  %7155 = vst.msk [vmem:[#allocation3 + $0x88] sm:$0xff] %vm6702, %v7104
  %7156 = vst.msk [vmem:[#allocation3 + $0x90] sm:$0xff] %vm6702, %v7105
  %7157 = vst.msk [vmem:[#allocation3 + $0x98] sm:$0xff] %vm6702, %v7106
  %7158 = vst.msk [vmem:[#allocation3 + $0xa0] sm:$0xff] %vm6702, %v7107
  %7159 = vst.msk [vmem:[#allocation3 + $0xa8] sm:$0xff] %vm6702, %v7108
  %7160 = vst.msk [vmem:[#allocation3 + $0xb0] sm:$0xff] %vm6702, %v7109
  %7161 = vst.msk [vmem:[#allocation3 + $0xb8] sm:$0xff] %vm6702, %v7110
  %7162 = vst.msk [vmem:[#allocation3 + $0xc0] sm:$0xff] %vm6702, %v7111
  %7163 = vst.msk [vmem:[#allocation3 + $0xc8] sm:$0xff] %vm6702, %v7112
  %7164 = vst.msk [vmem:[#allocation3 + $0xd0] sm:$0xff] %vm6702, %v7113
  %7165 = vst.msk [vmem:[#allocation3 + $0xd8] sm:$0xff] %vm6702, %v7114
  %7166 = vst.msk [vmem:[#allocation3 + $0xe0] sm:$0xff] %vm6702, %v7115
  %7167 = vst.msk [vmem:[#allocation3 + $0xe8] sm:$0xff] %vm6702, %v7116
  %7168 = vst.msk [vmem:[#allocation3 + $0xf0] sm:$0xff] %vm6702, %v7117
  %7169 = vst.msk [vmem:[#allocation3 + $0xf8] sm:$0xff] %vm6702, %v7118
  %7170 = vst.msk [vmem:[#allocation3 + $0x100] sm:$0xff] %vm6702, %v7119
  %7171 = vst.msk [vmem:[#allocation3 + $0x108] sm:$0xff] %vm6702, %v7120
  %7172 = vst.msk [vmem:[#allocation3 + $0x110] sm:$0xff] %vm6702, %v7121
  %7173 = vst.msk [vmem:[#allocation3 + $0x118] sm:$0xff] %vm6702, %v7122
  %7174 = vst.msk [vmem:[#allocation3 + $0x120] sm:$0xff] %vm6702, %v7123
  %7175 = vst.msk [vmem:[#allocation3 + $0x128] sm:$0xff] %vm6702, %v7124
  %7176 = vst.msk [vmem:[#allocation3 + $0x130] sm:$0xff] %vm6702, %v7125
  %7177 = vst.msk [vmem:[#allocation3 + $0x138] sm:$0xff] %vm6702, %v7126
  %7178 = vst.msk [vmem:[#allocation3 + $0x140] sm:$0xff] %vm6702, %v7127
  %7179 = vst.msk [vmem:[#allocation3 + $0x148] sm:$0xff] %vm6702, %v7128
  %7180 = vst.msk [vmem:[#allocation3 + $0x150] sm:$0xff] %vm6702, %v7129
  %7181 = vst.msk [vmem:[#allocation3 + $0x158] sm:$0xff] %vm6702, %v7130
  %7182 = vst.msk [vmem:[#allocation3 + $0x160] sm:$0xff] %vm6702, %v7131
  %7183 = vst.msk [vmem:[#allocation3 + $0x168] sm:$0xff] %vm6702, %v7132
  %7184 = vst.msk [vmem:[#allocation3 + $0x170] sm:$0xff] %vm6702, %v7133
  %7185 = vst.msk [vmem:[#allocation3 + $0x178] sm:$0xff] %vm6702, %v7134
  %7186 = vst.msk [vmem:[#allocation3 + $0x180] sm:$0xff] %vm6702, %v7135
  %7187 = vst.msk [vmem:[#allocation3 + $0x188] sm:$0xff] %vm6702, %v7136
  %7188 = vst.msk [vmem:[#allocation3 + $0x190] sm:$0xff] %vm6702, %v7137
  %v7189 = vld [vmem:[#allocation3] sm:$0xff]
  %v7190 = vld [vmem:[#allocation3 + $0x8] sm:$0xff]
  %v7191 = vld [vmem:[#allocation3 + $0x10] sm:$0xff]
  %v7192 = vld [vmem:[#allocation3 + $0x18] sm:$0xff]
  %v7193 = vld [vmem:[#allocation3 + $0x22] sm:$0xff]
  %v7194 = vld [vmem:[#allocation3 + $0x2a] sm:$0xff]
  %v7195 = vld [vmem:[#allocation3 + $0x32] sm:$0xff]
  %v7196 = vld [vmem:[#allocation3 + $0x3a] sm:$0xff]
  %v7197 = vld [vmem:[#allocation3 + $0x44] sm:$0xff]
  %v7198 = vld [vmem:[#allocation3 + $0x4c] sm:$0xff]
  %v7199 = vld [vmem:[#allocation3 + $0x54] sm:$0xff]
  %v7200 = vld [vmem:[#allocation3 + $0x5c] sm:$0xff]
  %v7201 = vld [vmem:[#allocation3 + $0x66] sm:$0xff]
  %v7202 = vld [vmem:[#allocation3 + $0x6e] sm:$0xff]
  %v7203 = vld [vmem:[#allocation3 + $0x76] sm:$0xff]
  %v7204 = vld [vmem:[#allocation3 + $0x7e] sm:$0xff]
  %v7205 = vld [vmem:[#allocation3 + $0xcc] sm:$0xff]
  %v7206 = vld [vmem:[#allocation3 + $0xd4] sm:$0xff]
  %v7207 = vld [vmem:[#allocation3 + $0xdc] sm:$0xff]
  %v7208 = vld [vmem:[#allocation3 + $0xe4] sm:$0xff]
  %v7209 = vld [vmem:[#allocation3 + $0xee] sm:$0xff]
  %v7210 = vld [vmem:[#allocation3 + $0xf6] sm:$0xff]
  %v7211 = vld [vmem:[#allocation3 + $0xfe] sm:$0xff]
  %v7212 = vld [vmem:[#allocation3 + $0x106] sm:$0xff]
  %v7213 = vld [vmem:[#allocation3 + $0x110] sm:$0xff]
  %v7214 = vld [vmem:[#allocation3 + $0x118] sm:$0xff]
  %v7215 = vld [vmem:[#allocation3 + $0x120] sm:$0xff]
  %v7216 = vld [vmem:[#allocation3 + $0x128] sm:$0xff]
  %v7217 = vld [vmem:[#allocation3 + $0x132] sm:$0xff]
  %v7218 = vld [vmem:[#allocation3 + $0x13a] sm:$0xff]
  %v7219 = vld [vmem:[#allocation3 + $0x142] sm:$0xff]
  %v7220 = vld [vmem:[#allocation3 + $0x14a] sm:$0xff]
  %7225 = vrot.lane.b32.xlu0 %v7193, 32
  %v7226 = vpop.permute.xlu0 %7225
  %7227 = vrot.lane.b32.xlu0 %v7194, 32
  %v7228 = vpop.permute.xlu0 %7227
  %7229 = vrot.lane.b32.xlu0 %v7195, 32
  %v7230 = vpop.permute.xlu0 %7229
  %7231 = vrot.lane.b32.xlu0 %v7196, 32
  %v7232 = vpop.permute.xlu0 %7231
  %7241 = vrot.lane.b32.xlu0 %v7197, 64
  %v7242 = vpop.permute.xlu0 %7241
  %7243 = vrot.lane.b32.xlu0 %v7198, 64
  %v7244 = vpop.permute.xlu0 %7243
  %7245 = vrot.lane.b32.xlu0 %v7199, 64
  %v7246 = vpop.permute.xlu0 %7245
  %7247 = vrot.lane.b32.xlu0 %v7200, 64
  %v7248 = vpop.permute.xlu0 %7247
  %7257 = vrot.lane.b32.xlu0 %v7201, 96
  %v7258 = vpop.permute.xlu0 %7257
  %7259 = vrot.lane.b32.xlu0 %v7202, 96
  %v7260 = vpop.permute.xlu0 %7259
  %7261 = vrot.lane.b32.xlu0 %v7203, 96
  %v7262 = vpop.permute.xlu0 %7261
  %7263 = vrot.lane.b32.xlu0 %v7204, 96
  %v7264 = vpop.permute.xlu0 %7263
  %7273 = vrot.lane.b32.xlu0 %v7209, 32
  %v7274 = vpop.permute.xlu0 %7273
  %7275 = vrot.lane.b32.xlu0 %v7210, 32
  %v7276 = vpop.permute.xlu0 %7275
  %7277 = vrot.lane.b32.xlu0 %v7211, 32
  %v7278 = vpop.permute.xlu0 %7277
  %7279 = vrot.lane.b32.xlu0 %v7212, 32
  %v7280 = vpop.permute.xlu0 %7279
  %7289 = vrot.lane.b32.xlu0 %v7213, 64
  %v7290 = vpop.permute.xlu0 %7289
  %7291 = vrot.lane.b32.xlu0 %v7214, 64
  %v7292 = vpop.permute.xlu0 %7291
  %7293 = vrot.lane.b32.xlu0 %v7215, 64
  %v7294 = vpop.permute.xlu0 %7293
  %7295 = vrot.lane.b32.xlu0 %v7216, 64
  %v7296 = vpop.permute.xlu0 %7295
  %7305 = vrot.lane.b32.xlu0 %v7217, 96
  %v7306 = vpop.permute.xlu0 %7305
  %7307 = vrot.lane.b32.xlu0 %v7218, 96
  %v7308 = vpop.permute.xlu0 %7307
  %7309 = vrot.lane.b32.xlu0 %v7219, 96
  %v7310 = vpop.permute.xlu0 %7309
  %7311 = vrot.lane.b32.xlu0 %v7220, 96
  %v7312 = vpop.permute.xlu0 %7311
  %v7317 = vsel %vm6702, %v7189, %v7226
  %v7318 = vsel %vm6702, %v7190, %v7228
  %v7319 = vsel %vm6702, %v7191, %v7230
  %v7320 = vsel %vm6702, %v7192, %v7232
  %v7321 = vsel %vm3141, %v7317, %v7242
  %v7322 = vsel %vm3141, %v7318, %v7244
  %v7323 = vsel %vm3141, %v7319, %v7246
  %v7324 = vsel %vm3141, %v7320, %v7248
  %vm7325 = vcmask 785408
  %v7326 = vsel %vm7325, %v7321, %v7258
  %v7327 = vsel %vm7325, %v7322, %v7260
  %v7328 = vsel %vm7325, %v7323, %v7262
  %v7329 = vsel %vm7325, %v7324, %v7264
  %v7330 = vsel %vm6702, %v7205, %v7274
  %v7331 = vsel %vm6702, %v7206, %v7276
  %v7332 = vsel %vm6702, %v7207, %v7278
  %v7333 = vsel %vm6702, %v7208, %v7280
  %v7334 = vsel %vm3141, %v7330, %v7290
  %v7335 = vsel %vm3141, %v7331, %v7292
  %v7336 = vsel %vm3141, %v7332, %v7294
  %v7337 = vsel %vm3141, %v7333, %v7296
  %v7338 = vsel %vm7325, %v7334, %v7306
  %v7339 = vsel %vm7325, %v7335, %v7308
  %v7340 = vsel %vm7325, %v7336, %v7310
  %v7341 = vsel %vm7325, %v7337, %v7312
  %v7342 = vld [vmem:[%s5] sm:$0xff]
  %v7343 = vld [vmem:[%s5 + $0x8] sm:$0xff]
  %v7344 = vld [vmem:[%s5 + $0x10] sm:$0xff]
  %v7345 = vld [vmem:[%s5 + $0x18] sm:$0xff]
  %v7346 = vld [vmem:[%s6] sm:$0xff]
  %v7347 = vld [vmem:[%s6 + $0x8] sm:$0xff]
  %v7348 = vld [vmem:[%s6 + $0x10] sm:$0xff]
  %v7349 = vld [vmem:[%s6 + $0x18] sm:$0xff]
  %7351 = vset.pattern.permute.xlu0 0
  %7352 = vperm.xlu0 %7351, %v7346
  %v7353 = vpop.permute.xlu0 %7352
  %7356 = vset.pattern.permute.xlu0 0
  %7357 = vperm.xlu0 %7356, %v7347
  %v7358 = vpop.permute.xlu0 %7357
  %7361 = vset.pattern.permute.xlu0 0
  %7362 = vperm.xlu0 %7361, %v7348
  %v7363 = vpop.permute.xlu0 %7362
  %7366 = vset.pattern.permute.xlu0 0
  %7367 = vperm.xlu0 %7366, %v7349
  %v7368 = vpop.permute.xlu0 %7367
  %v7371 = vsel %vm6702, %v7342, 0
  %v7374 = vsel %vm6702, %v7343, 0
  %v7377 = vsel %vm6702, %v7344, 0
  %v7380 = vsel %vm6702, %v7345, 0
  %7382 = vmatprep.subr.mxu0 0.0
  %7383 = vmatpush1.msra.mxu0 0.0
  %7384 = vmatprep.subr.mxu0 0.0
  %7385 = vmatpush1.msra.mxu0 0.0
  %7386 = vmatprep.subr.mxu0 0.0
  %7387 = vmatpush1.msra.mxu0 0.0
  %7388 = vmatprep.subr.mxu0 0.0
  %7389 = vmatpush1.msra.mxu0 0.0
  %7390 = vmatprep.subr.mxu0 0.0
  %7391 = vmatpush1.msra.mxu0 0.0
  %7392 = vmatprep.subr.mxu0 0.0
  %7393 = vmatpush1.msra.mxu0 0.0
  %7394 = vmatprep.subr.mxu0 0.0
  %7395 = vmatpush1.msra.mxu0 0.0
  %7396 = vmatprep.subr.mxu0 0.0
  %7397 = vmatpush1.msra.mxu0 0.0
  %7398 = vmatprep.subr.mxu0 0.0
  %7399 = vmatpush1.msra.mxu0 0.0
  %7400 = vmatprep.subr.mxu0 0.0
  %7401 = vmatpush1.msra.mxu0 0.0
  %7402 = vmatprep.subr.mxu0 0.0
  %7403 = vmatpush1.msra.mxu0 0.0
  %7404 = vmatprep.subr.mxu0 0.0
  %7405 = vmatpush1.msra.mxu0 0.0
  %7406 = vmatprep.subr.mxu0 %v7341
  %7407 = vmatpush1.msra.mxu0 %v7329
  %7408 = vmatprep.subr.mxu0 %v7340
  %7409 = vmatpush1.msra.mxu0 %v7328
  %7410 = vmatprep.subr.mxu0 %v7339
  %7411 = vmatpush1.msra.mxu0 %v7327
  %7412 = vmatprep.subr.mxu0 %v7338
  %7413 = vmatpush1.msra.mxu0 %v7326
  %7414 = vmatprep.subr.mxu0 0.0
  %7415 = vmatpush2.msra.mxu0 0.0
  %7416 = vmatprep.subr.mxu0 0.0
  %7417 = vmatpush2.msra.mxu0 0.0
  %7418 = vmatprep.subr.mxu0 0.0
  %7419 = vmatpush2.msra.mxu0 0.0
  %7420 = vmatprep.subr.mxu0 0.0
  %7421 = vmatpush2.msra.mxu0 0.0
  %7422 = vmatprep.subr.mxu0 0.0
  %7423 = vmatpush2.msra.mxu0 0.0
  %7424 = vmatprep.subr.mxu0 0.0
  %7425 = vmatpush2.msra.mxu0 0.0
  %7426 = vmatprep.subr.mxu0 0.0
  %7427 = vmatpush2.msra.mxu0 0.0
  %7428 = vmatprep.subr.mxu0 0.0
  %7429 = vmatpush2.msra.mxu0 0.0
  %7430 = vmatprep.subr.mxu0 0.0
  %7431 = vmatpush2.msra.mxu0 0.0
  %7432 = vmatprep.subr.mxu0 0.0
  %7433 = vmatpush2.msra.mxu0 0.0
  %7434 = vmatprep.subr.mxu0 0.0
  %7435 = vmatpush2.msra.mxu0 0.0
  %7436 = vmatprep.subr.mxu0 0.0
  %7437 = vmatpush2.msra.mxu0 0.0
  %7438 = vmatprep.subr.mxu0 0.0
  %7439 = vmatpush2.msra.mxu0 0.0
  %7440 = vmatprep.subr.mxu0 0.0
  %7441 = vmatpush2.msra.mxu0 0.0
  %7442 = vmatprep.subr.mxu0 0.0
  %7443 = vmatpush2.msra.mxu0 0.0
  %7444 = vmatprep.subr.mxu0 0.0
  %7445 = vmatpush2.msra.mxu0 0.0
  %7446 = vmatprep.mubr.f32.mxu0 0.0
  %7447 = vmatmul.mubr.f32.gmra.mxu0 %v7371
  %v7448 = vpop.f32.mrf.mxu0
  %v7449 = vadd.f32 %v7353, %v7448
  %v7450 = vpop.f32.mrf.mxu0
  %v7451 = vadd.f32 %v7353, %v7450
  %7452 = vmatprep.mubr.f32.mxu0 0.0
  %7453 = vmatmul.mubr.f32.gmra.mxu0 %v7374
  %v7454 = vpop.f32.mrf.mxu0
  %v7455 = vadd.f32 %v7358, %v7454
  %v7456 = vpop.f32.mrf.mxu0
  %v7457 = vadd.f32 %v7358, %v7456
  %7458 = vmatprep.mubr.f32.mxu0 0.0
  %7459 = vmatmul.mubr.f32.gmra.mxu0 %v7377
  %v7460 = vpop.f32.mrf.mxu0
  %v7461 = vadd.f32 %v7363, %v7460
  %v7462 = vpop.f32.mrf.mxu0
  %v7463 = vadd.f32 %v7363, %v7462
  %7464 = vmatprep.mubr.f32.mxu0 0.0
  %7465 = vmatmul.mubr.f32.gmra.mxu0 %v7380
  %v7466 = vpop.f32.mrf.mxu0
  %v7467 = vadd.f32 %v7368, %v7466
  %v7468 = vpop.f32.mrf.mxu0
  %v7469 = vadd.f32 %v7368, %v7468
  %7470 = vdwg.mxu0
  %v7471 = vmax.f32 %v7449, 0.0
  %v7472 = vmax.f32 %v7451, 0.0
  %v7473 = vmax.f32 %v7455, 0.0
  %v7474 = vmax.f32 %v7457, 0.0
  %v7475 = vmax.f32 %v7461, 0.0
  %v7476 = vmax.f32 %v7463, 0.0
  %v7477 = vmax.f32 %v7467, 0.0
  %v7478 = vmax.f32 %v7469, 0.0
  %v7479 = vld [vmem:[%s7] sm:$0xf]
  %v7480 = vld [vmem:[%s8] sm:$0xf]
  %7482 = vset.pattern.permute.xlu0 0
  %7483 = vperm.xlu0 %7482, %v7480
  %v7484 = vpop.permute.xlu0 %7483
  %v7487 = vsel %vm6702, %v7479, 0
  %7489 = vmatprep.subr.mxu0 0.0
  %7490 = vmatpush1.msra.mxu0 0.0
  %7491 = vmatprep.subr.mxu0 0.0
  %7492 = vmatpush1.msra.mxu0 0.0
  %7493 = vmatprep.subr.mxu0 0.0
  %7494 = vmatpush1.msra.mxu0 0.0
  %7495 = vmatprep.subr.mxu0 0.0
  %7496 = vmatpush1.msra.mxu0 0.0
  %7497 = vmatprep.subr.mxu0 0.0
  %7498 = vmatpush1.msra.mxu0 0.0
  %7499 = vmatprep.subr.mxu0 0.0
  %7500 = vmatpush1.msra.mxu0 0.0
  %7501 = vmatprep.subr.mxu0 0.0
  %7502 = vmatpush1.msra.mxu0 0.0
  %7503 = vmatprep.subr.mxu0 0.0
  %7504 = vmatpush1.msra.mxu0 0.0
  %7505 = vmatprep.subr.mxu0 0.0
  %7506 = vmatpush1.msra.mxu0 0.0
  %7507 = vmatprep.subr.mxu0 0.0
  %7508 = vmatpush1.msra.mxu0 0.0
  %7509 = vmatprep.subr.mxu0 0.0
  %7510 = vmatpush1.msra.mxu0 0.0
  %7511 = vmatprep.subr.mxu0 0.0
  %7512 = vmatpush1.msra.mxu0 0.0
  %7513 = vmatprep.subr.mxu0 %v7478
  %7514 = vmatpush1.msra.mxu0 %v7477
  %7515 = vmatprep.subr.mxu0 %v7476
  %7516 = vmatpush1.msra.mxu0 %v7475
  %7517 = vmatprep.subr.mxu0 %v7474
  %7518 = vmatpush1.msra.mxu0 %v7473
  %7519 = vmatprep.subr.mxu0 %v7472
  %7520 = vmatpush1.msra.mxu0 %v7471
  %7521 = vmatprep.subr.mxu0 0.0
  %7522 = vmatpush2.msra.mxu0 0.0
  %7523 = vmatprep.subr.mxu0 0.0
  %7524 = vmatpush2.msra.mxu0 0.0
  %7525 = vmatprep.subr.mxu0 0.0
  %7526 = vmatpush2.msra.mxu0 0.0
  %7527 = vmatprep.subr.mxu0 0.0
  %7528 = vmatpush2.msra.mxu0 0.0
  %7529 = vmatprep.subr.mxu0 0.0
  %7530 = vmatpush2.msra.mxu0 0.0
  %7531 = vmatprep.subr.mxu0 0.0
  %7532 = vmatpush2.msra.mxu0 0.0
  %7533 = vmatprep.subr.mxu0 0.0
  %7534 = vmatpush2.msra.mxu0 0.0
  %7535 = vmatprep.subr.mxu0 0.0
  %7536 = vmatpush2.msra.mxu0 0.0
  %7537 = vmatprep.subr.mxu0 0.0
  %7538 = vmatpush2.msra.mxu0 0.0
  %7539 = vmatprep.subr.mxu0 0.0
  %7540 = vmatpush2.msra.mxu0 0.0
  %7541 = vmatprep.subr.mxu0 0.0
  %7542 = vmatpush2.msra.mxu0 0.0
  %7543 = vmatprep.subr.mxu0 0.0
  %7544 = vmatpush2.msra.mxu0 0.0
  %7545 = vmatprep.subr.mxu0 0.0
  %7546 = vmatpush2.msra.mxu0 0.0
  %7547 = vmatprep.subr.mxu0 0.0
  %7548 = vmatpush2.msra.mxu0 0.0
  %7549 = vmatprep.subr.mxu0 0.0
  %7550 = vmatpush2.msra.mxu0 0.0
  %7551 = vmatprep.subr.mxu0 0.0
  %7552 = vmatpush2.msra.mxu0 0.0
  %7553 = vmatprep.mubr.f32.mxu0 0.0
  %7554 = vmatmul.mubr.f32.gmra.mxu0 %v7487
  %v7555 = vpop.f32.mrf.mxu0
  %v7556 = vadd.f32 %v7484, %v7555
  %v7557 = vpop.f32.mrf.mxu0
  %v7558 = vadd.f32 %v7484, %v7557
  %7559 = vdwg.mxu0
  %v7562 = vcombine.low %v7556, %v7558
  %7564 = vst [vmem:[%s11] sm:$0xff] %v7562
  // Predicated region
  $region46: #{pixel_qnetwork_forward.1} parent=0 // pred_check
    _
  $region47: #{pixel_qnetwork_forward.1} parent=0 // pred_check_branch
    %7566 = sbr.rel (0) target = $region49
  $region48: #{pixel_qnetwork_forward.1} parent=0 // pred_region
    _
  $region49: #{pixel_qnetwork_forward.1} parent=0 // pred_fallthru
    _
  // Predicated region
  $region50: #{pixel_qnetwork_forward.1} parent=0 // pred_check
    _
  $region51: #{pixel_qnetwork_forward.1} parent=0 // pred_check_branch
    %7568 = sbr.rel (0) target = $region53
  $region52: #{pixel_qnetwork_forward.1} parent=0 // pred_region
    _
  $region53: #{pixel_qnetwork_forward.1} parent=0 // pred_fallthru
    _

</llo_original>
